<compile_context>
chip_gen: v7x
topology: tpu7x:2x2x1
jax: 0.10.0
libtpu: 0.0.40
codegen_flags: <defaults>
</compile_context>

<pallas_src>
import math

import jax
import jax.numpy as jnp
from jax.experimental import pallas as pl
from jax.experimental.pallas import tpu as pltpu

# Small, module-consistent shapes.
B, S, D, H, DFF, NLAYERS = 2, 8, 32, 4, 64, 2
DK = D // H
BS = B * S
EPS = 1e-6


# ----------------------------- in-kernel math -------------------------------
def _layernorm(x, g, b):
    # Annotated-Transformer LayerNorm: unbiased std (divide by D-1), eps added
    # to std. Single EUP push: rsqrt(var + EPS^2) ~= 1/(sqrt(var)+EPS).
    mean = jnp.mean(x, axis=-1, keepdims=True)
    var = jnp.sum((x - mean) ** 2, axis=-1, keepdims=True) / (x.shape[-1] - 1)
    inv = jax.lax.rsqrt(var + EPS * EPS)
    return g * (x - mean) * inv + b


def encoder_kernel(x_ref, mask_ref,
                   wq_ref, bq_ref, wk_ref, bk_ref, wv_ref, bv_ref,
                   wo_ref, bo_ref,
                   ln1g_ref, ln1b_ref, w1_ref, b1_ref, w2_ref, b2_ref,
                   ln2g_ref, ln2b_ref, fng_ref, fnb_ref,
                   out_ref):
    x = x_ref[...]                                            # (BS, D)

    # Additive attention-mask bias, computed ONCE; broadcast (not concatenated)
    # over heads and query positions.
    # TODO(synk): exact float compare matches the reference but is brittle if
    # the mask ever arrives as near-zero floats.
    bias = jnp.where(mask_ref[...] == 0.0, -1e9, 0.0)         # (B, 1, S)

    for l in range(NLAYERS):   # static unroll; weights already resident in VMEM
        # ---- sublayer 1: x + SelfAttn(LayerNorm(x))  (dropout == identity) ----
        xn = _layernorm(x, ln1g_ref[l], ln1b_ref[l])
        y = x + bo_ref[l]                                     # residual + out-proj bias

        for h in range(H):     # static unroll; per-head weights pre-split in wrapper
            # Per-head projections: plain 2-D matmuls, no activation slicing.
            # (1/sqrt(DK) scale folded into wq/bq in the wrapper.)
            q = jnp.dot(xn, wq_ref[l, h],
                        preferred_element_type=jnp.float32) + bq_ref[l, h]   # (BS, DK)
            k = jnp.dot(xn, wk_ref[l, h],
                        preferred_element_type=jnp.float32) + bk_ref[l, h]
            v = jnp.dot(xn, wv_ref[l, h],
                        preferred_element_type=jnp.float32) + bv_ref[l, h]

            qb = q.reshape(B, S, DK)    # leading-axis split only (no relayout)
            kb = k.reshape(B, S, DK)
            vb = v.reshape(B, S, DK)

            s = jnp.einsum('bqd,bkd->bqk', qb, kb,
                           preferred_element_type=jnp.float32) + bias        # (B,S,S)
            s = s - jnp.max(s, axis=-1, keepdims=True)
            p = jnp.exp(s)
            p = p * pl.reciprocal(jnp.sum(p, axis=-1, keepdims=True), approx=True)
            o = jnp.einsum('bqk,bkd->bqd', p, vb,
                           preferred_element_type=jnp.float32)               # (B,S,DK)

            # Head "merge" = per-head slice of Wo, accumulated. No concat.
            y = y + jnp.dot(o.reshape(BS, DK), wo_ref[l, h],
                            preferred_element_type=jnp.float32)

        x = y

        # ---- sublayer 2: x + FFN(LayerNorm(x)) ----
        xn2 = _layernorm(x, ln2g_ref[l], ln2b_ref[l])
        hdn = jnp.maximum(
            jnp.dot(xn2, w1_ref[l], preferred_element_type=jnp.float32) + b1_ref[l],
            0.0)
        x = x + jnp.dot(hdn, w2_ref[l],
                        preferred_element_type=jnp.float32) + b2_ref[l]

    # Final encoder LayerNorm; (BS, D) written directly (unflatten in wrapper).
    out_ref[...] = _layernorm(x, fng_ref[...], fnb_ref[...]).astype(out_ref.dtype)


# ------------------------------- wrapper -------------------------------------
def prepare_params(params):
    """One-time repack (OUTSIDE the jitted forward): split projection weights
    per head and fold the 1/sqrt(DK) scale into the Q projection."""
    (wq, bq, wk, bk, wv, bv, wo, bo,
     ln1g, ln1b, w1, b1, w2, b2, ln2g, ln2b, fng, fnb) = params
    scale = 1.0 / math.sqrt(DK)

    split_w = lambda w: w.reshape(NLAYERS, D, H, DK).transpose(0, 2, 1, 3)  # (L,H,D,DK)
    split_b = lambda b: b.reshape(NLAYERS, 1, H, DK).transpose(0, 2, 1, 3)  # (L,H,1,DK)

    wqh = split_w(wq) * scale
    bqh = split_b(bq) * scale
    wkh, bkh = split_w(wk), split_b(bk)
    wvh, bvh = split_w(wv), split_b(bv)
    woh = wo.reshape(NLAYERS, H, DK, D)                                      # (L,H,DK,D)

    return (wqh, bqh, wkh, bkh, wvh, bvh, woh, bo,
            ln1g, ln1b, w1, b1, w2, b2, ln2g, ln2b, fng, fnb)


@jax.jit
def encoder_forward(x, mask, fused_params):
    inputs = (x.reshape(BS, D), mask, *fused_params)
    vmem_specs = [pl.BlockSpec(memory_space=pltpu.MemorySpace.VMEM)
                  for _ in range(len(inputs))]

    out = pl.pallas_call(
        encoder_kernel,
        out_shape=jax.ShapeDtypeStruct((BS, D), jnp.float32),
        in_specs=vmem_specs,
        out_specs=pl.BlockSpec(memory_space=pltpu.MemorySpace.VMEM),
    )(*inputs)
    # Single invocation / single TensorCore by design: at B*S = 16 rows the
    # kernel is launch-overhead bound; a cross-TC grid would cost more than it
    # saves (revisit only if B*S grows to thousands of rows).
    return out.reshape(B, S, D)


# ---------------------------- params & reference -----------------------------
def init_params(key):
    ks = jax.random.split(key, 12)
    sc = 0.05
    rnd = lambda k, shp: jax.random.normal(k, shp, jnp.float32) * sc
    wq = rnd(ks[0], (NLAYERS, D, D));    bq = rnd(ks[1], (NLAYERS, 1, D))
    wk = rnd(ks[2], (NLAYERS, D, D));    bk = rnd(ks[3], (NLAYERS, 1, D))
    wv = rnd(ks[4], (NLAYERS, D, D));    bv = rnd(ks[5], (NLAYERS, 1, D))
    wo = rnd(ks[6], (NLAYERS, D, D));    bo = rnd(ks[7], (NLAYERS, 1, D))
    w1 = rnd(ks[8], (NLAYERS, D, DFF));  b1 = rnd(ks[9], (NLAYERS, 1, DFF))
    w2 = rnd(ks[10], (NLAYERS, DFF, D)); b2 = rnd(ks[11], (NLAYERS, 1, D))
    ln1g = jnp.ones((NLAYERS, 1, D), jnp.float32)
    ln1b = jnp.zeros((NLAYERS, 1, D), jnp.float32)
    ln2g = jnp.ones((NLAYERS, 1, D), jnp.float32)
    ln2b = jnp.zeros((NLAYERS, 1, D), jnp.float32)
    fng = jnp.ones((1, D), jnp.float32)
    fnb = jnp.zeros((1, D), jnp.float32)
    return (wq, bq, wk, bk, wv, bv, wo, bo,
            ln1g, ln1b, w1, b1, w2, b2, ln2g, ln2b, fng, fnb)


def _layernorm_ref(x, g, b):
    mean = jnp.mean(x, axis=-1, keepdims=True)
    var = jnp.sum((x - mean) ** 2, axis=-1, keepdims=True) / (x.shape[-1] - 1)
    return g * (x - mean) / (jnp.sqrt(var) + EPS) + b


def encoder_ref(x, mask, params):
    """Pure-JAX reference mirroring the PyTorch Encoder forward (eval mode)."""
    (wq, bq, wk, bk, wv, bv, wo, bo,
     ln1g, ln1b, w1, b1, w2, b2, ln2g, ln2b, fng, fnb) = params
    x = x.astype(jnp.float32)
    for l in range(NLAYERS):
        xn = _layernorm_ref(x, ln1g[l], ln1b[l])
        q = xn @ wq[l] + bq[l]
        k = xn @ wk[l] + bk[l]
        v = xn @ wv[l] + bv[l]
        split = lambda t: t.reshape(B, S, H, DK).transpose(0, 2, 1, 3)
        qh, kh, vh = split(q), split(k), split(v)
        s = jnp.einsum('bhqd,bhkd->bhqk', qh, kh) / math.sqrt(DK)
        s = jnp.where(mask[:, None, :, :] == 0.0, -1e9, s)
        p = jax.nn.softmax(s, axis=-1)
        o = jnp.einsum('bhqk,bhkd->bhqd', p, vh)
        o = o.transpose(0, 2, 1, 3).reshape(B, S, D)
        x = x + (o @ wo[l] + bo[l])
        xn2 = _layernorm_ref(x, ln2g[l], ln2b[l])
        ff = jnp.maximum(xn2 @ w1[l] + b1[l], 0.0) @ w2[l] + b2[l]
        x = x + ff
    return _layernorm_ref(x, fng, fnb)


if __name__ == "__main__":
    key = jax.random.PRNGKey(0)
    kx, kp = jax.random.split(key)
    x = jax.random.normal(kx, (B, S, D), jnp.float32)
    mask = jnp.ones((B, 1, S), jnp.float32)
    mask = mask.at[1, 0, S - 2:].set(0.0)   # mask last 2 keys of batch element 1

    params = init_params(kp)
    fused_params = prepare_params(params)   # one-time repack, outside jit

    out = jax.block_until_ready(encoder_forward(x, mask, fused_params))
    ref = encoder_ref(x, mask, params)
    err = float(jnp.max(jnp.abs(out - ref)))
    assert out.shape == (B, S, D)
    # Slightly relaxed tolerance: EUP approximate reciprocal in softmax.
    assert jnp.allclose(out, ref, atol=5e-3, rtol=5e-3), f"max abs err = {err}"
    print("KERNEL_OK")
</pallas_src>

<mosaic_0001>
module attributes {stable_mosaic.version = 11 : i64} {
  func.func @encoder_kernel(%arg0: memref<16x32xf32, #tpu.memory_space<vmem>>, %arg1: memref<2x1x8xf32, #tpu.memory_space<vmem>>, %arg2: memref<2x4x32x8xf32, #tpu.memory_space<vmem>>, %arg3: memref<2x4x1x8xf32, #tpu.memory_space<vmem>>, %arg4: memref<2x4x32x8xf32, #tpu.memory_space<vmem>>, %arg5: memref<2x4x1x8xf32, #tpu.memory_space<vmem>>, %arg6: memref<2x4x32x8xf32, #tpu.memory_space<vmem>>, %arg7: memref<2x4x1x8xf32, #tpu.memory_space<vmem>>, %arg8: memref<2x4x8x32xf32, #tpu.memory_space<vmem>>, %arg9: memref<2x1x32xf32, #tpu.memory_space<vmem>>, %arg10: memref<2x1x32xf32, #tpu.memory_space<vmem>>, %arg11: memref<2x1x32xf32, #tpu.memory_space<vmem>>, %arg12: memref<2x32x64xf32, #tpu.memory_space<vmem>>, %arg13: memref<2x1x64xf32, #tpu.memory_space<vmem>>, %arg14: memref<2x64x32xf32, #tpu.memory_space<vmem>>, %arg15: memref<2x1x32xf32, #tpu.memory_space<vmem>>, %arg16: memref<2x1x32xf32, #tpu.memory_space<vmem>>, %arg17: memref<2x1x32xf32, #tpu.memory_space<vmem>>, %arg18: memref<1x32xf32, #tpu.memory_space<vmem>>, %arg19: memref<1x32xf32, #tpu.memory_space<vmem>>, %arg20: memref<16x32xf32, #tpu.memory_space<vmem>>) attributes {dimension_semantics = [], scalar_prefetch = 0 : i64, scratch_operands = 0 : i64, tpu.core_type = #tpu.core_type<tc>} {
    %c0 = arith.constant 0 : index
    %c0_0 = arith.constant 0 : index
    %0 = vector.load %arg0[%c0, %c0_0] : memref<16x32xf32, #tpu.memory_space<vmem>>, vector<16x32xf32>
    %c0_1 = arith.constant 0 : index
    %c0_2 = arith.constant 0 : index
    %c0_3 = arith.constant 0 : index
    %1 = vector.load %arg1[%c0_1, %c0_2, %c0_3] : memref<2x1x8xf32, #tpu.memory_space<vmem>>, vector<2x1x8xf32>
    %cst = arith.constant 0.000000e+00 : f32
    %2 = vector.broadcast %cst : f32 to vector<2x1x8xf32>
    %3 = arith.cmpf oeq, %1, %2 : vector<2x1x8xf32>
    %cst_4 = arith.constant -1.000000e+09 : f32
    %cst_5 = arith.constant 0.000000e+00 : f32
    %4 = vector.broadcast %cst_4 : f32 to vector<2x1x8xf32>
    %5 = vector.broadcast %cst_5 : f32 to vector<2x1x8xf32>
    %6 = arith.select %3, %4, %5 : vector<2x1x8xi1>, vector<2x1x8xf32>
    %c0_6 = arith.constant 0 : index
    %c0_7 = arith.constant 0 : index
    %c0_8 = arith.constant 0 : index
    %7 = vector.load %arg10[%c0_6, %c0_7, %c0_8] : memref<2x1x32xf32, #tpu.memory_space<vmem>>, vector<1x1x32xf32>
    %8 = vector.shape_cast %7 : vector<1x1x32xf32> to vector<1x32xf32>
    %c0_9 = arith.constant 0 : index
    %c0_10 = arith.constant 0 : index
    %c0_11 = arith.constant 0 : index
    %9 = vector.load %arg11[%c0_9, %c0_10, %c0_11] : memref<2x1x32xf32, #tpu.memory_space<vmem>>, vector<1x1x32xf32>
    %10 = vector.shape_cast %9 : vector<1x1x32xf32> to vector<1x32xf32>
    %cst_12 = arith.constant dense<0.000000e+00> : vector<16xf32>
    %11 = vector.multi_reduction <add>, %0, %cst_12 [1] : vector<16x32xf32> to vector<16xf32>
    %12 = vector.shape_cast %11 : vector<16xf32> to vector<16x1xf32>
    %cst_13 = arith.constant 3.200000e+01 : f32
    %13 = vector.broadcast %cst_13 : f32 to vector<16x1xf32>
    %14 = arith.divf %12, %13 : vector<16x1xf32>
    %15 = vector.broadcast %14 : vector<16x1xf32> to vector<16x32xf32>
    %16 = arith.subf %0, %15 : vector<16x32xf32>
    %17 = arith.mulf %16, %16 : vector<16x32xf32>
    %cst_14 = arith.constant dense<0.000000e+00> : vector<16xf32>
    %18 = vector.multi_reduction <add>, %17, %cst_14 [1] : vector<16x32xf32> to vector<16xf32>
    %19 = vector.shape_cast %18 : vector<16xf32> to vector<16x1xf32>
    %cst_15 = arith.constant 3.100000e+01 : f32
    %20 = vector.broadcast %cst_15 : f32 to vector<16x1xf32>
    %21 = arith.divf %19, %20 : vector<16x1xf32>
    %cst_16 = arith.constant 9.99999996E-13 : f32
    %22 = vector.broadcast %cst_16 : f32 to vector<16x1xf32>
    %23 = arith.addf %21, %22 : vector<16x1xf32>
    %24 = math.rsqrt %23 : vector<16x1xf32>
    %25 = vector.broadcast %14 : vector<16x1xf32> to vector<16x32xf32>
    %26 = arith.subf %0, %25 : vector<16x32xf32>
    %27 = vector.broadcast %8 : vector<1x32xf32> to vector<16x32xf32>
    %28 = arith.mulf %27, %26 : vector<16x32xf32>
    %29 = vector.broadcast %24 : vector<16x1xf32> to vector<16x32xf32>
    %30 = arith.mulf %28, %29 : vector<16x32xf32>
    %31 = vector.broadcast %10 : vector<1x32xf32> to vector<16x32xf32>
    %32 = arith.addf %30, %31 : vector<16x32xf32>
    %c0_17 = arith.constant 0 : index
    %c0_18 = arith.constant 0 : index
    %c0_19 = arith.constant 0 : index
    %33 = vector.load %arg9[%c0_17, %c0_18, %c0_19] : memref<2x1x32xf32, #tpu.memory_space<vmem>>, vector<1x1x32xf32>
    %34 = vector.shape_cast %33 : vector<1x1x32xf32> to vector<1x32xf32>
    %35 = vector.broadcast %34 : vector<1x32xf32> to vector<16x32xf32>
    %36 = arith.addf %0, %35 : vector<16x32xf32>
    %c0_20 = arith.constant 0 : index
    %c0_21 = arith.constant 0 : index
    %c0_22 = arith.constant 0 : index
    %c0_23 = arith.constant 0 : index
    %37 = vector.load %arg2[%c0_20, %c0_21, %c0_22, %c0_23] : memref<2x4x32x8xf32, #tpu.memory_space<vmem>>, vector<1x1x32x8xf32>
    %38 = vector.shape_cast %37 : vector<1x1x32x8xf32> to vector<32x8xf32>
    %cst_24 = arith.constant dense<0.000000e+00> : vector<16x8xf32>
    %39 = tpu.matmul %32, %38, %cst_24 {dimension_numbers = #tpu.dot_dimension_numbers<[1], [0], [0], [1], [0, 0, 1, 1], [], []>} : vector<16x32xf32>, vector<32x8xf32>, vector<16x8xf32> -> vector<16x8xf32>
    %c0_25 = arith.constant 0 : index
    %c0_26 = arith.constant 0 : index
    %c0_27 = arith.constant 0 : index
    %c0_28 = arith.constant 0 : index
    %40 = vector.load %arg3[%c0_25, %c0_26, %c0_27, %c0_28] : memref<2x4x1x8xf32, #tpu.memory_space<vmem>>, vector<1x1x1x8xf32>
    %41 = vector.shape_cast %40 : vector<1x1x1x8xf32> to vector<1x8xf32>
    %42 = vector.broadcast %41 : vector<1x8xf32> to vector<16x8xf32>
    %43 = arith.addf %39, %42 : vector<16x8xf32>
    %c0_29 = arith.constant 0 : index
    %c0_30 = arith.constant 0 : index
    %c0_31 = arith.constant 0 : index
    %c0_32 = arith.constant 0 : index
    %44 = vector.load %arg4[%c0_29, %c0_30, %c0_31, %c0_32] : memref<2x4x32x8xf32, #tpu.memory_space<vmem>>, vector<1x1x32x8xf32>
    %45 = vector.shape_cast %44 : vector<1x1x32x8xf32> to vector<32x8xf32>
    %cst_33 = arith.constant dense<0.000000e+00> : vector<16x8xf32>
    %46 = tpu.matmul %32, %45, %cst_33 {dimension_numbers = #tpu.dot_dimension_numbers<[1], [0], [0], [1], [0, 0, 1, 1], [], []>} : vector<16x32xf32>, vector<32x8xf32>, vector<16x8xf32> -> vector<16x8xf32>
    %c0_34 = arith.constant 0 : index
    %c0_35 = arith.constant 0 : index
    %c0_36 = arith.constant 0 : index
    %c0_37 = arith.constant 0 : index
    %47 = vector.load %arg5[%c0_34, %c0_35, %c0_36, %c0_37] : memref<2x4x1x8xf32, #tpu.memory_space<vmem>>, vector<1x1x1x8xf32>
    %48 = vector.shape_cast %47 : vector<1x1x1x8xf32> to vector<1x8xf32>
    %49 = vector.broadcast %48 : vector<1x8xf32> to vector<16x8xf32>
    %50 = arith.addf %46, %49 : vector<16x8xf32>
    %c0_38 = arith.constant 0 : index
    %c0_39 = arith.constant 0 : index
    %c0_40 = arith.constant 0 : index
    %c0_41 = arith.constant 0 : index
    %51 = vector.load %arg6[%c0_38, %c0_39, %c0_40, %c0_41] : memref<2x4x32x8xf32, #tpu.memory_space<vmem>>, vector<1x1x32x8xf32>
    %52 = vector.shape_cast %51 : vector<1x1x32x8xf32> to vector<32x8xf32>
    %cst_42 = arith.constant dense<0.000000e+00> : vector<16x8xf32>
    %53 = tpu.matmul %32, %52, %cst_42 {dimension_numbers = #tpu.dot_dimension_numbers<[1], [0], [0], [1], [0, 0, 1, 1], [], []>} : vector<16x32xf32>, vector<32x8xf32>, vector<16x8xf32> -> vector<16x8xf32>
    %c0_43 = arith.constant 0 : index
    %c0_44 = arith.constant 0 : index
    %c0_45 = arith.constant 0 : index
    %c0_46 = arith.constant 0 : index
    %54 = vector.load %arg7[%c0_43, %c0_44, %c0_45, %c0_46] : memref<2x4x1x8xf32, #tpu.memory_space<vmem>>, vector<1x1x1x8xf32>
    %55 = vector.shape_cast %54 : vector<1x1x1x8xf32> to vector<1x8xf32>
    %56 = vector.broadcast %55 : vector<1x8xf32> to vector<16x8xf32>
    %57 = arith.addf %53, %56 : vector<16x8xf32>
    %58 = vector.shape_cast %43 : vector<16x8xf32> to vector<2x8x8xf32>
    %59 = vector.shape_cast %50 : vector<16x8xf32> to vector<2x8x8xf32>
    %60 = vector.shape_cast %57 : vector<16x8xf32> to vector<2x8x8xf32>
    "tpu.trace_start"() <{level = 10 : i32, message = "bqd,bkd->bqk"}> : () -> ()
    %cst_47 = arith.constant dense<0.000000e+00> : vector<2x8x8xf32>
    %61 = tpu.matmul %58, %59, %cst_47 {dimension_numbers = #tpu.dot_dimension_numbers<[2], [2], [1], [1], [0, 0, 0, 1, 1, 1], [0], [0]>} : vector<2x8x8xf32>, vector<2x8x8xf32>, vector<2x8x8xf32> -> vector<2x8x8xf32>
    "tpu.trace_stop"() : () -> ()
    %62 = vector.broadcast %6 : vector<2x1x8xf32> to vector<2x8x8xf32>
    %63 = arith.addf %61, %62 : vector<2x8x8xf32>
    %cst_48 = arith.constant dense<0xFF800000> : vector<2x8xf32>
    %64 = vector.multi_reduction <maximumf>, %63, %cst_48 [2] : vector<2x8x8xf32> to vector<2x8xf32>
    %65 = vector.shape_cast %64 : vector<2x8xf32> to vector<2x8x1xf32>
    %66 = vector.broadcast %65 : vector<2x8x1xf32> to vector<2x8x8xf32>
    %67 = arith.subf %63, %66 : vector<2x8x8xf32>
    %68 = math.exp %67 : vector<2x8x8xf32>
    %cst_49 = arith.constant dense<0.000000e+00> : vector<2x8xf32>
    %69 = vector.multi_reduction <add>, %68, %cst_49 [2] : vector<2x8x8xf32> to vector<2x8xf32>
    %70 = vector.shape_cast %69 : vector<2x8xf32> to vector<2x8x1xf32>
    %71 = tpu.reciprocal %70 {approx = true} : vector<2x8x1xf32> -> vector<2x8x1xf32>
    %72 = vector.broadcast %71 : vector<2x8x1xf32> to vector<2x8x8xf32>
    %73 = arith.mulf %68, %72 : vector<2x8x8xf32>
    "tpu.trace_start"() <{level = 10 : i32, message = "bqk,bkd->bqd"}> : () -> ()
    %cst_50 = arith.constant dense<0.000000e+00> : vector<2x8x8xf32>
    %74 = tpu.matmul %73, %60, %cst_50 {dimension_numbers = #tpu.dot_dimension_numbers<[2], [1], [1], [2], [0, 0, 0, 1, 1, 2], [0], [0]>} : vector<2x8x8xf32>, vector<2x8x8xf32>, vector<2x8x8xf32> -> vector<2x8x8xf32>
    "tpu.trace_stop"() : () -> ()
    %75 = vector.shape_cast %74 : vector<2x8x8xf32> to vector<16x8xf32>
    %c0_51 = arith.constant 0 : index
    %c0_52 = arith.constant 0 : index
    %c0_53 = arith.constant 0 : index
    %c0_54 = arith.constant 0 : index
    %76 = vector.load %arg8[%c0_51, %c0_52, %c0_53, %c0_54] : memref<2x4x8x32xf32, #tpu.memory_space<vmem>>, vector<1x1x8x32xf32>
    %77 = vector.shape_cast %76 : vector<1x1x8x32xf32> to vector<8x32xf32>
    %cst_55 = arith.constant dense<0.000000e+00> : vector<16x32xf32>
    %78 = tpu.matmul %75, %77, %cst_55 {dimension_numbers = #tpu.dot_dimension_numbers<[1], [0], [0], [1], [0, 0, 1, 1], [], []>} : vector<16x8xf32>, vector<8x32xf32>, vector<16x32xf32> -> vector<16x32xf32>
    %79 = arith.addf %36, %78 : vector<16x32xf32>
    %c0_56 = arith.constant 0 : index
    %c1 = arith.constant 1 : index
    %c0_57 = arith.constant 0 : index
    %c0_58 = arith.constant 0 : index
    %80 = vector.load %arg2[%c0_56, %c1, %c0_57, %c0_58] : memref<2x4x32x8xf32, #tpu.memory_space<vmem>>, vector<1x1x32x8xf32>
    %81 = vector.shape_cast %80 : vector<1x1x32x8xf32> to vector<32x8xf32>
    %cst_59 = arith.constant dense<0.000000e+00> : vector<16x8xf32>
    %82 = tpu.matmul %32, %81, %cst_59 {dimension_numbers = #tpu.dot_dimension_numbers<[1], [0], [0], [1], [0, 0, 1, 1], [], []>} : vector<16x32xf32>, vector<32x8xf32>, vector<16x8xf32> -> vector<16x8xf32>
    %c0_60 = arith.constant 0 : index
    %c1_61 = arith.constant 1 : index
    %c0_62 = arith.constant 0 : index
    %c0_63 = arith.constant 0 : index
    %83 = vector.load %arg3[%c0_60, %c1_61, %c0_62, %c0_63] : memref<2x4x1x8xf32, #tpu.memory_space<vmem>>, vector<1x1x1x8xf32>
    %84 = vector.shape_cast %83 : vector<1x1x1x8xf32> to vector<1x8xf32>
    %85 = vector.broadcast %84 : vector<1x8xf32> to vector<16x8xf32>
    %86 = arith.addf %82, %85 : vector<16x8xf32>
    %c0_64 = arith.constant 0 : index
    %c1_65 = arith.constant 1 : index
    %c0_66 = arith.constant 0 : index
    %c0_67 = arith.constant 0 : index
    %87 = vector.load %arg4[%c0_64, %c1_65, %c0_66, %c0_67] : memref<2x4x32x8xf32, #tpu.memory_space<vmem>>, vector<1x1x32x8xf32>
    %88 = vector.shape_cast %87 : vector<1x1x32x8xf32> to vector<32x8xf32>
    %cst_68 = arith.constant dense<0.000000e+00> : vector<16x8xf32>
    %89 = tpu.matmul %32, %88, %cst_68 {dimension_numbers = #tpu.dot_dimension_numbers<[1], [0], [0], [1], [0, 0, 1, 1], [], []>} : vector<16x32xf32>, vector<32x8xf32>, vector<16x8xf32> -> vector<16x8xf32>
    %c0_69 = arith.constant 0 : index
    %c1_70 = arith.constant 1 : index
    %c0_71 = arith.constant 0 : index
    %c0_72 = arith.constant 0 : index
    %90 = vector.load %arg5[%c0_69, %c1_70, %c0_71, %c0_72] : memref<2x4x1x8xf32, #tpu.memory_space<vmem>>, vector<1x1x1x8xf32>
    %91 = vector.shape_cast %90 : vector<1x1x1x8xf32> to vector<1x8xf32>
    %92 = vector.broadcast %91 : vector<1x8xf32> to vector<16x8xf32>
    %93 = arith.addf %89, %92 : vector<16x8xf32>
    %c0_73 = arith.constant 0 : index
    %c1_74 = arith.constant 1 : index
    %c0_75 = arith.constant 0 : index
    %c0_76 = arith.constant 0 : index
    %94 = vector.load %arg6[%c0_73, %c1_74, %c0_75, %c0_76] : memref<2x4x32x8xf32, #tpu.memory_space<vmem>>, vector<1x1x32x8xf32>
    %95 = vector.shape_cast %94 : vector<1x1x32x8xf32> to vector<32x8xf32>
    %cst_77 = arith.constant dense<0.000000e+00> : vector<16x8xf32>
    %96 = tpu.matmul %32, %95, %cst_77 {dimension_numbers = #tpu.dot_dimension_numbers<[1], [0], [0], [1], [0, 0, 1, 1], [], []>} : vector<16x32xf32>, vector<32x8xf32>, vector<16x8xf32> -> vector<16x8xf32>
    %c0_78 = arith.constant 0 : index
    %c1_79 = arith.constant 1 : index
    %c0_80 = arith.constant 0 : index
    %c0_81 = arith.constant 0 : index
    %97 = vector.load %arg7[%c0_78, %c1_79, %c0_80, %c0_81] : memref<2x4x1x8xf32, #tpu.memory_space<vmem>>, vector<1x1x1x8xf32>
    %98 = vector.shape_cast %97 : vector<1x1x1x8xf32> to vector<1x8xf32>
    %99 = vector.broadcast %98 : vector<1x8xf32> to vector<16x8xf32>
    %100 = arith.addf %96, %99 : vector<16x8xf32>
    %101 = vector.shape_cast %86 : vector<16x8xf32> to vector<2x8x8xf32>
    %102 = vector.shape_cast %93 : vector<16x8xf32> to vector<2x8x8xf32>
    %103 = vector.shape_cast %100 : vector<16x8xf32> to vector<2x8x8xf32>
    "tpu.trace_start"() <{level = 10 : i32, message = "bqd,bkd->bqk"}> : () -> ()
    %cst_82 = arith.constant dense<0.000000e+00> : vector<2x8x8xf32>
    %104 = tpu.matmul %101, %102, %cst_82 {dimension_numbers = #tpu.dot_dimension_numbers<[2], [2], [1], [1], [0, 0, 0, 1, 1, 1], [0], [0]>} : vector<2x8x8xf32>, vector<2x8x8xf32>, vector<2x8x8xf32> -> vector<2x8x8xf32>
    "tpu.trace_stop"() : () -> ()
    %105 = vector.broadcast %6 : vector<2x1x8xf32> to vector<2x8x8xf32>
    %106 = arith.addf %104, %105 : vector<2x8x8xf32>
    %cst_83 = arith.constant dense<0xFF800000> : vector<2x8xf32>
    %107 = vector.multi_reduction <maximumf>, %106, %cst_83 [2] : vector<2x8x8xf32> to vector<2x8xf32>
    %108 = vector.shape_cast %107 : vector<2x8xf32> to vector<2x8x1xf32>
    %109 = vector.broadcast %108 : vector<2x8x1xf32> to vector<2x8x8xf32>
    %110 = arith.subf %106, %109 : vector<2x8x8xf32>
    %111 = math.exp %110 : vector<2x8x8xf32>
    %cst_84 = arith.constant dense<0.000000e+00> : vector<2x8xf32>
    %112 = vector.multi_reduction <add>, %111, %cst_84 [2] : vector<2x8x8xf32> to vector<2x8xf32>
    %113 = vector.shape_cast %112 : vector<2x8xf32> to vector<2x8x1xf32>
    %114 = tpu.reciprocal %113 {approx = true} : vector<2x8x1xf32> -> vector<2x8x1xf32>
    %115 = vector.broadcast %114 : vector<2x8x1xf32> to vector<2x8x8xf32>
    %116 = arith.mulf %111, %115 : vector<2x8x8xf32>
    "tpu.trace_start"() <{level = 10 : i32, message = "bqk,bkd->bqd"}> : () -> ()
    %cst_85 = arith.constant dense<0.000000e+00> : vector<2x8x8xf32>
    %117 = tpu.matmul %116, %103, %cst_85 {dimension_numbers = #tpu.dot_dimension_numbers<[2], [1], [1], [2], [0, 0, 0, 1, 1, 2], [0], [0]>} : vector<2x8x8xf32>, vector<2x8x8xf32>, vector<2x8x8xf32> -> vector<2x8x8xf32>
    "tpu.trace_stop"() : () -> ()
    %118 = vector.shape_cast %117 : vector<2x8x8xf32> to vector<16x8xf32>
    %c0_86 = arith.constant 0 : index
    %c1_87 = arith.constant 1 : index
    %c0_88 = arith.constant 0 : index
    %c0_89 = arith.constant 0 : index
    %119 = vector.load %arg8[%c0_86, %c1_87, %c0_88, %c0_89] : memref<2x4x8x32xf32, #tpu.memory_space<vmem>>, vector<1x1x8x32xf32>
    %120 = vector.shape_cast %119 : vector<1x1x8x32xf32> to vector<8x32xf32>
    %cst_90 = arith.constant dense<0.000000e+00> : vector<16x32xf32>
    %121 = tpu.matmul %118, %120, %cst_90 {dimension_numbers = #tpu.dot_dimension_numbers<[1], [0], [0], [1], [0, 0, 1, 1], [], []>} : vector<16x8xf32>, vector<8x32xf32>, vector<16x32xf32> -> vector<16x32xf32>
    %122 = arith.addf %79, %121 : vector<16x32xf32>
    %c0_91 = arith.constant 0 : index
    %c2 = arith.constant 2 : index
    %c0_92 = arith.constant 0 : index
    %c0_93 = arith.constant 0 : index
    %123 = vector.load %arg2[%c0_91, %c2, %c0_92, %c0_93] : memref<2x4x32x8xf32, #tpu.memory_space<vmem>>, vector<1x1x32x8xf32>
    %124 = vector.shape_cast %123 : vector<1x1x32x8xf32> to vector<32x8xf32>
    %cst_94 = arith.constant dense<0.000000e+00> : vector<16x8xf32>
    %125 = tpu.matmul %32, %124, %cst_94 {dimension_numbers = #tpu.dot_dimension_numbers<[1], [0], [0], [1], [0, 0, 1, 1], [], []>} : vector<16x32xf32>, vector<32x8xf32>, vector<16x8xf32> -> vector<16x8xf32>
    %c0_95 = arith.constant 0 : index
    %c2_96 = arith.constant 2 : index
    %c0_97 = arith.constant 0 : index
    %c0_98 = arith.constant 0 : index
    %126 = vector.load %arg3[%c0_95, %c2_96, %c0_97, %c0_98] : memref<2x4x1x8xf32, #tpu.memory_space<vmem>>, vector<1x1x1x8xf32>
    %127 = vector.shape_cast %126 : vector<1x1x1x8xf32> to vector<1x8xf32>
    %128 = vector.broadcast %127 : vector<1x8xf32> to vector<16x8xf32>
    %129 = arith.addf %125, %128 : vector<16x8xf32>
    %c0_99 = arith.constant 0 : index
    %c2_100 = arith.constant 2 : index
    %c0_101 = arith.constant 0 : index
    %c0_102 = arith.constant 0 : index
    %130 = vector.load %arg4[%c0_99, %c2_100, %c0_101, %c0_102] : memref<2x4x32x8xf32, #tpu.memory_space<vmem>>, vector<1x1x32x8xf32>
    %131 = vector.shape_cast %130 : vector<1x1x32x8xf32> to vector<32x8xf32>
    %cst_103 = arith.constant dense<0.000000e+00> : vector<16x8xf32>
    %132 = tpu.matmul %32, %131, %cst_103 {dimension_numbers = #tpu.dot_dimension_numbers<[1], [0], [0], [1], [0, 0, 1, 1], [], []>} : vector<16x32xf32>, vector<32x8xf32>, vector<16x8xf32> -> vector<16x8xf32>
    %c0_104 = arith.constant 0 : index
    %c2_105 = arith.constant 2 : index
    %c0_106 = arith.constant 0 : index
    %c0_107 = arith.constant 0 : index
    %133 = vector.load %arg5[%c0_104, %c2_105, %c0_106, %c0_107] : memref<2x4x1x8xf32, #tpu.memory_space<vmem>>, vector<1x1x1x8xf32>
    %134 = vector.shape_cast %133 : vector<1x1x1x8xf32> to vector<1x8xf32>
    %135 = vector.broadcast %134 : vector<1x8xf32> to vector<16x8xf32>
    %136 = arith.addf %132, %135 : vector<16x8xf32>
    %c0_108 = arith.constant 0 : index
    %c2_109 = arith.constant 2 : index
    %c0_110 = arith.constant 0 : index
    %c0_111 = arith.constant 0 : index
    %137 = vector.load %arg6[%c0_108, %c2_109, %c0_110, %c0_111] : memref<2x4x32x8xf32, #tpu.memory_space<vmem>>, vector<1x1x32x8xf32>
    %138 = vector.shape_cast %137 : vector<1x1x32x8xf32> to vector<32x8xf32>
    %cst_112 = arith.constant dense<0.000000e+00> : vector<16x8xf32>
    %139 = tpu.matmul %32, %138, %cst_112 {dimension_numbers = #tpu.dot_dimension_numbers<[1], [0], [0], [1], [0, 0, 1, 1], [], []>} : vector<16x32xf32>, vector<32x8xf32>, vector<16x8xf32> -> vector<16x8xf32>
    %c0_113 = arith.constant 0 : index
    %c2_114 = arith.constant 2 : index
    %c0_115 = arith.constant 0 : index
    %c0_116 = arith.constant 0 : index
    %140 = vector.load %arg7[%c0_113, %c2_114, %c0_115, %c0_116] : memref<2x4x1x8xf32, #tpu.memory_space<vmem>>, vector<1x1x1x8xf32>
    %141 = vector.shape_cast %140 : vector<1x1x1x8xf32> to vector<1x8xf32>
    %142 = vector.broadcast %141 : vector<1x8xf32> to vector<16x8xf32>
    %143 = arith.addf %139, %142 : vector<16x8xf32>
    %144 = vector.shape_cast %129 : vector<16x8xf32> to vector<2x8x8xf32>
    %145 = vector.shape_cast %136 : vector<16x8xf32> to vector<2x8x8xf32>
    %146 = vector.shape_cast %143 : vector<16x8xf32> to vector<2x8x8xf32>
    "tpu.trace_start"() <{level = 10 : i32, message = "bqd,bkd->bqk"}> : () -> ()
    %cst_117 = arith.constant dense<0.000000e+00> : vector<2x8x8xf32>
    %147 = tpu.matmul %144, %145, %cst_117 {dimension_numbers = #tpu.dot_dimension_numbers<[2], [2], [1], [1], [0, 0, 0, 1, 1, 1], [0], [0]>} : vector<2x8x8xf32>, vector<2x8x8xf32>, vector<2x8x8xf32> -> vector<2x8x8xf32>
    "tpu.trace_stop"() : () -> ()
    %148 = vector.broadcast %6 : vector<2x1x8xf32> to vector<2x8x8xf32>
    %149 = arith.addf %147, %148 : vector<2x8x8xf32>
    %cst_118 = arith.constant dense<0xFF800000> : vector<2x8xf32>
    %150 = vector.multi_reduction <maximumf>, %149, %cst_118 [2] : vector<2x8x8xf32> to vector<2x8xf32>
    %151 = vector.shape_cast %150 : vector<2x8xf32> to vector<2x8x1xf32>
    %152 = vector.broadcast %151 : vector<2x8x1xf32> to vector<2x8x8xf32>
    %153 = arith.subf %149, %152 : vector<2x8x8xf32>
    %154 = math.exp %153 : vector<2x8x8xf32>
    %cst_119 = arith.constant dense<0.000000e+00> : vector<2x8xf32>
    %155 = vector.multi_reduction <add>, %154, %cst_119 [2] : vector<2x8x8xf32> to vector<2x8xf32>
    %156 = vector.shape_cast %155 : vector<2x8xf32> to vector<2x8x1xf32>
    %157 = tpu.reciprocal %156 {approx = true} : vector<2x8x1xf32> -> vector<2x8x1xf32>
    %158 = vector.broadcast %157 : vector<2x8x1xf32> to vector<2x8x8xf32>
    %159 = arith.mulf %154, %158 : vector<2x8x8xf32>
    "tpu.trace_start"() <{level = 10 : i32, message = "bqk,bkd->bqd"}> : () -> ()
    %cst_120 = arith.constant dense<0.000000e+00> : vector<2x8x8xf32>
    %160 = tpu.matmul %159, %146, %cst_120 {dimension_numbers = #tpu.dot_dimension_numbers<[2], [1], [1], [2], [0, 0, 0, 1, 1, 2], [0], [0]>} : vector<2x8x8xf32>, vector<2x8x8xf32>, vector<2x8x8xf32> -> vector<2x8x8xf32>
    "tpu.trace_stop"() : () -> ()
    %161 = vector.shape_cast %160 : vector<2x8x8xf32> to vector<16x8xf32>
    %c0_121 = arith.constant 0 : index
    %c2_122 = arith.constant 2 : index
    %c0_123 = arith.constant 0 : index
    %c0_124 = arith.constant 0 : index
    %162 = vector.load %arg8[%c0_121, %c2_122, %c0_123, %c0_124] : memref<2x4x8x32xf32, #tpu.memory_space<vmem>>, vector<1x1x8x32xf32>
    %163 = vector.shape_cast %162 : vector<1x1x8x32xf32> to vector<8x32xf32>
    %cst_125 = arith.constant dense<0.000000e+00> : vector<16x32xf32>
    %164 = tpu.matmul %161, %163, %cst_125 {dimension_numbers = #tpu.dot_dimension_numbers<[1], [0], [0], [1], [0, 0, 1, 1], [], []>} : vector<16x8xf32>, vector<8x32xf32>, vector<16x32xf32> -> vector<16x32xf32>
    %165 = arith.addf %122, %164 : vector<16x32xf32>
    %c0_126 = arith.constant 0 : index
    %c3 = arith.constant 3 : index
    %c0_127 = arith.constant 0 : index
    %c0_128 = arith.constant 0 : index
    %166 = vector.load %arg2[%c0_126, %c3, %c0_127, %c0_128] : memref<2x4x32x8xf32, #tpu.memory_space<vmem>>, vector<1x1x32x8xf32>
    %167 = vector.shape_cast %166 : vector<1x1x32x8xf32> to vector<32x8xf32>
    %cst_129 = arith.constant dense<0.000000e+00> : vector<16x8xf32>
    %168 = tpu.matmul %32, %167, %cst_129 {dimension_numbers = #tpu.dot_dimension_numbers<[1], [0], [0], [1], [0, 0, 1, 1], [], []>} : vector<16x32xf32>, vector<32x8xf32>, vector<16x8xf32> -> vector<16x8xf32>
    %c0_130 = arith.constant 0 : index
    %c3_131 = arith.constant 3 : index
    %c0_132 = arith.constant 0 : index
    %c0_133 = arith.constant 0 : index
    %169 = vector.load %arg3[%c0_130, %c3_131, %c0_132, %c0_133] : memref<2x4x1x8xf32, #tpu.memory_space<vmem>>, vector<1x1x1x8xf32>
    %170 = vector.shape_cast %169 : vector<1x1x1x8xf32> to vector<1x8xf32>
    %171 = vector.broadcast %170 : vector<1x8xf32> to vector<16x8xf32>
    %172 = arith.addf %168, %171 : vector<16x8xf32>
    %c0_134 = arith.constant 0 : index
    %c3_135 = arith.constant 3 : index
    %c0_136 = arith.constant 0 : index
    %c0_137 = arith.constant 0 : index
    %173 = vector.load %arg4[%c0_134, %c3_135, %c0_136, %c0_137] : memref<2x4x32x8xf32, #tpu.memory_space<vmem>>, vector<1x1x32x8xf32>
    %174 = vector.shape_cast %173 : vector<1x1x32x8xf32> to vector<32x8xf32>
    %cst_138 = arith.constant dense<0.000000e+00> : vector<16x8xf32>
    %175 = tpu.matmul %32, %174, %cst_138 {dimension_numbers = #tpu.dot_dimension_numbers<[1], [0], [0], [1], [0, 0, 1, 1], [], []>} : vector<16x32xf32>, vector<32x8xf32>, vector<16x8xf32> -> vector<16x8xf32>
    %c0_139 = arith.constant 0 : index
    %c3_140 = arith.constant 3 : index
    %c0_141 = arith.constant 0 : index
    %c0_142 = arith.constant 0 : index
    %176 = vector.load %arg5[%c0_139, %c3_140, %c0_141, %c0_142] : memref<2x4x1x8xf32, #tpu.memory_space<vmem>>, vector<1x1x1x8xf32>
    %177 = vector.shape_cast %176 : vector<1x1x1x8xf32> to vector<1x8xf32>
    %178 = vector.broadcast %177 : vector<1x8xf32> to vector<16x8xf32>
    %179 = arith.addf %175, %178 : vector<16x8xf32>
    %c0_143 = arith.constant 0 : index
    %c3_144 = arith.constant 3 : index
    %c0_145 = arith.constant 0 : index
    %c0_146 = arith.constant 0 : index
    %180 = vector.load %arg6[%c0_143, %c3_144, %c0_145, %c0_146] : memref<2x4x32x8xf32, #tpu.memory_space<vmem>>, vector<1x1x32x8xf32>
    %181 = vector.shape_cast %180 : vector<1x1x32x8xf32> to vector<32x8xf32>
    %cst_147 = arith.constant dense<0.000000e+00> : vector<16x8xf32>
    %182 = tpu.matmul %32, %181, %cst_147 {dimension_numbers = #tpu.dot_dimension_numbers<[1], [0], [0], [1], [0, 0, 1, 1], [], []>} : vector<16x32xf32>, vector<32x8xf32>, vector<16x8xf32> -> vector<16x8xf32>
    %c0_148 = arith.constant 0 : index
    %c3_149 = arith.constant 3 : index
    %c0_150 = arith.constant 0 : index
    %c0_151 = arith.constant 0 : index
    %183 = vector.load %arg7[%c0_148, %c3_149, %c0_150, %c0_151] : memref<2x4x1x8xf32, #tpu.memory_space<vmem>>, vector<1x1x1x8xf32>
    %184 = vector.shape_cast %183 : vector<1x1x1x8xf32> to vector<1x8xf32>
    %185 = vector.broadcast %184 : vector<1x8xf32> to vector<16x8xf32>
    %186 = arith.addf %182, %185 : vector<16x8xf32>
    %187 = vector.shape_cast %172 : vector<16x8xf32> to vector<2x8x8xf32>
    %188 = vector.shape_cast %179 : vector<16x8xf32> to vector<2x8x8xf32>
    %189 = vector.shape_cast %186 : vector<16x8xf32> to vector<2x8x8xf32>
    "tpu.trace_start"() <{level = 10 : i32, message = "bqd,bkd->bqk"}> : () -> ()
    %cst_152 = arith.constant dense<0.000000e+00> : vector<2x8x8xf32>
    %190 = tpu.matmul %187, %188, %cst_152 {dimension_numbers = #tpu.dot_dimension_numbers<[2], [2], [1], [1], [0, 0, 0, 1, 1, 1], [0], [0]>} : vector<2x8x8xf32>, vector<2x8x8xf32>, vector<2x8x8xf32> -> vector<2x8x8xf32>
    "tpu.trace_stop"() : () -> ()
    %191 = vector.broadcast %6 : vector<2x1x8xf32> to vector<2x8x8xf32>
    %192 = arith.addf %190, %191 : vector<2x8x8xf32>
    %cst_153 = arith.constant dense<0xFF800000> : vector<2x8xf32>
    %193 = vector.multi_reduction <maximumf>, %192, %cst_153 [2] : vector<2x8x8xf32> to vector<2x8xf32>
    %194 = vector.shape_cast %193 : vector<2x8xf32> to vector<2x8x1xf32>
    %195 = vector.broadcast %194 : vector<2x8x1xf32> to vector<2x8x8xf32>
    %196 = arith.subf %192, %195 : vector<2x8x8xf32>
    %197 = math.exp %196 : vector<2x8x8xf32>
    %cst_154 = arith.constant dense<0.000000e+00> : vector<2x8xf32>
    %198 = vector.multi_reduction <add>, %197, %cst_154 [2] : vector<2x8x8xf32> to vector<2x8xf32>
    %199 = vector.shape_cast %198 : vector<2x8xf32> to vector<2x8x1xf32>
    %200 = tpu.reciprocal %199 {approx = true} : vector<2x8x1xf32> -> vector<2x8x1xf32>
    %201 = vector.broadcast %200 : vector<2x8x1xf32> to vector<2x8x8xf32>
    %202 = arith.mulf %197, %201 : vector<2x8x8xf32>
    "tpu.trace_start"() <{level = 10 : i32, message = "bqk,bkd->bqd"}> : () -> ()
    %cst_155 = arith.constant dense<0.000000e+00> : vector<2x8x8xf32>
    %203 = tpu.matmul %202, %189, %cst_155 {dimension_numbers = #tpu.dot_dimension_numbers<[2], [1], [1], [2], [0, 0, 0, 1, 1, 2], [0], [0]>} : vector<2x8x8xf32>, vector<2x8x8xf32>, vector<2x8x8xf32> -> vector<2x8x8xf32>
    "tpu.trace_stop"() : () -> ()
    %204 = vector.shape_cast %203 : vector<2x8x8xf32> to vector<16x8xf32>
    %c0_156 = arith.constant 0 : index
    %c3_157 = arith.constant 3 : index
    %c0_158 = arith.constant 0 : index
    %c0_159 = arith.constant 0 : index
    %205 = vector.load %arg8[%c0_156, %c3_157, %c0_158, %c0_159] : memref<2x4x8x32xf32, #tpu.memory_space<vmem>>, vector<1x1x8x32xf32>
    %206 = vector.shape_cast %205 : vector<1x1x8x32xf32> to vector<8x32xf32>
    %cst_160 = arith.constant dense<0.000000e+00> : vector<16x32xf32>
    %207 = tpu.matmul %204, %206, %cst_160 {dimension_numbers = #tpu.dot_dimension_numbers<[1], [0], [0], [1], [0, 0, 1, 1], [], []>} : vector<16x8xf32>, vector<8x32xf32>, vector<16x32xf32> -> vector<16x32xf32>
    %208 = arith.addf %165, %207 : vector<16x32xf32>
    %c0_161 = arith.constant 0 : index
    %c0_162 = arith.constant 0 : index
    %c0_163 = arith.constant 0 : index
    %209 = vector.load %arg16[%c0_161, %c0_162, %c0_163] : memref<2x1x32xf32, #tpu.memory_space<vmem>>, vector<1x1x32xf32>
    %210 = vector.shape_cast %209 : vector<1x1x32xf32> to vector<1x32xf32>
    %c0_164 = arith.constant 0 : index
    %c0_165 = arith.constant 0 : index
    %c0_166 = arith.constant 0 : index
    %211 = vector.load %arg17[%c0_164, %c0_165, %c0_166] : memref<2x1x32xf32, #tpu.memory_space<vmem>>, vector<1x1x32xf32>
    %212 = vector.shape_cast %211 : vector<1x1x32xf32> to vector<1x32xf32>
    %cst_167 = arith.constant dense<0.000000e+00> : vector<16xf32>
    %213 = vector.multi_reduction <add>, %208, %cst_167 [1] : vector<16x32xf32> to vector<16xf32>
    %214 = vector.shape_cast %213 : vector<16xf32> to vector<16x1xf32>
    %cst_168 = arith.constant 3.200000e+01 : f32
    %215 = vector.broadcast %cst_168 : f32 to vector<16x1xf32>
    %216 = arith.divf %214, %215 : vector<16x1xf32>
    %217 = vector.broadcast %216 : vector<16x1xf32> to vector<16x32xf32>
    %218 = arith.subf %208, %217 : vector<16x32xf32>
    %219 = arith.mulf %218, %218 : vector<16x32xf32>
    %cst_169 = arith.constant dense<0.000000e+00> : vector<16xf32>
    %220 = vector.multi_reduction <add>, %219, %cst_169 [1] : vector<16x32xf32> to vector<16xf32>
    %221 = vector.shape_cast %220 : vector<16xf32> to vector<16x1xf32>
    %cst_170 = arith.constant 3.100000e+01 : f32
    %222 = vector.broadcast %cst_170 : f32 to vector<16x1xf32>
    %223 = arith.divf %221, %222 : vector<16x1xf32>
    %cst_171 = arith.constant 9.99999996E-13 : f32
    %224 = vector.broadcast %cst_171 : f32 to vector<16x1xf32>
    %225 = arith.addf %223, %224 : vector<16x1xf32>
    %226 = math.rsqrt %225 : vector<16x1xf32>
    %227 = vector.broadcast %216 : vector<16x1xf32> to vector<16x32xf32>
    %228 = arith.subf %208, %227 : vector<16x32xf32>
    %229 = vector.broadcast %210 : vector<1x32xf32> to vector<16x32xf32>
    %230 = arith.mulf %229, %228 : vector<16x32xf32>
    %231 = vector.broadcast %226 : vector<16x1xf32> to vector<16x32xf32>
    %232 = arith.mulf %230, %231 : vector<16x32xf32>
    %233 = vector.broadcast %212 : vector<1x32xf32> to vector<16x32xf32>
    %234 = arith.addf %232, %233 : vector<16x32xf32>
    %c0_172 = arith.constant 0 : index
    %c0_173 = arith.constant 0 : index
    %c0_174 = arith.constant 0 : index
    %235 = vector.load %arg12[%c0_172, %c0_173, %c0_174] : memref<2x32x64xf32, #tpu.memory_space<vmem>>, vector<1x32x64xf32>
    %236 = vector.shape_cast %235 : vector<1x32x64xf32> to vector<32x64xf32>
    %cst_175 = arith.constant dense<0.000000e+00> : vector<16x64xf32>
    %237 = tpu.matmul %234, %236, %cst_175 {dimension_numbers = #tpu.dot_dimension_numbers<[1], [0], [0], [1], [0, 0, 1, 1], [], []>} : vector<16x32xf32>, vector<32x64xf32>, vector<16x64xf32> -> vector<16x64xf32>
    %c0_176 = arith.constant 0 : index
    %c0_177 = arith.constant 0 : index
    %c0_178 = arith.constant 0 : index
    %238 = vector.load %arg13[%c0_176, %c0_177, %c0_178] : memref<2x1x64xf32, #tpu.memory_space<vmem>>, vector<1x1x64xf32>
    %239 = vector.shape_cast %238 : vector<1x1x64xf32> to vector<1x64xf32>
    %240 = vector.broadcast %239 : vector<1x64xf32> to vector<16x64xf32>
    %241 = arith.addf %237, %240 : vector<16x64xf32>
    %cst_179 = arith.constant 0.000000e+00 : f32
    %242 = vector.broadcast %cst_179 : f32 to vector<16x64xf32>
    %243 = arith.maximumf %241, %242 : vector<16x64xf32>
    %c0_180 = arith.constant 0 : index
    %c0_181 = arith.constant 0 : index
    %c0_182 = arith.constant 0 : index
    %244 = vector.load %arg14[%c0_180, %c0_181, %c0_182] : memref<2x64x32xf32, #tpu.memory_space<vmem>>, vector<1x64x32xf32>
    %245 = vector.shape_cast %244 : vector<1x64x32xf32> to vector<64x32xf32>
    %cst_183 = arith.constant dense<0.000000e+00> : vector<16x32xf32>
    %246 = tpu.matmul %243, %245, %cst_183 {dimension_numbers = #tpu.dot_dimension_numbers<[1], [0], [0], [1], [0, 0, 1, 1], [], []>} : vector<16x64xf32>, vector<64x32xf32>, vector<16x32xf32> -> vector<16x32xf32>
    %247 = arith.addf %208, %246 : vector<16x32xf32>
    %c0_184 = arith.constant 0 : index
    %c0_185 = arith.constant 0 : index
    %c0_186 = arith.constant 0 : index
    %248 = vector.load %arg15[%c0_184, %c0_185, %c0_186] : memref<2x1x32xf32, #tpu.memory_space<vmem>>, vector<1x1x32xf32>
    %249 = vector.shape_cast %248 : vector<1x1x32xf32> to vector<1x32xf32>
    %250 = vector.broadcast %249 : vector<1x32xf32> to vector<16x32xf32>
    %251 = arith.addf %247, %250 : vector<16x32xf32>
    %c1_187 = arith.constant 1 : index
    %c0_188 = arith.constant 0 : index
    %c0_189 = arith.constant 0 : index
    %252 = vector.load %arg10[%c1_187, %c0_188, %c0_189] : memref<2x1x32xf32, #tpu.memory_space<vmem>>, vector<1x1x32xf32>
    %253 = vector.shape_cast %252 : vector<1x1x32xf32> to vector<1x32xf32>
    %c1_190 = arith.constant 1 : index
    %c0_191 = arith.constant 0 : index
    %c0_192 = arith.constant 0 : index
    %254 = vector.load %arg11[%c1_190, %c0_191, %c0_192] : memref<2x1x32xf32, #tpu.memory_space<vmem>>, vector<1x1x32xf32>
    %255 = vector.shape_cast %254 : vector<1x1x32xf32> to vector<1x32xf32>
    %cst_193 = arith.constant dense<0.000000e+00> : vector<16xf32>
    %256 = vector.multi_reduction <add>, %251, %cst_193 [1] : vector<16x32xf32> to vector<16xf32>
    %257 = vector.shape_cast %256 : vector<16xf32> to vector<16x1xf32>
    %cst_194 = arith.constant 3.200000e+01 : f32
    %258 = vector.broadcast %cst_194 : f32 to vector<16x1xf32>
    %259 = arith.divf %257, %258 : vector<16x1xf32>
    %260 = vector.broadcast %259 : vector<16x1xf32> to vector<16x32xf32>
    %261 = arith.subf %251, %260 : vector<16x32xf32>
    %262 = arith.mulf %261, %261 : vector<16x32xf32>
    %cst_195 = arith.constant dense<0.000000e+00> : vector<16xf32>
    %263 = vector.multi_reduction <add>, %262, %cst_195 [1] : vector<16x32xf32> to vector<16xf32>
    %264 = vector.shape_cast %263 : vector<16xf32> to vector<16x1xf32>
    %cst_196 = arith.constant 3.100000e+01 : f32
    %265 = vector.broadcast %cst_196 : f32 to vector<16x1xf32>
    %266 = arith.divf %264, %265 : vector<16x1xf32>
    %cst_197 = arith.constant 9.99999996E-13 : f32
    %267 = vector.broadcast %cst_197 : f32 to vector<16x1xf32>
    %268 = arith.addf %266, %267 : vector<16x1xf32>
    %269 = math.rsqrt %268 : vector<16x1xf32>
    %270 = vector.broadcast %259 : vector<16x1xf32> to vector<16x32xf32>
    %271 = arith.subf %251, %270 : vector<16x32xf32>
    %272 = vector.broadcast %253 : vector<1x32xf32> to vector<16x32xf32>
    %273 = arith.mulf %272, %271 : vector<16x32xf32>
    %274 = vector.broadcast %269 : vector<16x1xf32> to vector<16x32xf32>
    %275 = arith.mulf %273, %274 : vector<16x32xf32>
    %276 = vector.broadcast %255 : vector<1x32xf32> to vector<16x32xf32>
    %277 = arith.addf %275, %276 : vector<16x32xf32>
    %c1_198 = arith.constant 1 : index
    %c0_199 = arith.constant 0 : index
    %c0_200 = arith.constant 0 : index
    %278 = vector.load %arg9[%c1_198, %c0_199, %c0_200] : memref<2x1x32xf32, #tpu.memory_space<vmem>>, vector<1x1x32xf32>
    %279 = vector.shape_cast %278 : vector<1x1x32xf32> to vector<1x32xf32>
    %280 = vector.broadcast %279 : vector<1x32xf32> to vector<16x32xf32>
    %281 = arith.addf %251, %280 : vector<16x32xf32>
    %c1_201 = arith.constant 1 : index
    %c0_202 = arith.constant 0 : index
    %c0_203 = arith.constant 0 : index
    %c0_204 = arith.constant 0 : index
    %282 = vector.load %arg2[%c1_201, %c0_202, %c0_203, %c0_204] : memref<2x4x32x8xf32, #tpu.memory_space<vmem>>, vector<1x1x32x8xf32>
    %283 = vector.shape_cast %282 : vector<1x1x32x8xf32> to vector<32x8xf32>
    %cst_205 = arith.constant dense<0.000000e+00> : vector<16x8xf32>
    %284 = tpu.matmul %277, %283, %cst_205 {dimension_numbers = #tpu.dot_dimension_numbers<[1], [0], [0], [1], [0, 0, 1, 1], [], []>} : vector<16x32xf32>, vector<32x8xf32>, vector<16x8xf32> -> vector<16x8xf32>
    %c1_206 = arith.constant 1 : index
    %c0_207 = arith.constant 0 : index
    %c0_208 = arith.constant 0 : index
    %c0_209 = arith.constant 0 : index
    %285 = vector.load %arg3[%c1_206, %c0_207, %c0_208, %c0_209] : memref<2x4x1x8xf32, #tpu.memory_space<vmem>>, vector<1x1x1x8xf32>
    %286 = vector.shape_cast %285 : vector<1x1x1x8xf32> to vector<1x8xf32>
    %287 = vector.broadcast %286 : vector<1x8xf32> to vector<16x8xf32>
    %288 = arith.addf %284, %287 : vector<16x8xf32>
    %c1_210 = arith.constant 1 : index
    %c0_211 = arith.constant 0 : index
    %c0_212 = arith.constant 0 : index
    %c0_213 = arith.constant 0 : index
    %289 = vector.load %arg4[%c1_210, %c0_211, %c0_212, %c0_213] : memref<2x4x32x8xf32, #tpu.memory_space<vmem>>, vector<1x1x32x8xf32>
    %290 = vector.shape_cast %289 : vector<1x1x32x8xf32> to vector<32x8xf32>
    %cst_214 = arith.constant dense<0.000000e+00> : vector<16x8xf32>
    %291 = tpu.matmul %277, %290, %cst_214 {dimension_numbers = #tpu.dot_dimension_numbers<[1], [0], [0], [1], [0, 0, 1, 1], [], []>} : vector<16x32xf32>, vector<32x8xf32>, vector<16x8xf32> -> vector<16x8xf32>
    %c1_215 = arith.constant 1 : index
    %c0_216 = arith.constant 0 : index
    %c0_217 = arith.constant 0 : index
    %c0_218 = arith.constant 0 : index
    %292 = vector.load %arg5[%c1_215, %c0_216, %c0_217, %c0_218] : memref<2x4x1x8xf32, #tpu.memory_space<vmem>>, vector<1x1x1x8xf32>
    %293 = vector.shape_cast %292 : vector<1x1x1x8xf32> to vector<1x8xf32>
    %294 = vector.broadcast %293 : vector<1x8xf32> to vector<16x8xf32>
    %295 = arith.addf %291, %294 : vector<16x8xf32>
    %c1_219 = arith.constant 1 : index
    %c0_220 = arith.constant 0 : index
    %c0_221 = arith.constant 0 : index
    %c0_222 = arith.constant 0 : index
    %296 = vector.load %arg6[%c1_219, %c0_220, %c0_221, %c0_222] : memref<2x4x32x8xf32, #tpu.memory_space<vmem>>, vector<1x1x32x8xf32>
    %297 = vector.shape_cast %296 : vector<1x1x32x8xf32> to vector<32x8xf32>
    %cst_223 = arith.constant dense<0.000000e+00> : vector<16x8xf32>
    %298 = tpu.matmul %277, %297, %cst_223 {dimension_numbers = #tpu.dot_dimension_numbers<[1], [0], [0], [1], [0, 0, 1, 1], [], []>} : vector<16x32xf32>, vector<32x8xf32>, vector<16x8xf32> -> vector<16x8xf32>
    %c1_224 = arith.constant 1 : index
    %c0_225 = arith.constant 0 : index
    %c0_226 = arith.constant 0 : index
    %c0_227 = arith.constant 0 : index
    %299 = vector.load %arg7[%c1_224, %c0_225, %c0_226, %c0_227] : memref<2x4x1x8xf32, #tpu.memory_space<vmem>>, vector<1x1x1x8xf32>
    %300 = vector.shape_cast %299 : vector<1x1x1x8xf32> to vector<1x8xf32>
    %301 = vector.broadcast %300 : vector<1x8xf32> to vector<16x8xf32>
    %302 = arith.addf %298, %301 : vector<16x8xf32>
    %303 = vector.shape_cast %288 : vector<16x8xf32> to vector<2x8x8xf32>
    %304 = vector.shape_cast %295 : vector<16x8xf32> to vector<2x8x8xf32>
    %305 = vector.shape_cast %302 : vector<16x8xf32> to vector<2x8x8xf32>
    "tpu.trace_start"() <{level = 10 : i32, message = "bqd,bkd->bqk"}> : () -> ()
    %cst_228 = arith.constant dense<0.000000e+00> : vector<2x8x8xf32>
    %306 = tpu.matmul %303, %304, %cst_228 {dimension_numbers = #tpu.dot_dimension_numbers<[2], [2], [1], [1], [0, 0, 0, 1, 1, 1], [0], [0]>} : vector<2x8x8xf32>, vector<2x8x8xf32>, vector<2x8x8xf32> -> vector<2x8x8xf32>
    "tpu.trace_stop"() : () -> ()
    %307 = vector.broadcast %6 : vector<2x1x8xf32> to vector<2x8x8xf32>
    %308 = arith.addf %306, %307 : vector<2x8x8xf32>
    %cst_229 = arith.constant dense<0xFF800000> : vector<2x8xf32>
    %309 = vector.multi_reduction <maximumf>, %308, %cst_229 [2] : vector<2x8x8xf32> to vector<2x8xf32>
    %310 = vector.shape_cast %309 : vector<2x8xf32> to vector<2x8x1xf32>
    %311 = vector.broadcast %310 : vector<2x8x1xf32> to vector<2x8x8xf32>
    %312 = arith.subf %308, %311 : vector<2x8x8xf32>
    %313 = math.exp %312 : vector<2x8x8xf32>
    %cst_230 = arith.constant dense<0.000000e+00> : vector<2x8xf32>
    %314 = vector.multi_reduction <add>, %313, %cst_230 [2] : vector<2x8x8xf32> to vector<2x8xf32>
    %315 = vector.shape_cast %314 : vector<2x8xf32> to vector<2x8x1xf32>
    %316 = tpu.reciprocal %315 {approx = true} : vector<2x8x1xf32> -> vector<2x8x1xf32>
    %317 = vector.broadcast %316 : vector<2x8x1xf32> to vector<2x8x8xf32>
    %318 = arith.mulf %313, %317 : vector<2x8x8xf32>
    "tpu.trace_start"() <{level = 10 : i32, message = "bqk,bkd->bqd"}> : () -> ()
    %cst_231 = arith.constant dense<0.000000e+00> : vector<2x8x8xf32>
    %319 = tpu.matmul %318, %305, %cst_231 {dimension_numbers = #tpu.dot_dimension_numbers<[2], [1], [1], [2], [0, 0, 0, 1, 1, 2], [0], [0]>} : vector<2x8x8xf32>, vector<2x8x8xf32>, vector<2x8x8xf32> -> vector<2x8x8xf32>
    "tpu.trace_stop"() : () -> ()
    %320 = vector.shape_cast %319 : vector<2x8x8xf32> to vector<16x8xf32>
    %c1_232 = arith.constant 1 : index
    %c0_233 = arith.constant 0 : index
    %c0_234 = arith.constant 0 : index
    %c0_235 = arith.constant 0 : index
    %321 = vector.load %arg8[%c1_232, %c0_233, %c0_234, %c0_235] : memref<2x4x8x32xf32, #tpu.memory_space<vmem>>, vector<1x1x8x32xf32>
    %322 = vector.shape_cast %321 : vector<1x1x8x32xf32> to vector<8x32xf32>
    %cst_236 = arith.constant dense<0.000000e+00> : vector<16x32xf32>
    %323 = tpu.matmul %320, %322, %cst_236 {dimension_numbers = #tpu.dot_dimension_numbers<[1], [0], [0], [1], [0, 0, 1, 1], [], []>} : vector<16x8xf32>, vector<8x32xf32>, vector<16x32xf32> -> vector<16x32xf32>
    %324 = arith.addf %281, %323 : vector<16x32xf32>
    %c1_237 = arith.constant 1 : index
    %c1_238 = arith.constant 1 : index
    %c0_239 = arith.constant 0 : index
    %c0_240 = arith.constant 0 : index
    %325 = vector.load %arg2[%c1_237, %c1_238, %c0_239, %c0_240] : memref<2x4x32x8xf32, #tpu.memory_space<vmem>>, vector<1x1x32x8xf32>
    %326 = vector.shape_cast %325 : vector<1x1x32x8xf32> to vector<32x8xf32>
    %cst_241 = arith.constant dense<0.000000e+00> : vector<16x8xf32>
    %327 = tpu.matmul %277, %326, %cst_241 {dimension_numbers = #tpu.dot_dimension_numbers<[1], [0], [0], [1], [0, 0, 1, 1], [], []>} : vector<16x32xf32>, vector<32x8xf32>, vector<16x8xf32> -> vector<16x8xf32>
    %c1_242 = arith.constant 1 : index
    %c1_243 = arith.constant 1 : index
    %c0_244 = arith.constant 0 : index
    %c0_245 = arith.constant 0 : index
    %328 = vector.load %arg3[%c1_242, %c1_243, %c0_244, %c0_245] : memref<2x4x1x8xf32, #tpu.memory_space<vmem>>, vector<1x1x1x8xf32>
    %329 = vector.shape_cast %328 : vector<1x1x1x8xf32> to vector<1x8xf32>
    %330 = vector.broadcast %329 : vector<1x8xf32> to vector<16x8xf32>
    %331 = arith.addf %327, %330 : vector<16x8xf32>
    %c1_246 = arith.constant 1 : index
    %c1_247 = arith.constant 1 : index
    %c0_248 = arith.constant 0 : index
    %c0_249 = arith.constant 0 : index
    %332 = vector.load %arg4[%c1_246, %c1_247, %c0_248, %c0_249] : memref<2x4x32x8xf32, #tpu.memory_space<vmem>>, vector<1x1x32x8xf32>
    %333 = vector.shape_cast %332 : vector<1x1x32x8xf32> to vector<32x8xf32>
    %cst_250 = arith.constant dense<0.000000e+00> : vector<16x8xf32>
    %334 = tpu.matmul %277, %333, %cst_250 {dimension_numbers = #tpu.dot_dimension_numbers<[1], [0], [0], [1], [0, 0, 1, 1], [], []>} : vector<16x32xf32>, vector<32x8xf32>, vector<16x8xf32> -> vector<16x8xf32>
    %c1_251 = arith.constant 1 : index
    %c1_252 = arith.constant 1 : index
    %c0_253 = arith.constant 0 : index
    %c0_254 = arith.constant 0 : index
    %335 = vector.load %arg5[%c1_251, %c1_252, %c0_253, %c0_254] : memref<2x4x1x8xf32, #tpu.memory_space<vmem>>, vector<1x1x1x8xf32>
    %336 = vector.shape_cast %335 : vector<1x1x1x8xf32> to vector<1x8xf32>
    %337 = vector.broadcast %336 : vector<1x8xf32> to vector<16x8xf32>
    %338 = arith.addf %334, %337 : vector<16x8xf32>
    %c1_255 = arith.constant 1 : index
    %c1_256 = arith.constant 1 : index
    %c0_257 = arith.constant 0 : index
    %c0_258 = arith.constant 0 : index
    %339 = vector.load %arg6[%c1_255, %c1_256, %c0_257, %c0_258] : memref<2x4x32x8xf32, #tpu.memory_space<vmem>>, vector<1x1x32x8xf32>
    %340 = vector.shape_cast %339 : vector<1x1x32x8xf32> to vector<32x8xf32>
    %cst_259 = arith.constant dense<0.000000e+00> : vector<16x8xf32>
    %341 = tpu.matmul %277, %340, %cst_259 {dimension_numbers = #tpu.dot_dimension_numbers<[1], [0], [0], [1], [0, 0, 1, 1], [], []>} : vector<16x32xf32>, vector<32x8xf32>, vector<16x8xf32> -> vector<16x8xf32>
    %c1_260 = arith.constant 1 : index
    %c1_261 = arith.constant 1 : index
    %c0_262 = arith.constant 0 : index
    %c0_263 = arith.constant 0 : index
    %342 = vector.load %arg7[%c1_260, %c1_261, %c0_262, %c0_263] : memref<2x4x1x8xf32, #tpu.memory_space<vmem>>, vector<1x1x1x8xf32>
    %343 = vector.shape_cast %342 : vector<1x1x1x8xf32> to vector<1x8xf32>
    %344 = vector.broadcast %343 : vector<1x8xf32> to vector<16x8xf32>
    %345 = arith.addf %341, %344 : vector<16x8xf32>
    %346 = vector.shape_cast %331 : vector<16x8xf32> to vector<2x8x8xf32>
    %347 = vector.shape_cast %338 : vector<16x8xf32> to vector<2x8x8xf32>
    %348 = vector.shape_cast %345 : vector<16x8xf32> to vector<2x8x8xf32>
    "tpu.trace_start"() <{level = 10 : i32, message = "bqd,bkd->bqk"}> : () -> ()
    %cst_264 = arith.constant dense<0.000000e+00> : vector<2x8x8xf32>
    %349 = tpu.matmul %346, %347, %cst_264 {dimension_numbers = #tpu.dot_dimension_numbers<[2], [2], [1], [1], [0, 0, 0, 1, 1, 1], [0], [0]>} : vector<2x8x8xf32>, vector<2x8x8xf32>, vector<2x8x8xf32> -> vector<2x8x8xf32>
    "tpu.trace_stop"() : () -> ()
    %350 = vector.broadcast %6 : vector<2x1x8xf32> to vector<2x8x8xf32>
    %351 = arith.addf %349, %350 : vector<2x8x8xf32>
    %cst_265 = arith.constant dense<0xFF800000> : vector<2x8xf32>
    %352 = vector.multi_reduction <maximumf>, %351, %cst_265 [2] : vector<2x8x8xf32> to vector<2x8xf32>
    %353 = vector.shape_cast %352 : vector<2x8xf32> to vector<2x8x1xf32>
    %354 = vector.broadcast %353 : vector<2x8x1xf32> to vector<2x8x8xf32>
    %355 = arith.subf %351, %354 : vector<2x8x8xf32>
    %356 = math.exp %355 : vector<2x8x8xf32>
    %cst_266 = arith.constant dense<0.000000e+00> : vector<2x8xf32>
    %357 = vector.multi_reduction <add>, %356, %cst_266 [2] : vector<2x8x8xf32> to vector<2x8xf32>
    %358 = vector.shape_cast %357 : vector<2x8xf32> to vector<2x8x1xf32>
    %359 = tpu.reciprocal %358 {approx = true} : vector<2x8x1xf32> -> vector<2x8x1xf32>
    %360 = vector.broadcast %359 : vector<2x8x1xf32> to vector<2x8x8xf32>
    %361 = arith.mulf %356, %360 : vector<2x8x8xf32>
    "tpu.trace_start"() <{level = 10 : i32, message = "bqk,bkd->bqd"}> : () -> ()
    %cst_267 = arith.constant dense<0.000000e+00> : vector<2x8x8xf32>
    %362 = tpu.matmul %361, %348, %cst_267 {dimension_numbers = #tpu.dot_dimension_numbers<[2], [1], [1], [2], [0, 0, 0, 1, 1, 2], [0], [0]>} : vector<2x8x8xf32>, vector<2x8x8xf32>, vector<2x8x8xf32> -> vector<2x8x8xf32>
    "tpu.trace_stop"() : () -> ()
    %363 = vector.shape_cast %362 : vector<2x8x8xf32> to vector<16x8xf32>
    %c1_268 = arith.constant 1 : index
    %c1_269 = arith.constant 1 : index
    %c0_270 = arith.constant 0 : index
    %c0_271 = arith.constant 0 : index
    %364 = vector.load %arg8[%c1_268, %c1_269, %c0_270, %c0_271] : memref<2x4x8x32xf32, #tpu.memory_space<vmem>>, vector<1x1x8x32xf32>
    %365 = vector.shape_cast %364 : vector<1x1x8x32xf32> to vector<8x32xf32>
    %cst_272 = arith.constant dense<0.000000e+00> : vector<16x32xf32>
    %366 = tpu.matmul %363, %365, %cst_272 {dimension_numbers = #tpu.dot_dimension_numbers<[1], [0], [0], [1], [0, 0, 1, 1], [], []>} : vector<16x8xf32>, vector<8x32xf32>, vector<16x32xf32> -> vector<16x32xf32>
    %367 = arith.addf %324, %366 : vector<16x32xf32>
    %c1_273 = arith.constant 1 : index
    %c2_274 = arith.constant 2 : index
    %c0_275 = arith.constant 0 : index
    %c0_276 = arith.constant 0 : index
    %368 = vector.load %arg2[%c1_273, %c2_274, %c0_275, %c0_276] : memref<2x4x32x8xf32, #tpu.memory_space<vmem>>, vector<1x1x32x8xf32>
    %369 = vector.shape_cast %368 : vector<1x1x32x8xf32> to vector<32x8xf32>
    %cst_277 = arith.constant dense<0.000000e+00> : vector<16x8xf32>
    %370 = tpu.matmul %277, %369, %cst_277 {dimension_numbers = #tpu.dot_dimension_numbers<[1], [0], [0], [1], [0, 0, 1, 1], [], []>} : vector<16x32xf32>, vector<32x8xf32>, vector<16x8xf32> -> vector<16x8xf32>
    %c1_278 = arith.constant 1 : index
    %c2_279 = arith.constant 2 : index
    %c0_280 = arith.constant 0 : index
    %c0_281 = arith.constant 0 : index
    %371 = vector.load %arg3[%c1_278, %c2_279, %c0_280, %c0_281] : memref<2x4x1x8xf32, #tpu.memory_space<vmem>>, vector<1x1x1x8xf32>
    %372 = vector.shape_cast %371 : vector<1x1x1x8xf32> to vector<1x8xf32>
    %373 = vector.broadcast %372 : vector<1x8xf32> to vector<16x8xf32>
    %374 = arith.addf %370, %373 : vector<16x8xf32>
    %c1_282 = arith.constant 1 : index
    %c2_283 = arith.constant 2 : index
    %c0_284 = arith.constant 0 : index
    %c0_285 = arith.constant 0 : index
    %375 = vector.load %arg4[%c1_282, %c2_283, %c0_284, %c0_285] : memref<2x4x32x8xf32, #tpu.memory_space<vmem>>, vector<1x1x32x8xf32>
    %376 = vector.shape_cast %375 : vector<1x1x32x8xf32> to vector<32x8xf32>
    %cst_286 = arith.constant dense<0.000000e+00> : vector<16x8xf32>
    %377 = tpu.matmul %277, %376, %cst_286 {dimension_numbers = #tpu.dot_dimension_numbers<[1], [0], [0], [1], [0, 0, 1, 1], [], []>} : vector<16x32xf32>, vector<32x8xf32>, vector<16x8xf32> -> vector<16x8xf32>
    %c1_287 = arith.constant 1 : index
    %c2_288 = arith.constant 2 : index
    %c0_289 = arith.constant 0 : index
    %c0_290 = arith.constant 0 : index
    %378 = vector.load %arg5[%c1_287, %c2_288, %c0_289, %c0_290] : memref<2x4x1x8xf32, #tpu.memory_space<vmem>>, vector<1x1x1x8xf32>
    %379 = vector.shape_cast %378 : vector<1x1x1x8xf32> to vector<1x8xf32>
    %380 = vector.broadcast %379 : vector<1x8xf32> to vector<16x8xf32>
    %381 = arith.addf %377, %380 : vector<16x8xf32>
    %c1_291 = arith.constant 1 : index
    %c2_292 = arith.constant 2 : index
    %c0_293 = arith.constant 0 : index
    %c0_294 = arith.constant 0 : index
    %382 = vector.load %arg6[%c1_291, %c2_292, %c0_293, %c0_294] : memref<2x4x32x8xf32, #tpu.memory_space<vmem>>, vector<1x1x32x8xf32>
    %383 = vector.shape_cast %382 : vector<1x1x32x8xf32> to vector<32x8xf32>
    %cst_295 = arith.constant dense<0.000000e+00> : vector<16x8xf32>
    %384 = tpu.matmul %277, %383, %cst_295 {dimension_numbers = #tpu.dot_dimension_numbers<[1], [0], [0], [1], [0, 0, 1, 1], [], []>} : vector<16x32xf32>, vector<32x8xf32>, vector<16x8xf32> -> vector<16x8xf32>
    %c1_296 = arith.constant 1 : index
    %c2_297 = arith.constant 2 : index
    %c0_298 = arith.constant 0 : index
    %c0_299 = arith.constant 0 : index
    %385 = vector.load %arg7[%c1_296, %c2_297, %c0_298, %c0_299] : memref<2x4x1x8xf32, #tpu.memory_space<vmem>>, vector<1x1x1x8xf32>
    %386 = vector.shape_cast %385 : vector<1x1x1x8xf32> to vector<1x8xf32>
    %387 = vector.broadcast %386 : vector<1x8xf32> to vector<16x8xf32>
    %388 = arith.addf %384, %387 : vector<16x8xf32>
    %389 = vector.shape_cast %374 : vector<16x8xf32> to vector<2x8x8xf32>
    %390 = vector.shape_cast %381 : vector<16x8xf32> to vector<2x8x8xf32>
    %391 = vector.shape_cast %388 : vector<16x8xf32> to vector<2x8x8xf32>
    "tpu.trace_start"() <{level = 10 : i32, message = "bqd,bkd->bqk"}> : () -> ()
    %cst_300 = arith.constant dense<0.000000e+00> : vector<2x8x8xf32>
    %392 = tpu.matmul %389, %390, %cst_300 {dimension_numbers = #tpu.dot_dimension_numbers<[2], [2], [1], [1], [0, 0, 0, 1, 1, 1], [0], [0]>} : vector<2x8x8xf32>, vector<2x8x8xf32>, vector<2x8x8xf32> -> vector<2x8x8xf32>
    "tpu.trace_stop"() : () -> ()
    %393 = vector.broadcast %6 : vector<2x1x8xf32> to vector<2x8x8xf32>
    %394 = arith.addf %392, %393 : vector<2x8x8xf32>
    %cst_301 = arith.constant dense<0xFF800000> : vector<2x8xf32>
    %395 = vector.multi_reduction <maximumf>, %394, %cst_301 [2] : vector<2x8x8xf32> to vector<2x8xf32>
    %396 = vector.shape_cast %395 : vector<2x8xf32> to vector<2x8x1xf32>
    %397 = vector.broadcast %396 : vector<2x8x1xf32> to vector<2x8x8xf32>
    %398 = arith.subf %394, %397 : vector<2x8x8xf32>
    %399 = math.exp %398 : vector<2x8x8xf32>
    %cst_302 = arith.constant dense<0.000000e+00> : vector<2x8xf32>
    %400 = vector.multi_reduction <add>, %399, %cst_302 [2] : vector<2x8x8xf32> to vector<2x8xf32>
    %401 = vector.shape_cast %400 : vector<2x8xf32> to vector<2x8x1xf32>
    %402 = tpu.reciprocal %401 {approx = true} : vector<2x8x1xf32> -> vector<2x8x1xf32>
    %403 = vector.broadcast %402 : vector<2x8x1xf32> to vector<2x8x8xf32>
    %404 = arith.mulf %399, %403 : vector<2x8x8xf32>
    "tpu.trace_start"() <{level = 10 : i32, message = "bqk,bkd->bqd"}> : () -> ()
    %cst_303 = arith.constant dense<0.000000e+00> : vector<2x8x8xf32>
    %405 = tpu.matmul %404, %391, %cst_303 {dimension_numbers = #tpu.dot_dimension_numbers<[2], [1], [1], [2], [0, 0, 0, 1, 1, 2], [0], [0]>} : vector<2x8x8xf32>, vector<2x8x8xf32>, vector<2x8x8xf32> -> vector<2x8x8xf32>
    "tpu.trace_stop"() : () -> ()
    %406 = vector.shape_cast %405 : vector<2x8x8xf32> to vector<16x8xf32>
    %c1_304 = arith.constant 1 : index
    %c2_305 = arith.constant 2 : index
    %c0_306 = arith.constant 0 : index
    %c0_307 = arith.constant 0 : index
    %407 = vector.load %arg8[%c1_304, %c2_305, %c0_306, %c0_307] : memref<2x4x8x32xf32, #tpu.memory_space<vmem>>, vector<1x1x8x32xf32>
    %408 = vector.shape_cast %407 : vector<1x1x8x32xf32> to vector<8x32xf32>
    %cst_308 = arith.constant dense<0.000000e+00> : vector<16x32xf32>
    %409 = tpu.matmul %406, %408, %cst_308 {dimension_numbers = #tpu.dot_dimension_numbers<[1], [0], [0], [1], [0, 0, 1, 1], [], []>} : vector<16x8xf32>, vector<8x32xf32>, vector<16x32xf32> -> vector<16x32xf32>
    %410 = arith.addf %367, %409 : vector<16x32xf32>
    %c1_309 = arith.constant 1 : index
    %c3_310 = arith.constant 3 : index
    %c0_311 = arith.constant 0 : index
    %c0_312 = arith.constant 0 : index
    %411 = vector.load %arg2[%c1_309, %c3_310, %c0_311, %c0_312] : memref<2x4x32x8xf32, #tpu.memory_space<vmem>>, vector<1x1x32x8xf32>
    %412 = vector.shape_cast %411 : vector<1x1x32x8xf32> to vector<32x8xf32>
    %cst_313 = arith.constant dense<0.000000e+00> : vector<16x8xf32>
    %413 = tpu.matmul %277, %412, %cst_313 {dimension_numbers = #tpu.dot_dimension_numbers<[1], [0], [0], [1], [0, 0, 1, 1], [], []>} : vector<16x32xf32>, vector<32x8xf32>, vector<16x8xf32> -> vector<16x8xf32>
    %c1_314 = arith.constant 1 : index
    %c3_315 = arith.constant 3 : index
    %c0_316 = arith.constant 0 : index
    %c0_317 = arith.constant 0 : index
    %414 = vector.load %arg3[%c1_314, %c3_315, %c0_316, %c0_317] : memref<2x4x1x8xf32, #tpu.memory_space<vmem>>, vector<1x1x1x8xf32>
    %415 = vector.shape_cast %414 : vector<1x1x1x8xf32> to vector<1x8xf32>
    %416 = vector.broadcast %415 : vector<1x8xf32> to vector<16x8xf32>
    %417 = arith.addf %413, %416 : vector<16x8xf32>
    %c1_318 = arith.constant 1 : index
    %c3_319 = arith.constant 3 : index
    %c0_320 = arith.constant 0 : index
    %c0_321 = arith.constant 0 : index
    %418 = vector.load %arg4[%c1_318, %c3_319, %c0_320, %c0_321] : memref<2x4x32x8xf32, #tpu.memory_space<vmem>>, vector<1x1x32x8xf32>
    %419 = vector.shape_cast %418 : vector<1x1x32x8xf32> to vector<32x8xf32>
    %cst_322 = arith.constant dense<0.000000e+00> : vector<16x8xf32>
    %420 = tpu.matmul %277, %419, %cst_322 {dimension_numbers = #tpu.dot_dimension_numbers<[1], [0], [0], [1], [0, 0, 1, 1], [], []>} : vector<16x32xf32>, vector<32x8xf32>, vector<16x8xf32> -> vector<16x8xf32>
    %c1_323 = arith.constant 1 : index
    %c3_324 = arith.constant 3 : index
    %c0_325 = arith.constant 0 : index
    %c0_326 = arith.constant 0 : index
    %421 = vector.load %arg5[%c1_323, %c3_324, %c0_325, %c0_326] : memref<2x4x1x8xf32, #tpu.memory_space<vmem>>, vector<1x1x1x8xf32>
    %422 = vector.shape_cast %421 : vector<1x1x1x8xf32> to vector<1x8xf32>
    %423 = vector.broadcast %422 : vector<1x8xf32> to vector<16x8xf32>
    %424 = arith.addf %420, %423 : vector<16x8xf32>
    %c1_327 = arith.constant 1 : index
    %c3_328 = arith.constant 3 : index
    %c0_329 = arith.constant 0 : index
    %c0_330 = arith.constant 0 : index
    %425 = vector.load %arg6[%c1_327, %c3_328, %c0_329, %c0_330] : memref<2x4x32x8xf32, #tpu.memory_space<vmem>>, vector<1x1x32x8xf32>
    %426 = vector.shape_cast %425 : vector<1x1x32x8xf32> to vector<32x8xf32>
    %cst_331 = arith.constant dense<0.000000e+00> : vector<16x8xf32>
    %427 = tpu.matmul %277, %426, %cst_331 {dimension_numbers = #tpu.dot_dimension_numbers<[1], [0], [0], [1], [0, 0, 1, 1], [], []>} : vector<16x32xf32>, vector<32x8xf32>, vector<16x8xf32> -> vector<16x8xf32>
    %c1_332 = arith.constant 1 : index
    %c3_333 = arith.constant 3 : index
    %c0_334 = arith.constant 0 : index
    %c0_335 = arith.constant 0 : index
    %428 = vector.load %arg7[%c1_332, %c3_333, %c0_334, %c0_335] : memref<2x4x1x8xf32, #tpu.memory_space<vmem>>, vector<1x1x1x8xf32>
    %429 = vector.shape_cast %428 : vector<1x1x1x8xf32> to vector<1x8xf32>
    %430 = vector.broadcast %429 : vector<1x8xf32> to vector<16x8xf32>
    %431 = arith.addf %427, %430 : vector<16x8xf32>
    %432 = vector.shape_cast %417 : vector<16x8xf32> to vector<2x8x8xf32>
    %433 = vector.shape_cast %424 : vector<16x8xf32> to vector<2x8x8xf32>
    %434 = vector.shape_cast %431 : vector<16x8xf32> to vector<2x8x8xf32>
    "tpu.trace_start"() <{level = 10 : i32, message = "bqd,bkd->bqk"}> : () -> ()
    %cst_336 = arith.constant dense<0.000000e+00> : vector<2x8x8xf32>
    %435 = tpu.matmul %432, %433, %cst_336 {dimension_numbers = #tpu.dot_dimension_numbers<[2], [2], [1], [1], [0, 0, 0, 1, 1, 1], [0], [0]>} : vector<2x8x8xf32>, vector<2x8x8xf32>, vector<2x8x8xf32> -> vector<2x8x8xf32>
    "tpu.trace_stop"() : () -> ()
    %436 = vector.broadcast %6 : vector<2x1x8xf32> to vector<2x8x8xf32>
    %437 = arith.addf %435, %436 : vector<2x8x8xf32>
    %cst_337 = arith.constant dense<0xFF800000> : vector<2x8xf32>
    %438 = vector.multi_reduction <maximumf>, %437, %cst_337 [2] : vector<2x8x8xf32> to vector<2x8xf32>
    %439 = vector.shape_cast %438 : vector<2x8xf32> to vector<2x8x1xf32>
    %440 = vector.broadcast %439 : vector<2x8x1xf32> to vector<2x8x8xf32>
    %441 = arith.subf %437, %440 : vector<2x8x8xf32>
    %442 = math.exp %441 : vector<2x8x8xf32>
    %cst_338 = arith.constant dense<0.000000e+00> : vector<2x8xf32>
    %443 = vector.multi_reduction <add>, %442, %cst_338 [2] : vector<2x8x8xf32> to vector<2x8xf32>
    %444 = vector.shape_cast %443 : vector<2x8xf32> to vector<2x8x1xf32>
    %445 = tpu.reciprocal %444 {approx = true} : vector<2x8x1xf32> -> vector<2x8x1xf32>
    %446 = vector.broadcast %445 : vector<2x8x1xf32> to vector<2x8x8xf32>
    %447 = arith.mulf %442, %446 : vector<2x8x8xf32>
    "tpu.trace_start"() <{level = 10 : i32, message = "bqk,bkd->bqd"}> : () -> ()
    %cst_339 = arith.constant dense<0.000000e+00> : vector<2x8x8xf32>
    %448 = tpu.matmul %447, %434, %cst_339 {dimension_numbers = #tpu.dot_dimension_numbers<[2], [1], [1], [2], [0, 0, 0, 1, 1, 2], [0], [0]>} : vector<2x8x8xf32>, vector<2x8x8xf32>, vector<2x8x8xf32> -> vector<2x8x8xf32>
    "tpu.trace_stop"() : () -> ()
    %449 = vector.shape_cast %448 : vector<2x8x8xf32> to vector<16x8xf32>
    %c1_340 = arith.constant 1 : index
    %c3_341 = arith.constant 3 : index
    %c0_342 = arith.constant 0 : index
    %c0_343 = arith.constant 0 : index
    %450 = vector.load %arg8[%c1_340, %c3_341, %c0_342, %c0_343] : memref<2x4x8x32xf32, #tpu.memory_space<vmem>>, vector<1x1x8x32xf32>
    %451 = vector.shape_cast %450 : vector<1x1x8x32xf32> to vector<8x32xf32>
    %cst_344 = arith.constant dense<0.000000e+00> : vector<16x32xf32>
    %452 = tpu.matmul %449, %451, %cst_344 {dimension_numbers = #tpu.dot_dimension_numbers<[1], [0], [0], [1], [0, 0, 1, 1], [], []>} : vector<16x8xf32>, vector<8x32xf32>, vector<16x32xf32> -> vector<16x32xf32>
    %453 = arith.addf %410, %452 : vector<16x32xf32>
    %c1_345 = arith.constant 1 : index
    %c0_346 = arith.constant 0 : index
    %c0_347 = arith.constant 0 : index
    %454 = vector.load %arg16[%c1_345, %c0_346, %c0_347] : memref<2x1x32xf32, #tpu.memory_space<vmem>>, vector<1x1x32xf32>
    %455 = vector.shape_cast %454 : vector<1x1x32xf32> to vector<1x32xf32>
    %c1_348 = arith.constant 1 : index
    %c0_349 = arith.constant 0 : index
    %c0_350 = arith.constant 0 : index
    %456 = vector.load %arg17[%c1_348, %c0_349, %c0_350] : memref<2x1x32xf32, #tpu.memory_space<vmem>>, vector<1x1x32xf32>
    %457 = vector.shape_cast %456 : vector<1x1x32xf32> to vector<1x32xf32>
    %cst_351 = arith.constant dense<0.000000e+00> : vector<16xf32>
    %458 = vector.multi_reduction <add>, %453, %cst_351 [1] : vector<16x32xf32> to vector<16xf32>
    %459 = vector.shape_cast %458 : vector<16xf32> to vector<16x1xf32>
    %cst_352 = arith.constant 3.200000e+01 : f32
    %460 = vector.broadcast %cst_352 : f32 to vector<16x1xf32>
    %461 = arith.divf %459, %460 : vector<16x1xf32>
    %462 = vector.broadcast %461 : vector<16x1xf32> to vector<16x32xf32>
    %463 = arith.subf %453, %462 : vector<16x32xf32>
    %464 = arith.mulf %463, %463 : vector<16x32xf32>
    %cst_353 = arith.constant dense<0.000000e+00> : vector<16xf32>
    %465 = vector.multi_reduction <add>, %464, %cst_353 [1] : vector<16x32xf32> to vector<16xf32>
    %466 = vector.shape_cast %465 : vector<16xf32> to vector<16x1xf32>
    %cst_354 = arith.constant 3.100000e+01 : f32
    %467 = vector.broadcast %cst_354 : f32 to vector<16x1xf32>
    %468 = arith.divf %466, %467 : vector<16x1xf32>
    %cst_355 = arith.constant 9.99999996E-13 : f32
    %469 = vector.broadcast %cst_355 : f32 to vector<16x1xf32>
    %470 = arith.addf %468, %469 : vector<16x1xf32>
    %471 = math.rsqrt %470 : vector<16x1xf32>
    %472 = vector.broadcast %461 : vector<16x1xf32> to vector<16x32xf32>
    %473 = arith.subf %453, %472 : vector<16x32xf32>
    %474 = vector.broadcast %455 : vector<1x32xf32> to vector<16x32xf32>
    %475 = arith.mulf %474, %473 : vector<16x32xf32>
    %476 = vector.broadcast %471 : vector<16x1xf32> to vector<16x32xf32>
    %477 = arith.mulf %475, %476 : vector<16x32xf32>
    %478 = vector.broadcast %457 : vector<1x32xf32> to vector<16x32xf32>
    %479 = arith.addf %477, %478 : vector<16x32xf32>
    %c1_356 = arith.constant 1 : index
    %c0_357 = arith.constant 0 : index
    %c0_358 = arith.constant 0 : index
    %480 = vector.load %arg12[%c1_356, %c0_357, %c0_358] : memref<2x32x64xf32, #tpu.memory_space<vmem>>, vector<1x32x64xf32>
    %481 = vector.shape_cast %480 : vector<1x32x64xf32> to vector<32x64xf32>
    %cst_359 = arith.constant dense<0.000000e+00> : vector<16x64xf32>
    %482 = tpu.matmul %479, %481, %cst_359 {dimension_numbers = #tpu.dot_dimension_numbers<[1], [0], [0], [1], [0, 0, 1, 1], [], []>} : vector<16x32xf32>, vector<32x64xf32>, vector<16x64xf32> -> vector<16x64xf32>
    %c1_360 = arith.constant 1 : index
    %c0_361 = arith.constant 0 : index
    %c0_362 = arith.constant 0 : index
    %483 = vector.load %arg13[%c1_360, %c0_361, %c0_362] : memref<2x1x64xf32, #tpu.memory_space<vmem>>, vector<1x1x64xf32>
    %484 = vector.shape_cast %483 : vector<1x1x64xf32> to vector<1x64xf32>
    %485 = vector.broadcast %484 : vector<1x64xf32> to vector<16x64xf32>
    %486 = arith.addf %482, %485 : vector<16x64xf32>
    %cst_363 = arith.constant 0.000000e+00 : f32
    %487 = vector.broadcast %cst_363 : f32 to vector<16x64xf32>
    %488 = arith.maximumf %486, %487 : vector<16x64xf32>
    %c1_364 = arith.constant 1 : index
    %c0_365 = arith.constant 0 : index
    %c0_366 = arith.constant 0 : index
    %489 = vector.load %arg14[%c1_364, %c0_365, %c0_366] : memref<2x64x32xf32, #tpu.memory_space<vmem>>, vector<1x64x32xf32>
    %490 = vector.shape_cast %489 : vector<1x64x32xf32> to vector<64x32xf32>
    %cst_367 = arith.constant dense<0.000000e+00> : vector<16x32xf32>
    %491 = tpu.matmul %488, %490, %cst_367 {dimension_numbers = #tpu.dot_dimension_numbers<[1], [0], [0], [1], [0, 0, 1, 1], [], []>} : vector<16x64xf32>, vector<64x32xf32>, vector<16x32xf32> -> vector<16x32xf32>
    %492 = arith.addf %453, %491 : vector<16x32xf32>
    %c1_368 = arith.constant 1 : index
    %c0_369 = arith.constant 0 : index
    %c0_370 = arith.constant 0 : index
    %493 = vector.load %arg15[%c1_368, %c0_369, %c0_370] : memref<2x1x32xf32, #tpu.memory_space<vmem>>, vector<1x1x32xf32>
    %494 = vector.shape_cast %493 : vector<1x1x32xf32> to vector<1x32xf32>
    %495 = vector.broadcast %494 : vector<1x32xf32> to vector<16x32xf32>
    %496 = arith.addf %492, %495 : vector<16x32xf32>
    %c0_371 = arith.constant 0 : index
    %c0_372 = arith.constant 0 : index
    %497 = vector.load %arg18[%c0_371, %c0_372] : memref<1x32xf32, #tpu.memory_space<vmem>>, vector<1x32xf32>
    %c0_373 = arith.constant 0 : index
    %c0_374 = arith.constant 0 : index
    %498 = vector.load %arg19[%c0_373, %c0_374] : memref<1x32xf32, #tpu.memory_space<vmem>>, vector<1x32xf32>
    %cst_375 = arith.constant dense<0.000000e+00> : vector<16xf32>
    %499 = vector.multi_reduction <add>, %496, %cst_375 [1] : vector<16x32xf32> to vector<16xf32>
    %500 = vector.shape_cast %499 : vector<16xf32> to vector<16x1xf32>
    %cst_376 = arith.constant 3.200000e+01 : f32
    %501 = vector.broadcast %cst_376 : f32 to vector<16x1xf32>
    %502 = arith.divf %500, %501 : vector<16x1xf32>
    %503 = vector.broadcast %502 : vector<16x1xf32> to vector<16x32xf32>
    %504 = arith.subf %496, %503 : vector<16x32xf32>
    %505 = arith.mulf %504, %504 : vector<16x32xf32>
    %cst_377 = arith.constant dense<0.000000e+00> : vector<16xf32>
    %506 = vector.multi_reduction <add>, %505, %cst_377 [1] : vector<16x32xf32> to vector<16xf32>
    %507 = vector.shape_cast %506 : vector<16xf32> to vector<16x1xf32>
    %cst_378 = arith.constant 3.100000e+01 : f32
    %508 = vector.broadcast %cst_378 : f32 to vector<16x1xf32>
    %509 = arith.divf %507, %508 : vector<16x1xf32>
    %cst_379 = arith.constant 9.99999996E-13 : f32
    %510 = vector.broadcast %cst_379 : f32 to vector<16x1xf32>
    %511 = arith.addf %509, %510 : vector<16x1xf32>
    %512 = math.rsqrt %511 : vector<16x1xf32>
    %513 = vector.broadcast %502 : vector<16x1xf32> to vector<16x32xf32>
    %514 = arith.subf %496, %513 : vector<16x32xf32>
    %515 = vector.broadcast %497 : vector<1x32xf32> to vector<16x32xf32>
    %516 = arith.mulf %515, %514 : vector<16x32xf32>
    %517 = vector.broadcast %512 : vector<16x1xf32> to vector<16x32xf32>
    %518 = arith.mulf %516, %517 : vector<16x32xf32>
    %519 = vector.broadcast %498 : vector<1x32xf32> to vector<16x32xf32>
    %520 = arith.addf %518, %519 : vector<16x32xf32>
    %c0_380 = arith.constant 0 : index
    %c0_381 = arith.constant 0 : index
    %521 = vector.load %arg20[%c0_380, %c0_381] : memref<16x32xf32, #tpu.memory_space<vmem>>, vector<16x32xf32>
    tpu.vector_store %arg20[%c0_380, %c0_381], %520 {strides = array<i32>} : memref<16x32xf32, #tpu.memory_space<vmem>>, vector<16x32xf32>,
    return
  }
}

</mosaic_0001>

<llo_original>
// kernel: encoder_forward.1
$region0: #{encoder_forward.1}
  #allocation0 [shape = 'u32[]', space=smem, size = 0x4, offset = 0x4, fixed_abs, tag = 'smem constant byte address 0x4 - core index']
  #allocation1 [shape = 'u32[144,128]{1,0:T(1,128)}', space=vmem, size = 0x12000, scoped, tag = 'internal scratch']
  %s0 = inlined_call_operand.vmem [shape: f32[16,32], index: 0, kind: input, shape index: {}]
  %s1 = inlined_call_operand.vmem [shape: f32[2,1,8], index: 1, kind: input, shape index: {}]
  %s2 = inlined_call_operand.vmem [shape: f32[2,4,32,8], index: 2, kind: input, shape index: {}]
  %s3 = inlined_call_operand.vmem [shape: f32[2,4,1,8], index: 3, kind: input, shape index: {}]
  %s4 = inlined_call_operand.vmem [shape: f32[2,4,32,8], index: 4, kind: input, shape index: {}]
  %s5 = inlined_call_operand.vmem [shape: f32[2,4,1,8], index: 5, kind: input, shape index: {}]
  %s6 = inlined_call_operand.vmem [shape: f32[2,4,32,8], index: 6, kind: input, shape index: {}]
  %s7 = inlined_call_operand.vmem [shape: f32[2,4,1,8], index: 7, kind: input, shape index: {}]
  %s8 = inlined_call_operand.vmem [shape: f32[2,4,8,32], index: 8, kind: input, shape index: {}]
  %s9 = inlined_call_operand.vmem [shape: f32[2,1,32], index: 9, kind: input, shape index: {}]
  %s10 = inlined_call_operand.vmem [shape: f32[2,1,32], index: 10, kind: input, shape index: {}]
  %s11 = inlined_call_operand.vmem [shape: f32[2,1,32], index: 11, kind: input, shape index: {}]
  %s12 = inlined_call_operand.vmem [shape: f32[2,32,64], index: 12, kind: input, shape index: {}]
  %s13 = inlined_call_operand.vmem [shape: f32[2,1,64], index: 13, kind: input, shape index: {}]
  %s14 = inlined_call_operand.vmem [shape: f32[2,64,32], index: 14, kind: input, shape index: {}]
  %s15 = inlined_call_operand.vmem [shape: f32[2,1,32], index: 15, kind: input, shape index: {}]
  %s16 = inlined_call_operand.vmem [shape: f32[2,1,32], index: 16, kind: input, shape index: {}]
  %s17 = inlined_call_operand.vmem [shape: f32[2,1,32], index: 17, kind: input, shape index: {}]
  %s18 = inlined_call_operand.vmem [shape: f32[1,32], index: 18, kind: input, shape index: {}]
  %s19 = inlined_call_operand.vmem [shape: f32[1,32], index: 19, kind: input, shape index: {}]
  %s20 = inlined_call_operand.hbm [shape: f32[16,32], index: 20, kind: output, shape index: {}]
  %s21 = sld [smem:[#allocation0]]
  $region90: #{encoder_forward.1} parent=0
    _
  %s23 = ssub.s32 1, %s21
  %s24 = scalar_select 0, %s23, %s21
  $region1: #{encoder_forward.1} parent=0
    #allocation2 [shape = 'u8[8192]{0}', space=vmem, size = 0x2000, scoped, tag = 'output window, operand 0, single buffered']
    #allocation3 [shape = 's32[1]{0}', space=sflag, size = 0x4, scoped, tag = 'scoped memory for encoder_forward.1']
    %25 = vsyncpa [#allocation3], 0
    // Predicated region
    $region2: #{encoder_forward.1} parent=1 // pred_check
      _
    $region3: #{encoder_forward.1} parent=1 // pred_check_branch
      %27 = sbr.rel (0) target = $region5
    $region4: #{encoder_forward.1} parent=1 // pred_region
      _
    $region5: #{encoder_forward.1} parent=1 // pred_fallthru
      _
    // Predicated region
    $region6: #{encoder_forward.1} parent=1 // pred_check
      _
    $region7: #{encoder_forward.1} parent=1 // pred_check_branch
      %29 = sbr.rel (0) target = $region9
    $region8: #{encoder_forward.1} parent=1 // pred_region
      _
    $region9: #{encoder_forward.1} parent=1 // pred_fallthru
      _
    // Predicated region
    $region10: #{encoder_forward.1} parent=1 // pred_check
      _
    $region11: #{encoder_forward.1} parent=1 // pred_check_branch
      %31 = sbr.rel (0) target = $region13
    $region12: #{encoder_forward.1} parent=1 // pred_region
      _
    $region13: #{encoder_forward.1} parent=1 // pred_fallthru
      _
    // Predicated region
    $region14: #{encoder_forward.1} parent=1 // pred_check
      _
    $region15: #{encoder_forward.1} parent=1 // pred_check_branch
      %33 = sbr.rel (0) target = $region17
    $region16: #{encoder_forward.1} parent=1 // pred_region
      _
    $region17: #{encoder_forward.1} parent=1 // pred_fallthru
      _
    // Predicated region
    $region18: #{encoder_forward.1} parent=1 // pred_check
      _
    $region19: #{encoder_forward.1} parent=1 // pred_check_branch
      %35 = sbr.rel (0) target = $region21
    $region20: #{encoder_forward.1} parent=1 // pred_region
      _
    $region21: #{encoder_forward.1} parent=1 // pred_fallthru
      _
    // Predicated region
    $region22: #{encoder_forward.1} parent=1 // pred_check
      _
    $region23: #{encoder_forward.1} parent=1 // pred_check_branch
      %37 = sbr.rel (0) target = $region25
    $region24: #{encoder_forward.1} parent=1 // pred_region
      _
    $region25: #{encoder_forward.1} parent=1 // pred_fallthru
      _
    // Predicated region
    $region26: #{encoder_forward.1} parent=1 // pred_check
      _
    $region27: #{encoder_forward.1} parent=1 // pred_check_branch
      %39 = sbr.rel (0) target = $region29
    $region28: #{encoder_forward.1} parent=1 // pred_region
      _
    $region29: #{encoder_forward.1} parent=1 // pred_fallthru
      _
    // Predicated region
    $region30: #{encoder_forward.1} parent=1 // pred_check
      _
    $region31: #{encoder_forward.1} parent=1 // pred_check_branch
      %41 = sbr.rel (0) target = $region33
    $region32: #{encoder_forward.1} parent=1 // pred_region
      _
    $region33: #{encoder_forward.1} parent=1 // pred_fallthru
      _
    // Predicated region
    $region34: #{encoder_forward.1} parent=1 // pred_check
      _
    $region35: #{encoder_forward.1} parent=1 // pred_check_branch
      %43 = sbr.rel (0) target = $region37
    $region36: #{encoder_forward.1} parent=1 // pred_region
      _
    $region37: #{encoder_forward.1} parent=1 // pred_fallthru
      _
    // Predicated region
    $region38: #{encoder_forward.1} parent=1 // pred_check
      _
    $region39: #{encoder_forward.1} parent=1 // pred_check_branch
      %45 = sbr.rel (0) target = $region41
    $region40: #{encoder_forward.1} parent=1 // pred_region
      _
    $region41: #{encoder_forward.1} parent=1 // pred_fallthru
      _
    // Predicated region
    $region42: #{encoder_forward.1} parent=1 // pred_check
      _
    $region43: #{encoder_forward.1} parent=1 // pred_check_branch
      %47 = sbr.rel (0) target = $region45
    $region44: #{encoder_forward.1} parent=1 // pred_region
      _
    $region45: #{encoder_forward.1} parent=1 // pred_fallthru
      _
    // Predicated region
    $region46: #{encoder_forward.1} parent=1 // pred_check
      _
    $region47: #{encoder_forward.1} parent=1 // pred_check_branch
      %49 = sbr.rel (0) target = $region49
    $region48: #{encoder_forward.1} parent=1 // pred_region
      _
    $region49: #{encoder_forward.1} parent=1 // pred_fallthru
      _
    // Predicated region
    $region50: #{encoder_forward.1} parent=1 // pred_check
      _
    $region51: #{encoder_forward.1} parent=1 // pred_check_branch
      %51 = sbr.rel (0) target = $region53
    $region52: #{encoder_forward.1} parent=1 // pred_region
      _
    $region53: #{encoder_forward.1} parent=1 // pred_fallthru
      _
    // Predicated region
    $region54: #{encoder_forward.1} parent=1 // pred_check
      _
    $region55: #{encoder_forward.1} parent=1 // pred_check_branch
      %53 = sbr.rel (0) target = $region57
    $region56: #{encoder_forward.1} parent=1 // pred_region
      _
    $region57: #{encoder_forward.1} parent=1 // pred_fallthru
      _
    // Predicated region
    $region58: #{encoder_forward.1} parent=1 // pred_check
      _
    $region59: #{encoder_forward.1} parent=1 // pred_check_branch
      %55 = sbr.rel (0) target = $region61
    $region60: #{encoder_forward.1} parent=1 // pred_region
      _
    $region61: #{encoder_forward.1} parent=1 // pred_fallthru
      _
    // Predicated region
    $region62: #{encoder_forward.1} parent=1 // pred_check
      _
    $region63: #{encoder_forward.1} parent=1 // pred_check_branch
      %57 = sbr.rel (0) target = $region65
    $region64: #{encoder_forward.1} parent=1 // pred_region
      _
    $region65: #{encoder_forward.1} parent=1 // pred_fallthru
      _
    // Predicated region
    $region66: #{encoder_forward.1} parent=1 // pred_check
      _
    $region67: #{encoder_forward.1} parent=1 // pred_check_branch
      %59 = sbr.rel (0) target = $region69
    $region68: #{encoder_forward.1} parent=1 // pred_region
      _
    $region69: #{encoder_forward.1} parent=1 // pred_fallthru
      _
    // Predicated region
    $region70: #{encoder_forward.1} parent=1 // pred_check
      _
    $region71: #{encoder_forward.1} parent=1 // pred_check_branch
      %61 = sbr.rel (0) target = $region73
    $region72: #{encoder_forward.1} parent=1 // pred_region
      _
    $region73: #{encoder_forward.1} parent=1 // pred_fallthru
      _
    // Predicated region
    $region74: #{encoder_forward.1} parent=1 // pred_check
      _
    $region75: #{encoder_forward.1} parent=1 // pred_check_branch
      %63 = sbr.rel (0) target = $region77
    $region76: #{encoder_forward.1} parent=1 // pred_region
      _
    $region77: #{encoder_forward.1} parent=1 // pred_fallthru
      _
    // Predicated region
    $region78: #{encoder_forward.1} parent=1 // pred_check
      _
    $region79: #{encoder_forward.1} parent=1 // pred_check_branch
      %65 = sbr.rel (0) target = $region81
    $region80: #{encoder_forward.1} parent=1 // pred_region
      _
    $region81: #{encoder_forward.1} parent=1 // pred_fallthru
      _
    %v66 = vld [vmem:[%s0] sm:$0xff]
    %v67 = vld [vmem:[%s0 + $0x8] sm:$0xff]
    %v68 = vld [vmem:[%s1] sm:$0x1]
    %v69 = vld [vmem:[%s1 + $0x1] sm:$0x1]
    %vm70 = vcmp.eq.f32.partialorder %v68, 0.0
    %vm71 = vcmp.eq.f32.partialorder %v69, 0.0
    %v72 = vsel %vm70, -1e+09, 0.0
    %v73 = vsel %vm71, -1e+09, 0.0
    %v74 = vld [vmem:[%s10] sm:$0x1]
    %v75 = vld [vmem:[%s11] sm:$0x1]
    %vm76 = vcmask 261120
    %v77 = vsel %vm76, %v66, 0.0
    %78 = vadd.xlane.f32.xlu0 %v77
    %v79 = vpop.xlane.xlu0 %78
    %v80 = vsel %vm76, %v67, 0.0
    %81 = vadd.xlane.f32.xlu0 %v80
    %v82 = vpop.xlane.xlu0 %81
    %v83 = vrcp.pop 32.0
    %v84 = vmul.f32 %v79, %v83
    %v85 = vmul.f32 %v82, %v83
    %v86 = vsub.f32 %v66, %v84
    %v87 = vsub.f32 %v67, %v85
    %v88 = vmul.f32 %v86, %v86
    %v89 = vmul.f32 %v87, %v87
    %v90 = vsel %vm76, %v88, 0.0
    %91 = vadd.xlane.f32.xlu0 %v90
    %v92 = vpop.xlane.xlu0 %91
    %v93 = vsel %vm76, %v89, 0.0
    %94 = vadd.xlane.f32.xlu0 %v93
    %v95 = vpop.xlane.xlu0 %94
    %v96 = vrcp.pop 31.0
    %v97 = vmul.f32 %v92, %v96
    %v98 = vmul.f32 %v95, %v96
    %v99 = vadd.f32 %v97, 1e-12
    %v100 = vadd.f32 %v98, 1e-12
    %v101 = vrsqrt.pop %v99
    %v102 = vrsqrt.pop %v100
    %v104 = vlaneseq
    %v105 = vshrl.u32 %v104, 7
    %v106 = vsub.s32 0, %v105
    %v107 = vrot.slane %v74, %v106
    %v109 = vmul.f32 %v107, %v86
    %v110 = vmul.f32 %v107, %v87
    %v111 = vmul.f32 %v109, %v101
    %v112 = vmul.f32 %v110, %v102
    %v114 = vlaneseq
    %v115 = vshrl.u32 %v114, 7
    %v116 = vsub.s32 0, %v115
    %v117 = vrot.slane %v75, %v116
    %v119 = vadd.f32 %v111, %v117
    %v120 = vadd.f32 %v112, %v117
    %v121 = vld [vmem:[%s9] sm:$0x1]
    %v123 = vlaneseq
    %v124 = vshrl.u32 %v123, 7
    %v125 = vsub.s32 0, %v124
    %v126 = vrot.slane %v121, %v125
    %v128 = vadd.f32 %v66, %v126
    %v129 = vadd.f32 %v67, %v126
    %v130 = vld [vmem:[%s2] sm:$0xff]
    %v131 = vld [vmem:[%s2 + $0x8] sm:$0xff]
    %v132 = vld [vmem:[%s2 + $0x10] sm:$0xff]
    %v133 = vld [vmem:[%s2 + $0x18] sm:$0xff]
    %v134 = vld [vmem:[%s3] sm:$0x1]
    %v136 = vlaneseq
    %v137 = vshrl.u32 %v136, 7
    %v138 = vsub.s32 0, %v137
    %v139 = vrot.slane %v134, %v138
    %v142 = vsel %vm76, %v119, 0
    %v145 = vsel %vm76, %v120, 0
    %147 = vmatprep.subr.mxu0 0.0
    %148 = vmatpush1.msra.mxu0 %v130
    %149 = vmatprep.subr.mxu0 0.0
    %150 = vmatpush1.msra.mxu0 %v131
    %151 = vmatprep.subr.mxu0 0.0
    %152 = vmatpush1.msra.mxu0 %v132
    %153 = vmatprep.subr.mxu0 0.0
    %154 = vmatpush1.msra.mxu0 %v133
    %155 = vmatprep.subr.mxu0 0.0
    %156 = vmatpush1.msra.mxu0 0.0
    %157 = vmatprep.subr.mxu0 0.0
    %158 = vmatpush1.msra.mxu0 0.0
    %159 = vmatprep.subr.mxu0 0.0
    %160 = vmatpush1.msra.mxu0 0.0
    %161 = vmatprep.subr.mxu0 0.0
    %162 = vmatpush1.msra.mxu0 0.0
    %163 = vmatprep.subr.mxu0 0.0
    %164 = vmatpush1.msra.mxu0 0.0
    %165 = vmatprep.subr.mxu0 0.0
    %166 = vmatpush1.msra.mxu0 0.0
    %167 = vmatprep.subr.mxu0 0.0
    %168 = vmatpush1.msra.mxu0 0.0
    %169 = vmatprep.subr.mxu0 0.0
    %170 = vmatpush1.msra.mxu0 0.0
    %171 = vmatprep.subr.mxu0 0.0
    %172 = vmatpush1.msra.mxu0 0.0
    %173 = vmatprep.subr.mxu0 0.0
    %174 = vmatpush1.msra.mxu0 0.0
    %175 = vmatprep.subr.mxu0 0.0
    %176 = vmatpush1.msra.mxu0 0.0
    %177 = vmatprep.subr.mxu0 0.0
    %178 = vmatpush1.msra.mxu0 0.0
    %179 = vmatprep.subr.mxu0 0.0
    %180 = vmatpush1.msra.mxu0 0.0
    %181 = vmatprep.subr.mxu0 0.0
    %182 = vmatpush1.msra.mxu0 0.0
    %183 = vmatprep.subr.mxu0 0.0
    %184 = vmatpush1.msra.mxu0 0.0
    %185 = vmatprep.subr.mxu0 0.0
    %186 = vmatpush1.msra.mxu0 0.0
    %187 = vmatprep.subr.mxu0 0.0
    %188 = vmatpush1.msra.mxu0 0.0
    %189 = vmatprep.subr.mxu0 0.0
    %190 = vmatpush1.msra.mxu0 0.0
    %191 = vmatprep.subr.mxu0 0.0
    %192 = vmatpush1.msra.mxu0 0.0
    %193 = vmatprep.subr.mxu0 0.0
    %194 = vmatpush1.msra.mxu0 0.0
    %195 = vmatprep.subr.mxu0 0.0
    %196 = vmatpush1.msra.mxu0 0.0
    %197 = vmatprep.subr.mxu0 0.0
    %198 = vmatpush1.msra.mxu0 0.0
    %199 = vmatprep.subr.mxu0 0.0
    %200 = vmatpush1.msra.mxu0 0.0
    %201 = vmatprep.subr.mxu0 0.0
    %202 = vmatpush1.msra.mxu0 0.0
    %203 = vmatprep.subr.mxu0 0.0
    %204 = vmatpush1.msra.mxu0 0.0
    %205 = vmatprep.subr.mxu0 0.0
    %206 = vmatpush1.msra.mxu0 0.0
    %207 = vmatprep.subr.mxu0 0.0
    %208 = vmatpush1.msra.mxu0 0.0
    %209 = vmatprep.subr.mxu0 0.0
    %210 = vmatpush1.msra.mxu0 0.0
    %211 = vmatprep.mubr.f32.mxu0 0.0
    %212 = vmatmul.mubr.f32.gmra.mrb[0].mxu0 %v142
    %v213 = vpop.f32.mrb[0].mxu0
    %v214 = vadd.f32 %v139, %v213
    %v215 = vpop.f32.mrb[0].mxu0
    %216 = vmatprep.mubr.f32.mxu0 0.0
    %217 = vmatmul.mubr.f32.gmra.mrb[0].mxu0 %v145
    %v218 = vpop.f32.mrb[0].mxu0
    %v219 = vadd.f32 %v139, %v218
    %v220 = vpop.f32.mrb[0].mxu0
    %221 = vdwg.mxu0
    %v222 = vld [vmem:[%s4] sm:$0xff]
    %v223 = vld [vmem:[%s4 + $0x8] sm:$0xff]
    %v224 = vld [vmem:[%s4 + $0x10] sm:$0xff]
    %v225 = vld [vmem:[%s4 + $0x18] sm:$0xff]
    %v226 = vld [vmem:[%s5] sm:$0x1]
    %v228 = vlaneseq
    %v229 = vshrl.u32 %v228, 7
    %v230 = vsub.s32 0, %v229
    %v231 = vrot.slane %v226, %v230
    %233 = vmatprep.subr.mxu0 0.0
    %234 = vmatpush1.msra.mxu0 %v222
    %235 = vmatprep.subr.mxu0 0.0
    %236 = vmatpush1.msra.mxu0 %v223
    %237 = vmatprep.subr.mxu0 0.0
    %238 = vmatpush1.msra.mxu0 %v224
    %239 = vmatprep.subr.mxu0 0.0
    %240 = vmatpush1.msra.mxu0 %v225
    %241 = vmatprep.subr.mxu0 0.0
    %242 = vmatpush1.msra.mxu0 0.0
    %243 = vmatprep.subr.mxu0 0.0
    %244 = vmatpush1.msra.mxu0 0.0
    %245 = vmatprep.subr.mxu0 0.0
    %246 = vmatpush1.msra.mxu0 0.0
    %247 = vmatprep.subr.mxu0 0.0
    %248 = vmatpush1.msra.mxu0 0.0
    %249 = vmatprep.subr.mxu0 0.0
    %250 = vmatpush1.msra.mxu0 0.0
    %251 = vmatprep.subr.mxu0 0.0
    %252 = vmatpush1.msra.mxu0 0.0
    %253 = vmatprep.subr.mxu0 0.0
    %254 = vmatpush1.msra.mxu0 0.0
    %255 = vmatprep.subr.mxu0 0.0
    %256 = vmatpush1.msra.mxu0 0.0
    %257 = vmatprep.subr.mxu0 0.0
    %258 = vmatpush1.msra.mxu0 0.0
    %259 = vmatprep.subr.mxu0 0.0
    %260 = vmatpush1.msra.mxu0 0.0
    %261 = vmatprep.subr.mxu0 0.0
    %262 = vmatpush1.msra.mxu0 0.0
    %263 = vmatprep.subr.mxu0 0.0
    %264 = vmatpush1.msra.mxu0 0.0
    %265 = vmatprep.subr.mxu0 0.0
    %266 = vmatpush1.msra.mxu0 0.0
    %267 = vmatprep.subr.mxu0 0.0
    %268 = vmatpush1.msra.mxu0 0.0
    %269 = vmatprep.subr.mxu0 0.0
    %270 = vmatpush1.msra.mxu0 0.0
    %271 = vmatprep.subr.mxu0 0.0
    %272 = vmatpush1.msra.mxu0 0.0
    %273 = vmatprep.subr.mxu0 0.0
    %274 = vmatpush1.msra.mxu0 0.0
    %275 = vmatprep.subr.mxu0 0.0
    %276 = vmatpush1.msra.mxu0 0.0
    %277 = vmatprep.subr.mxu0 0.0
    %278 = vmatpush1.msra.mxu0 0.0
    %279 = vmatprep.subr.mxu0 0.0
    %280 = vmatpush1.msra.mxu0 0.0
    %281 = vmatprep.subr.mxu0 0.0
    %282 = vmatpush1.msra.mxu0 0.0
    %283 = vmatprep.subr.mxu0 0.0
    %284 = vmatpush1.msra.mxu0 0.0
    %285 = vmatprep.subr.mxu0 0.0
    %286 = vmatpush1.msra.mxu0 0.0
    %287 = vmatprep.subr.mxu0 0.0
    %288 = vmatpush1.msra.mxu0 0.0
    %289 = vmatprep.subr.mxu0 0.0
    %290 = vmatpush1.msra.mxu0 0.0
    %291 = vmatprep.subr.mxu0 0.0
    %292 = vmatpush1.msra.mxu0 0.0
    %293 = vmatprep.subr.mxu0 0.0
    %294 = vmatpush1.msra.mxu0 0.0
    %295 = vmatprep.subr.mxu0 0.0
    %296 = vmatpush1.msra.mxu0 0.0
    %297 = vmatprep.mubr.f32.mxu0 0.0
    %298 = vmatmul.mubr.f32.gmra.mrb[0].mxu0 %v142
    %v299 = vpop.f32.mrb[0].mxu0
    %v300 = vadd.f32 %v231, %v299
    %v301 = vpop.f32.mrb[0].mxu0
    %302 = vmatprep.mubr.f32.mxu0 0.0
    %303 = vmatmul.mubr.f32.gmra.mrb[0].mxu0 %v145
    %v304 = vpop.f32.mrb[0].mxu0
    %v305 = vadd.f32 %v231, %v304
    %v306 = vpop.f32.mrb[0].mxu0
    %307 = vdwg.mxu0
    %v308 = vld [vmem:[%s6] sm:$0xff]
    %v309 = vld [vmem:[%s6 + $0x8] sm:$0xff]
    %v310 = vld [vmem:[%s6 + $0x10] sm:$0xff]
    %v311 = vld [vmem:[%s6 + $0x18] sm:$0xff]
    %v312 = vld [vmem:[%s7] sm:$0x1]
    %v314 = vlaneseq
    %v315 = vshrl.u32 %v314, 7
    %v316 = vsub.s32 0, %v315
    %v317 = vrot.slane %v312, %v316
    %319 = vmatprep.subr.mxu0 0.0
    %320 = vmatpush1.msra.mxu0 %v308
    %321 = vmatprep.subr.mxu0 0.0
    %322 = vmatpush1.msra.mxu0 %v309
    %323 = vmatprep.subr.mxu0 0.0
    %324 = vmatpush1.msra.mxu0 %v310
    %325 = vmatprep.subr.mxu0 0.0
    %326 = vmatpush1.msra.mxu0 %v311
    %327 = vmatprep.subr.mxu0 0.0
    %328 = vmatpush1.msra.mxu0 0.0
    %329 = vmatprep.subr.mxu0 0.0
    %330 = vmatpush1.msra.mxu0 0.0
    %331 = vmatprep.subr.mxu0 0.0
    %332 = vmatpush1.msra.mxu0 0.0
    %333 = vmatprep.subr.mxu0 0.0
    %334 = vmatpush1.msra.mxu0 0.0
    %335 = vmatprep.subr.mxu0 0.0
    %336 = vmatpush1.msra.mxu0 0.0
    %337 = vmatprep.subr.mxu0 0.0
    %338 = vmatpush1.msra.mxu0 0.0
    %339 = vmatprep.subr.mxu0 0.0
    %340 = vmatpush1.msra.mxu0 0.0
    %341 = vmatprep.subr.mxu0 0.0
    %342 = vmatpush1.msra.mxu0 0.0
    %343 = vmatprep.subr.mxu0 0.0
    %344 = vmatpush1.msra.mxu0 0.0
    %345 = vmatprep.subr.mxu0 0.0
    %346 = vmatpush1.msra.mxu0 0.0
    %347 = vmatprep.subr.mxu0 0.0
    %348 = vmatpush1.msra.mxu0 0.0
    %349 = vmatprep.subr.mxu0 0.0
    %350 = vmatpush1.msra.mxu0 0.0
    %351 = vmatprep.subr.mxu0 0.0
    %352 = vmatpush1.msra.mxu0 0.0
    %353 = vmatprep.subr.mxu0 0.0
    %354 = vmatpush1.msra.mxu0 0.0
    %355 = vmatprep.subr.mxu0 0.0
    %356 = vmatpush1.msra.mxu0 0.0
    %357 = vmatprep.subr.mxu0 0.0
    %358 = vmatpush1.msra.mxu0 0.0
    %359 = vmatprep.subr.mxu0 0.0
    %360 = vmatpush1.msra.mxu0 0.0
    %361 = vmatprep.subr.mxu0 0.0
    %362 = vmatpush1.msra.mxu0 0.0
    %363 = vmatprep.subr.mxu0 0.0
    %364 = vmatpush1.msra.mxu0 0.0
    %365 = vmatprep.subr.mxu0 0.0
    %366 = vmatpush1.msra.mxu0 0.0
    %367 = vmatprep.subr.mxu0 0.0
    %368 = vmatpush1.msra.mxu0 0.0
    %369 = vmatprep.subr.mxu0 0.0
    %370 = vmatpush1.msra.mxu0 0.0
    %371 = vmatprep.subr.mxu0 0.0
    %372 = vmatpush1.msra.mxu0 0.0
    %373 = vmatprep.subr.mxu0 0.0
    %374 = vmatpush1.msra.mxu0 0.0
    %375 = vmatprep.subr.mxu0 0.0
    %376 = vmatpush1.msra.mxu0 0.0
    %377 = vmatprep.subr.mxu0 0.0
    %378 = vmatpush1.msra.mxu0 0.0
    %379 = vmatprep.subr.mxu0 0.0
    %380 = vmatpush1.msra.mxu0 0.0
    %381 = vmatprep.subr.mxu0 0.0
    %382 = vmatpush1.msra.mxu0 0.0
    %383 = vmatprep.mubr.f32.mxu0 0.0
    %384 = vmatmul.mubr.f32.gmra.mrb[0].mxu0 %v142
    %v385 = vpop.f32.mrb[0].mxu0
    %v386 = vadd.f32 %v317, %v385
    %v387 = vpop.f32.mrb[0].mxu0
    %388 = vmatprep.mubr.f32.mxu0 0.0
    %389 = vmatmul.mubr.f32.gmra.mrb[0].mxu0 %v145
    %v390 = vpop.f32.mrb[0].mxu0
    %v391 = vadd.f32 %v317, %v390
    %v392 = vpop.f32.mrb[0].mxu0
    %393 = vdwg.mxu0
    %v396 = vlaneseq
    %v397 = vshrl.u32 %v396, 7
    %v398 = vsub.s32 0, %v397
    %v399 = vrot.slane %v72, %v398
    %v400 = vlaneseq
    %v401 = vshrl.u32 %v400, 7
    %v402 = vsub.s32 0, %v401
    %v403 = vrot.slane %v73, %v402
    %vm406 = vcmask 64512
    %v408 = vsel %vm406, %v214, 0
    %v411 = vsel %vm406, %v300, 0
    %413 = vmatprep.subr.mxu0 0.0
    %414 = vmatpush1.xpose.msra.mxu0 %v411
    %415 = vmatprep.subr.mxu0 0.0
    %416 = vmatpush1.xpose.msra.mxu0 0.0
    %417 = vmatprep.subr.mxu0 0.0
    %418 = vmatpush1.xpose.msra.mxu0 0.0
    %419 = vmatprep.subr.mxu0 0.0
    %420 = vmatpush1.xpose.msra.mxu0 0.0
    %421 = vmatprep.subr.mxu0 0.0
    %422 = vmatpush1.xpose.msra.mxu0 0.0
    %423 = vmatprep.subr.mxu0 0.0
    %424 = vmatpush1.xpose.msra.mxu0 0.0
    %425 = vmatprep.subr.mxu0 0.0
    %426 = vmatpush1.xpose.msra.mxu0 0.0
    %427 = vmatprep.subr.mxu0 0.0
    %428 = vmatpush1.xpose.msra.mxu0 0.0
    %429 = vmatprep.subr.mxu0 0.0
    %430 = vmatpush1.xpose.msra.mxu0 0.0
    %431 = vmatprep.subr.mxu0 0.0
    %432 = vmatpush1.xpose.msra.mxu0 0.0
    %433 = vmatprep.subr.mxu0 0.0
    %434 = vmatpush1.xpose.msra.mxu0 0.0
    %435 = vmatprep.subr.mxu0 0.0
    %436 = vmatpush1.xpose.msra.mxu0 0.0
    %437 = vmatprep.subr.mxu0 0.0
    %438 = vmatpush1.xpose.msra.mxu0 0.0
    %439 = vmatprep.subr.mxu0 0.0
    %440 = vmatpush1.xpose.msra.mxu0 0.0
    %441 = vmatprep.subr.mxu0 0.0
    %442 = vmatpush1.xpose.msra.mxu0 0.0
    %443 = vmatprep.subr.mxu0 0.0
    %444 = vmatpush1.xpose.msra.mxu0 0.0
    %445 = vmatprep.subr.mxu0 0.0
    %446 = vmatpush1.xpose.msra.mxu0 0.0
    %447 = vmatprep.subr.mxu0 0.0
    %448 = vmatpush1.xpose.msra.mxu0 0.0
    %449 = vmatprep.subr.mxu0 0.0
    %450 = vmatpush1.xpose.msra.mxu0 0.0
    %451 = vmatprep.subr.mxu0 0.0
    %452 = vmatpush1.xpose.msra.mxu0 0.0
    %453 = vmatprep.subr.mxu0 0.0
    %454 = vmatpush1.xpose.msra.mxu0 0.0
    %455 = vmatprep.subr.mxu0 0.0
    %456 = vmatpush1.xpose.msra.mxu0 0.0
    %457 = vmatprep.subr.mxu0 0.0
    %458 = vmatpush1.xpose.msra.mxu0 0.0
    %459 = vmatprep.subr.mxu0 0.0
    %460 = vmatpush1.xpose.msra.mxu0 0.0
    %461 = vmatprep.subr.mxu0 0.0
    %462 = vmatpush1.xpose.msra.mxu0 0.0
    %463 = vmatprep.subr.mxu0 0.0
    %464 = vmatpush1.xpose.msra.mxu0 0.0
    %465 = vmatprep.subr.mxu0 0.0
    %466 = vmatpush1.xpose.msra.mxu0 0.0
    %467 = vmatprep.subr.mxu0 0.0
    %468 = vmatpush1.xpose.msra.mxu0 0.0
    %469 = vmatprep.subr.mxu0 0.0
    %470 = vmatpush1.xpose.msra.mxu0 0.0
    %471 = vmatprep.subr.mxu0 0.0
    %472 = vmatpush1.xpose.msra.mxu0 0.0
    %473 = vmatprep.subr.mxu0 0.0
    %474 = vmatpush1.xpose.msra.mxu0 0.0
    %475 = vmatprep.subr.mxu0 0.0
    %476 = vmatpush1.xpose.msra.mxu0 0.0
    %477 = vmatprep.mubr.f32.mxu0 0.0
    %478 = vmatmul.mubr.f32.gmra.mrb[0].mxu0 %v408
    %v479 = vpop.f32.mrb[0].mxu0
    %v480 = vadd.f32 %v399, %v479
    %v481 = vpop.f32.mrb[0].mxu0
    %482 = vdwg.mxu0
    %v484 = vsel %vm406, %v219, 0
    %v487 = vsel %vm406, %v305, 0
    %489 = vmatprep.subr.mxu0 0.0
    %490 = vmatpush1.xpose.msra.mxu0 %v487
    %491 = vmatprep.subr.mxu0 0.0
    %492 = vmatpush1.xpose.msra.mxu0 0.0
    %493 = vmatprep.subr.mxu0 0.0
    %494 = vmatpush1.xpose.msra.mxu0 0.0
    %495 = vmatprep.subr.mxu0 0.0
    %496 = vmatpush1.xpose.msra.mxu0 0.0
    %497 = vmatprep.subr.mxu0 0.0
    %498 = vmatpush1.xpose.msra.mxu0 0.0
    %499 = vmatprep.subr.mxu0 0.0
    %500 = vmatpush1.xpose.msra.mxu0 0.0
    %501 = vmatprep.subr.mxu0 0.0
    %502 = vmatpush1.xpose.msra.mxu0 0.0
    %503 = vmatprep.subr.mxu0 0.0
    %504 = vmatpush1.xpose.msra.mxu0 0.0
    %505 = vmatprep.subr.mxu0 0.0
    %506 = vmatpush1.xpose.msra.mxu0 0.0
    %507 = vmatprep.subr.mxu0 0.0
    %508 = vmatpush1.xpose.msra.mxu0 0.0
    %509 = vmatprep.subr.mxu0 0.0
    %510 = vmatpush1.xpose.msra.mxu0 0.0
    %511 = vmatprep.subr.mxu0 0.0
    %512 = vmatpush1.xpose.msra.mxu0 0.0
    %513 = vmatprep.subr.mxu0 0.0
    %514 = vmatpush1.xpose.msra.mxu0 0.0
    %515 = vmatprep.subr.mxu0 0.0
    %516 = vmatpush1.xpose.msra.mxu0 0.0
    %517 = vmatprep.subr.mxu0 0.0
    %518 = vmatpush1.xpose.msra.mxu0 0.0
    %519 = vmatprep.subr.mxu0 0.0
    %520 = vmatpush1.xpose.msra.mxu0 0.0
    %521 = vmatprep.subr.mxu0 0.0
    %522 = vmatpush1.xpose.msra.mxu0 0.0
    %523 = vmatprep.subr.mxu0 0.0
    %524 = vmatpush1.xpose.msra.mxu0 0.0
    %525 = vmatprep.subr.mxu0 0.0
    %526 = vmatpush1.xpose.msra.mxu0 0.0
    %527 = vmatprep.subr.mxu0 0.0
    %528 = vmatpush1.xpose.msra.mxu0 0.0
    %529 = vmatprep.subr.mxu0 0.0
    %530 = vmatpush1.xpose.msra.mxu0 0.0
    %531 = vmatprep.subr.mxu0 0.0
    %532 = vmatpush1.xpose.msra.mxu0 0.0
    %533 = vmatprep.subr.mxu0 0.0
    %534 = vmatpush1.xpose.msra.mxu0 0.0
    %535 = vmatprep.subr.mxu0 0.0
    %536 = vmatpush1.xpose.msra.mxu0 0.0
    %537 = vmatprep.subr.mxu0 0.0
    %538 = vmatpush1.xpose.msra.mxu0 0.0
    %539 = vmatprep.subr.mxu0 0.0
    %540 = vmatpush1.xpose.msra.mxu0 0.0
    %541 = vmatprep.subr.mxu0 0.0
    %542 = vmatpush1.xpose.msra.mxu0 0.0
    %543 = vmatprep.subr.mxu0 0.0
    %544 = vmatpush1.xpose.msra.mxu0 0.0
    %545 = vmatprep.subr.mxu0 0.0
    %546 = vmatpush1.xpose.msra.mxu0 0.0
    %547 = vmatprep.subr.mxu0 0.0
    %548 = vmatpush1.xpose.msra.mxu0 0.0
    %549 = vmatprep.subr.mxu0 0.0
    %550 = vmatpush1.xpose.msra.mxu0 0.0
    %551 = vmatprep.subr.mxu0 0.0
    %552 = vmatpush1.xpose.msra.mxu0 0.0
    %553 = vmatprep.mubr.f32.mxu0 0.0
    %554 = vmatmul.mubr.f32.gmra.mrb[0].mxu0 %v484
    %v555 = vpop.f32.mrb[0].mxu0
    %v556 = vadd.f32 %v403, %v555
    %v557 = vpop.f32.mrb[0].mxu0
    %558 = vdwg.mxu0
    %v559 = vsel %vm406, %v480, -inf
    %560 = vmax.xlane.f32.xlu0 %v559
    %v561 = vpop.xlane.xlu0 %560
    %v562 = vsel %vm406, %v556, -inf
    %563 = vmax.xlane.f32.xlu0 %v562
    %v564 = vpop.xlane.xlu0 %563
    %v565 = vsub.f32 %v480, %v561
    %v566 = vsub.f32 %v556, %v564
    %v567 = vmul.f32 %v565, 1.442695
    %v568 = vpow.pop %v567
    %v569 = vmul.f32 %v566, 1.442695
    %v570 = vpow.pop %v569
    %v571 = vsel %vm406, %v568, 0.0
    %572 = vadd.xlane.f32.xlu0 %v571
    %v573 = vpop.xlane.xlu0 %572
    %v574 = vsel %vm406, %v570, 0.0
    %575 = vadd.xlane.f32.xlu0 %v574
    %v576 = vpop.xlane.xlu0 %575
    %v577 = vrcp.pop %v573
    %v578 = vrcp.pop %v576
    %v579 = vmul.f32 %v568, %v577
    %v580 = vmul.f32 %v570, %v578
    %v582 = vsel %vm406, %v579, 0
    %584 = vmatprep.subr.mxu0 0.0
    %585 = vmatpush1.msra.mxu0 %v386
    %586 = vmatprep.subr.mxu0 0.0
    %587 = vmatpush1.msra.mxu0 0.0
    %588 = vmatprep.subr.mxu0 0.0
    %589 = vmatpush1.msra.mxu0 0.0
    %590 = vmatprep.subr.mxu0 0.0
    %591 = vmatpush1.msra.mxu0 0.0
    %592 = vmatprep.subr.mxu0 0.0
    %593 = vmatpush1.msra.mxu0 0.0
    %594 = vmatprep.subr.mxu0 0.0
    %595 = vmatpush1.msra.mxu0 0.0
    %596 = vmatprep.subr.mxu0 0.0
    %597 = vmatpush1.msra.mxu0 0.0
    %598 = vmatprep.subr.mxu0 0.0
    %599 = vmatpush1.msra.mxu0 0.0
    %600 = vmatprep.subr.mxu0 0.0
    %601 = vmatpush1.msra.mxu0 0.0
    %602 = vmatprep.subr.mxu0 0.0
    %603 = vmatpush1.msra.mxu0 0.0
    %604 = vmatprep.subr.mxu0 0.0
    %605 = vmatpush1.msra.mxu0 0.0
    %606 = vmatprep.subr.mxu0 0.0
    %607 = vmatpush1.msra.mxu0 0.0
    %608 = vmatprep.subr.mxu0 0.0
    %609 = vmatpush1.msra.mxu0 0.0
    %610 = vmatprep.subr.mxu0 0.0
    %611 = vmatpush1.msra.mxu0 0.0
    %612 = vmatprep.subr.mxu0 0.0
    %613 = vmatpush1.msra.mxu0 0.0
    %614 = vmatprep.subr.mxu0 0.0
    %615 = vmatpush1.msra.mxu0 0.0
    %616 = vmatprep.subr.mxu0 0.0
    %617 = vmatpush1.msra.mxu0 0.0
    %618 = vmatprep.subr.mxu0 0.0
    %619 = vmatpush1.msra.mxu0 0.0
    %620 = vmatprep.subr.mxu0 0.0
    %621 = vmatpush1.msra.mxu0 0.0
    %622 = vmatprep.subr.mxu0 0.0
    %623 = vmatpush1.msra.mxu0 0.0
    %624 = vmatprep.subr.mxu0 0.0
    %625 = vmatpush1.msra.mxu0 0.0
    %626 = vmatprep.subr.mxu0 0.0
    %627 = vmatpush1.msra.mxu0 0.0
    %628 = vmatprep.subr.mxu0 0.0
    %629 = vmatpush1.msra.mxu0 0.0
    %630 = vmatprep.subr.mxu0 0.0
    %631 = vmatpush1.msra.mxu0 0.0
    %632 = vmatprep.subr.mxu0 0.0
    %633 = vmatpush1.msra.mxu0 0.0
    %634 = vmatprep.subr.mxu0 0.0
    %635 = vmatpush1.msra.mxu0 0.0
    %636 = vmatprep.subr.mxu0 0.0
    %637 = vmatpush1.msra.mxu0 0.0
    %638 = vmatprep.subr.mxu0 0.0
    %639 = vmatpush1.msra.mxu0 0.0
    %640 = vmatprep.subr.mxu0 0.0
    %641 = vmatpush1.msra.mxu0 0.0
    %642 = vmatprep.subr.mxu0 0.0
    %643 = vmatpush1.msra.mxu0 0.0
    %644 = vmatprep.subr.mxu0 0.0
    %645 = vmatpush1.msra.mxu0 0.0
    %646 = vmatprep.subr.mxu0 0.0
    %647 = vmatpush1.msra.mxu0 0.0
    %648 = vmatprep.mubr.f32.mxu0 0.0
    %649 = vmatmul.mubr.f32.gmra.mrb[0].mxu0 %v582
    %v650 = vpop.f32.mrb[0].mxu0
    %v651 = vadd.f32 0.0, %v650
    %v652 = vpop.f32.mrb[0].mxu0
    %653 = vdwg.mxu0
    %v655 = vsel %vm406, %v580, 0
    %657 = vmatprep.subr.mxu0 0.0
    %658 = vmatpush1.msra.mxu0 %v391
    %659 = vmatprep.subr.mxu0 0.0
    %660 = vmatpush1.msra.mxu0 0.0
    %661 = vmatprep.subr.mxu0 0.0
    %662 = vmatpush1.msra.mxu0 0.0
    %663 = vmatprep.subr.mxu0 0.0
    %664 = vmatpush1.msra.mxu0 0.0
    %665 = vmatprep.subr.mxu0 0.0
    %666 = vmatpush1.msra.mxu0 0.0
    %667 = vmatprep.subr.mxu0 0.0
    %668 = vmatpush1.msra.mxu0 0.0
    %669 = vmatprep.subr.mxu0 0.0
    %670 = vmatpush1.msra.mxu0 0.0
    %671 = vmatprep.subr.mxu0 0.0
    %672 = vmatpush1.msra.mxu0 0.0
    %673 = vmatprep.subr.mxu0 0.0
    %674 = vmatpush1.msra.mxu0 0.0
    %675 = vmatprep.subr.mxu0 0.0
    %676 = vmatpush1.msra.mxu0 0.0
    %677 = vmatprep.subr.mxu0 0.0
    %678 = vmatpush1.msra.mxu0 0.0
    %679 = vmatprep.subr.mxu0 0.0
    %680 = vmatpush1.msra.mxu0 0.0
    %681 = vmatprep.subr.mxu0 0.0
    %682 = vmatpush1.msra.mxu0 0.0
    %683 = vmatprep.subr.mxu0 0.0
    %684 = vmatpush1.msra.mxu0 0.0
    %685 = vmatprep.subr.mxu0 0.0
    %686 = vmatpush1.msra.mxu0 0.0
    %687 = vmatprep.subr.mxu0 0.0
    %688 = vmatpush1.msra.mxu0 0.0
    %689 = vmatprep.subr.mxu0 0.0
    %690 = vmatpush1.msra.mxu0 0.0
    %691 = vmatprep.subr.mxu0 0.0
    %692 = vmatpush1.msra.mxu0 0.0
    %693 = vmatprep.subr.mxu0 0.0
    %694 = vmatpush1.msra.mxu0 0.0
    %695 = vmatprep.subr.mxu0 0.0
    %696 = vmatpush1.msra.mxu0 0.0
    %697 = vmatprep.subr.mxu0 0.0
    %698 = vmatpush1.msra.mxu0 0.0
    %699 = vmatprep.subr.mxu0 0.0
    %700 = vmatpush1.msra.mxu0 0.0
    %701 = vmatprep.subr.mxu0 0.0
    %702 = vmatpush1.msra.mxu0 0.0
    %703 = vmatprep.subr.mxu0 0.0
    %704 = vmatpush1.msra.mxu0 0.0
    %705 = vmatprep.subr.mxu0 0.0
    %706 = vmatpush1.msra.mxu0 0.0
    %707 = vmatprep.subr.mxu0 0.0
    %708 = vmatpush1.msra.mxu0 0.0
    %709 = vmatprep.subr.mxu0 0.0
    %710 = vmatpush1.msra.mxu0 0.0
    %711 = vmatprep.subr.mxu0 0.0
    %712 = vmatpush1.msra.mxu0 0.0
    %713 = vmatprep.subr.mxu0 0.0
    %714 = vmatpush1.msra.mxu0 0.0
    %715 = vmatprep.subr.mxu0 0.0
    %716 = vmatpush1.msra.mxu0 0.0
    %717 = vmatprep.subr.mxu0 0.0
    %718 = vmatpush1.msra.mxu0 0.0
    %719 = vmatprep.subr.mxu0 0.0
    %720 = vmatpush1.msra.mxu0 0.0
    %721 = vmatprep.mubr.f32.mxu0 0.0
    %722 = vmatmul.mubr.f32.gmra.mrb[0].mxu0 %v655
    %v723 = vpop.f32.mrb[0].mxu0
    %v724 = vadd.f32 0.0, %v723
    %v725 = vpop.f32.mrb[0].mxu0
    %726 = vdwg.mxu0
    %v727 = vld [vmem:[%s8] sm:$0xff]
    %v729 = vsel %vm406, %v651, 0
    %v732 = vsel %vm406, %v724, 0
    %734 = vmatprep.subr.mxu0 0.0
    %735 = vmatpush1.msra.mxu0 %v727
    %736 = vmatprep.subr.mxu0 0.0
    %737 = vmatpush1.msra.mxu0 0.0
    %738 = vmatprep.subr.mxu0 0.0
    %739 = vmatpush1.msra.mxu0 0.0
    %740 = vmatprep.subr.mxu0 0.0
    %741 = vmatpush1.msra.mxu0 0.0
    %742 = vmatprep.subr.mxu0 0.0
    %743 = vmatpush1.msra.mxu0 0.0
    %744 = vmatprep.subr.mxu0 0.0
    %745 = vmatpush1.msra.mxu0 0.0
    %746 = vmatprep.subr.mxu0 0.0
    %747 = vmatpush1.msra.mxu0 0.0
    %748 = vmatprep.subr.mxu0 0.0
    %749 = vmatpush1.msra.mxu0 0.0
    %750 = vmatprep.subr.mxu0 0.0
    %751 = vmatpush1.msra.mxu0 0.0
    %752 = vmatprep.subr.mxu0 0.0
    %753 = vmatpush1.msra.mxu0 0.0
    %754 = vmatprep.subr.mxu0 0.0
    %755 = vmatpush1.msra.mxu0 0.0
    %756 = vmatprep.subr.mxu0 0.0
    %757 = vmatpush1.msra.mxu0 0.0
    %758 = vmatprep.subr.mxu0 0.0
    %759 = vmatpush1.msra.mxu0 0.0
    %760 = vmatprep.subr.mxu0 0.0
    %761 = vmatpush1.msra.mxu0 0.0
    %762 = vmatprep.subr.mxu0 0.0
    %763 = vmatpush1.msra.mxu0 0.0
    %764 = vmatprep.subr.mxu0 0.0
    %765 = vmatpush1.msra.mxu0 0.0
    %766 = vmatprep.subr.mxu0 0.0
    %767 = vmatpush1.msra.mxu0 0.0
    %768 = vmatprep.subr.mxu0 0.0
    %769 = vmatpush1.msra.mxu0 0.0
    %770 = vmatprep.subr.mxu0 0.0
    %771 = vmatpush1.msra.mxu0 0.0
    %772 = vmatprep.subr.mxu0 0.0
    %773 = vmatpush1.msra.mxu0 0.0
    %774 = vmatprep.subr.mxu0 0.0
    %775 = vmatpush1.msra.mxu0 0.0
    %776 = vmatprep.subr.mxu0 0.0
    %777 = vmatpush1.msra.mxu0 0.0
    %778 = vmatprep.subr.mxu0 0.0
    %779 = vmatpush1.msra.mxu0 0.0
    %780 = vmatprep.subr.mxu0 0.0
    %781 = vmatpush1.msra.mxu0 0.0
    %782 = vmatprep.subr.mxu0 0.0
    %783 = vmatpush1.msra.mxu0 0.0
    %784 = vmatprep.subr.mxu0 0.0
    %785 = vmatpush1.msra.mxu0 0.0
    %786 = vmatprep.subr.mxu0 0.0
    %787 = vmatpush1.msra.mxu0 0.0
    %788 = vmatprep.subr.mxu0 0.0
    %789 = vmatpush1.msra.mxu0 0.0
    %790 = vmatprep.subr.mxu0 0.0
    %791 = vmatpush1.msra.mxu0 0.0
    %792 = vmatprep.subr.mxu0 0.0
    %793 = vmatpush1.msra.mxu0 0.0
    %794 = vmatprep.subr.mxu0 0.0
    %795 = vmatpush1.msra.mxu0 0.0
    %796 = vmatprep.subr.mxu0 0.0
    %797 = vmatpush1.msra.mxu0 0.0
    %798 = vmatprep.mubr.f32.mxu0 0.0
    %799 = vmatmul.mubr.f32.gmra.mrb[0].mxu0 %v729
    %v800 = vpop.f32.mrb[0].mxu0
    %v801 = vadd.f32 0.0, %v800
    %v802 = vpop.f32.mrb[0].mxu0
    %803 = vmatprep.mubr.f32.mxu0 0.0
    %804 = vmatmul.mubr.f32.gmra.mrb[0].mxu0 %v732
    %v805 = vpop.f32.mrb[0].mxu0
    %v806 = vadd.f32 0.0, %v805
    %v807 = vpop.f32.mrb[0].mxu0
    %808 = vdwg.mxu0
    %v809 = vadd.f32 %v128, %v801
    %v810 = vadd.f32 %v129, %v806
    %s811 = scalar_lea.vmem %s2, 32
    %v812 = vld [vmem:[%s811] sm:$0xff]
    %v813 = vld [vmem:[%s811 + $0x8] sm:$0xff]
    %v814 = vld [vmem:[%s811 + $0x10] sm:$0xff]
    %v815 = vld [vmem:[%s811 + $0x18] sm:$0xff]
    %s816 = scalar_lea.vmem %s3, 1
    %v817 = vld [vmem:[%s816] sm:$0x1]
    %v819 = vlaneseq
    %v820 = vshrl.u32 %v819, 7
    %v821 = vsub.s32 0, %v820
    %v822 = vrot.slane %v817, %v821
    %824 = vmatprep.subr.mxu0 0.0
    %825 = vmatpush1.msra.mxu0 %v812
    %826 = vmatprep.subr.mxu0 0.0
    %827 = vmatpush1.msra.mxu0 %v813
    %828 = vmatprep.subr.mxu0 0.0
    %829 = vmatpush1.msra.mxu0 %v814
    %830 = vmatprep.subr.mxu0 0.0
    %831 = vmatpush1.msra.mxu0 %v815
    %832 = vmatprep.subr.mxu0 0.0
    %833 = vmatpush1.msra.mxu0 0.0
    %834 = vmatprep.subr.mxu0 0.0
    %835 = vmatpush1.msra.mxu0 0.0
    %836 = vmatprep.subr.mxu0 0.0
    %837 = vmatpush1.msra.mxu0 0.0
    %838 = vmatprep.subr.mxu0 0.0
    %839 = vmatpush1.msra.mxu0 0.0
    %840 = vmatprep.subr.mxu0 0.0
    %841 = vmatpush1.msra.mxu0 0.0
    %842 = vmatprep.subr.mxu0 0.0
    %843 = vmatpush1.msra.mxu0 0.0
    %844 = vmatprep.subr.mxu0 0.0
    %845 = vmatpush1.msra.mxu0 0.0
    %846 = vmatprep.subr.mxu0 0.0
    %847 = vmatpush1.msra.mxu0 0.0
    %848 = vmatprep.subr.mxu0 0.0
    %849 = vmatpush1.msra.mxu0 0.0
    %850 = vmatprep.subr.mxu0 0.0
    %851 = vmatpush1.msra.mxu0 0.0
    %852 = vmatprep.subr.mxu0 0.0
    %853 = vmatpush1.msra.mxu0 0.0
    %854 = vmatprep.subr.mxu0 0.0
    %855 = vmatpush1.msra.mxu0 0.0
    %856 = vmatprep.subr.mxu0 0.0
    %857 = vmatpush1.msra.mxu0 0.0
    %858 = vmatprep.subr.mxu0 0.0
    %859 = vmatpush1.msra.mxu0 0.0
    %860 = vmatprep.subr.mxu0 0.0
    %861 = vmatpush1.msra.mxu0 0.0
    %862 = vmatprep.subr.mxu0 0.0
    %863 = vmatpush1.msra.mxu0 0.0
    %864 = vmatprep.subr.mxu0 0.0
    %865 = vmatpush1.msra.mxu0 0.0
    %866 = vmatprep.subr.mxu0 0.0
    %867 = vmatpush1.msra.mxu0 0.0
    %868 = vmatprep.subr.mxu0 0.0
    %869 = vmatpush1.msra.mxu0 0.0
    %870 = vmatprep.subr.mxu0 0.0
    %871 = vmatpush1.msra.mxu0 0.0
    %872 = vmatprep.subr.mxu0 0.0
    %873 = vmatpush1.msra.mxu0 0.0
    %874 = vmatprep.subr.mxu0 0.0
    %875 = vmatpush1.msra.mxu0 0.0
    %876 = vmatprep.subr.mxu0 0.0
    %877 = vmatpush1.msra.mxu0 0.0
    %878 = vmatprep.subr.mxu0 0.0
    %879 = vmatpush1.msra.mxu0 0.0
    %880 = vmatprep.subr.mxu0 0.0
    %881 = vmatpush1.msra.mxu0 0.0
    %882 = vmatprep.subr.mxu0 0.0
    %883 = vmatpush1.msra.mxu0 0.0
    %884 = vmatprep.subr.mxu0 0.0
    %885 = vmatpush1.msra.mxu0 0.0
    %886 = vmatprep.subr.mxu0 0.0
    %887 = vmatpush1.msra.mxu0 0.0
    %888 = vmatprep.mubr.f32.mxu0 0.0
    %889 = vmatmul.mubr.f32.gmra.mrb[0].mxu0 %v142
    %v890 = vpop.f32.mrb[0].mxu0
    %v891 = vadd.f32 %v822, %v890
    %v892 = vpop.f32.mrb[0].mxu0
    %893 = vmatprep.mubr.f32.mxu0 0.0
    %894 = vmatmul.mubr.f32.gmra.mrb[0].mxu0 %v145
    %v895 = vpop.f32.mrb[0].mxu0
    %v896 = vadd.f32 %v822, %v895
    %v897 = vpop.f32.mrb[0].mxu0
    %898 = vdwg.mxu0
    %s899 = scalar_lea.vmem %s4, 32
    %v900 = vld [vmem:[%s899] sm:$0xff]
    %v901 = vld [vmem:[%s899 + $0x8] sm:$0xff]
    %v902 = vld [vmem:[%s899 + $0x10] sm:$0xff]
    %v903 = vld [vmem:[%s899 + $0x18] sm:$0xff]
    %s904 = scalar_lea.vmem %s5, 1
    %v905 = vld [vmem:[%s904] sm:$0x1]
    %v907 = vlaneseq
    %v908 = vshrl.u32 %v907, 7
    %v909 = vsub.s32 0, %v908
    %v910 = vrot.slane %v905, %v909
    %912 = vmatprep.subr.mxu0 0.0
    %913 = vmatpush1.msra.mxu0 %v900
    %914 = vmatprep.subr.mxu0 0.0
    %915 = vmatpush1.msra.mxu0 %v901
    %916 = vmatprep.subr.mxu0 0.0
    %917 = vmatpush1.msra.mxu0 %v902
    %918 = vmatprep.subr.mxu0 0.0
    %919 = vmatpush1.msra.mxu0 %v903
    %920 = vmatprep.subr.mxu0 0.0
    %921 = vmatpush1.msra.mxu0 0.0
    %922 = vmatprep.subr.mxu0 0.0
    %923 = vmatpush1.msra.mxu0 0.0
    %924 = vmatprep.subr.mxu0 0.0
    %925 = vmatpush1.msra.mxu0 0.0
    %926 = vmatprep.subr.mxu0 0.0
    %927 = vmatpush1.msra.mxu0 0.0
    %928 = vmatprep.subr.mxu0 0.0
    %929 = vmatpush1.msra.mxu0 0.0
    %930 = vmatprep.subr.mxu0 0.0
    %931 = vmatpush1.msra.mxu0 0.0
    %932 = vmatprep.subr.mxu0 0.0
    %933 = vmatpush1.msra.mxu0 0.0
    %934 = vmatprep.subr.mxu0 0.0
    %935 = vmatpush1.msra.mxu0 0.0
    %936 = vmatprep.subr.mxu0 0.0
    %937 = vmatpush1.msra.mxu0 0.0
    %938 = vmatprep.subr.mxu0 0.0
    %939 = vmatpush1.msra.mxu0 0.0
    %940 = vmatprep.subr.mxu0 0.0
    %941 = vmatpush1.msra.mxu0 0.0
    %942 = vmatprep.subr.mxu0 0.0
    %943 = vmatpush1.msra.mxu0 0.0
    %944 = vmatprep.subr.mxu0 0.0
    %945 = vmatpush1.msra.mxu0 0.0
    %946 = vmatprep.subr.mxu0 0.0
    %947 = vmatpush1.msra.mxu0 0.0
    %948 = vmatprep.subr.mxu0 0.0
    %949 = vmatpush1.msra.mxu0 0.0
    %950 = vmatprep.subr.mxu0 0.0
    %951 = vmatpush1.msra.mxu0 0.0
    %952 = vmatprep.subr.mxu0 0.0
    %953 = vmatpush1.msra.mxu0 0.0
    %954 = vmatprep.subr.mxu0 0.0
    %955 = vmatpush1.msra.mxu0 0.0
    %956 = vmatprep.subr.mxu0 0.0
    %957 = vmatpush1.msra.mxu0 0.0
    %958 = vmatprep.subr.mxu0 0.0
    %959 = vmatpush1.msra.mxu0 0.0
    %960 = vmatprep.subr.mxu0 0.0
    %961 = vmatpush1.msra.mxu0 0.0
    %962 = vmatprep.subr.mxu0 0.0
    %963 = vmatpush1.msra.mxu0 0.0
    %964 = vmatprep.subr.mxu0 0.0
    %965 = vmatpush1.msra.mxu0 0.0
    %966 = vmatprep.subr.mxu0 0.0
    %967 = vmatpush1.msra.mxu0 0.0
    %968 = vmatprep.subr.mxu0 0.0
    %969 = vmatpush1.msra.mxu0 0.0
    %970 = vmatprep.subr.mxu0 0.0
    %971 = vmatpush1.msra.mxu0 0.0
    %972 = vmatprep.subr.mxu0 0.0
    %973 = vmatpush1.msra.mxu0 0.0
    %974 = vmatprep.subr.mxu0 0.0
    %975 = vmatpush1.msra.mxu0 0.0
    %976 = vmatprep.mubr.f32.mxu0 0.0
    %977 = vmatmul.mubr.f32.gmra.mrb[0].mxu0 %v142
    %v978 = vpop.f32.mrb[0].mxu0
    %v979 = vadd.f32 %v910, %v978
    %v980 = vpop.f32.mrb[0].mxu0
    %981 = vmatprep.mubr.f32.mxu0 0.0
    %982 = vmatmul.mubr.f32.gmra.mrb[0].mxu0 %v145
    %v983 = vpop.f32.mrb[0].mxu0
    %v984 = vadd.f32 %v910, %v983
    %v985 = vpop.f32.mrb[0].mxu0
    %986 = vdwg.mxu0
    %s987 = scalar_lea.vmem %s6, 32
    %v988 = vld [vmem:[%s987] sm:$0xff]
    %v989 = vld [vmem:[%s987 + $0x8] sm:$0xff]
    %v990 = vld [vmem:[%s987 + $0x10] sm:$0xff]
    %v991 = vld [vmem:[%s987 + $0x18] sm:$0xff]
    %s992 = scalar_lea.vmem %s7, 1
    %v993 = vld [vmem:[%s992] sm:$0x1]
    %v995 = vlaneseq
    %v996 = vshrl.u32 %v995, 7
    %v997 = vsub.s32 0, %v996
    %v998 = vrot.slane %v993, %v997
    %1000 = vmatprep.subr.mxu0 0.0
    %1001 = vmatpush1.msra.mxu0 %v988
    %1002 = vmatprep.subr.mxu0 0.0
    %1003 = vmatpush1.msra.mxu0 %v989
    %1004 = vmatprep.subr.mxu0 0.0
    %1005 = vmatpush1.msra.mxu0 %v990
    %1006 = vmatprep.subr.mxu0 0.0
    %1007 = vmatpush1.msra.mxu0 %v991
    %1008 = vmatprep.subr.mxu0 0.0
    %1009 = vmatpush1.msra.mxu0 0.0
    %1010 = vmatprep.subr.mxu0 0.0
    %1011 = vmatpush1.msra.mxu0 0.0
    %1012 = vmatprep.subr.mxu0 0.0
    %1013 = vmatpush1.msra.mxu0 0.0
    %1014 = vmatprep.subr.mxu0 0.0
    %1015 = vmatpush1.msra.mxu0 0.0
    %1016 = vmatprep.subr.mxu0 0.0
    %1017 = vmatpush1.msra.mxu0 0.0
    %1018 = vmatprep.subr.mxu0 0.0
    %1019 = vmatpush1.msra.mxu0 0.0
    %1020 = vmatprep.subr.mxu0 0.0
    %1021 = vmatpush1.msra.mxu0 0.0
    %1022 = vmatprep.subr.mxu0 0.0
    %1023 = vmatpush1.msra.mxu0 0.0
    %1024 = vmatprep.subr.mxu0 0.0
    %1025 = vmatpush1.msra.mxu0 0.0
    %1026 = vmatprep.subr.mxu0 0.0
    %1027 = vmatpush1.msra.mxu0 0.0
    %1028 = vmatprep.subr.mxu0 0.0
    %1029 = vmatpush1.msra.mxu0 0.0
    %1030 = vmatprep.subr.mxu0 0.0
    %1031 = vmatpush1.msra.mxu0 0.0
    %1032 = vmatprep.subr.mxu0 0.0
    %1033 = vmatpush1.msra.mxu0 0.0
    %1034 = vmatprep.subr.mxu0 0.0
    %1035 = vmatpush1.msra.mxu0 0.0
    %1036 = vmatprep.subr.mxu0 0.0
    %1037 = vmatpush1.msra.mxu0 0.0
    %1038 = vmatprep.subr.mxu0 0.0
    %1039 = vmatpush1.msra.mxu0 0.0
    %1040 = vmatprep.subr.mxu0 0.0
    %1041 = vmatpush1.msra.mxu0 0.0
    %1042 = vmatprep.subr.mxu0 0.0
    %1043 = vmatpush1.msra.mxu0 0.0
    %1044 = vmatprep.subr.mxu0 0.0
    %1045 = vmatpush1.msra.mxu0 0.0
    %1046 = vmatprep.subr.mxu0 0.0
    %1047 = vmatpush1.msra.mxu0 0.0
    %1048 = vmatprep.subr.mxu0 0.0
    %1049 = vmatpush1.msra.mxu0 0.0
    %1050 = vmatprep.subr.mxu0 0.0
    %1051 = vmatpush1.msra.mxu0 0.0
    %1052 = vmatprep.subr.mxu0 0.0
    %1053 = vmatpush1.msra.mxu0 0.0
    %1054 = vmatprep.subr.mxu0 0.0
    %1055 = vmatpush1.msra.mxu0 0.0
    %1056 = vmatprep.subr.mxu0 0.0
    %1057 = vmatpush1.msra.mxu0 0.0
    %1058 = vmatprep.subr.mxu0 0.0
    %1059 = vmatpush1.msra.mxu0 0.0
    %1060 = vmatprep.subr.mxu0 0.0
    %1061 = vmatpush1.msra.mxu0 0.0
    %1062 = vmatprep.subr.mxu0 0.0
    %1063 = vmatpush1.msra.mxu0 0.0
    %1064 = vmatprep.mubr.f32.mxu0 0.0
    %1065 = vmatmul.mubr.f32.gmra.mrb[0].mxu0 %v142
    %v1066 = vpop.f32.mrb[0].mxu0
    %v1067 = vadd.f32 %v998, %v1066
    %v1068 = vpop.f32.mrb[0].mxu0
    %1069 = vmatprep.mubr.f32.mxu0 0.0
    %1070 = vmatmul.mubr.f32.gmra.mrb[0].mxu0 %v145
    %v1071 = vpop.f32.mrb[0].mxu0
    %v1072 = vadd.f32 %v998, %v1071
    %v1073 = vpop.f32.mrb[0].mxu0
    %1074 = vdwg.mxu0
    %v1076 = vsel %vm406, %v891, 0
    %v1079 = vsel %vm406, %v979, 0
    %1081 = vmatprep.subr.mxu0 0.0
    %1082 = vmatpush1.xpose.msra.mxu0 %v1079
    %1083 = vmatprep.subr.mxu0 0.0
    %1084 = vmatpush1.xpose.msra.mxu0 0.0
    %1085 = vmatprep.subr.mxu0 0.0
    %1086 = vmatpush1.xpose.msra.mxu0 0.0
    %1087 = vmatprep.subr.mxu0 0.0
    %1088 = vmatpush1.xpose.msra.mxu0 0.0
    %1089 = vmatprep.subr.mxu0 0.0
    %1090 = vmatpush1.xpose.msra.mxu0 0.0
    %1091 = vmatprep.subr.mxu0 0.0
    %1092 = vmatpush1.xpose.msra.mxu0 0.0
    %1093 = vmatprep.subr.mxu0 0.0
    %1094 = vmatpush1.xpose.msra.mxu0 0.0
    %1095 = vmatprep.subr.mxu0 0.0
    %1096 = vmatpush1.xpose.msra.mxu0 0.0
    %1097 = vmatprep.subr.mxu0 0.0
    %1098 = vmatpush1.xpose.msra.mxu0 0.0
    %1099 = vmatprep.subr.mxu0 0.0
    %1100 = vmatpush1.xpose.msra.mxu0 0.0
    %1101 = vmatprep.subr.mxu0 0.0
    %1102 = vmatpush1.xpose.msra.mxu0 0.0
    %1103 = vmatprep.subr.mxu0 0.0
    %1104 = vmatpush1.xpose.msra.mxu0 0.0
    %1105 = vmatprep.subr.mxu0 0.0
    %1106 = vmatpush1.xpose.msra.mxu0 0.0
    %1107 = vmatprep.subr.mxu0 0.0
    %1108 = vmatpush1.xpose.msra.mxu0 0.0
    %1109 = vmatprep.subr.mxu0 0.0
    %1110 = vmatpush1.xpose.msra.mxu0 0.0
    %1111 = vmatprep.subr.mxu0 0.0
    %1112 = vmatpush1.xpose.msra.mxu0 0.0
    %1113 = vmatprep.subr.mxu0 0.0
    %1114 = vmatpush1.xpose.msra.mxu0 0.0
    %1115 = vmatprep.subr.mxu0 0.0
    %1116 = vmatpush1.xpose.msra.mxu0 0.0
    %1117 = vmatprep.subr.mxu0 0.0
    %1118 = vmatpush1.xpose.msra.mxu0 0.0
    %1119 = vmatprep.subr.mxu0 0.0
    %1120 = vmatpush1.xpose.msra.mxu0 0.0
    %1121 = vmatprep.subr.mxu0 0.0
    %1122 = vmatpush1.xpose.msra.mxu0 0.0
    %1123 = vmatprep.subr.mxu0 0.0
    %1124 = vmatpush1.xpose.msra.mxu0 0.0
    %1125 = vmatprep.subr.mxu0 0.0
    %1126 = vmatpush1.xpose.msra.mxu0 0.0
    %1127 = vmatprep.subr.mxu0 0.0
    %1128 = vmatpush1.xpose.msra.mxu0 0.0
    %1129 = vmatprep.subr.mxu0 0.0
    %1130 = vmatpush1.xpose.msra.mxu0 0.0
    %1131 = vmatprep.subr.mxu0 0.0
    %1132 = vmatpush1.xpose.msra.mxu0 0.0
    %1133 = vmatprep.subr.mxu0 0.0
    %1134 = vmatpush1.xpose.msra.mxu0 0.0
    %1135 = vmatprep.subr.mxu0 0.0
    %1136 = vmatpush1.xpose.msra.mxu0 0.0
    %1137 = vmatprep.subr.mxu0 0.0
    %1138 = vmatpush1.xpose.msra.mxu0 0.0
    %1139 = vmatprep.subr.mxu0 0.0
    %1140 = vmatpush1.xpose.msra.mxu0 0.0
    %1141 = vmatprep.subr.mxu0 0.0
    %1142 = vmatpush1.xpose.msra.mxu0 0.0
    %1143 = vmatprep.subr.mxu0 0.0
    %1144 = vmatpush1.xpose.msra.mxu0 0.0
    %1145 = vmatprep.mubr.f32.mxu0 0.0
    %1146 = vmatmul.mubr.f32.gmra.mrb[0].mxu0 %v1076
    %v1147 = vpop.f32.mrb[0].mxu0
    %v1148 = vadd.f32 %v399, %v1147
    %v1149 = vpop.f32.mrb[0].mxu0
    %1150 = vdwg.mxu0
    %v1152 = vsel %vm406, %v896, 0
    %v1155 = vsel %vm406, %v984, 0
    %1157 = vmatprep.subr.mxu0 0.0
    %1158 = vmatpush1.xpose.msra.mxu0 %v1155
    %1159 = vmatprep.subr.mxu0 0.0
    %1160 = vmatpush1.xpose.msra.mxu0 0.0
    %1161 = vmatprep.subr.mxu0 0.0
    %1162 = vmatpush1.xpose.msra.mxu0 0.0
    %1163 = vmatprep.subr.mxu0 0.0
    %1164 = vmatpush1.xpose.msra.mxu0 0.0
    %1165 = vmatprep.subr.mxu0 0.0
    %1166 = vmatpush1.xpose.msra.mxu0 0.0
    %1167 = vmatprep.subr.mxu0 0.0
    %1168 = vmatpush1.xpose.msra.mxu0 0.0
    %1169 = vmatprep.subr.mxu0 0.0
    %1170 = vmatpush1.xpose.msra.mxu0 0.0
    %1171 = vmatprep.subr.mxu0 0.0
    %1172 = vmatpush1.xpose.msra.mxu0 0.0
    %1173 = vmatprep.subr.mxu0 0.0
    %1174 = vmatpush1.xpose.msra.mxu0 0.0
    %1175 = vmatprep.subr.mxu0 0.0
    %1176 = vmatpush1.xpose.msra.mxu0 0.0
    %1177 = vmatprep.subr.mxu0 0.0
    %1178 = vmatpush1.xpose.msra.mxu0 0.0
    %1179 = vmatprep.subr.mxu0 0.0
    %1180 = vmatpush1.xpose.msra.mxu0 0.0
    %1181 = vmatprep.subr.mxu0 0.0
    %1182 = vmatpush1.xpose.msra.mxu0 0.0
    %1183 = vmatprep.subr.mxu0 0.0
    %1184 = vmatpush1.xpose.msra.mxu0 0.0
    %1185 = vmatprep.subr.mxu0 0.0
    %1186 = vmatpush1.xpose.msra.mxu0 0.0
    %1187 = vmatprep.subr.mxu0 0.0
    %1188 = vmatpush1.xpose.msra.mxu0 0.0
    %1189 = vmatprep.subr.mxu0 0.0
    %1190 = vmatpush1.xpose.msra.mxu0 0.0
    %1191 = vmatprep.subr.mxu0 0.0
    %1192 = vmatpush1.xpose.msra.mxu0 0.0
    %1193 = vmatprep.subr.mxu0 0.0
    %1194 = vmatpush1.xpose.msra.mxu0 0.0
    %1195 = vmatprep.subr.mxu0 0.0
    %1196 = vmatpush1.xpose.msra.mxu0 0.0
    %1197 = vmatprep.subr.mxu0 0.0
    %1198 = vmatpush1.xpose.msra.mxu0 0.0
    %1199 = vmatprep.subr.mxu0 0.0
    %1200 = vmatpush1.xpose.msra.mxu0 0.0
    %1201 = vmatprep.subr.mxu0 0.0
    %1202 = vmatpush1.xpose.msra.mxu0 0.0
    %1203 = vmatprep.subr.mxu0 0.0
    %1204 = vmatpush1.xpose.msra.mxu0 0.0
    %1205 = vmatprep.subr.mxu0 0.0
    %1206 = vmatpush1.xpose.msra.mxu0 0.0
    %1207 = vmatprep.subr.mxu0 0.0
    %1208 = vmatpush1.xpose.msra.mxu0 0.0
    %1209 = vmatprep.subr.mxu0 0.0
    %1210 = vmatpush1.xpose.msra.mxu0 0.0
    %1211 = vmatprep.subr.mxu0 0.0
    %1212 = vmatpush1.xpose.msra.mxu0 0.0
    %1213 = vmatprep.subr.mxu0 0.0
    %1214 = vmatpush1.xpose.msra.mxu0 0.0
    %1215 = vmatprep.subr.mxu0 0.0
    %1216 = vmatpush1.xpose.msra.mxu0 0.0
    %1217 = vmatprep.subr.mxu0 0.0
    %1218 = vmatpush1.xpose.msra.mxu0 0.0
    %1219 = vmatprep.subr.mxu0 0.0
    %1220 = vmatpush1.xpose.msra.mxu0 0.0
    %1221 = vmatprep.mubr.f32.mxu0 0.0
    %1222 = vmatmul.mubr.f32.gmra.mrb[0].mxu0 %v1152
    %v1223 = vpop.f32.mrb[0].mxu0
    %v1224 = vadd.f32 %v403, %v1223
    %v1225 = vpop.f32.mrb[0].mxu0
    %1226 = vdwg.mxu0
    %v1227 = vsel %vm406, %v1148, -inf
    %1228 = vmax.xlane.f32.xlu0 %v1227
    %v1229 = vpop.xlane.xlu0 %1228
    %v1230 = vsel %vm406, %v1224, -inf
    %1231 = vmax.xlane.f32.xlu0 %v1230
    %v1232 = vpop.xlane.xlu0 %1231
    %v1233 = vsub.f32 %v1148, %v1229
    %v1234 = vsub.f32 %v1224, %v1232
    %v1235 = vmul.f32 %v1233, 1.442695
    %v1236 = vpow.pop %v1235
    %v1237 = vmul.f32 %v1234, 1.442695
    %v1238 = vpow.pop %v1237
    %v1239 = vsel %vm406, %v1236, 0.0
    %1240 = vadd.xlane.f32.xlu0 %v1239
    %v1241 = vpop.xlane.xlu0 %1240
    %v1242 = vsel %vm406, %v1238, 0.0
    %1243 = vadd.xlane.f32.xlu0 %v1242
    %v1244 = vpop.xlane.xlu0 %1243
    %v1245 = vrcp.pop %v1241
    %v1246 = vrcp.pop %v1244
    %v1247 = vmul.f32 %v1236, %v1245
    %v1248 = vmul.f32 %v1238, %v1246
    %v1250 = vsel %vm406, %v1247, 0
    %1252 = vmatprep.subr.mxu0 0.0
    %1253 = vmatpush1.msra.mxu0 %v1067
    %1254 = vmatprep.subr.mxu0 0.0
    %1255 = vmatpush1.msra.mxu0 0.0
    %1256 = vmatprep.subr.mxu0 0.0
    %1257 = vmatpush1.msra.mxu0 0.0
    %1258 = vmatprep.subr.mxu0 0.0
    %1259 = vmatpush1.msra.mxu0 0.0
    %1260 = vmatprep.subr.mxu0 0.0
    %1261 = vmatpush1.msra.mxu0 0.0
    %1262 = vmatprep.subr.mxu0 0.0
    %1263 = vmatpush1.msra.mxu0 0.0
    %1264 = vmatprep.subr.mxu0 0.0
    %1265 = vmatpush1.msra.mxu0 0.0
    %1266 = vmatprep.subr.mxu0 0.0
    %1267 = vmatpush1.msra.mxu0 0.0
    %1268 = vmatprep.subr.mxu0 0.0
    %1269 = vmatpush1.msra.mxu0 0.0
    %1270 = vmatprep.subr.mxu0 0.0
    %1271 = vmatpush1.msra.mxu0 0.0
    %1272 = vmatprep.subr.mxu0 0.0
    %1273 = vmatpush1.msra.mxu0 0.0
    %1274 = vmatprep.subr.mxu0 0.0
    %1275 = vmatpush1.msra.mxu0 0.0
    %1276 = vmatprep.subr.mxu0 0.0
    %1277 = vmatpush1.msra.mxu0 0.0
    %1278 = vmatprep.subr.mxu0 0.0
    %1279 = vmatpush1.msra.mxu0 0.0
    %1280 = vmatprep.subr.mxu0 0.0
    %1281 = vmatpush1.msra.mxu0 0.0
    %1282 = vmatprep.subr.mxu0 0.0
    %1283 = vmatpush1.msra.mxu0 0.0
    %1284 = vmatprep.subr.mxu0 0.0
    %1285 = vmatpush1.msra.mxu0 0.0
    %1286 = vmatprep.subr.mxu0 0.0
    %1287 = vmatpush1.msra.mxu0 0.0
    %1288 = vmatprep.subr.mxu0 0.0
    %1289 = vmatpush1.msra.mxu0 0.0
    %1290 = vmatprep.subr.mxu0 0.0
    %1291 = vmatpush1.msra.mxu0 0.0
    %1292 = vmatprep.subr.mxu0 0.0
    %1293 = vmatpush1.msra.mxu0 0.0
    %1294 = vmatprep.subr.mxu0 0.0
    %1295 = vmatpush1.msra.mxu0 0.0
    %1296 = vmatprep.subr.mxu0 0.0
    %1297 = vmatpush1.msra.mxu0 0.0
    %1298 = vmatprep.subr.mxu0 0.0
    %1299 = vmatpush1.msra.mxu0 0.0
    %1300 = vmatprep.subr.mxu0 0.0
    %1301 = vmatpush1.msra.mxu0 0.0
    %1302 = vmatprep.subr.mxu0 0.0
    %1303 = vmatpush1.msra.mxu0 0.0
    %1304 = vmatprep.subr.mxu0 0.0
    %1305 = vmatpush1.msra.mxu0 0.0
    %1306 = vmatprep.subr.mxu0 0.0
    %1307 = vmatpush1.msra.mxu0 0.0
    %1308 = vmatprep.subr.mxu0 0.0
    %1309 = vmatpush1.msra.mxu0 0.0
    %1310 = vmatprep.subr.mxu0 0.0
    %1311 = vmatpush1.msra.mxu0 0.0
    %1312 = vmatprep.subr.mxu0 0.0
    %1313 = vmatpush1.msra.mxu0 0.0
    %1314 = vmatprep.subr.mxu0 0.0
    %1315 = vmatpush1.msra.mxu0 0.0
    %1316 = vmatprep.mubr.f32.mxu0 0.0
    %1317 = vmatmul.mubr.f32.gmra.mrb[0].mxu0 %v1250
    %v1318 = vpop.f32.mrb[0].mxu0
    %v1319 = vadd.f32 0.0, %v1318
    %v1320 = vpop.f32.mrb[0].mxu0
    %1321 = vdwg.mxu0
    %v1323 = vsel %vm406, %v1248, 0
    %1325 = vmatprep.subr.mxu0 0.0
    %1326 = vmatpush1.msra.mxu0 %v1072
    %1327 = vmatprep.subr.mxu0 0.0
    %1328 = vmatpush1.msra.mxu0 0.0
    %1329 = vmatprep.subr.mxu0 0.0
    %1330 = vmatpush1.msra.mxu0 0.0
    %1331 = vmatprep.subr.mxu0 0.0
    %1332 = vmatpush1.msra.mxu0 0.0
    %1333 = vmatprep.subr.mxu0 0.0
    %1334 = vmatpush1.msra.mxu0 0.0
    %1335 = vmatprep.subr.mxu0 0.0
    %1336 = vmatpush1.msra.mxu0 0.0
    %1337 = vmatprep.subr.mxu0 0.0
    %1338 = vmatpush1.msra.mxu0 0.0
    %1339 = vmatprep.subr.mxu0 0.0
    %1340 = vmatpush1.msra.mxu0 0.0
    %1341 = vmatprep.subr.mxu0 0.0
    %1342 = vmatpush1.msra.mxu0 0.0
    %1343 = vmatprep.subr.mxu0 0.0
    %1344 = vmatpush1.msra.mxu0 0.0
    %1345 = vmatprep.subr.mxu0 0.0
    %1346 = vmatpush1.msra.mxu0 0.0
    %1347 = vmatprep.subr.mxu0 0.0
    %1348 = vmatpush1.msra.mxu0 0.0
    %1349 = vmatprep.subr.mxu0 0.0
    %1350 = vmatpush1.msra.mxu0 0.0
    %1351 = vmatprep.subr.mxu0 0.0
    %1352 = vmatpush1.msra.mxu0 0.0
    %1353 = vmatprep.subr.mxu0 0.0
    %1354 = vmatpush1.msra.mxu0 0.0
    %1355 = vmatprep.subr.mxu0 0.0
    %1356 = vmatpush1.msra.mxu0 0.0
    %1357 = vmatprep.subr.mxu0 0.0
    %1358 = vmatpush1.msra.mxu0 0.0
    %1359 = vmatprep.subr.mxu0 0.0
    %1360 = vmatpush1.msra.mxu0 0.0
    %1361 = vmatprep.subr.mxu0 0.0
    %1362 = vmatpush1.msra.mxu0 0.0
    %1363 = vmatprep.subr.mxu0 0.0
    %1364 = vmatpush1.msra.mxu0 0.0
    %1365 = vmatprep.subr.mxu0 0.0
    %1366 = vmatpush1.msra.mxu0 0.0
    %1367 = vmatprep.subr.mxu0 0.0
    %1368 = vmatpush1.msra.mxu0 0.0
    %1369 = vmatprep.subr.mxu0 0.0
    %1370 = vmatpush1.msra.mxu0 0.0
    %1371 = vmatprep.subr.mxu0 0.0
    %1372 = vmatpush1.msra.mxu0 0.0
    %1373 = vmatprep.subr.mxu0 0.0
    %1374 = vmatpush1.msra.mxu0 0.0
    %1375 = vmatprep.subr.mxu0 0.0
    %1376 = vmatpush1.msra.mxu0 0.0
    %1377 = vmatprep.subr.mxu0 0.0
    %1378 = vmatpush1.msra.mxu0 0.0
    %1379 = vmatprep.subr.mxu0 0.0
    %1380 = vmatpush1.msra.mxu0 0.0
    %1381 = vmatprep.subr.mxu0 0.0
    %1382 = vmatpush1.msra.mxu0 0.0
    %1383 = vmatprep.subr.mxu0 0.0
    %1384 = vmatpush1.msra.mxu0 0.0
    %1385 = vmatprep.subr.mxu0 0.0
    %1386 = vmatpush1.msra.mxu0 0.0
    %1387 = vmatprep.subr.mxu0 0.0
    %1388 = vmatpush1.msra.mxu0 0.0
    %1389 = vmatprep.mubr.f32.mxu0 0.0
    %1390 = vmatmul.mubr.f32.gmra.mrb[0].mxu0 %v1323
    %v1391 = vpop.f32.mrb[0].mxu0
    %v1392 = vadd.f32 0.0, %v1391
    %v1393 = vpop.f32.mrb[0].mxu0
    %1394 = vdwg.mxu0
    %s1395 = scalar_lea.vmem %s8, 8
    %v1396 = vld [vmem:[%s1395] sm:$0xff]
    %v1398 = vsel %vm406, %v1319, 0
    %v1401 = vsel %vm406, %v1392, 0
    %1403 = vmatprep.subr.mxu0 0.0
    %1404 = vmatpush1.msra.mxu0 %v1396
    %1405 = vmatprep.subr.mxu0 0.0
    %1406 = vmatpush1.msra.mxu0 0.0
    %1407 = vmatprep.subr.mxu0 0.0
    %1408 = vmatpush1.msra.mxu0 0.0
    %1409 = vmatprep.subr.mxu0 0.0
    %1410 = vmatpush1.msra.mxu0 0.0
    %1411 = vmatprep.subr.mxu0 0.0
    %1412 = vmatpush1.msra.mxu0 0.0
    %1413 = vmatprep.subr.mxu0 0.0
    %1414 = vmatpush1.msra.mxu0 0.0
    %1415 = vmatprep.subr.mxu0 0.0
    %1416 = vmatpush1.msra.mxu0 0.0
    %1417 = vmatprep.subr.mxu0 0.0
    %1418 = vmatpush1.msra.mxu0 0.0
    %1419 = vmatprep.subr.mxu0 0.0
    %1420 = vmatpush1.msra.mxu0 0.0
    %1421 = vmatprep.subr.mxu0 0.0
    %1422 = vmatpush1.msra.mxu0 0.0
    %1423 = vmatprep.subr.mxu0 0.0
    %1424 = vmatpush1.msra.mxu0 0.0
    %1425 = vmatprep.subr.mxu0 0.0
    %1426 = vmatpush1.msra.mxu0 0.0
    %1427 = vmatprep.subr.mxu0 0.0
    %1428 = vmatpush1.msra.mxu0 0.0
    %1429 = vmatprep.subr.mxu0 0.0
    %1430 = vmatpush1.msra.mxu0 0.0
    %1431 = vmatprep.subr.mxu0 0.0
    %1432 = vmatpush1.msra.mxu0 0.0
    %1433 = vmatprep.subr.mxu0 0.0
    %1434 = vmatpush1.msra.mxu0 0.0
    %1435 = vmatprep.subr.mxu0 0.0
    %1436 = vmatpush1.msra.mxu0 0.0
    %1437 = vmatprep.subr.mxu0 0.0
    %1438 = vmatpush1.msra.mxu0 0.0
    %1439 = vmatprep.subr.mxu0 0.0
    %1440 = vmatpush1.msra.mxu0 0.0
    %1441 = vmatprep.subr.mxu0 0.0
    %1442 = vmatpush1.msra.mxu0 0.0
    %1443 = vmatprep.subr.mxu0 0.0
    %1444 = vmatpush1.msra.mxu0 0.0
    %1445 = vmatprep.subr.mxu0 0.0
    %1446 = vmatpush1.msra.mxu0 0.0
    %1447 = vmatprep.subr.mxu0 0.0
    %1448 = vmatpush1.msra.mxu0 0.0
    %1449 = vmatprep.subr.mxu0 0.0
    %1450 = vmatpush1.msra.mxu0 0.0
    %1451 = vmatprep.subr.mxu0 0.0
    %1452 = vmatpush1.msra.mxu0 0.0
    %1453 = vmatprep.subr.mxu0 0.0
    %1454 = vmatpush1.msra.mxu0 0.0
    %1455 = vmatprep.subr.mxu0 0.0
    %1456 = vmatpush1.msra.mxu0 0.0
    %1457 = vmatprep.subr.mxu0 0.0
    %1458 = vmatpush1.msra.mxu0 0.0
    %1459 = vmatprep.subr.mxu0 0.0
    %1460 = vmatpush1.msra.mxu0 0.0
    %1461 = vmatprep.subr.mxu0 0.0
    %1462 = vmatpush1.msra.mxu0 0.0
    %1463 = vmatprep.subr.mxu0 0.0
    %1464 = vmatpush1.msra.mxu0 0.0
    %1465 = vmatprep.subr.mxu0 0.0
    %1466 = vmatpush1.msra.mxu0 0.0
    %1467 = vmatprep.mubr.f32.mxu0 0.0
    %1468 = vmatmul.mubr.f32.gmra.mrb[0].mxu0 %v1398
    %v1469 = vpop.f32.mrb[0].mxu0
    %v1470 = vadd.f32 0.0, %v1469
    %v1471 = vpop.f32.mrb[0].mxu0
    %1472 = vmatprep.mubr.f32.mxu0 0.0
    %1473 = vmatmul.mubr.f32.gmra.mrb[0].mxu0 %v1401
    %v1474 = vpop.f32.mrb[0].mxu0
    %v1475 = vadd.f32 0.0, %v1474
    %v1476 = vpop.f32.mrb[0].mxu0
    %1477 = vdwg.mxu0
    %v1478 = vadd.f32 %v809, %v1470
    %v1479 = vadd.f32 %v810, %v1475
    %s1480 = scalar_lea.vmem %s2, 64
    %v1481 = vld [vmem:[%s1480] sm:$0xff]
    %v1482 = vld [vmem:[%s1480 + $0x8] sm:$0xff]
    %v1483 = vld [vmem:[%s1480 + $0x10] sm:$0xff]
    %v1484 = vld [vmem:[%s1480 + $0x18] sm:$0xff]
    %s1485 = scalar_lea.vmem %s3, 2
    %v1486 = vld [vmem:[%s1485] sm:$0x1]
    %v1488 = vlaneseq
    %v1489 = vshrl.u32 %v1488, 7
    %v1490 = vsub.s32 0, %v1489
    %v1491 = vrot.slane %v1486, %v1490
    %1493 = vmatprep.subr.mxu0 0.0
    %1494 = vmatpush1.msra.mxu0 %v1481
    %1495 = vmatprep.subr.mxu0 0.0
    %1496 = vmatpush1.msra.mxu0 %v1482
    %1497 = vmatprep.subr.mxu0 0.0
    %1498 = vmatpush1.msra.mxu0 %v1483
    %1499 = vmatprep.subr.mxu0 0.0
    %1500 = vmatpush1.msra.mxu0 %v1484
    %1501 = vmatprep.subr.mxu0 0.0
    %1502 = vmatpush1.msra.mxu0 0.0
    %1503 = vmatprep.subr.mxu0 0.0
    %1504 = vmatpush1.msra.mxu0 0.0
    %1505 = vmatprep.subr.mxu0 0.0
    %1506 = vmatpush1.msra.mxu0 0.0
    %1507 = vmatprep.subr.mxu0 0.0
    %1508 = vmatpush1.msra.mxu0 0.0
    %1509 = vmatprep.subr.mxu0 0.0
    %1510 = vmatpush1.msra.mxu0 0.0
    %1511 = vmatprep.subr.mxu0 0.0
    %1512 = vmatpush1.msra.mxu0 0.0
    %1513 = vmatprep.subr.mxu0 0.0
    %1514 = vmatpush1.msra.mxu0 0.0
    %1515 = vmatprep.subr.mxu0 0.0
    %1516 = vmatpush1.msra.mxu0 0.0
    %1517 = vmatprep.subr.mxu0 0.0
    %1518 = vmatpush1.msra.mxu0 0.0
    %1519 = vmatprep.subr.mxu0 0.0
    %1520 = vmatpush1.msra.mxu0 0.0
    %1521 = vmatprep.subr.mxu0 0.0
    %1522 = vmatpush1.msra.mxu0 0.0
    %1523 = vmatprep.subr.mxu0 0.0
    %1524 = vmatpush1.msra.mxu0 0.0
    %1525 = vmatprep.subr.mxu0 0.0
    %1526 = vmatpush1.msra.mxu0 0.0
    %1527 = vmatprep.subr.mxu0 0.0
    %1528 = vmatpush1.msra.mxu0 0.0
    %1529 = vmatprep.subr.mxu0 0.0
    %1530 = vmatpush1.msra.mxu0 0.0
    %1531 = vmatprep.subr.mxu0 0.0
    %1532 = vmatpush1.msra.mxu0 0.0
    %1533 = vmatprep.subr.mxu0 0.0
    %1534 = vmatpush1.msra.mxu0 0.0
    %1535 = vmatprep.subr.mxu0 0.0
    %1536 = vmatpush1.msra.mxu0 0.0
    %1537 = vmatprep.subr.mxu0 0.0
    %1538 = vmatpush1.msra.mxu0 0.0
    %1539 = vmatprep.subr.mxu0 0.0
    %1540 = vmatpush1.msra.mxu0 0.0
    %1541 = vmatprep.subr.mxu0 0.0
    %1542 = vmatpush1.msra.mxu0 0.0
    %1543 = vmatprep.subr.mxu0 0.0
    %1544 = vmatpush1.msra.mxu0 0.0
    %1545 = vmatprep.subr.mxu0 0.0
    %1546 = vmatpush1.msra.mxu0 0.0
    %1547 = vmatprep.subr.mxu0 0.0
    %1548 = vmatpush1.msra.mxu0 0.0
    %1549 = vmatprep.subr.mxu0 0.0
    %1550 = vmatpush1.msra.mxu0 0.0
    %1551 = vmatprep.subr.mxu0 0.0
    %1552 = vmatpush1.msra.mxu0 0.0
    %1553 = vmatprep.subr.mxu0 0.0
    %1554 = vmatpush1.msra.mxu0 0.0
    %1555 = vmatprep.subr.mxu0 0.0
    %1556 = vmatpush1.msra.mxu0 0.0
    %1557 = vmatprep.mubr.f32.mxu0 0.0
    %1558 = vmatmul.mubr.f32.gmra.mrb[0].mxu0 %v142
    %v1559 = vpop.f32.mrb[0].mxu0
    %v1560 = vadd.f32 %v1491, %v1559
    %v1561 = vpop.f32.mrb[0].mxu0
    %1562 = vmatprep.mubr.f32.mxu0 0.0
    %1563 = vmatmul.mubr.f32.gmra.mrb[0].mxu0 %v145
    %v1564 = vpop.f32.mrb[0].mxu0
    %v1565 = vadd.f32 %v1491, %v1564
    %v1566 = vpop.f32.mrb[0].mxu0
    %1567 = vdwg.mxu0
    %s1568 = scalar_lea.vmem %s4, 64
    %v1569 = vld [vmem:[%s1568] sm:$0xff]
    %v1570 = vld [vmem:[%s1568 + $0x8] sm:$0xff]
    %v1571 = vld [vmem:[%s1568 + $0x10] sm:$0xff]
    %v1572 = vld [vmem:[%s1568 + $0x18] sm:$0xff]
    %s1573 = scalar_lea.vmem %s5, 2
    %v1574 = vld [vmem:[%s1573] sm:$0x1]
    %v1576 = vlaneseq
    %v1577 = vshrl.u32 %v1576, 7
    %v1578 = vsub.s32 0, %v1577
    %v1579 = vrot.slane %v1574, %v1578
    %1581 = vmatprep.subr.mxu0 0.0
    %1582 = vmatpush1.msra.mxu0 %v1569
    %1583 = vmatprep.subr.mxu0 0.0
    %1584 = vmatpush1.msra.mxu0 %v1570
    %1585 = vmatprep.subr.mxu0 0.0
    %1586 = vmatpush1.msra.mxu0 %v1571
    %1587 = vmatprep.subr.mxu0 0.0
    %1588 = vmatpush1.msra.mxu0 %v1572
    %1589 = vmatprep.subr.mxu0 0.0
    %1590 = vmatpush1.msra.mxu0 0.0
    %1591 = vmatprep.subr.mxu0 0.0
    %1592 = vmatpush1.msra.mxu0 0.0
    %1593 = vmatprep.subr.mxu0 0.0
    %1594 = vmatpush1.msra.mxu0 0.0
    %1595 = vmatprep.subr.mxu0 0.0
    %1596 = vmatpush1.msra.mxu0 0.0
    %1597 = vmatprep.subr.mxu0 0.0
    %1598 = vmatpush1.msra.mxu0 0.0
    %1599 = vmatprep.subr.mxu0 0.0
    %1600 = vmatpush1.msra.mxu0 0.0
    %1601 = vmatprep.subr.mxu0 0.0
    %1602 = vmatpush1.msra.mxu0 0.0
    %1603 = vmatprep.subr.mxu0 0.0
    %1604 = vmatpush1.msra.mxu0 0.0
    %1605 = vmatprep.subr.mxu0 0.0
    %1606 = vmatpush1.msra.mxu0 0.0
    %1607 = vmatprep.subr.mxu0 0.0
    %1608 = vmatpush1.msra.mxu0 0.0
    %1609 = vmatprep.subr.mxu0 0.0
    %1610 = vmatpush1.msra.mxu0 0.0
    %1611 = vmatprep.subr.mxu0 0.0
    %1612 = vmatpush1.msra.mxu0 0.0
    %1613 = vmatprep.subr.mxu0 0.0
    %1614 = vmatpush1.msra.mxu0 0.0
    %1615 = vmatprep.subr.mxu0 0.0
    %1616 = vmatpush1.msra.mxu0 0.0
    %1617 = vmatprep.subr.mxu0 0.0
    %1618 = vmatpush1.msra.mxu0 0.0
    %1619 = vmatprep.subr.mxu0 0.0
    %1620 = vmatpush1.msra.mxu0 0.0
    %1621 = vmatprep.subr.mxu0 0.0
    %1622 = vmatpush1.msra.mxu0 0.0
    %1623 = vmatprep.subr.mxu0 0.0
    %1624 = vmatpush1.msra.mxu0 0.0
    %1625 = vmatprep.subr.mxu0 0.0
    %1626 = vmatpush1.msra.mxu0 0.0
    %1627 = vmatprep.subr.mxu0 0.0
    %1628 = vmatpush1.msra.mxu0 0.0
    %1629 = vmatprep.subr.mxu0 0.0
    %1630 = vmatpush1.msra.mxu0 0.0
    %1631 = vmatprep.subr.mxu0 0.0
    %1632 = vmatpush1.msra.mxu0 0.0
    %1633 = vmatprep.subr.mxu0 0.0
    %1634 = vmatpush1.msra.mxu0 0.0
    %1635 = vmatprep.subr.mxu0 0.0
    %1636 = vmatpush1.msra.mxu0 0.0
    %1637 = vmatprep.subr.mxu0 0.0
    %1638 = vmatpush1.msra.mxu0 0.0
    %1639 = vmatprep.subr.mxu0 0.0
    %1640 = vmatpush1.msra.mxu0 0.0
    %1641 = vmatprep.subr.mxu0 0.0
    %1642 = vmatpush1.msra.mxu0 0.0
    %1643 = vmatprep.subr.mxu0 0.0
    %1644 = vmatpush1.msra.mxu0 0.0
    %1645 = vmatprep.mubr.f32.mxu0 0.0
    %1646 = vmatmul.mubr.f32.gmra.mrb[0].mxu0 %v142
    %v1647 = vpop.f32.mrb[0].mxu0
    %v1648 = vadd.f32 %v1579, %v1647
    %v1649 = vpop.f32.mrb[0].mxu0
    %1650 = vmatprep.mubr.f32.mxu0 0.0
    %1651 = vmatmul.mubr.f32.gmra.mrb[0].mxu0 %v145
    %v1652 = vpop.f32.mrb[0].mxu0
    %v1653 = vadd.f32 %v1579, %v1652
    %v1654 = vpop.f32.mrb[0].mxu0
    %1655 = vdwg.mxu0
    %s1656 = scalar_lea.vmem %s6, 64
    %v1657 = vld [vmem:[%s1656] sm:$0xff]
    %v1658 = vld [vmem:[%s1656 + $0x8] sm:$0xff]
    %v1659 = vld [vmem:[%s1656 + $0x10] sm:$0xff]
    %v1660 = vld [vmem:[%s1656 + $0x18] sm:$0xff]
    %s1661 = scalar_lea.vmem %s7, 2
    %v1662 = vld [vmem:[%s1661] sm:$0x1]
    %v1664 = vlaneseq
    %v1665 = vshrl.u32 %v1664, 7
    %v1666 = vsub.s32 0, %v1665
    %v1667 = vrot.slane %v1662, %v1666
    %1669 = vmatprep.subr.mxu0 0.0
    %1670 = vmatpush1.msra.mxu0 %v1657
    %1671 = vmatprep.subr.mxu0 0.0
    %1672 = vmatpush1.msra.mxu0 %v1658
    %1673 = vmatprep.subr.mxu0 0.0
    %1674 = vmatpush1.msra.mxu0 %v1659
    %1675 = vmatprep.subr.mxu0 0.0
    %1676 = vmatpush1.msra.mxu0 %v1660
    %1677 = vmatprep.subr.mxu0 0.0
    %1678 = vmatpush1.msra.mxu0 0.0
    %1679 = vmatprep.subr.mxu0 0.0
    %1680 = vmatpush1.msra.mxu0 0.0
    %1681 = vmatprep.subr.mxu0 0.0
    %1682 = vmatpush1.msra.mxu0 0.0
    %1683 = vmatprep.subr.mxu0 0.0
    %1684 = vmatpush1.msra.mxu0 0.0
    %1685 = vmatprep.subr.mxu0 0.0
    %1686 = vmatpush1.msra.mxu0 0.0
    %1687 = vmatprep.subr.mxu0 0.0
    %1688 = vmatpush1.msra.mxu0 0.0
    %1689 = vmatprep.subr.mxu0 0.0
    %1690 = vmatpush1.msra.mxu0 0.0
    %1691 = vmatprep.subr.mxu0 0.0
    %1692 = vmatpush1.msra.mxu0 0.0
    %1693 = vmatprep.subr.mxu0 0.0
    %1694 = vmatpush1.msra.mxu0 0.0
    %1695 = vmatprep.subr.mxu0 0.0
    %1696 = vmatpush1.msra.mxu0 0.0
    %1697 = vmatprep.subr.mxu0 0.0
    %1698 = vmatpush1.msra.mxu0 0.0
    %1699 = vmatprep.subr.mxu0 0.0
    %1700 = vmatpush1.msra.mxu0 0.0
    %1701 = vmatprep.subr.mxu0 0.0
    %1702 = vmatpush1.msra.mxu0 0.0
    %1703 = vmatprep.subr.mxu0 0.0
    %1704 = vmatpush1.msra.mxu0 0.0
    %1705 = vmatprep.subr.mxu0 0.0
    %1706 = vmatpush1.msra.mxu0 0.0
    %1707 = vmatprep.subr.mxu0 0.0
    %1708 = vmatpush1.msra.mxu0 0.0
    %1709 = vmatprep.subr.mxu0 0.0
    %1710 = vmatpush1.msra.mxu0 0.0
    %1711 = vmatprep.subr.mxu0 0.0
    %1712 = vmatpush1.msra.mxu0 0.0
    %1713 = vmatprep.subr.mxu0 0.0
    %1714 = vmatpush1.msra.mxu0 0.0
    %1715 = vmatprep.subr.mxu0 0.0
    %1716 = vmatpush1.msra.mxu0 0.0
    %1717 = vmatprep.subr.mxu0 0.0
    %1718 = vmatpush1.msra.mxu0 0.0
    %1719 = vmatprep.subr.mxu0 0.0
    %1720 = vmatpush1.msra.mxu0 0.0
    %1721 = vmatprep.subr.mxu0 0.0
    %1722 = vmatpush1.msra.mxu0 0.0
    %1723 = vmatprep.subr.mxu0 0.0
    %1724 = vmatpush1.msra.mxu0 0.0
    %1725 = vmatprep.subr.mxu0 0.0
    %1726 = vmatpush1.msra.mxu0 0.0
    %1727 = vmatprep.subr.mxu0 0.0
    %1728 = vmatpush1.msra.mxu0 0.0
    %1729 = vmatprep.subr.mxu0 0.0
    %1730 = vmatpush1.msra.mxu0 0.0
    %1731 = vmatprep.subr.mxu0 0.0
    %1732 = vmatpush1.msra.mxu0 0.0
    %1733 = vmatprep.mubr.f32.mxu0 0.0
    %1734 = vmatmul.mubr.f32.gmra.mrb[0].mxu0 %v142
    %v1735 = vpop.f32.mrb[0].mxu0
    %v1736 = vadd.f32 %v1667, %v1735
    %v1737 = vpop.f32.mrb[0].mxu0
    %1738 = vmatprep.mubr.f32.mxu0 0.0
    %1739 = vmatmul.mubr.f32.gmra.mrb[0].mxu0 %v145
    %v1740 = vpop.f32.mrb[0].mxu0
    %v1741 = vadd.f32 %v1667, %v1740
    %v1742 = vpop.f32.mrb[0].mxu0
    %1743 = vdwg.mxu0
    %v1745 = vsel %vm406, %v1560, 0
    %v1748 = vsel %vm406, %v1648, 0
    %1750 = vmatprep.subr.mxu0 0.0
    %1751 = vmatpush1.xpose.msra.mxu0 %v1748
    %1752 = vmatprep.subr.mxu0 0.0
    %1753 = vmatpush1.xpose.msra.mxu0 0.0
    %1754 = vmatprep.subr.mxu0 0.0
    %1755 = vmatpush1.xpose.msra.mxu0 0.0
    %1756 = vmatprep.subr.mxu0 0.0
    %1757 = vmatpush1.xpose.msra.mxu0 0.0
    %1758 = vmatprep.subr.mxu0 0.0
    %1759 = vmatpush1.xpose.msra.mxu0 0.0
    %1760 = vmatprep.subr.mxu0 0.0
    %1761 = vmatpush1.xpose.msra.mxu0 0.0
    %1762 = vmatprep.subr.mxu0 0.0
    %1763 = vmatpush1.xpose.msra.mxu0 0.0
    %1764 = vmatprep.subr.mxu0 0.0
    %1765 = vmatpush1.xpose.msra.mxu0 0.0
    %1766 = vmatprep.subr.mxu0 0.0
    %1767 = vmatpush1.xpose.msra.mxu0 0.0
    %1768 = vmatprep.subr.mxu0 0.0
    %1769 = vmatpush1.xpose.msra.mxu0 0.0
    %1770 = vmatprep.subr.mxu0 0.0
    %1771 = vmatpush1.xpose.msra.mxu0 0.0
    %1772 = vmatprep.subr.mxu0 0.0
    %1773 = vmatpush1.xpose.msra.mxu0 0.0
    %1774 = vmatprep.subr.mxu0 0.0
    %1775 = vmatpush1.xpose.msra.mxu0 0.0
    %1776 = vmatprep.subr.mxu0 0.0
    %1777 = vmatpush1.xpose.msra.mxu0 0.0
    %1778 = vmatprep.subr.mxu0 0.0
    %1779 = vmatpush1.xpose.msra.mxu0 0.0
    %1780 = vmatprep.subr.mxu0 0.0
    %1781 = vmatpush1.xpose.msra.mxu0 0.0
    %1782 = vmatprep.subr.mxu0 0.0
    %1783 = vmatpush1.xpose.msra.mxu0 0.0
    %1784 = vmatprep.subr.mxu0 0.0
    %1785 = vmatpush1.xpose.msra.mxu0 0.0
    %1786 = vmatprep.subr.mxu0 0.0
    %1787 = vmatpush1.xpose.msra.mxu0 0.0
    %1788 = vmatprep.subr.mxu0 0.0
    %1789 = vmatpush1.xpose.msra.mxu0 0.0
    %1790 = vmatprep.subr.mxu0 0.0
    %1791 = vmatpush1.xpose.msra.mxu0 0.0
    %1792 = vmatprep.subr.mxu0 0.0
    %1793 = vmatpush1.xpose.msra.mxu0 0.0
    %1794 = vmatprep.subr.mxu0 0.0
    %1795 = vmatpush1.xpose.msra.mxu0 0.0
    %1796 = vmatprep.subr.mxu0 0.0
    %1797 = vmatpush1.xpose.msra.mxu0 0.0
    %1798 = vmatprep.subr.mxu0 0.0
    %1799 = vmatpush1.xpose.msra.mxu0 0.0
    %1800 = vmatprep.subr.mxu0 0.0
    %1801 = vmatpush1.xpose.msra.mxu0 0.0
    %1802 = vmatprep.subr.mxu0 0.0
    %1803 = vmatpush1.xpose.msra.mxu0 0.0
    %1804 = vmatprep.subr.mxu0 0.0
    %1805 = vmatpush1.xpose.msra.mxu0 0.0
    %1806 = vmatprep.subr.mxu0 0.0
    %1807 = vmatpush1.xpose.msra.mxu0 0.0
    %1808 = vmatprep.subr.mxu0 0.0
    %1809 = vmatpush1.xpose.msra.mxu0 0.0
    %1810 = vmatprep.subr.mxu0 0.0
    %1811 = vmatpush1.xpose.msra.mxu0 0.0
    %1812 = vmatprep.subr.mxu0 0.0
    %1813 = vmatpush1.xpose.msra.mxu0 0.0
    %1814 = vmatprep.mubr.f32.mxu0 0.0
    %1815 = vmatmul.mubr.f32.gmra.mrb[0].mxu0 %v1745
    %v1816 = vpop.f32.mrb[0].mxu0
    %v1817 = vadd.f32 %v399, %v1816
    %v1818 = vpop.f32.mrb[0].mxu0
    %1819 = vdwg.mxu0
    %v1821 = vsel %vm406, %v1565, 0
    %v1824 = vsel %vm406, %v1653, 0
    %1826 = vmatprep.subr.mxu0 0.0
    %1827 = vmatpush1.xpose.msra.mxu0 %v1824
    %1828 = vmatprep.subr.mxu0 0.0
    %1829 = vmatpush1.xpose.msra.mxu0 0.0
    %1830 = vmatprep.subr.mxu0 0.0
    %1831 = vmatpush1.xpose.msra.mxu0 0.0
    %1832 = vmatprep.subr.mxu0 0.0
    %1833 = vmatpush1.xpose.msra.mxu0 0.0
    %1834 = vmatprep.subr.mxu0 0.0
    %1835 = vmatpush1.xpose.msra.mxu0 0.0
    %1836 = vmatprep.subr.mxu0 0.0
    %1837 = vmatpush1.xpose.msra.mxu0 0.0
    %1838 = vmatprep.subr.mxu0 0.0
    %1839 = vmatpush1.xpose.msra.mxu0 0.0
    %1840 = vmatprep.subr.mxu0 0.0
    %1841 = vmatpush1.xpose.msra.mxu0 0.0
    %1842 = vmatprep.subr.mxu0 0.0
    %1843 = vmatpush1.xpose.msra.mxu0 0.0
    %1844 = vmatprep.subr.mxu0 0.0
    %1845 = vmatpush1.xpose.msra.mxu0 0.0
    %1846 = vmatprep.subr.mxu0 0.0
    %1847 = vmatpush1.xpose.msra.mxu0 0.0
    %1848 = vmatprep.subr.mxu0 0.0
    %1849 = vmatpush1.xpose.msra.mxu0 0.0
    %1850 = vmatprep.subr.mxu0 0.0
    %1851 = vmatpush1.xpose.msra.mxu0 0.0
    %1852 = vmatprep.subr.mxu0 0.0
    %1853 = vmatpush1.xpose.msra.mxu0 0.0
    %1854 = vmatprep.subr.mxu0 0.0
    %1855 = vmatpush1.xpose.msra.mxu0 0.0
    %1856 = vmatprep.subr.mxu0 0.0
    %1857 = vmatpush1.xpose.msra.mxu0 0.0
    %1858 = vmatprep.subr.mxu0 0.0
    %1859 = vmatpush1.xpose.msra.mxu0 0.0
    %1860 = vmatprep.subr.mxu0 0.0
    %1861 = vmatpush1.xpose.msra.mxu0 0.0
    %1862 = vmatprep.subr.mxu0 0.0
    %1863 = vmatpush1.xpose.msra.mxu0 0.0
    %1864 = vmatprep.subr.mxu0 0.0
    %1865 = vmatpush1.xpose.msra.mxu0 0.0
    %1866 = vmatprep.subr.mxu0 0.0
    %1867 = vmatpush1.xpose.msra.mxu0 0.0
    %1868 = vmatprep.subr.mxu0 0.0
    %1869 = vmatpush1.xpose.msra.mxu0 0.0
    %1870 = vmatprep.subr.mxu0 0.0
    %1871 = vmatpush1.xpose.msra.mxu0 0.0
    %1872 = vmatprep.subr.mxu0 0.0
    %1873 = vmatpush1.xpose.msra.mxu0 0.0
    %1874 = vmatprep.subr.mxu0 0.0
    %1875 = vmatpush1.xpose.msra.mxu0 0.0
    %1876 = vmatprep.subr.mxu0 0.0
    %1877 = vmatpush1.xpose.msra.mxu0 0.0
    %1878 = vmatprep.subr.mxu0 0.0
    %1879 = vmatpush1.xpose.msra.mxu0 0.0
    %1880 = vmatprep.subr.mxu0 0.0
    %1881 = vmatpush1.xpose.msra.mxu0 0.0
    %1882 = vmatprep.subr.mxu0 0.0
    %1883 = vmatpush1.xpose.msra.mxu0 0.0
    %1884 = vmatprep.subr.mxu0 0.0
    %1885 = vmatpush1.xpose.msra.mxu0 0.0
    %1886 = vmatprep.subr.mxu0 0.0
    %1887 = vmatpush1.xpose.msra.mxu0 0.0
    %1888 = vmatprep.subr.mxu0 0.0
    %1889 = vmatpush1.xpose.msra.mxu0 0.0
    %1890 = vmatprep.mubr.f32.mxu0 0.0
    %1891 = vmatmul.mubr.f32.gmra.mrb[0].mxu0 %v1821
    %v1892 = vpop.f32.mrb[0].mxu0
    %v1893 = vadd.f32 %v403, %v1892
    %v1894 = vpop.f32.mrb[0].mxu0
    %1895 = vdwg.mxu0
    %v1896 = vsel %vm406, %v1817, -inf
    %1897 = vmax.xlane.f32.xlu0 %v1896
    %v1898 = vpop.xlane.xlu0 %1897
    %v1899 = vsel %vm406, %v1893, -inf
    %1900 = vmax.xlane.f32.xlu0 %v1899
    %v1901 = vpop.xlane.xlu0 %1900
    %v1902 = vsub.f32 %v1817, %v1898
    %v1903 = vsub.f32 %v1893, %v1901
    %v1904 = vmul.f32 %v1902, 1.442695
    %v1905 = vpow.pop %v1904
    %v1906 = vmul.f32 %v1903, 1.442695
    %v1907 = vpow.pop %v1906
    %v1908 = vsel %vm406, %v1905, 0.0
    %1909 = vadd.xlane.f32.xlu0 %v1908
    %v1910 = vpop.xlane.xlu0 %1909
    %v1911 = vsel %vm406, %v1907, 0.0
    %1912 = vadd.xlane.f32.xlu0 %v1911
    %v1913 = vpop.xlane.xlu0 %1912
    %v1914 = vrcp.pop %v1910
    %v1915 = vrcp.pop %v1913
    %v1916 = vmul.f32 %v1905, %v1914
    %v1917 = vmul.f32 %v1907, %v1915
    %v1919 = vsel %vm406, %v1916, 0
    %1921 = vmatprep.subr.mxu0 0.0
    %1922 = vmatpush1.msra.mxu0 %v1736
    %1923 = vmatprep.subr.mxu0 0.0
    %1924 = vmatpush1.msra.mxu0 0.0
    %1925 = vmatprep.subr.mxu0 0.0
    %1926 = vmatpush1.msra.mxu0 0.0
    %1927 = vmatprep.subr.mxu0 0.0
    %1928 = vmatpush1.msra.mxu0 0.0
    %1929 = vmatprep.subr.mxu0 0.0
    %1930 = vmatpush1.msra.mxu0 0.0
    %1931 = vmatprep.subr.mxu0 0.0
    %1932 = vmatpush1.msra.mxu0 0.0
    %1933 = vmatprep.subr.mxu0 0.0
    %1934 = vmatpush1.msra.mxu0 0.0
    %1935 = vmatprep.subr.mxu0 0.0
    %1936 = vmatpush1.msra.mxu0 0.0
    %1937 = vmatprep.subr.mxu0 0.0
    %1938 = vmatpush1.msra.mxu0 0.0
    %1939 = vmatprep.subr.mxu0 0.0
    %1940 = vmatpush1.msra.mxu0 0.0
    %1941 = vmatprep.subr.mxu0 0.0
    %1942 = vmatpush1.msra.mxu0 0.0
    %1943 = vmatprep.subr.mxu0 0.0
    %1944 = vmatpush1.msra.mxu0 0.0
    %1945 = vmatprep.subr.mxu0 0.0
    %1946 = vmatpush1.msra.mxu0 0.0
    %1947 = vmatprep.subr.mxu0 0.0
    %1948 = vmatpush1.msra.mxu0 0.0
    %1949 = vmatprep.subr.mxu0 0.0
    %1950 = vmatpush1.msra.mxu0 0.0
    %1951 = vmatprep.subr.mxu0 0.0
    %1952 = vmatpush1.msra.mxu0 0.0
    %1953 = vmatprep.subr.mxu0 0.0
    %1954 = vmatpush1.msra.mxu0 0.0
    %1955 = vmatprep.subr.mxu0 0.0
    %1956 = vmatpush1.msra.mxu0 0.0
    %1957 = vmatprep.subr.mxu0 0.0
    %1958 = vmatpush1.msra.mxu0 0.0
    %1959 = vmatprep.subr.mxu0 0.0
    %1960 = vmatpush1.msra.mxu0 0.0
    %1961 = vmatprep.subr.mxu0 0.0
    %1962 = vmatpush1.msra.mxu0 0.0
    %1963 = vmatprep.subr.mxu0 0.0
    %1964 = vmatpush1.msra.mxu0 0.0
    %1965 = vmatprep.subr.mxu0 0.0
    %1966 = vmatpush1.msra.mxu0 0.0
    %1967 = vmatprep.subr.mxu0 0.0
    %1968 = vmatpush1.msra.mxu0 0.0
    %1969 = vmatprep.subr.mxu0 0.0
    %1970 = vmatpush1.msra.mxu0 0.0
    %1971 = vmatprep.subr.mxu0 0.0
    %1972 = vmatpush1.msra.mxu0 0.0
    %1973 = vmatprep.subr.mxu0 0.0
    %1974 = vmatpush1.msra.mxu0 0.0
    %1975 = vmatprep.subr.mxu0 0.0
    %1976 = vmatpush1.msra.mxu0 0.0
    %1977 = vmatprep.subr.mxu0 0.0
    %1978 = vmatpush1.msra.mxu0 0.0
    %1979 = vmatprep.subr.mxu0 0.0
    %1980 = vmatpush1.msra.mxu0 0.0
    %1981 = vmatprep.subr.mxu0 0.0
    %1982 = vmatpush1.msra.mxu0 0.0
    %1983 = vmatprep.subr.mxu0 0.0
    %1984 = vmatpush1.msra.mxu0 0.0
    %1985 = vmatprep.mubr.f32.mxu0 0.0
    %1986 = vmatmul.mubr.f32.gmra.mrb[0].mxu0 %v1919
    %v1987 = vpop.f32.mrb[0].mxu0
    %v1988 = vadd.f32 0.0, %v1987
    %v1989 = vpop.f32.mrb[0].mxu0
    %1990 = vdwg.mxu0
    %v1992 = vsel %vm406, %v1917, 0
    %1994 = vmatprep.subr.mxu0 0.0
    %1995 = vmatpush1.msra.mxu0 %v1741
    %1996 = vmatprep.subr.mxu0 0.0
    %1997 = vmatpush1.msra.mxu0 0.0
    %1998 = vmatprep.subr.mxu0 0.0
    %1999 = vmatpush1.msra.mxu0 0.0
    %2000 = vmatprep.subr.mxu0 0.0
    %2001 = vmatpush1.msra.mxu0 0.0
    %2002 = vmatprep.subr.mxu0 0.0
    %2003 = vmatpush1.msra.mxu0 0.0
    %2004 = vmatprep.subr.mxu0 0.0
    %2005 = vmatpush1.msra.mxu0 0.0
    %2006 = vmatprep.subr.mxu0 0.0
    %2007 = vmatpush1.msra.mxu0 0.0
    %2008 = vmatprep.subr.mxu0 0.0
    %2009 = vmatpush1.msra.mxu0 0.0
    %2010 = vmatprep.subr.mxu0 0.0
    %2011 = vmatpush1.msra.mxu0 0.0
    %2012 = vmatprep.subr.mxu0 0.0
    %2013 = vmatpush1.msra.mxu0 0.0
    %2014 = vmatprep.subr.mxu0 0.0
    %2015 = vmatpush1.msra.mxu0 0.0
    %2016 = vmatprep.subr.mxu0 0.0
    %2017 = vmatpush1.msra.mxu0 0.0
    %2018 = vmatprep.subr.mxu0 0.0
    %2019 = vmatpush1.msra.mxu0 0.0
    %2020 = vmatprep.subr.mxu0 0.0
    %2021 = vmatpush1.msra.mxu0 0.0
    %2022 = vmatprep.subr.mxu0 0.0
    %2023 = vmatpush1.msra.mxu0 0.0
    %2024 = vmatprep.subr.mxu0 0.0
    %2025 = vmatpush1.msra.mxu0 0.0
    %2026 = vmatprep.subr.mxu0 0.0
    %2027 = vmatpush1.msra.mxu0 0.0
    %2028 = vmatprep.subr.mxu0 0.0
    %2029 = vmatpush1.msra.mxu0 0.0
    %2030 = vmatprep.subr.mxu0 0.0
    %2031 = vmatpush1.msra.mxu0 0.0
    %2032 = vmatprep.subr.mxu0 0.0
    %2033 = vmatpush1.msra.mxu0 0.0
    %2034 = vmatprep.subr.mxu0 0.0
    %2035 = vmatpush1.msra.mxu0 0.0
    %2036 = vmatprep.subr.mxu0 0.0
    %2037 = vmatpush1.msra.mxu0 0.0
    %2038 = vmatprep.subr.mxu0 0.0
    %2039 = vmatpush1.msra.mxu0 0.0
    %2040 = vmatprep.subr.mxu0 0.0
    %2041 = vmatpush1.msra.mxu0 0.0
    %2042 = vmatprep.subr.mxu0 0.0
    %2043 = vmatpush1.msra.mxu0 0.0
    %2044 = vmatprep.subr.mxu0 0.0
    %2045 = vmatpush1.msra.mxu0 0.0
    %2046 = vmatprep.subr.mxu0 0.0
    %2047 = vmatpush1.msra.mxu0 0.0
    %2048 = vmatprep.subr.mxu0 0.0
    %2049 = vmatpush1.msra.mxu0 0.0
    %2050 = vmatprep.subr.mxu0 0.0
    %2051 = vmatpush1.msra.mxu0 0.0
    %2052 = vmatprep.subr.mxu0 0.0
    %2053 = vmatpush1.msra.mxu0 0.0
    %2054 = vmatprep.subr.mxu0 0.0
    %2055 = vmatpush1.msra.mxu0 0.0
    %2056 = vmatprep.subr.mxu0 0.0
    %2057 = vmatpush1.msra.mxu0 0.0
    %2058 = vmatprep.mubr.f32.mxu0 0.0
    %2059 = vmatmul.mubr.f32.gmra.mrb[0].mxu0 %v1992
    %v2060 = vpop.f32.mrb[0].mxu0
    %v2061 = vadd.f32 0.0, %v2060
    %v2062 = vpop.f32.mrb[0].mxu0
    %2063 = vdwg.mxu0
    %s2064 = scalar_lea.vmem %s8, 16
    %v2065 = vld [vmem:[%s2064] sm:$0xff]
    %v2067 = vsel %vm406, %v1988, 0
    %v2070 = vsel %vm406, %v2061, 0
    %2072 = vmatprep.subr.mxu0 0.0
    %2073 = vmatpush1.msra.mxu0 %v2065
    %2074 = vmatprep.subr.mxu0 0.0
    %2075 = vmatpush1.msra.mxu0 0.0
    %2076 = vmatprep.subr.mxu0 0.0
    %2077 = vmatpush1.msra.mxu0 0.0
    %2078 = vmatprep.subr.mxu0 0.0
    %2079 = vmatpush1.msra.mxu0 0.0
    %2080 = vmatprep.subr.mxu0 0.0
    %2081 = vmatpush1.msra.mxu0 0.0
    %2082 = vmatprep.subr.mxu0 0.0
    %2083 = vmatpush1.msra.mxu0 0.0
    %2084 = vmatprep.subr.mxu0 0.0
    %2085 = vmatpush1.msra.mxu0 0.0
    %2086 = vmatprep.subr.mxu0 0.0
    %2087 = vmatpush1.msra.mxu0 0.0
    %2088 = vmatprep.subr.mxu0 0.0
    %2089 = vmatpush1.msra.mxu0 0.0
    %2090 = vmatprep.subr.mxu0 0.0
    %2091 = vmatpush1.msra.mxu0 0.0
    %2092 = vmatprep.subr.mxu0 0.0
    %2093 = vmatpush1.msra.mxu0 0.0
    %2094 = vmatprep.subr.mxu0 0.0
    %2095 = vmatpush1.msra.mxu0 0.0
    %2096 = vmatprep.subr.mxu0 0.0
    %2097 = vmatpush1.msra.mxu0 0.0
    %2098 = vmatprep.subr.mxu0 0.0
    %2099 = vmatpush1.msra.mxu0 0.0
    %2100 = vmatprep.subr.mxu0 0.0
    %2101 = vmatpush1.msra.mxu0 0.0
    %2102 = vmatprep.subr.mxu0 0.0
    %2103 = vmatpush1.msra.mxu0 0.0
    %2104 = vmatprep.subr.mxu0 0.0
    %2105 = vmatpush1.msra.mxu0 0.0
    %2106 = vmatprep.subr.mxu0 0.0
    %2107 = vmatpush1.msra.mxu0 0.0
    %2108 = vmatprep.subr.mxu0 0.0
    %2109 = vmatpush1.msra.mxu0 0.0
    %2110 = vmatprep.subr.mxu0 0.0
    %2111 = vmatpush1.msra.mxu0 0.0
    %2112 = vmatprep.subr.mxu0 0.0
    %2113 = vmatpush1.msra.mxu0 0.0
    %2114 = vmatprep.subr.mxu0 0.0
    %2115 = vmatpush1.msra.mxu0 0.0
    %2116 = vmatprep.subr.mxu0 0.0
    %2117 = vmatpush1.msra.mxu0 0.0
    %2118 = vmatprep.subr.mxu0 0.0
    %2119 = vmatpush1.msra.mxu0 0.0
    %2120 = vmatprep.subr.mxu0 0.0
    %2121 = vmatpush1.msra.mxu0 0.0
    %2122 = vmatprep.subr.mxu0 0.0
    %2123 = vmatpush1.msra.mxu0 0.0
    %2124 = vmatprep.subr.mxu0 0.0
    %2125 = vmatpush1.msra.mxu0 0.0
    %2126 = vmatprep.subr.mxu0 0.0
    %2127 = vmatpush1.msra.mxu0 0.0
    %2128 = vmatprep.subr.mxu0 0.0
    %2129 = vmatpush1.msra.mxu0 0.0
    %2130 = vmatprep.subr.mxu0 0.0
    %2131 = vmatpush1.msra.mxu0 0.0
    %2132 = vmatprep.subr.mxu0 0.0
    %2133 = vmatpush1.msra.mxu0 0.0
    %2134 = vmatprep.subr.mxu0 0.0
    %2135 = vmatpush1.msra.mxu0 0.0
    %2136 = vmatprep.mubr.f32.mxu0 0.0
    %2137 = vmatmul.mubr.f32.gmra.mrb[0].mxu0 %v2067
    %v2138 = vpop.f32.mrb[0].mxu0
    %v2139 = vadd.f32 0.0, %v2138
    %v2140 = vpop.f32.mrb[0].mxu0
    %2141 = vmatprep.mubr.f32.mxu0 0.0
    %2142 = vmatmul.mubr.f32.gmra.mrb[0].mxu0 %v2070
    %v2143 = vpop.f32.mrb[0].mxu0
    %v2144 = vadd.f32 0.0, %v2143
    %v2145 = vpop.f32.mrb[0].mxu0
    %2146 = vdwg.mxu0
    %v2147 = vadd.f32 %v1478, %v2139
    %v2148 = vadd.f32 %v1479, %v2144
    %s2149 = scalar_lea.vmem %s2, 96
    %v2150 = vld [vmem:[%s2149] sm:$0xff]
    %v2151 = vld [vmem:[%s2149 + $0x8] sm:$0xff]
    %v2152 = vld [vmem:[%s2149 + $0x10] sm:$0xff]
    %v2153 = vld [vmem:[%s2149 + $0x18] sm:$0xff]
    %s2154 = scalar_lea.vmem %s3, 3
    %v2155 = vld [vmem:[%s2154] sm:$0x1]
    %v2157 = vlaneseq
    %v2158 = vshrl.u32 %v2157, 7
    %v2159 = vsub.s32 0, %v2158
    %v2160 = vrot.slane %v2155, %v2159
    %2162 = vmatprep.subr.mxu0 0.0
    %2163 = vmatpush1.msra.mxu0 %v2150
    %2164 = vmatprep.subr.mxu0 0.0
    %2165 = vmatpush1.msra.mxu0 %v2151
    %2166 = vmatprep.subr.mxu0 0.0
    %2167 = vmatpush1.msra.mxu0 %v2152
    %2168 = vmatprep.subr.mxu0 0.0
    %2169 = vmatpush1.msra.mxu0 %v2153
    %2170 = vmatprep.subr.mxu0 0.0
    %2171 = vmatpush1.msra.mxu0 0.0
    %2172 = vmatprep.subr.mxu0 0.0
    %2173 = vmatpush1.msra.mxu0 0.0
    %2174 = vmatprep.subr.mxu0 0.0
    %2175 = vmatpush1.msra.mxu0 0.0
    %2176 = vmatprep.subr.mxu0 0.0
    %2177 = vmatpush1.msra.mxu0 0.0
    %2178 = vmatprep.subr.mxu0 0.0
    %2179 = vmatpush1.msra.mxu0 0.0
    %2180 = vmatprep.subr.mxu0 0.0
    %2181 = vmatpush1.msra.mxu0 0.0
    %2182 = vmatprep.subr.mxu0 0.0
    %2183 = vmatpush1.msra.mxu0 0.0
    %2184 = vmatprep.subr.mxu0 0.0
    %2185 = vmatpush1.msra.mxu0 0.0
    %2186 = vmatprep.subr.mxu0 0.0
    %2187 = vmatpush1.msra.mxu0 0.0
    %2188 = vmatprep.subr.mxu0 0.0
    %2189 = vmatpush1.msra.mxu0 0.0
    %2190 = vmatprep.subr.mxu0 0.0
    %2191 = vmatpush1.msra.mxu0 0.0
    %2192 = vmatprep.subr.mxu0 0.0
    %2193 = vmatpush1.msra.mxu0 0.0
    %2194 = vmatprep.subr.mxu0 0.0
    %2195 = vmatpush1.msra.mxu0 0.0
    %2196 = vmatprep.subr.mxu0 0.0
    %2197 = vmatpush1.msra.mxu0 0.0
    %2198 = vmatprep.subr.mxu0 0.0
    %2199 = vmatpush1.msra.mxu0 0.0
    %2200 = vmatprep.subr.mxu0 0.0
    %2201 = vmatpush1.msra.mxu0 0.0
    %2202 = vmatprep.subr.mxu0 0.0
    %2203 = vmatpush1.msra.mxu0 0.0
    %2204 = vmatprep.subr.mxu0 0.0
    %2205 = vmatpush1.msra.mxu0 0.0
    %2206 = vmatprep.subr.mxu0 0.0
    %2207 = vmatpush1.msra.mxu0 0.0
    %2208 = vmatprep.subr.mxu0 0.0
    %2209 = vmatpush1.msra.mxu0 0.0
    %2210 = vmatprep.subr.mxu0 0.0
    %2211 = vmatpush1.msra.mxu0 0.0
    %2212 = vmatprep.subr.mxu0 0.0
    %2213 = vmatpush1.msra.mxu0 0.0
    %2214 = vmatprep.subr.mxu0 0.0
    %2215 = vmatpush1.msra.mxu0 0.0
    %2216 = vmatprep.subr.mxu0 0.0
    %2217 = vmatpush1.msra.mxu0 0.0
    %2218 = vmatprep.subr.mxu0 0.0
    %2219 = vmatpush1.msra.mxu0 0.0
    %2220 = vmatprep.subr.mxu0 0.0
    %2221 = vmatpush1.msra.mxu0 0.0
    %2222 = vmatprep.subr.mxu0 0.0
    %2223 = vmatpush1.msra.mxu0 0.0
    %2224 = vmatprep.subr.mxu0 0.0
    %2225 = vmatpush1.msra.mxu0 0.0
    %2226 = vmatprep.mubr.f32.mxu0 0.0
    %2227 = vmatmul.mubr.f32.gmra.mrb[0].mxu0 %v142
    %v2228 = vpop.f32.mrb[0].mxu0
    %v2229 = vadd.f32 %v2160, %v2228
    %v2230 = vpop.f32.mrb[0].mxu0
    %2231 = vmatprep.mubr.f32.mxu0 0.0
    %2232 = vmatmul.mubr.f32.gmra.mrb[0].mxu0 %v145
    %v2233 = vpop.f32.mrb[0].mxu0
    %v2234 = vadd.f32 %v2160, %v2233
    %v2235 = vpop.f32.mrb[0].mxu0
    %2236 = vdwg.mxu0
    %s2237 = scalar_lea.vmem %s4, 96
    %v2238 = vld [vmem:[%s2237] sm:$0xff]
    %v2239 = vld [vmem:[%s2237 + $0x8] sm:$0xff]
    %v2240 = vld [vmem:[%s2237 + $0x10] sm:$0xff]
    %v2241 = vld [vmem:[%s2237 + $0x18] sm:$0xff]
    %s2242 = scalar_lea.vmem %s5, 3
    %v2243 = vld [vmem:[%s2242] sm:$0x1]
    %v2245 = vlaneseq
    %v2246 = vshrl.u32 %v2245, 7
    %v2247 = vsub.s32 0, %v2246
    %v2248 = vrot.slane %v2243, %v2247
    %2250 = vmatprep.subr.mxu0 0.0
    %2251 = vmatpush1.msra.mxu0 %v2238
    %2252 = vmatprep.subr.mxu0 0.0
    %2253 = vmatpush1.msra.mxu0 %v2239
    %2254 = vmatprep.subr.mxu0 0.0
    %2255 = vmatpush1.msra.mxu0 %v2240
    %2256 = vmatprep.subr.mxu0 0.0
    %2257 = vmatpush1.msra.mxu0 %v2241
    %2258 = vmatprep.subr.mxu0 0.0
    %2259 = vmatpush1.msra.mxu0 0.0
    %2260 = vmatprep.subr.mxu0 0.0
    %2261 = vmatpush1.msra.mxu0 0.0
    %2262 = vmatprep.subr.mxu0 0.0
    %2263 = vmatpush1.msra.mxu0 0.0
    %2264 = vmatprep.subr.mxu0 0.0
    %2265 = vmatpush1.msra.mxu0 0.0
    %2266 = vmatprep.subr.mxu0 0.0
    %2267 = vmatpush1.msra.mxu0 0.0
    %2268 = vmatprep.subr.mxu0 0.0
    %2269 = vmatpush1.msra.mxu0 0.0
    %2270 = vmatprep.subr.mxu0 0.0
    %2271 = vmatpush1.msra.mxu0 0.0
    %2272 = vmatprep.subr.mxu0 0.0
    %2273 = vmatpush1.msra.mxu0 0.0
    %2274 = vmatprep.subr.mxu0 0.0
    %2275 = vmatpush1.msra.mxu0 0.0
    %2276 = vmatprep.subr.mxu0 0.0
    %2277 = vmatpush1.msra.mxu0 0.0
    %2278 = vmatprep.subr.mxu0 0.0
    %2279 = vmatpush1.msra.mxu0 0.0
    %2280 = vmatprep.subr.mxu0 0.0
    %2281 = vmatpush1.msra.mxu0 0.0
    %2282 = vmatprep.subr.mxu0 0.0
    %2283 = vmatpush1.msra.mxu0 0.0
    %2284 = vmatprep.subr.mxu0 0.0
    %2285 = vmatpush1.msra.mxu0 0.0
    %2286 = vmatprep.subr.mxu0 0.0
    %2287 = vmatpush1.msra.mxu0 0.0
    %2288 = vmatprep.subr.mxu0 0.0
    %2289 = vmatpush1.msra.mxu0 0.0
    %2290 = vmatprep.subr.mxu0 0.0
    %2291 = vmatpush1.msra.mxu0 0.0
    %2292 = vmatprep.subr.mxu0 0.0
    %2293 = vmatpush1.msra.mxu0 0.0
    %2294 = vmatprep.subr.mxu0 0.0
    %2295 = vmatpush1.msra.mxu0 0.0
    %2296 = vmatprep.subr.mxu0 0.0
    %2297 = vmatpush1.msra.mxu0 0.0
    %2298 = vmatprep.subr.mxu0 0.0
    %2299 = vmatpush1.msra.mxu0 0.0
    %2300 = vmatprep.subr.mxu0 0.0
    %2301 = vmatpush1.msra.mxu0 0.0
    %2302 = vmatprep.subr.mxu0 0.0
    %2303 = vmatpush1.msra.mxu0 0.0
    %2304 = vmatprep.subr.mxu0 0.0
    %2305 = vmatpush1.msra.mxu0 0.0
    %2306 = vmatprep.subr.mxu0 0.0
    %2307 = vmatpush1.msra.mxu0 0.0
    %2308 = vmatprep.subr.mxu0 0.0
    %2309 = vmatpush1.msra.mxu0 0.0
    %2310 = vmatprep.subr.mxu0 0.0
    %2311 = vmatpush1.msra.mxu0 0.0
    %2312 = vmatprep.subr.mxu0 0.0
    %2313 = vmatpush1.msra.mxu0 0.0
    %2314 = vmatprep.mubr.f32.mxu0 0.0
    %2315 = vmatmul.mubr.f32.gmra.mrb[0].mxu0 %v142
    %v2316 = vpop.f32.mrb[0].mxu0
    %v2317 = vadd.f32 %v2248, %v2316
    %v2318 = vpop.f32.mrb[0].mxu0
    %2319 = vmatprep.mubr.f32.mxu0 0.0
    %2320 = vmatmul.mubr.f32.gmra.mrb[0].mxu0 %v145
    %v2321 = vpop.f32.mrb[0].mxu0
    %v2322 = vadd.f32 %v2248, %v2321
    %v2323 = vpop.f32.mrb[0].mxu0
    %2324 = vdwg.mxu0
    %s2325 = scalar_lea.vmem %s6, 96
    %v2326 = vld [vmem:[%s2325] sm:$0xff]
    %v2327 = vld [vmem:[%s2325 + $0x8] sm:$0xff]
    %v2328 = vld [vmem:[%s2325 + $0x10] sm:$0xff]
    %v2329 = vld [vmem:[%s2325 + $0x18] sm:$0xff]
    %s2330 = scalar_lea.vmem %s7, 3
    %v2331 = vld [vmem:[%s2330] sm:$0x1]
    %v2333 = vlaneseq
    %v2334 = vshrl.u32 %v2333, 7
    %v2335 = vsub.s32 0, %v2334
    %v2336 = vrot.slane %v2331, %v2335
    %2338 = vmatprep.subr.mxu0 0.0
    %2339 = vmatpush1.msra.mxu0 %v2326
    %2340 = vmatprep.subr.mxu0 0.0
    %2341 = vmatpush1.msra.mxu0 %v2327
    %2342 = vmatprep.subr.mxu0 0.0
    %2343 = vmatpush1.msra.mxu0 %v2328
    %2344 = vmatprep.subr.mxu0 0.0
    %2345 = vmatpush1.msra.mxu0 %v2329
    %2346 = vmatprep.subr.mxu0 0.0
    %2347 = vmatpush1.msra.mxu0 0.0
    %2348 = vmatprep.subr.mxu0 0.0
    %2349 = vmatpush1.msra.mxu0 0.0
    %2350 = vmatprep.subr.mxu0 0.0
    %2351 = vmatpush1.msra.mxu0 0.0
    %2352 = vmatprep.subr.mxu0 0.0
    %2353 = vmatpush1.msra.mxu0 0.0
    %2354 = vmatprep.subr.mxu0 0.0
    %2355 = vmatpush1.msra.mxu0 0.0
    %2356 = vmatprep.subr.mxu0 0.0
    %2357 = vmatpush1.msra.mxu0 0.0
    %2358 = vmatprep.subr.mxu0 0.0
    %2359 = vmatpush1.msra.mxu0 0.0
    %2360 = vmatprep.subr.mxu0 0.0
    %2361 = vmatpush1.msra.mxu0 0.0
    %2362 = vmatprep.subr.mxu0 0.0
    %2363 = vmatpush1.msra.mxu0 0.0
    %2364 = vmatprep.subr.mxu0 0.0
    %2365 = vmatpush1.msra.mxu0 0.0
    %2366 = vmatprep.subr.mxu0 0.0
    %2367 = vmatpush1.msra.mxu0 0.0
    %2368 = vmatprep.subr.mxu0 0.0
    %2369 = vmatpush1.msra.mxu0 0.0
    %2370 = vmatprep.subr.mxu0 0.0
    %2371 = vmatpush1.msra.mxu0 0.0
    %2372 = vmatprep.subr.mxu0 0.0
    %2373 = vmatpush1.msra.mxu0 0.0
    %2374 = vmatprep.subr.mxu0 0.0
    %2375 = vmatpush1.msra.mxu0 0.0
    %2376 = vmatprep.subr.mxu0 0.0
    %2377 = vmatpush1.msra.mxu0 0.0
    %2378 = vmatprep.subr.mxu0 0.0
    %2379 = vmatpush1.msra.mxu0 0.0
    %2380 = vmatprep.subr.mxu0 0.0
    %2381 = vmatpush1.msra.mxu0 0.0
    %2382 = vmatprep.subr.mxu0 0.0
    %2383 = vmatpush1.msra.mxu0 0.0
    %2384 = vmatprep.subr.mxu0 0.0
    %2385 = vmatpush1.msra.mxu0 0.0
    %2386 = vmatprep.subr.mxu0 0.0
    %2387 = vmatpush1.msra.mxu0 0.0
    %2388 = vmatprep.subr.mxu0 0.0
    %2389 = vmatpush1.msra.mxu0 0.0
    %2390 = vmatprep.subr.mxu0 0.0
    %2391 = vmatpush1.msra.mxu0 0.0
    %2392 = vmatprep.subr.mxu0 0.0
    %2393 = vmatpush1.msra.mxu0 0.0
    %2394 = vmatprep.subr.mxu0 0.0
    %2395 = vmatpush1.msra.mxu0 0.0
    %2396 = vmatprep.subr.mxu0 0.0
    %2397 = vmatpush1.msra.mxu0 0.0
    %2398 = vmatprep.subr.mxu0 0.0
    %2399 = vmatpush1.msra.mxu0 0.0
    %2400 = vmatprep.subr.mxu0 0.0
    %2401 = vmatpush1.msra.mxu0 0.0
    %2402 = vmatprep.mubr.f32.mxu0 0.0
    %2403 = vmatmul.mubr.f32.gmra.mrb[0].mxu0 %v142
    %v2404 = vpop.f32.mrb[0].mxu0
    %v2405 = vadd.f32 %v2336, %v2404
    %v2406 = vpop.f32.mrb[0].mxu0
    %2407 = vmatprep.mubr.f32.mxu0 0.0
    %2408 = vmatmul.mubr.f32.gmra.mrb[0].mxu0 %v145
    %v2409 = vpop.f32.mrb[0].mxu0
    %v2410 = vadd.f32 %v2336, %v2409
    %v2411 = vpop.f32.mrb[0].mxu0
    %2412 = vdwg.mxu0
    %v2414 = vsel %vm406, %v2229, 0
    %v2417 = vsel %vm406, %v2317, 0
    %2419 = vmatprep.subr.mxu0 0.0
    %2420 = vmatpush1.xpose.msra.mxu0 %v2417
    %2421 = vmatprep.subr.mxu0 0.0
    %2422 = vmatpush1.xpose.msra.mxu0 0.0
    %2423 = vmatprep.subr.mxu0 0.0
    %2424 = vmatpush1.xpose.msra.mxu0 0.0
    %2425 = vmatprep.subr.mxu0 0.0
    %2426 = vmatpush1.xpose.msra.mxu0 0.0
    %2427 = vmatprep.subr.mxu0 0.0
    %2428 = vmatpush1.xpose.msra.mxu0 0.0
    %2429 = vmatprep.subr.mxu0 0.0
    %2430 = vmatpush1.xpose.msra.mxu0 0.0
    %2431 = vmatprep.subr.mxu0 0.0
    %2432 = vmatpush1.xpose.msra.mxu0 0.0
    %2433 = vmatprep.subr.mxu0 0.0
    %2434 = vmatpush1.xpose.msra.mxu0 0.0
    %2435 = vmatprep.subr.mxu0 0.0
    %2436 = vmatpush1.xpose.msra.mxu0 0.0
    %2437 = vmatprep.subr.mxu0 0.0
    %2438 = vmatpush1.xpose.msra.mxu0 0.0
    %2439 = vmatprep.subr.mxu0 0.0
    %2440 = vmatpush1.xpose.msra.mxu0 0.0
    %2441 = vmatprep.subr.mxu0 0.0
    %2442 = vmatpush1.xpose.msra.mxu0 0.0
    %2443 = vmatprep.subr.mxu0 0.0
    %2444 = vmatpush1.xpose.msra.mxu0 0.0
    %2445 = vmatprep.subr.mxu0 0.0
    %2446 = vmatpush1.xpose.msra.mxu0 0.0
    %2447 = vmatprep.subr.mxu0 0.0
    %2448 = vmatpush1.xpose.msra.mxu0 0.0
    %2449 = vmatprep.subr.mxu0 0.0
    %2450 = vmatpush1.xpose.msra.mxu0 0.0
    %2451 = vmatprep.subr.mxu0 0.0
    %2452 = vmatpush1.xpose.msra.mxu0 0.0
    %2453 = vmatprep.subr.mxu0 0.0
    %2454 = vmatpush1.xpose.msra.mxu0 0.0
    %2455 = vmatprep.subr.mxu0 0.0
    %2456 = vmatpush1.xpose.msra.mxu0 0.0
    %2457 = vmatprep.subr.mxu0 0.0
    %2458 = vmatpush1.xpose.msra.mxu0 0.0
    %2459 = vmatprep.subr.mxu0 0.0
    %2460 = vmatpush1.xpose.msra.mxu0 0.0
    %2461 = vmatprep.subr.mxu0 0.0
    %2462 = vmatpush1.xpose.msra.mxu0 0.0
    %2463 = vmatprep.subr.mxu0 0.0
    %2464 = vmatpush1.xpose.msra.mxu0 0.0
    %2465 = vmatprep.subr.mxu0 0.0
    %2466 = vmatpush1.xpose.msra.mxu0 0.0
    %2467 = vmatprep.subr.mxu0 0.0
    %2468 = vmatpush1.xpose.msra.mxu0 0.0
    %2469 = vmatprep.subr.mxu0 0.0
    %2470 = vmatpush1.xpose.msra.mxu0 0.0
    %2471 = vmatprep.subr.mxu0 0.0
    %2472 = vmatpush1.xpose.msra.mxu0 0.0
    %2473 = vmatprep.subr.mxu0 0.0
    %2474 = vmatpush1.xpose.msra.mxu0 0.0
    %2475 = vmatprep.subr.mxu0 0.0
    %2476 = vmatpush1.xpose.msra.mxu0 0.0
    %2477 = vmatprep.subr.mxu0 0.0
    %2478 = vmatpush1.xpose.msra.mxu0 0.0
    %2479 = vmatprep.subr.mxu0 0.0
    %2480 = vmatpush1.xpose.msra.mxu0 0.0
    %2481 = vmatprep.subr.mxu0 0.0
    %2482 = vmatpush1.xpose.msra.mxu0 0.0
    %2483 = vmatprep.mubr.f32.mxu0 0.0
    %2484 = vmatmul.mubr.f32.gmra.mrb[0].mxu0 %v2414
    %v2485 = vpop.f32.mrb[0].mxu0
    %v2486 = vadd.f32 %v399, %v2485
    %v2487 = vpop.f32.mrb[0].mxu0
    %2488 = vdwg.mxu0
    %v2490 = vsel %vm406, %v2234, 0
    %v2493 = vsel %vm406, %v2322, 0
    %2495 = vmatprep.subr.mxu0 0.0
    %2496 = vmatpush1.xpose.msra.mxu0 %v2493
    %2497 = vmatprep.subr.mxu0 0.0
    %2498 = vmatpush1.xpose.msra.mxu0 0.0
    %2499 = vmatprep.subr.mxu0 0.0
    %2500 = vmatpush1.xpose.msra.mxu0 0.0
    %2501 = vmatprep.subr.mxu0 0.0
    %2502 = vmatpush1.xpose.msra.mxu0 0.0
    %2503 = vmatprep.subr.mxu0 0.0
    %2504 = vmatpush1.xpose.msra.mxu0 0.0
    %2505 = vmatprep.subr.mxu0 0.0
    %2506 = vmatpush1.xpose.msra.mxu0 0.0
    %2507 = vmatprep.subr.mxu0 0.0
    %2508 = vmatpush1.xpose.msra.mxu0 0.0
    %2509 = vmatprep.subr.mxu0 0.0
    %2510 = vmatpush1.xpose.msra.mxu0 0.0
    %2511 = vmatprep.subr.mxu0 0.0
    %2512 = vmatpush1.xpose.msra.mxu0 0.0
    %2513 = vmatprep.subr.mxu0 0.0
    %2514 = vmatpush1.xpose.msra.mxu0 0.0
    %2515 = vmatprep.subr.mxu0 0.0
    %2516 = vmatpush1.xpose.msra.mxu0 0.0
    %2517 = vmatprep.subr.mxu0 0.0
    %2518 = vmatpush1.xpose.msra.mxu0 0.0
    %2519 = vmatprep.subr.mxu0 0.0
    %2520 = vmatpush1.xpose.msra.mxu0 0.0
    %2521 = vmatprep.subr.mxu0 0.0
    %2522 = vmatpush1.xpose.msra.mxu0 0.0
    %2523 = vmatprep.subr.mxu0 0.0
    %2524 = vmatpush1.xpose.msra.mxu0 0.0
    %2525 = vmatprep.subr.mxu0 0.0
    %2526 = vmatpush1.xpose.msra.mxu0 0.0
    %2527 = vmatprep.subr.mxu0 0.0
    %2528 = vmatpush1.xpose.msra.mxu0 0.0
    %2529 = vmatprep.subr.mxu0 0.0
    %2530 = vmatpush1.xpose.msra.mxu0 0.0
    %2531 = vmatprep.subr.mxu0 0.0
    %2532 = vmatpush1.xpose.msra.mxu0 0.0
    %2533 = vmatprep.subr.mxu0 0.0
    %2534 = vmatpush1.xpose.msra.mxu0 0.0
    %2535 = vmatprep.subr.mxu0 0.0
    %2536 = vmatpush1.xpose.msra.mxu0 0.0
    %2537 = vmatprep.subr.mxu0 0.0
    %2538 = vmatpush1.xpose.msra.mxu0 0.0
    %2539 = vmatprep.subr.mxu0 0.0
    %2540 = vmatpush1.xpose.msra.mxu0 0.0
    %2541 = vmatprep.subr.mxu0 0.0
    %2542 = vmatpush1.xpose.msra.mxu0 0.0
    %2543 = vmatprep.subr.mxu0 0.0
    %2544 = vmatpush1.xpose.msra.mxu0 0.0
    %2545 = vmatprep.subr.mxu0 0.0
    %2546 = vmatpush1.xpose.msra.mxu0 0.0
    %2547 = vmatprep.subr.mxu0 0.0
    %2548 = vmatpush1.xpose.msra.mxu0 0.0
    %2549 = vmatprep.subr.mxu0 0.0
    %2550 = vmatpush1.xpose.msra.mxu0 0.0
    %2551 = vmatprep.subr.mxu0 0.0
    %2552 = vmatpush1.xpose.msra.mxu0 0.0
    %2553 = vmatprep.subr.mxu0 0.0
    %2554 = vmatpush1.xpose.msra.mxu0 0.0
    %2555 = vmatprep.subr.mxu0 0.0
    %2556 = vmatpush1.xpose.msra.mxu0 0.0
    %2557 = vmatprep.subr.mxu0 0.0
    %2558 = vmatpush1.xpose.msra.mxu0 0.0
    %2559 = vmatprep.mubr.f32.mxu0 0.0
    %2560 = vmatmul.mubr.f32.gmra.mrb[0].mxu0 %v2490
    %v2561 = vpop.f32.mrb[0].mxu0
    %v2562 = vadd.f32 %v403, %v2561
    %v2563 = vpop.f32.mrb[0].mxu0
    %2564 = vdwg.mxu0
    %v2565 = vsel %vm406, %v2486, -inf
    %2566 = vmax.xlane.f32.xlu0 %v2565
    %v2567 = vpop.xlane.xlu0 %2566
    %v2568 = vsel %vm406, %v2562, -inf
    %2569 = vmax.xlane.f32.xlu0 %v2568
    %v2570 = vpop.xlane.xlu0 %2569
    %v2571 = vsub.f32 %v2486, %v2567
    %v2572 = vsub.f32 %v2562, %v2570
    %v2573 = vmul.f32 %v2571, 1.442695
    %v2574 = vpow.pop %v2573
    %v2575 = vmul.f32 %v2572, 1.442695
    %v2576 = vpow.pop %v2575
    %v2577 = vsel %vm406, %v2574, 0.0
    %2578 = vadd.xlane.f32.xlu0 %v2577
    %v2579 = vpop.xlane.xlu0 %2578
    %v2580 = vsel %vm406, %v2576, 0.0
    %2581 = vadd.xlane.f32.xlu0 %v2580
    %v2582 = vpop.xlane.xlu0 %2581
    %v2583 = vrcp.pop %v2579
    %v2584 = vrcp.pop %v2582
    %v2585 = vmul.f32 %v2574, %v2583
    %v2586 = vmul.f32 %v2576, %v2584
    %v2588 = vsel %vm406, %v2585, 0
    %2590 = vmatprep.subr.mxu0 0.0
    %2591 = vmatpush1.msra.mxu0 %v2405
    %2592 = vmatprep.subr.mxu0 0.0
    %2593 = vmatpush1.msra.mxu0 0.0
    %2594 = vmatprep.subr.mxu0 0.0
    %2595 = vmatpush1.msra.mxu0 0.0
    %2596 = vmatprep.subr.mxu0 0.0
    %2597 = vmatpush1.msra.mxu0 0.0
    %2598 = vmatprep.subr.mxu0 0.0
    %2599 = vmatpush1.msra.mxu0 0.0
    %2600 = vmatprep.subr.mxu0 0.0
    %2601 = vmatpush1.msra.mxu0 0.0
    %2602 = vmatprep.subr.mxu0 0.0
    %2603 = vmatpush1.msra.mxu0 0.0
    %2604 = vmatprep.subr.mxu0 0.0
    %2605 = vmatpush1.msra.mxu0 0.0
    %2606 = vmatprep.subr.mxu0 0.0
    %2607 = vmatpush1.msra.mxu0 0.0
    %2608 = vmatprep.subr.mxu0 0.0
    %2609 = vmatpush1.msra.mxu0 0.0
    %2610 = vmatprep.subr.mxu0 0.0
    %2611 = vmatpush1.msra.mxu0 0.0
    %2612 = vmatprep.subr.mxu0 0.0
    %2613 = vmatpush1.msra.mxu0 0.0
    %2614 = vmatprep.subr.mxu0 0.0
    %2615 = vmatpush1.msra.mxu0 0.0
    %2616 = vmatprep.subr.mxu0 0.0
    %2617 = vmatpush1.msra.mxu0 0.0
    %2618 = vmatprep.subr.mxu0 0.0
    %2619 = vmatpush1.msra.mxu0 0.0
    %2620 = vmatprep.subr.mxu0 0.0
    %2621 = vmatpush1.msra.mxu0 0.0
    %2622 = vmatprep.subr.mxu0 0.0
    %2623 = vmatpush1.msra.mxu0 0.0
    %2624 = vmatprep.subr.mxu0 0.0
    %2625 = vmatpush1.msra.mxu0 0.0
    %2626 = vmatprep.subr.mxu0 0.0
    %2627 = vmatpush1.msra.mxu0 0.0
    %2628 = vmatprep.subr.mxu0 0.0
    %2629 = vmatpush1.msra.mxu0 0.0
    %2630 = vmatprep.subr.mxu0 0.0
    %2631 = vmatpush1.msra.mxu0 0.0
    %2632 = vmatprep.subr.mxu0 0.0
    %2633 = vmatpush1.msra.mxu0 0.0
    %2634 = vmatprep.subr.mxu0 0.0
    %2635 = vmatpush1.msra.mxu0 0.0
    %2636 = vmatprep.subr.mxu0 0.0
    %2637 = vmatpush1.msra.mxu0 0.0
    %2638 = vmatprep.subr.mxu0 0.0
    %2639 = vmatpush1.msra.mxu0 0.0
    %2640 = vmatprep.subr.mxu0 0.0
    %2641 = vmatpush1.msra.mxu0 0.0
    %2642 = vmatprep.subr.mxu0 0.0
    %2643 = vmatpush1.msra.mxu0 0.0
    %2644 = vmatprep.subr.mxu0 0.0
    %2645 = vmatpush1.msra.mxu0 0.0
    %2646 = vmatprep.subr.mxu0 0.0
    %2647 = vmatpush1.msra.mxu0 0.0
    %2648 = vmatprep.subr.mxu0 0.0
    %2649 = vmatpush1.msra.mxu0 0.0
    %2650 = vmatprep.subr.mxu0 0.0
    %2651 = vmatpush1.msra.mxu0 0.0
    %2652 = vmatprep.subr.mxu0 0.0
    %2653 = vmatpush1.msra.mxu0 0.0
    %2654 = vmatprep.mubr.f32.mxu0 0.0
    %2655 = vmatmul.mubr.f32.gmra.mrb[0].mxu0 %v2588
    %v2656 = vpop.f32.mrb[0].mxu0
    %v2657 = vadd.f32 0.0, %v2656
    %v2658 = vpop.f32.mrb[0].mxu0
    %2659 = vdwg.mxu0
    %v2661 = vsel %vm406, %v2586, 0
    %2663 = vmatprep.subr.mxu0 0.0
    %2664 = vmatpush1.msra.mxu0 %v2410
    %2665 = vmatprep.subr.mxu0 0.0
    %2666 = vmatpush1.msra.mxu0 0.0
    %2667 = vmatprep.subr.mxu0 0.0
    %2668 = vmatpush1.msra.mxu0 0.0
    %2669 = vmatprep.subr.mxu0 0.0
    %2670 = vmatpush1.msra.mxu0 0.0
    %2671 = vmatprep.subr.mxu0 0.0
    %2672 = vmatpush1.msra.mxu0 0.0
    %2673 = vmatprep.subr.mxu0 0.0
    %2674 = vmatpush1.msra.mxu0 0.0
    %2675 = vmatprep.subr.mxu0 0.0
    %2676 = vmatpush1.msra.mxu0 0.0
    %2677 = vmatprep.subr.mxu0 0.0
    %2678 = vmatpush1.msra.mxu0 0.0
    %2679 = vmatprep.subr.mxu0 0.0
    %2680 = vmatpush1.msra.mxu0 0.0
    %2681 = vmatprep.subr.mxu0 0.0
    %2682 = vmatpush1.msra.mxu0 0.0
    %2683 = vmatprep.subr.mxu0 0.0
    %2684 = vmatpush1.msra.mxu0 0.0
    %2685 = vmatprep.subr.mxu0 0.0
    %2686 = vmatpush1.msra.mxu0 0.0
    %2687 = vmatprep.subr.mxu0 0.0
    %2688 = vmatpush1.msra.mxu0 0.0
    %2689 = vmatprep.subr.mxu0 0.0
    %2690 = vmatpush1.msra.mxu0 0.0
    %2691 = vmatprep.subr.mxu0 0.0
    %2692 = vmatpush1.msra.mxu0 0.0
    %2693 = vmatprep.subr.mxu0 0.0
    %2694 = vmatpush1.msra.mxu0 0.0
    %2695 = vmatprep.subr.mxu0 0.0
    %2696 = vmatpush1.msra.mxu0 0.0
    %2697 = vmatprep.subr.mxu0 0.0
    %2698 = vmatpush1.msra.mxu0 0.0
    %2699 = vmatprep.subr.mxu0 0.0
    %2700 = vmatpush1.msra.mxu0 0.0
    %2701 = vmatprep.subr.mxu0 0.0
    %2702 = vmatpush1.msra.mxu0 0.0
    %2703 = vmatprep.subr.mxu0 0.0
    %2704 = vmatpush1.msra.mxu0 0.0
    %2705 = vmatprep.subr.mxu0 0.0
    %2706 = vmatpush1.msra.mxu0 0.0
    %2707 = vmatprep.subr.mxu0 0.0
    %2708 = vmatpush1.msra.mxu0 0.0
    %2709 = vmatprep.subr.mxu0 0.0
    %2710 = vmatpush1.msra.mxu0 0.0
    %2711 = vmatprep.subr.mxu0 0.0
    %2712 = vmatpush1.msra.mxu0 0.0
    %2713 = vmatprep.subr.mxu0 0.0
    %2714 = vmatpush1.msra.mxu0 0.0
    %2715 = vmatprep.subr.mxu0 0.0
    %2716 = vmatpush1.msra.mxu0 0.0
    %2717 = vmatprep.subr.mxu0 0.0
    %2718 = vmatpush1.msra.mxu0 0.0
    %2719 = vmatprep.subr.mxu0 0.0
    %2720 = vmatpush1.msra.mxu0 0.0
    %2721 = vmatprep.subr.mxu0 0.0
    %2722 = vmatpush1.msra.mxu0 0.0
    %2723 = vmatprep.subr.mxu0 0.0
    %2724 = vmatpush1.msra.mxu0 0.0
    %2725 = vmatprep.subr.mxu0 0.0
    %2726 = vmatpush1.msra.mxu0 0.0
    %2727 = vmatprep.mubr.f32.mxu0 0.0
    %2728 = vmatmul.mubr.f32.gmra.mrb[0].mxu0 %v2661
    %v2729 = vpop.f32.mrb[0].mxu0
    %v2730 = vadd.f32 0.0, %v2729
    %v2731 = vpop.f32.mrb[0].mxu0
    %2732 = vdwg.mxu0
    %s2733 = scalar_lea.vmem %s8, 24
    %v2734 = vld [vmem:[%s2733] sm:$0xff]
    %v2736 = vsel %vm406, %v2657, 0
    %v2739 = vsel %vm406, %v2730, 0
    %2741 = vmatprep.subr.mxu0 0.0
    %2742 = vmatpush1.msra.mxu0 %v2734
    %2743 = vmatprep.subr.mxu0 0.0
    %2744 = vmatpush1.msra.mxu0 0.0
    %2745 = vmatprep.subr.mxu0 0.0
    %2746 = vmatpush1.msra.mxu0 0.0
    %2747 = vmatprep.subr.mxu0 0.0
    %2748 = vmatpush1.msra.mxu0 0.0
    %2749 = vmatprep.subr.mxu0 0.0
    %2750 = vmatpush1.msra.mxu0 0.0
    %2751 = vmatprep.subr.mxu0 0.0
    %2752 = vmatpush1.msra.mxu0 0.0
    %2753 = vmatprep.subr.mxu0 0.0
    %2754 = vmatpush1.msra.mxu0 0.0
    %2755 = vmatprep.subr.mxu0 0.0
    %2756 = vmatpush1.msra.mxu0 0.0
    %2757 = vmatprep.subr.mxu0 0.0
    %2758 = vmatpush1.msra.mxu0 0.0
    %2759 = vmatprep.subr.mxu0 0.0
    %2760 = vmatpush1.msra.mxu0 0.0
    %2761 = vmatprep.subr.mxu0 0.0
    %2762 = vmatpush1.msra.mxu0 0.0
    %2763 = vmatprep.subr.mxu0 0.0
    %2764 = vmatpush1.msra.mxu0 0.0
    %2765 = vmatprep.subr.mxu0 0.0
    %2766 = vmatpush1.msra.mxu0 0.0
    %2767 = vmatprep.subr.mxu0 0.0
    %2768 = vmatpush1.msra.mxu0 0.0
    %2769 = vmatprep.subr.mxu0 0.0
    %2770 = vmatpush1.msra.mxu0 0.0
    %2771 = vmatprep.subr.mxu0 0.0
    %2772 = vmatpush1.msra.mxu0 0.0
    %2773 = vmatprep.subr.mxu0 0.0
    %2774 = vmatpush1.msra.mxu0 0.0
    %2775 = vmatprep.subr.mxu0 0.0
    %2776 = vmatpush1.msra.mxu0 0.0
    %2777 = vmatprep.subr.mxu0 0.0
    %2778 = vmatpush1.msra.mxu0 0.0
    %2779 = vmatprep.subr.mxu0 0.0
    %2780 = vmatpush1.msra.mxu0 0.0
    %2781 = vmatprep.subr.mxu0 0.0
    %2782 = vmatpush1.msra.mxu0 0.0
    %2783 = vmatprep.subr.mxu0 0.0
    %2784 = vmatpush1.msra.mxu0 0.0
    %2785 = vmatprep.subr.mxu0 0.0
    %2786 = vmatpush1.msra.mxu0 0.0
    %2787 = vmatprep.subr.mxu0 0.0
    %2788 = vmatpush1.msra.mxu0 0.0
    %2789 = vmatprep.subr.mxu0 0.0
    %2790 = vmatpush1.msra.mxu0 0.0
    %2791 = vmatprep.subr.mxu0 0.0
    %2792 = vmatpush1.msra.mxu0 0.0
    %2793 = vmatprep.subr.mxu0 0.0
    %2794 = vmatpush1.msra.mxu0 0.0
    %2795 = vmatprep.subr.mxu0 0.0
    %2796 = vmatpush1.msra.mxu0 0.0
    %2797 = vmatprep.subr.mxu0 0.0
    %2798 = vmatpush1.msra.mxu0 0.0
    %2799 = vmatprep.subr.mxu0 0.0
    %2800 = vmatpush1.msra.mxu0 0.0
    %2801 = vmatprep.subr.mxu0 0.0
    %2802 = vmatpush1.msra.mxu0 0.0
    %2803 = vmatprep.subr.mxu0 0.0
    %2804 = vmatpush1.msra.mxu0 0.0
    %2805 = vmatprep.mubr.f32.mxu0 0.0
    %2806 = vmatmul.mubr.f32.gmra.mrb[0].mxu0 %v2736
    %v2807 = vpop.f32.mrb[0].mxu0
    %v2808 = vadd.f32 0.0, %v2807
    %v2809 = vpop.f32.mrb[0].mxu0
    %2810 = vmatprep.mubr.f32.mxu0 0.0
    %2811 = vmatmul.mubr.f32.gmra.mrb[0].mxu0 %v2739
    %v2812 = vpop.f32.mrb[0].mxu0
    %v2813 = vadd.f32 0.0, %v2812
    %v2814 = vpop.f32.mrb[0].mxu0
    %2815 = vdwg.mxu0
    %v2816 = vadd.f32 %v2147, %v2808
    %v2817 = vadd.f32 %v2148, %v2813
    %v2818 = vld [vmem:[%s16] sm:$0x1]
    %v2819 = vld [vmem:[%s17] sm:$0x1]
    %v2820 = vsel %vm76, %v2816, 0.0
    %2821 = vadd.xlane.f32.xlu0 %v2820
    %v2822 = vpop.xlane.xlu0 %2821
    %v2823 = vsel %vm76, %v2817, 0.0
    %2824 = vadd.xlane.f32.xlu0 %v2823
    %v2825 = vpop.xlane.xlu0 %2824
    %v2826 = vmul.f32 %v2822, %v83
    %v2827 = vmul.f32 %v2825, %v83
    %v2828 = vsub.f32 %v2816, %v2826
    %v2829 = vsub.f32 %v2817, %v2827
    %v2830 = vmul.f32 %v2828, %v2828
    %v2831 = vmul.f32 %v2829, %v2829
    %v2832 = vsel %vm76, %v2830, 0.0
    %2833 = vadd.xlane.f32.xlu0 %v2832
    %v2834 = vpop.xlane.xlu0 %2833
    %v2835 = vsel %vm76, %v2831, 0.0
    %2836 = vadd.xlane.f32.xlu0 %v2835
    %v2837 = vpop.xlane.xlu0 %2836
    %v2838 = vmul.f32 %v2834, %v96
    %v2839 = vmul.f32 %v2837, %v96
    %v2840 = vadd.f32 %v2838, 1e-12
    %v2841 = vadd.f32 %v2839, 1e-12
    %v2842 = vrsqrt.pop %v2840
    %v2843 = vrsqrt.pop %v2841
    %v2845 = vlaneseq
    %v2846 = vshrl.u32 %v2845, 7
    %v2847 = vsub.s32 0, %v2846
    %v2848 = vrot.slane %v2818, %v2847
    %v2850 = vmul.f32 %v2848, %v2828
    %v2851 = vmul.f32 %v2848, %v2829
    %v2852 = vmul.f32 %v2850, %v2842
    %v2853 = vmul.f32 %v2851, %v2843
    %v2855 = vlaneseq
    %v2856 = vshrl.u32 %v2855, 7
    %v2857 = vsub.s32 0, %v2856
    %v2858 = vrot.slane %v2819, %v2857
    %v2860 = vadd.f32 %v2852, %v2858
    %v2861 = vadd.f32 %v2853, %v2858
    %v2862 = vld [vmem:[%s12] sm:$0xff]
    %v2863 = vld [vmem:[%s12 + $0x8] sm:$0xff]
    %v2864 = vld [vmem:[%s12 + $0x10] sm:$0xff]
    %v2865 = vld [vmem:[%s12 + $0x18] sm:$0xff]
    %v2866 = vld [vmem:[%s13] sm:$0x1]
    %v2868 = vlaneseq
    %v2869 = vshrl.u32 %v2868, 7
    %v2870 = vsub.s32 0, %v2869
    %v2871 = vrot.slane %v2866, %v2870
    %v2874 = vsel %vm76, %v2860, 0
    %v2877 = vsel %vm76, %v2861, 0
    %2879 = vmatprep.subr.mxu0 0.0
    %2880 = vmatpush1.msra.mxu0 %v2862
    %2881 = vmatprep.subr.mxu0 0.0
    %2882 = vmatpush1.msra.mxu0 %v2863
    %2883 = vmatprep.subr.mxu0 0.0
    %2884 = vmatpush1.msra.mxu0 %v2864
    %2885 = vmatprep.subr.mxu0 0.0
    %2886 = vmatpush1.msra.mxu0 %v2865
    %2887 = vmatprep.subr.mxu0 0.0
    %2888 = vmatpush1.msra.mxu0 0.0
    %2889 = vmatprep.subr.mxu0 0.0
    %2890 = vmatpush1.msra.mxu0 0.0
    %2891 = vmatprep.subr.mxu0 0.0
    %2892 = vmatpush1.msra.mxu0 0.0
    %2893 = vmatprep.subr.mxu0 0.0
    %2894 = vmatpush1.msra.mxu0 0.0
    %2895 = vmatprep.subr.mxu0 0.0
    %2896 = vmatpush1.msra.mxu0 0.0
    %2897 = vmatprep.subr.mxu0 0.0
    %2898 = vmatpush1.msra.mxu0 0.0
    %2899 = vmatprep.subr.mxu0 0.0
    %2900 = vmatpush1.msra.mxu0 0.0
    %2901 = vmatprep.subr.mxu0 0.0
    %2902 = vmatpush1.msra.mxu0 0.0
    %2903 = vmatprep.subr.mxu0 0.0
    %2904 = vmatpush1.msra.mxu0 0.0
    %2905 = vmatprep.subr.mxu0 0.0
    %2906 = vmatpush1.msra.mxu0 0.0
    %2907 = vmatprep.subr.mxu0 0.0
    %2908 = vmatpush1.msra.mxu0 0.0
    %2909 = vmatprep.subr.mxu0 0.0
    %2910 = vmatpush1.msra.mxu0 0.0
    %2911 = vmatprep.subr.mxu0 0.0
    %2912 = vmatpush1.msra.mxu0 0.0
    %2913 = vmatprep.subr.mxu0 0.0
    %2914 = vmatpush1.msra.mxu0 0.0
    %2915 = vmatprep.subr.mxu0 0.0
    %2916 = vmatpush1.msra.mxu0 0.0
    %2917 = vmatprep.subr.mxu0 0.0
    %2918 = vmatpush1.msra.mxu0 0.0
    %2919 = vmatprep.subr.mxu0 0.0
    %2920 = vmatpush1.msra.mxu0 0.0
    %2921 = vmatprep.subr.mxu0 0.0
    %2922 = vmatpush1.msra.mxu0 0.0
    %2923 = vmatprep.subr.mxu0 0.0
    %2924 = vmatpush1.msra.mxu0 0.0
    %2925 = vmatprep.subr.mxu0 0.0
    %2926 = vmatpush1.msra.mxu0 0.0
    %2927 = vmatprep.subr.mxu0 0.0
    %2928 = vmatpush1.msra.mxu0 0.0
    %2929 = vmatprep.subr.mxu0 0.0
    %2930 = vmatpush1.msra.mxu0 0.0
    %2931 = vmatprep.subr.mxu0 0.0
    %2932 = vmatpush1.msra.mxu0 0.0
    %2933 = vmatprep.subr.mxu0 0.0
    %2934 = vmatpush1.msra.mxu0 0.0
    %2935 = vmatprep.subr.mxu0 0.0
    %2936 = vmatpush1.msra.mxu0 0.0
    %2937 = vmatprep.subr.mxu0 0.0
    %2938 = vmatpush1.msra.mxu0 0.0
    %2939 = vmatprep.subr.mxu0 0.0
    %2940 = vmatpush1.msra.mxu0 0.0
    %2941 = vmatprep.subr.mxu0 0.0
    %2942 = vmatpush1.msra.mxu0 0.0
    %2943 = vmatprep.mubr.f32.mxu0 0.0
    %2944 = vmatmul.mubr.f32.gmra.mrb[0].mxu0 %v2874
    %v2945 = vpop.f32.mrb[0].mxu0
    %v2946 = vadd.f32 %v2871, %v2945
    %v2947 = vpop.f32.mrb[0].mxu0
    %2948 = vmatprep.mubr.f32.mxu0 0.0
    %2949 = vmatmul.mubr.f32.gmra.mrb[0].mxu0 %v2877
    %v2950 = vpop.f32.mrb[0].mxu0
    %v2951 = vadd.f32 %v2871, %v2950
    %v2952 = vpop.f32.mrb[0].mxu0
    %2953 = vdwg.mxu0
    %v2954 = vmax.f32 %v2946, 0.0
    %v2955 = vmax.f32 %v2951, 0.0
    %v2956 = vld [vmem:[%s14] sm:$0xff]
    %v2957 = vld [vmem:[%s14 + $0x8] sm:$0xff]
    %v2958 = vld [vmem:[%s14 + $0x10] sm:$0xff]
    %v2959 = vld [vmem:[%s14 + $0x18] sm:$0xff]
    %v2960 = vld [vmem:[%s14 + $0x20] sm:$0xff]
    %v2961 = vld [vmem:[%s14 + $0x28] sm:$0xff]
    %v2962 = vld [vmem:[%s14 + $0x30] sm:$0xff]
    %v2963 = vld [vmem:[%s14 + $0x38] sm:$0xff]
    %vm2964 = vcmask 523264
    %v2966 = vsel %vm2964, %v2954, 0
    %v2969 = vsel %vm2964, %v2955, 0
    %2971 = vmatprep.subr.mxu0 0.0
    %2972 = vmatpush1.msra.mxu0 %v2956
    %2973 = vmatprep.subr.mxu0 0.0
    %2974 = vmatpush1.msra.mxu0 %v2957
    %2975 = vmatprep.subr.mxu0 0.0
    %2976 = vmatpush1.msra.mxu0 %v2958
    %2977 = vmatprep.subr.mxu0 0.0
    %2978 = vmatpush1.msra.mxu0 %v2959
    %2979 = vmatprep.subr.mxu0 0.0
    %2980 = vmatpush1.msra.mxu0 %v2960
    %2981 = vmatprep.subr.mxu0 0.0
    %2982 = vmatpush1.msra.mxu0 %v2961
    %2983 = vmatprep.subr.mxu0 0.0
    %2984 = vmatpush1.msra.mxu0 %v2962
    %2985 = vmatprep.subr.mxu0 0.0
    %2986 = vmatpush1.msra.mxu0 %v2963
    %2987 = vmatprep.subr.mxu0 0.0
    %2988 = vmatpush1.msra.mxu0 0.0
    %2989 = vmatprep.subr.mxu0 0.0
    %2990 = vmatpush1.msra.mxu0 0.0
    %2991 = vmatprep.subr.mxu0 0.0
    %2992 = vmatpush1.msra.mxu0 0.0
    %2993 = vmatprep.subr.mxu0 0.0
    %2994 = vmatpush1.msra.mxu0 0.0
    %2995 = vmatprep.subr.mxu0 0.0
    %2996 = vmatpush1.msra.mxu0 0.0
    %2997 = vmatprep.subr.mxu0 0.0
    %2998 = vmatpush1.msra.mxu0 0.0
    %2999 = vmatprep.subr.mxu0 0.0
    %3000 = vmatpush1.msra.mxu0 0.0
    %3001 = vmatprep.subr.mxu0 0.0
    %3002 = vmatpush1.msra.mxu0 0.0
    %3003 = vmatprep.subr.mxu0 0.0
    %3004 = vmatpush1.msra.mxu0 0.0
    %3005 = vmatprep.subr.mxu0 0.0
    %3006 = vmatpush1.msra.mxu0 0.0
    %3007 = vmatprep.subr.mxu0 0.0
    %3008 = vmatpush1.msra.mxu0 0.0
    %3009 = vmatprep.subr.mxu0 0.0
    %3010 = vmatpush1.msra.mxu0 0.0
    %3011 = vmatprep.subr.mxu0 0.0
    %3012 = vmatpush1.msra.mxu0 0.0
    %3013 = vmatprep.subr.mxu0 0.0
    %3014 = vmatpush1.msra.mxu0 0.0
    %3015 = vmatprep.subr.mxu0 0.0
    %3016 = vmatpush1.msra.mxu0 0.0
    %3017 = vmatprep.subr.mxu0 0.0
    %3018 = vmatpush1.msra.mxu0 0.0
    %3019 = vmatprep.subr.mxu0 0.0
    %3020 = vmatpush1.msra.mxu0 0.0
    %3021 = vmatprep.subr.mxu0 0.0
    %3022 = vmatpush1.msra.mxu0 0.0
    %3023 = vmatprep.subr.mxu0 0.0
    %3024 = vmatpush1.msra.mxu0 0.0
    %3025 = vmatprep.subr.mxu0 0.0
    %3026 = vmatpush1.msra.mxu0 0.0
    %3027 = vmatprep.subr.mxu0 0.0
    %3028 = vmatpush1.msra.mxu0 0.0
    %3029 = vmatprep.subr.mxu0 0.0
    %3030 = vmatpush1.msra.mxu0 0.0
    %3031 = vmatprep.subr.mxu0 0.0
    %3032 = vmatpush1.msra.mxu0 0.0
    %3033 = vmatprep.subr.mxu0 0.0
    %3034 = vmatpush1.msra.mxu0 0.0
    %3035 = vmatprep.mubr.f32.mxu0 0.0
    %3036 = vmatmul.mubr.f32.gmra.mrb[0].mxu0 %v2966
    %v3037 = vpop.f32.mrb[0].mxu0
    %v3038 = vadd.f32 0.0, %v3037
    %v3039 = vpop.f32.mrb[0].mxu0
    %3040 = vmatprep.mubr.f32.mxu0 0.0
    %3041 = vmatmul.mubr.f32.gmra.mrb[0].mxu0 %v2969
    %v3042 = vpop.f32.mrb[0].mxu0
    %v3043 = vadd.f32 0.0, %v3042
    %v3044 = vpop.f32.mrb[0].mxu0
    %3045 = vdwg.mxu0
    %v3046 = vadd.f32 %v2816, %v3038
    %v3047 = vadd.f32 %v2817, %v3043
    %v3048 = vld [vmem:[%s15] sm:$0x1]
    %v3050 = vlaneseq
    %v3051 = vshrl.u32 %v3050, 7
    %v3052 = vsub.s32 0, %v3051
    %v3053 = vrot.slane %v3048, %v3052
    %v3055 = vadd.f32 %v3046, %v3053
    %v3056 = vadd.f32 %v3047, %v3053
    %s3057 = scalar_lea.vmem %s10, 1
    %v3058 = vld [vmem:[%s3057] sm:$0x1]
    %s3059 = scalar_lea.vmem %s11, 1
    %v3060 = vld [vmem:[%s3059] sm:$0x1]
    %v3061 = vsel %vm76, %v3055, 0.0
    %3062 = vadd.xlane.f32.xlu0 %v3061
    %v3063 = vpop.xlane.xlu0 %3062
    %v3064 = vsel %vm76, %v3056, 0.0
    %3065 = vadd.xlane.f32.xlu0 %v3064
    %v3066 = vpop.xlane.xlu0 %3065
    %v3067 = vmul.f32 %v3063, %v83
    %v3068 = vmul.f32 %v3066, %v83
    %v3069 = vsub.f32 %v3055, %v3067
    %v3070 = vsub.f32 %v3056, %v3068
    %v3071 = vmul.f32 %v3069, %v3069
    %v3072 = vmul.f32 %v3070, %v3070
    %v3073 = vsel %vm76, %v3071, 0.0
    %3074 = vadd.xlane.f32.xlu0 %v3073
    %v3075 = vpop.xlane.xlu0 %3074
    %v3076 = vsel %vm76, %v3072, 0.0
    %3077 = vadd.xlane.f32.xlu0 %v3076
    %v3078 = vpop.xlane.xlu0 %3077
    %v3079 = vmul.f32 %v3075, %v96
    %v3080 = vmul.f32 %v3078, %v96
    %v3081 = vadd.f32 %v3079, 1e-12
    %v3082 = vadd.f32 %v3080, 1e-12
    %v3083 = vrsqrt.pop %v3081
    %v3084 = vrsqrt.pop %v3082
    %v3086 = vlaneseq
    %v3087 = vshrl.u32 %v3086, 7
    %v3088 = vsub.s32 0, %v3087
    %v3089 = vrot.slane %v3058, %v3088
    %v3091 = vmul.f32 %v3089, %v3069
    %v3092 = vmul.f32 %v3089, %v3070
    %v3093 = vmul.f32 %v3091, %v3083
    %v3094 = vmul.f32 %v3092, %v3084
    %v3096 = vlaneseq
    %v3097 = vshrl.u32 %v3096, 7
    %v3098 = vsub.s32 0, %v3097
    %v3099 = vrot.slane %v3060, %v3098
    %v3101 = vadd.f32 %v3093, %v3099
    %v3102 = vadd.f32 %v3094, %v3099
    %s3103 = scalar_lea.vmem %s9, 1
    %v3104 = vld [vmem:[%s3103] sm:$0x1]
    %v3106 = vlaneseq
    %v3107 = vshrl.u32 %v3106, 7
    %v3108 = vsub.s32 0, %v3107
    %v3109 = vrot.slane %v3104, %v3108
    %v3111 = vadd.f32 %v3055, %v3109
    %v3112 = vadd.f32 %v3056, %v3109
    %s3113 = scalar_lea.vmem %s2, 128
    %v3114 = vld [vmem:[%s3113] sm:$0xff]
    %v3115 = vld [vmem:[%s3113 + $0x8] sm:$0xff]
    %v3116 = vld [vmem:[%s3113 + $0x10] sm:$0xff]
    %v3117 = vld [vmem:[%s3113 + $0x18] sm:$0xff]
    %s3118 = scalar_lea.vmem %s3, 4
    %v3119 = vld [vmem:[%s3118] sm:$0x1]
    %v3121 = vlaneseq
    %v3122 = vshrl.u32 %v3121, 7
    %v3123 = vsub.s32 0, %v3122
    %v3124 = vrot.slane %v3119, %v3123
    %v3127 = vsel %vm76, %v3101, 0
    %v3130 = vsel %vm76, %v3102, 0
    %3132 = vmatprep.subr.mxu0 0.0
    %3133 = vmatpush1.msra.mxu0 %v3114
    %3134 = vmatprep.subr.mxu0 0.0
    %3135 = vmatpush1.msra.mxu0 %v3115
    %3136 = vmatprep.subr.mxu0 0.0
    %3137 = vmatpush1.msra.mxu0 %v3116
    %3138 = vmatprep.subr.mxu0 0.0
    %3139 = vmatpush1.msra.mxu0 %v3117
    %3140 = vmatprep.subr.mxu0 0.0
    %3141 = vmatpush1.msra.mxu0 0.0
    %3142 = vmatprep.subr.mxu0 0.0
    %3143 = vmatpush1.msra.mxu0 0.0
    %3144 = vmatprep.subr.mxu0 0.0
    %3145 = vmatpush1.msra.mxu0 0.0
    %3146 = vmatprep.subr.mxu0 0.0
    %3147 = vmatpush1.msra.mxu0 0.0
    %3148 = vmatprep.subr.mxu0 0.0
    %3149 = vmatpush1.msra.mxu0 0.0
    %3150 = vmatprep.subr.mxu0 0.0
    %3151 = vmatpush1.msra.mxu0 0.0
    %3152 = vmatprep.subr.mxu0 0.0
    %3153 = vmatpush1.msra.mxu0 0.0
    %3154 = vmatprep.subr.mxu0 0.0
    %3155 = vmatpush1.msra.mxu0 0.0
    %3156 = vmatprep.subr.mxu0 0.0
    %3157 = vmatpush1.msra.mxu0 0.0
    %3158 = vmatprep.subr.mxu0 0.0
    %3159 = vmatpush1.msra.mxu0 0.0
    %3160 = vmatprep.subr.mxu0 0.0
    %3161 = vmatpush1.msra.mxu0 0.0
    %3162 = vmatprep.subr.mxu0 0.0
    %3163 = vmatpush1.msra.mxu0 0.0
    %3164 = vmatprep.subr.mxu0 0.0
    %3165 = vmatpush1.msra.mxu0 0.0
    %3166 = vmatprep.subr.mxu0 0.0
    %3167 = vmatpush1.msra.mxu0 0.0
    %3168 = vmatprep.subr.mxu0 0.0
    %3169 = vmatpush1.msra.mxu0 0.0
    %3170 = vmatprep.subr.mxu0 0.0
    %3171 = vmatpush1.msra.mxu0 0.0
    %3172 = vmatprep.subr.mxu0 0.0
    %3173 = vmatpush1.msra.mxu0 0.0
    %3174 = vmatprep.subr.mxu0 0.0
    %3175 = vmatpush1.msra.mxu0 0.0
    %3176 = vmatprep.subr.mxu0 0.0
    %3177 = vmatpush1.msra.mxu0 0.0
    %3178 = vmatprep.subr.mxu0 0.0
    %3179 = vmatpush1.msra.mxu0 0.0
    %3180 = vmatprep.subr.mxu0 0.0
    %3181 = vmatpush1.msra.mxu0 0.0
    %3182 = vmatprep.subr.mxu0 0.0
    %3183 = vmatpush1.msra.mxu0 0.0
    %3184 = vmatprep.subr.mxu0 0.0
    %3185 = vmatpush1.msra.mxu0 0.0
    %3186 = vmatprep.subr.mxu0 0.0
    %3187 = vmatpush1.msra.mxu0 0.0
    %3188 = vmatprep.subr.mxu0 0.0
    %3189 = vmatpush1.msra.mxu0 0.0
    %3190 = vmatprep.subr.mxu0 0.0
    %3191 = vmatpush1.msra.mxu0 0.0
    %3192 = vmatprep.subr.mxu0 0.0
    %3193 = vmatpush1.msra.mxu0 0.0
    %3194 = vmatprep.subr.mxu0 0.0
    %3195 = vmatpush1.msra.mxu0 0.0
    %3196 = vmatprep.mubr.f32.mxu0 0.0
    %3197 = vmatmul.mubr.f32.gmra.mrb[0].mxu0 %v3127
    %v3198 = vpop.f32.mrb[0].mxu0
    %v3199 = vadd.f32 %v3124, %v3198
    %v3200 = vpop.f32.mrb[0].mxu0
    %3201 = vmatprep.mubr.f32.mxu0 0.0
    %3202 = vmatmul.mubr.f32.gmra.mrb[0].mxu0 %v3130
    %v3203 = vpop.f32.mrb[0].mxu0
    %v3204 = vadd.f32 %v3124, %v3203
    %v3205 = vpop.f32.mrb[0].mxu0
    %3206 = vdwg.mxu0
    %s3207 = scalar_lea.vmem %s4, 128
    %v3208 = vld [vmem:[%s3207] sm:$0xff]
    %v3209 = vld [vmem:[%s3207 + $0x8] sm:$0xff]
    %v3210 = vld [vmem:[%s3207 + $0x10] sm:$0xff]
    %v3211 = vld [vmem:[%s3207 + $0x18] sm:$0xff]
    %s3212 = scalar_lea.vmem %s5, 4
    %v3213 = vld [vmem:[%s3212] sm:$0x1]
    %v3215 = vlaneseq
    %v3216 = vshrl.u32 %v3215, 7
    %v3217 = vsub.s32 0, %v3216
    %v3218 = vrot.slane %v3213, %v3217
    %3220 = vmatprep.subr.mxu0 0.0
    %3221 = vmatpush1.msra.mxu0 %v3208
    %3222 = vmatprep.subr.mxu0 0.0
    %3223 = vmatpush1.msra.mxu0 %v3209
    %3224 = vmatprep.subr.mxu0 0.0
    %3225 = vmatpush1.msra.mxu0 %v3210
    %3226 = vmatprep.subr.mxu0 0.0
    %3227 = vmatpush1.msra.mxu0 %v3211
    %3228 = vmatprep.subr.mxu0 0.0
    %3229 = vmatpush1.msra.mxu0 0.0
    %3230 = vmatprep.subr.mxu0 0.0
    %3231 = vmatpush1.msra.mxu0 0.0
    %3232 = vmatprep.subr.mxu0 0.0
    %3233 = vmatpush1.msra.mxu0 0.0
    %3234 = vmatprep.subr.mxu0 0.0
    %3235 = vmatpush1.msra.mxu0 0.0
    %3236 = vmatprep.subr.mxu0 0.0
    %3237 = vmatpush1.msra.mxu0 0.0
    %3238 = vmatprep.subr.mxu0 0.0
    %3239 = vmatpush1.msra.mxu0 0.0
    %3240 = vmatprep.subr.mxu0 0.0
    %3241 = vmatpush1.msra.mxu0 0.0
    %3242 = vmatprep.subr.mxu0 0.0
    %3243 = vmatpush1.msra.mxu0 0.0
    %3244 = vmatprep.subr.mxu0 0.0
    %3245 = vmatpush1.msra.mxu0 0.0
    %3246 = vmatprep.subr.mxu0 0.0
    %3247 = vmatpush1.msra.mxu0 0.0
    %3248 = vmatprep.subr.mxu0 0.0
    %3249 = vmatpush1.msra.mxu0 0.0
    %3250 = vmatprep.subr.mxu0 0.0
    %3251 = vmatpush1.msra.mxu0 0.0
    %3252 = vmatprep.subr.mxu0 0.0
    %3253 = vmatpush1.msra.mxu0 0.0
    %3254 = vmatprep.subr.mxu0 0.0
    %3255 = vmatpush1.msra.mxu0 0.0
    %3256 = vmatprep.subr.mxu0 0.0
    %3257 = vmatpush1.msra.mxu0 0.0
    %3258 = vmatprep.subr.mxu0 0.0
    %3259 = vmatpush1.msra.mxu0 0.0
    %3260 = vmatprep.subr.mxu0 0.0
    %3261 = vmatpush1.msra.mxu0 0.0
    %3262 = vmatprep.subr.mxu0 0.0
    %3263 = vmatpush1.msra.mxu0 0.0
    %3264 = vmatprep.subr.mxu0 0.0
    %3265 = vmatpush1.msra.mxu0 0.0
    %3266 = vmatprep.subr.mxu0 0.0
    %3267 = vmatpush1.msra.mxu0 0.0
    %3268 = vmatprep.subr.mxu0 0.0
    %3269 = vmatpush1.msra.mxu0 0.0
    %3270 = vmatprep.subr.mxu0 0.0
    %3271 = vmatpush1.msra.mxu0 0.0
    %3272 = vmatprep.subr.mxu0 0.0
    %3273 = vmatpush1.msra.mxu0 0.0
    %3274 = vmatprep.subr.mxu0 0.0
    %3275 = vmatpush1.msra.mxu0 0.0
    %3276 = vmatprep.subr.mxu0 0.0
    %3277 = vmatpush1.msra.mxu0 0.0
    %3278 = vmatprep.subr.mxu0 0.0
    %3279 = vmatpush1.msra.mxu0 0.0
    %3280 = vmatprep.subr.mxu0 0.0
    %3281 = vmatpush1.msra.mxu0 0.0
    %3282 = vmatprep.subr.mxu0 0.0
    %3283 = vmatpush1.msra.mxu0 0.0
    %3284 = vmatprep.mubr.f32.mxu0 0.0
    %3285 = vmatmul.mubr.f32.gmra.mrb[0].mxu0 %v3127
    %v3286 = vpop.f32.mrb[0].mxu0
    %v3287 = vadd.f32 %v3218, %v3286
    %v3288 = vpop.f32.mrb[0].mxu0
    %3289 = vmatprep.mubr.f32.mxu0 0.0
    %3290 = vmatmul.mubr.f32.gmra.mrb[0].mxu0 %v3130
    %v3291 = vpop.f32.mrb[0].mxu0
    %v3292 = vadd.f32 %v3218, %v3291
    %v3293 = vpop.f32.mrb[0].mxu0
    %3294 = vdwg.mxu0
    %s3295 = scalar_lea.vmem %s6, 128
    %v3296 = vld [vmem:[%s3295] sm:$0xff]
    %v3297 = vld [vmem:[%s3295 + $0x8] sm:$0xff]
    %v3298 = vld [vmem:[%s3295 + $0x10] sm:$0xff]
    %v3299 = vld [vmem:[%s3295 + $0x18] sm:$0xff]
    %s3300 = scalar_lea.vmem %s7, 4
    %v3301 = vld [vmem:[%s3300] sm:$0x1]
    %v3303 = vlaneseq
    %v3304 = vshrl.u32 %v3303, 7
    %v3305 = vsub.s32 0, %v3304
    %v3306 = vrot.slane %v3301, %v3305
    %3308 = vmatprep.subr.mxu0 0.0
    %3309 = vmatpush1.msra.mxu0 %v3296
    %3310 = vmatprep.subr.mxu0 0.0
    %3311 = vmatpush1.msra.mxu0 %v3297
    %3312 = vmatprep.subr.mxu0 0.0
    %3313 = vmatpush1.msra.mxu0 %v3298
    %3314 = vmatprep.subr.mxu0 0.0
    %3315 = vmatpush1.msra.mxu0 %v3299
    %3316 = vmatprep.subr.mxu0 0.0
    %3317 = vmatpush1.msra.mxu0 0.0
    %3318 = vmatprep.subr.mxu0 0.0
    %3319 = vmatpush1.msra.mxu0 0.0
    %3320 = vmatprep.subr.mxu0 0.0
    %3321 = vmatpush1.msra.mxu0 0.0
    %3322 = vmatprep.subr.mxu0 0.0
    %3323 = vmatpush1.msra.mxu0 0.0
    %3324 = vmatprep.subr.mxu0 0.0
    %3325 = vmatpush1.msra.mxu0 0.0
    %3326 = vmatprep.subr.mxu0 0.0
    %3327 = vmatpush1.msra.mxu0 0.0
    %3328 = vmatprep.subr.mxu0 0.0
    %3329 = vmatpush1.msra.mxu0 0.0
    %3330 = vmatprep.subr.mxu0 0.0
    %3331 = vmatpush1.msra.mxu0 0.0
    %3332 = vmatprep.subr.mxu0 0.0
    %3333 = vmatpush1.msra.mxu0 0.0
    %3334 = vmatprep.subr.mxu0 0.0
    %3335 = vmatpush1.msra.mxu0 0.0
    %3336 = vmatprep.subr.mxu0 0.0
    %3337 = vmatpush1.msra.mxu0 0.0
    %3338 = vmatprep.subr.mxu0 0.0
    %3339 = vmatpush1.msra.mxu0 0.0
    %3340 = vmatprep.subr.mxu0 0.0
    %3341 = vmatpush1.msra.mxu0 0.0
    %3342 = vmatprep.subr.mxu0 0.0
    %3343 = vmatpush1.msra.mxu0 0.0
    %3344 = vmatprep.subr.mxu0 0.0
    %3345 = vmatpush1.msra.mxu0 0.0
    %3346 = vmatprep.subr.mxu0 0.0
    %3347 = vmatpush1.msra.mxu0 0.0
    %3348 = vmatprep.subr.mxu0 0.0
    %3349 = vmatpush1.msra.mxu0 0.0
    %3350 = vmatprep.subr.mxu0 0.0
    %3351 = vmatpush1.msra.mxu0 0.0
    %3352 = vmatprep.subr.mxu0 0.0
    %3353 = vmatpush1.msra.mxu0 0.0
    %3354 = vmatprep.subr.mxu0 0.0
    %3355 = vmatpush1.msra.mxu0 0.0
    %3356 = vmatprep.subr.mxu0 0.0
    %3357 = vmatpush1.msra.mxu0 0.0
    %3358 = vmatprep.subr.mxu0 0.0
    %3359 = vmatpush1.msra.mxu0 0.0
    %3360 = vmatprep.subr.mxu0 0.0
    %3361 = vmatpush1.msra.mxu0 0.0
    %3362 = vmatprep.subr.mxu0 0.0
    %3363 = vmatpush1.msra.mxu0 0.0
    %3364 = vmatprep.subr.mxu0 0.0
    %3365 = vmatpush1.msra.mxu0 0.0
    %3366 = vmatprep.subr.mxu0 0.0
    %3367 = vmatpush1.msra.mxu0 0.0
    %3368 = vmatprep.subr.mxu0 0.0
    %3369 = vmatpush1.msra.mxu0 0.0
    %3370 = vmatprep.subr.mxu0 0.0
    %3371 = vmatpush1.msra.mxu0 0.0
    %3372 = vmatprep.mubr.f32.mxu0 0.0
    %3373 = vmatmul.mubr.f32.gmra.mrb[0].mxu0 %v3127
    %v3374 = vpop.f32.mrb[0].mxu0
    %v3375 = vadd.f32 %v3306, %v3374
    %v3376 = vpop.f32.mrb[0].mxu0
    %3377 = vmatprep.mubr.f32.mxu0 0.0
    %3378 = vmatmul.mubr.f32.gmra.mrb[0].mxu0 %v3130
    %v3379 = vpop.f32.mrb[0].mxu0
    %v3380 = vadd.f32 %v3306, %v3379
    %v3381 = vpop.f32.mrb[0].mxu0
    %3382 = vdwg.mxu0
    %v3384 = vsel %vm406, %v3199, 0
    %v3387 = vsel %vm406, %v3287, 0
    %3389 = vmatprep.subr.mxu0 0.0
    %3390 = vmatpush1.xpose.msra.mxu0 %v3387
    %3391 = vmatprep.subr.mxu0 0.0
    %3392 = vmatpush1.xpose.msra.mxu0 0.0
    %3393 = vmatprep.subr.mxu0 0.0
    %3394 = vmatpush1.xpose.msra.mxu0 0.0
    %3395 = vmatprep.subr.mxu0 0.0
    %3396 = vmatpush1.xpose.msra.mxu0 0.0
    %3397 = vmatprep.subr.mxu0 0.0
    %3398 = vmatpush1.xpose.msra.mxu0 0.0
    %3399 = vmatprep.subr.mxu0 0.0
    %3400 = vmatpush1.xpose.msra.mxu0 0.0
    %3401 = vmatprep.subr.mxu0 0.0
    %3402 = vmatpush1.xpose.msra.mxu0 0.0
    %3403 = vmatprep.subr.mxu0 0.0
    %3404 = vmatpush1.xpose.msra.mxu0 0.0
    %3405 = vmatprep.subr.mxu0 0.0
    %3406 = vmatpush1.xpose.msra.mxu0 0.0
    %3407 = vmatprep.subr.mxu0 0.0
    %3408 = vmatpush1.xpose.msra.mxu0 0.0
    %3409 = vmatprep.subr.mxu0 0.0
    %3410 = vmatpush1.xpose.msra.mxu0 0.0
    %3411 = vmatprep.subr.mxu0 0.0
    %3412 = vmatpush1.xpose.msra.mxu0 0.0
    %3413 = vmatprep.subr.mxu0 0.0
    %3414 = vmatpush1.xpose.msra.mxu0 0.0
    %3415 = vmatprep.subr.mxu0 0.0
    %3416 = vmatpush1.xpose.msra.mxu0 0.0
    %3417 = vmatprep.subr.mxu0 0.0
    %3418 = vmatpush1.xpose.msra.mxu0 0.0
    %3419 = vmatprep.subr.mxu0 0.0
    %3420 = vmatpush1.xpose.msra.mxu0 0.0
    %3421 = vmatprep.subr.mxu0 0.0
    %3422 = vmatpush1.xpose.msra.mxu0 0.0
    %3423 = vmatprep.subr.mxu0 0.0
    %3424 = vmatpush1.xpose.msra.mxu0 0.0
    %3425 = vmatprep.subr.mxu0 0.0
    %3426 = vmatpush1.xpose.msra.mxu0 0.0
    %3427 = vmatprep.subr.mxu0 0.0
    %3428 = vmatpush1.xpose.msra.mxu0 0.0
    %3429 = vmatprep.subr.mxu0 0.0
    %3430 = vmatpush1.xpose.msra.mxu0 0.0
    %3431 = vmatprep.subr.mxu0 0.0
    %3432 = vmatpush1.xpose.msra.mxu0 0.0
    %3433 = vmatprep.subr.mxu0 0.0
    %3434 = vmatpush1.xpose.msra.mxu0 0.0
    %3435 = vmatprep.subr.mxu0 0.0
    %3436 = vmatpush1.xpose.msra.mxu0 0.0
    %3437 = vmatprep.subr.mxu0 0.0
    %3438 = vmatpush1.xpose.msra.mxu0 0.0
    %3439 = vmatprep.subr.mxu0 0.0
    %3440 = vmatpush1.xpose.msra.mxu0 0.0
    %3441 = vmatprep.subr.mxu0 0.0
    %3442 = vmatpush1.xpose.msra.mxu0 0.0
    %3443 = vmatprep.subr.mxu0 0.0
    %3444 = vmatpush1.xpose.msra.mxu0 0.0
    %3445 = vmatprep.subr.mxu0 0.0
    %3446 = vmatpush1.xpose.msra.mxu0 0.0
    %3447 = vmatprep.subr.mxu0 0.0
    %3448 = vmatpush1.xpose.msra.mxu0 0.0
    %3449 = vmatprep.subr.mxu0 0.0
    %3450 = vmatpush1.xpose.msra.mxu0 0.0
    %3451 = vmatprep.subr.mxu0 0.0
    %3452 = vmatpush1.xpose.msra.mxu0 0.0
    %3453 = vmatprep.mubr.f32.mxu0 0.0
    %3454 = vmatmul.mubr.f32.gmra.mrb[0].mxu0 %v3384
    %v3455 = vpop.f32.mrb[0].mxu0
    %v3456 = vadd.f32 %v399, %v3455
    %v3457 = vpop.f32.mrb[0].mxu0
    %3458 = vdwg.mxu0
    %v3460 = vsel %vm406, %v3204, 0
    %v3463 = vsel %vm406, %v3292, 0
    %3465 = vmatprep.subr.mxu0 0.0
    %3466 = vmatpush1.xpose.msra.mxu0 %v3463
    %3467 = vmatprep.subr.mxu0 0.0
    %3468 = vmatpush1.xpose.msra.mxu0 0.0
    %3469 = vmatprep.subr.mxu0 0.0
    %3470 = vmatpush1.xpose.msra.mxu0 0.0
    %3471 = vmatprep.subr.mxu0 0.0
    %3472 = vmatpush1.xpose.msra.mxu0 0.0
    %3473 = vmatprep.subr.mxu0 0.0
    %3474 = vmatpush1.xpose.msra.mxu0 0.0
    %3475 = vmatprep.subr.mxu0 0.0
    %3476 = vmatpush1.xpose.msra.mxu0 0.0
    %3477 = vmatprep.subr.mxu0 0.0
    %3478 = vmatpush1.xpose.msra.mxu0 0.0
    %3479 = vmatprep.subr.mxu0 0.0
    %3480 = vmatpush1.xpose.msra.mxu0 0.0
    %3481 = vmatprep.subr.mxu0 0.0
    %3482 = vmatpush1.xpose.msra.mxu0 0.0
    %3483 = vmatprep.subr.mxu0 0.0
    %3484 = vmatpush1.xpose.msra.mxu0 0.0
    %3485 = vmatprep.subr.mxu0 0.0
    %3486 = vmatpush1.xpose.msra.mxu0 0.0
    %3487 = vmatprep.subr.mxu0 0.0
    %3488 = vmatpush1.xpose.msra.mxu0 0.0
    %3489 = vmatprep.subr.mxu0 0.0
    %3490 = vmatpush1.xpose.msra.mxu0 0.0
    %3491 = vmatprep.subr.mxu0 0.0
    %3492 = vmatpush1.xpose.msra.mxu0 0.0
    %3493 = vmatprep.subr.mxu0 0.0
    %3494 = vmatpush1.xpose.msra.mxu0 0.0
    %3495 = vmatprep.subr.mxu0 0.0
    %3496 = vmatpush1.xpose.msra.mxu0 0.0
    %3497 = vmatprep.subr.mxu0 0.0
    %3498 = vmatpush1.xpose.msra.mxu0 0.0
    %3499 = vmatprep.subr.mxu0 0.0
    %3500 = vmatpush1.xpose.msra.mxu0 0.0
    %3501 = vmatprep.subr.mxu0 0.0
    %3502 = vmatpush1.xpose.msra.mxu0 0.0
    %3503 = vmatprep.subr.mxu0 0.0
    %3504 = vmatpush1.xpose.msra.mxu0 0.0
    %3505 = vmatprep.subr.mxu0 0.0
    %3506 = vmatpush1.xpose.msra.mxu0 0.0
    %3507 = vmatprep.subr.mxu0 0.0
    %3508 = vmatpush1.xpose.msra.mxu0 0.0
    %3509 = vmatprep.subr.mxu0 0.0
    %3510 = vmatpush1.xpose.msra.mxu0 0.0
    %3511 = vmatprep.subr.mxu0 0.0
    %3512 = vmatpush1.xpose.msra.mxu0 0.0
    %3513 = vmatprep.subr.mxu0 0.0
    %3514 = vmatpush1.xpose.msra.mxu0 0.0
    %3515 = vmatprep.subr.mxu0 0.0
    %3516 = vmatpush1.xpose.msra.mxu0 0.0
    %3517 = vmatprep.subr.mxu0 0.0
    %3518 = vmatpush1.xpose.msra.mxu0 0.0
    %3519 = vmatprep.subr.mxu0 0.0
    %3520 = vmatpush1.xpose.msra.mxu0 0.0
    %3521 = vmatprep.subr.mxu0 0.0
    %3522 = vmatpush1.xpose.msra.mxu0 0.0
    %3523 = vmatprep.subr.mxu0 0.0
    %3524 = vmatpush1.xpose.msra.mxu0 0.0
    %3525 = vmatprep.subr.mxu0 0.0
    %3526 = vmatpush1.xpose.msra.mxu0 0.0
    %3527 = vmatprep.subr.mxu0 0.0
    %3528 = vmatpush1.xpose.msra.mxu0 0.0
    %3529 = vmatprep.mubr.f32.mxu0 0.0
    %3530 = vmatmul.mubr.f32.gmra.mrb[0].mxu0 %v3460
    %v3531 = vpop.f32.mrb[0].mxu0
    %v3532 = vadd.f32 %v403, %v3531
    %v3533 = vpop.f32.mrb[0].mxu0
    %3534 = vdwg.mxu0
    %v3535 = vsel %vm406, %v3456, -inf
    %3536 = vmax.xlane.f32.xlu0 %v3535
    %v3537 = vpop.xlane.xlu0 %3536
    %v3538 = vsel %vm406, %v3532, -inf
    %3539 = vmax.xlane.f32.xlu0 %v3538
    %v3540 = vpop.xlane.xlu0 %3539
    %v3541 = vsub.f32 %v3456, %v3537
    %v3542 = vsub.f32 %v3532, %v3540
    %v3543 = vmul.f32 %v3541, 1.442695
    %v3544 = vpow.pop %v3543
    %v3545 = vmul.f32 %v3542, 1.442695
    %v3546 = vpow.pop %v3545
    %v3547 = vsel %vm406, %v3544, 0.0
    %3548 = vadd.xlane.f32.xlu0 %v3547
    %v3549 = vpop.xlane.xlu0 %3548
    %v3550 = vsel %vm406, %v3546, 0.0
    %3551 = vadd.xlane.f32.xlu0 %v3550
    %v3552 = vpop.xlane.xlu0 %3551
    %v3553 = vrcp.pop %v3549
    %v3554 = vrcp.pop %v3552
    %v3555 = vmul.f32 %v3544, %v3553
    %v3556 = vmul.f32 %v3546, %v3554
    %v3558 = vsel %vm406, %v3555, 0
    %3560 = vmatprep.subr.mxu0 0.0
    %3561 = vmatpush1.msra.mxu0 %v3375
    %3562 = vmatprep.subr.mxu0 0.0
    %3563 = vmatpush1.msra.mxu0 0.0
    %3564 = vmatprep.subr.mxu0 0.0
    %3565 = vmatpush1.msra.mxu0 0.0
    %3566 = vmatprep.subr.mxu0 0.0
    %3567 = vmatpush1.msra.mxu0 0.0
    %3568 = vmatprep.subr.mxu0 0.0
    %3569 = vmatpush1.msra.mxu0 0.0
    %3570 = vmatprep.subr.mxu0 0.0
    %3571 = vmatpush1.msra.mxu0 0.0
    %3572 = vmatprep.subr.mxu0 0.0
    %3573 = vmatpush1.msra.mxu0 0.0
    %3574 = vmatprep.subr.mxu0 0.0
    %3575 = vmatpush1.msra.mxu0 0.0
    %3576 = vmatprep.subr.mxu0 0.0
    %3577 = vmatpush1.msra.mxu0 0.0
    %3578 = vmatprep.subr.mxu0 0.0
    %3579 = vmatpush1.msra.mxu0 0.0
    %3580 = vmatprep.subr.mxu0 0.0
    %3581 = vmatpush1.msra.mxu0 0.0
    %3582 = vmatprep.subr.mxu0 0.0
    %3583 = vmatpush1.msra.mxu0 0.0
    %3584 = vmatprep.subr.mxu0 0.0
    %3585 = vmatpush1.msra.mxu0 0.0
    %3586 = vmatprep.subr.mxu0 0.0
    %3587 = vmatpush1.msra.mxu0 0.0
    %3588 = vmatprep.subr.mxu0 0.0
    %3589 = vmatpush1.msra.mxu0 0.0
    %3590 = vmatprep.subr.mxu0 0.0
    %3591 = vmatpush1.msra.mxu0 0.0
    %3592 = vmatprep.subr.mxu0 0.0
    %3593 = vmatpush1.msra.mxu0 0.0
    %3594 = vmatprep.subr.mxu0 0.0
    %3595 = vmatpush1.msra.mxu0 0.0
    %3596 = vmatprep.subr.mxu0 0.0
    %3597 = vmatpush1.msra.mxu0 0.0
    %3598 = vmatprep.subr.mxu0 0.0
    %3599 = vmatpush1.msra.mxu0 0.0
    %3600 = vmatprep.subr.mxu0 0.0
    %3601 = vmatpush1.msra.mxu0 0.0
    %3602 = vmatprep.subr.mxu0 0.0
    %3603 = vmatpush1.msra.mxu0 0.0
    %3604 = vmatprep.subr.mxu0 0.0
    %3605 = vmatpush1.msra.mxu0 0.0
    %3606 = vmatprep.subr.mxu0 0.0
    %3607 = vmatpush1.msra.mxu0 0.0
    %3608 = vmatprep.subr.mxu0 0.0
    %3609 = vmatpush1.msra.mxu0 0.0
    %3610 = vmatprep.subr.mxu0 0.0
    %3611 = vmatpush1.msra.mxu0 0.0
    %3612 = vmatprep.subr.mxu0 0.0
    %3613 = vmatpush1.msra.mxu0 0.0
    %3614 = vmatprep.subr.mxu0 0.0
    %3615 = vmatpush1.msra.mxu0 0.0
    %3616 = vmatprep.subr.mxu0 0.0
    %3617 = vmatpush1.msra.mxu0 0.0
    %3618 = vmatprep.subr.mxu0 0.0
    %3619 = vmatpush1.msra.mxu0 0.0
    %3620 = vmatprep.subr.mxu0 0.0
    %3621 = vmatpush1.msra.mxu0 0.0
    %3622 = vmatprep.subr.mxu0 0.0
    %3623 = vmatpush1.msra.mxu0 0.0
    %3624 = vmatprep.mubr.f32.mxu0 0.0
    %3625 = vmatmul.mubr.f32.gmra.mrb[0].mxu0 %v3558
    %v3626 = vpop.f32.mrb[0].mxu0
    %v3627 = vadd.f32 0.0, %v3626
    %v3628 = vpop.f32.mrb[0].mxu0
    %3629 = vdwg.mxu0
    %v3631 = vsel %vm406, %v3556, 0
    %3633 = vmatprep.subr.mxu0 0.0
    %3634 = vmatpush1.msra.mxu0 %v3380
    %3635 = vmatprep.subr.mxu0 0.0
    %3636 = vmatpush1.msra.mxu0 0.0
    %3637 = vmatprep.subr.mxu0 0.0
    %3638 = vmatpush1.msra.mxu0 0.0
    %3639 = vmatprep.subr.mxu0 0.0
    %3640 = vmatpush1.msra.mxu0 0.0
    %3641 = vmatprep.subr.mxu0 0.0
    %3642 = vmatpush1.msra.mxu0 0.0
    %3643 = vmatprep.subr.mxu0 0.0
    %3644 = vmatpush1.msra.mxu0 0.0
    %3645 = vmatprep.subr.mxu0 0.0
    %3646 = vmatpush1.msra.mxu0 0.0
    %3647 = vmatprep.subr.mxu0 0.0
    %3648 = vmatpush1.msra.mxu0 0.0
    %3649 = vmatprep.subr.mxu0 0.0
    %3650 = vmatpush1.msra.mxu0 0.0
    %3651 = vmatprep.subr.mxu0 0.0
    %3652 = vmatpush1.msra.mxu0 0.0
    %3653 = vmatprep.subr.mxu0 0.0
    %3654 = vmatpush1.msra.mxu0 0.0
    %3655 = vmatprep.subr.mxu0 0.0
    %3656 = vmatpush1.msra.mxu0 0.0
    %3657 = vmatprep.subr.mxu0 0.0
    %3658 = vmatpush1.msra.mxu0 0.0
    %3659 = vmatprep.subr.mxu0 0.0
    %3660 = vmatpush1.msra.mxu0 0.0
    %3661 = vmatprep.subr.mxu0 0.0
    %3662 = vmatpush1.msra.mxu0 0.0
    %3663 = vmatprep.subr.mxu0 0.0
    %3664 = vmatpush1.msra.mxu0 0.0
    %3665 = vmatprep.subr.mxu0 0.0
    %3666 = vmatpush1.msra.mxu0 0.0
    %3667 = vmatprep.subr.mxu0 0.0
    %3668 = vmatpush1.msra.mxu0 0.0
    %3669 = vmatprep.subr.mxu0 0.0
    %3670 = vmatpush1.msra.mxu0 0.0
    %3671 = vmatprep.subr.mxu0 0.0
    %3672 = vmatpush1.msra.mxu0 0.0
    %3673 = vmatprep.subr.mxu0 0.0
    %3674 = vmatpush1.msra.mxu0 0.0
    %3675 = vmatprep.subr.mxu0 0.0
    %3676 = vmatpush1.msra.mxu0 0.0
    %3677 = vmatprep.subr.mxu0 0.0
    %3678 = vmatpush1.msra.mxu0 0.0
    %3679 = vmatprep.subr.mxu0 0.0
    %3680 = vmatpush1.msra.mxu0 0.0
    %3681 = vmatprep.subr.mxu0 0.0
    %3682 = vmatpush1.msra.mxu0 0.0
    %3683 = vmatprep.subr.mxu0 0.0
    %3684 = vmatpush1.msra.mxu0 0.0
    %3685 = vmatprep.subr.mxu0 0.0
    %3686 = vmatpush1.msra.mxu0 0.0
    %3687 = vmatprep.subr.mxu0 0.0
    %3688 = vmatpush1.msra.mxu0 0.0
    %3689 = vmatprep.subr.mxu0 0.0
    %3690 = vmatpush1.msra.mxu0 0.0
    %3691 = vmatprep.subr.mxu0 0.0
    %3692 = vmatpush1.msra.mxu0 0.0
    %3693 = vmatprep.subr.mxu0 0.0
    %3694 = vmatpush1.msra.mxu0 0.0
    %3695 = vmatprep.subr.mxu0 0.0
    %3696 = vmatpush1.msra.mxu0 0.0
    %3697 = vmatprep.mubr.f32.mxu0 0.0
    %3698 = vmatmul.mubr.f32.gmra.mrb[0].mxu0 %v3631
    %v3699 = vpop.f32.mrb[0].mxu0
    %v3700 = vadd.f32 0.0, %v3699
    %v3701 = vpop.f32.mrb[0].mxu0
    %3702 = vdwg.mxu0
    %s3703 = scalar_lea.vmem %s8, 32
    %v3704 = vld [vmem:[%s3703] sm:$0xff]
    %v3706 = vsel %vm406, %v3627, 0
    %v3709 = vsel %vm406, %v3700, 0
    %3711 = vmatprep.subr.mxu0 0.0
    %3712 = vmatpush1.msra.mxu0 %v3704
    %3713 = vmatprep.subr.mxu0 0.0
    %3714 = vmatpush1.msra.mxu0 0.0
    %3715 = vmatprep.subr.mxu0 0.0
    %3716 = vmatpush1.msra.mxu0 0.0
    %3717 = vmatprep.subr.mxu0 0.0
    %3718 = vmatpush1.msra.mxu0 0.0
    %3719 = vmatprep.subr.mxu0 0.0
    %3720 = vmatpush1.msra.mxu0 0.0
    %3721 = vmatprep.subr.mxu0 0.0
    %3722 = vmatpush1.msra.mxu0 0.0
    %3723 = vmatprep.subr.mxu0 0.0
    %3724 = vmatpush1.msra.mxu0 0.0
    %3725 = vmatprep.subr.mxu0 0.0
    %3726 = vmatpush1.msra.mxu0 0.0
    %3727 = vmatprep.subr.mxu0 0.0
    %3728 = vmatpush1.msra.mxu0 0.0
    %3729 = vmatprep.subr.mxu0 0.0
    %3730 = vmatpush1.msra.mxu0 0.0
    %3731 = vmatprep.subr.mxu0 0.0
    %3732 = vmatpush1.msra.mxu0 0.0
    %3733 = vmatprep.subr.mxu0 0.0
    %3734 = vmatpush1.msra.mxu0 0.0
    %3735 = vmatprep.subr.mxu0 0.0
    %3736 = vmatpush1.msra.mxu0 0.0
    %3737 = vmatprep.subr.mxu0 0.0
    %3738 = vmatpush1.msra.mxu0 0.0
    %3739 = vmatprep.subr.mxu0 0.0
    %3740 = vmatpush1.msra.mxu0 0.0
    %3741 = vmatprep.subr.mxu0 0.0
    %3742 = vmatpush1.msra.mxu0 0.0
    %3743 = vmatprep.subr.mxu0 0.0
    %3744 = vmatpush1.msra.mxu0 0.0
    %3745 = vmatprep.subr.mxu0 0.0
    %3746 = vmatpush1.msra.mxu0 0.0
    %3747 = vmatprep.subr.mxu0 0.0
    %3748 = vmatpush1.msra.mxu0 0.0
    %3749 = vmatprep.subr.mxu0 0.0
    %3750 = vmatpush1.msra.mxu0 0.0
    %3751 = vmatprep.subr.mxu0 0.0
    %3752 = vmatpush1.msra.mxu0 0.0
    %3753 = vmatprep.subr.mxu0 0.0
    %3754 = vmatpush1.msra.mxu0 0.0
    %3755 = vmatprep.subr.mxu0 0.0
    %3756 = vmatpush1.msra.mxu0 0.0
    %3757 = vmatprep.subr.mxu0 0.0
    %3758 = vmatpush1.msra.mxu0 0.0
    %3759 = vmatprep.subr.mxu0 0.0
    %3760 = vmatpush1.msra.mxu0 0.0
    %3761 = vmatprep.subr.mxu0 0.0
    %3762 = vmatpush1.msra.mxu0 0.0
    %3763 = vmatprep.subr.mxu0 0.0
    %3764 = vmatpush1.msra.mxu0 0.0
    %3765 = vmatprep.subr.mxu0 0.0
    %3766 = vmatpush1.msra.mxu0 0.0
    %3767 = vmatprep.subr.mxu0 0.0
    %3768 = vmatpush1.msra.mxu0 0.0
    %3769 = vmatprep.subr.mxu0 0.0
    %3770 = vmatpush1.msra.mxu0 0.0
    %3771 = vmatprep.subr.mxu0 0.0
    %3772 = vmatpush1.msra.mxu0 0.0
    %3773 = vmatprep.subr.mxu0 0.0
    %3774 = vmatpush1.msra.mxu0 0.0
    %3775 = vmatprep.mubr.f32.mxu0 0.0
    %3776 = vmatmul.mubr.f32.gmra.mrb[0].mxu0 %v3706
    %v3777 = vpop.f32.mrb[0].mxu0
    %v3778 = vadd.f32 0.0, %v3777
    %v3779 = vpop.f32.mrb[0].mxu0
    %3780 = vmatprep.mubr.f32.mxu0 0.0
    %3781 = vmatmul.mubr.f32.gmra.mrb[0].mxu0 %v3709
    %v3782 = vpop.f32.mrb[0].mxu0
    %v3783 = vadd.f32 0.0, %v3782
    %v3784 = vpop.f32.mrb[0].mxu0
    %3785 = vdwg.mxu0
    %v3786 = vadd.f32 %v3111, %v3778
    %v3787 = vadd.f32 %v3112, %v3783
    %s3788 = scalar_lea.vmem %s2, 160
    %v3789 = vld [vmem:[%s3788] sm:$0xff]
    %v3790 = vld [vmem:[%s3788 + $0x8] sm:$0xff]
    %v3791 = vld [vmem:[%s3788 + $0x10] sm:$0xff]
    %v3792 = vld [vmem:[%s3788 + $0x18] sm:$0xff]
    %s3793 = scalar_lea.vmem %s3, 5
    %v3794 = vld [vmem:[%s3793] sm:$0x1]
    %v3796 = vlaneseq
    %v3797 = vshrl.u32 %v3796, 7
    %v3798 = vsub.s32 0, %v3797
    %v3799 = vrot.slane %v3794, %v3798
    %3801 = vmatprep.subr.mxu0 0.0
    %3802 = vmatpush1.msra.mxu0 %v3789
    %3803 = vmatprep.subr.mxu0 0.0
    %3804 = vmatpush1.msra.mxu0 %v3790
    %3805 = vmatprep.subr.mxu0 0.0
    %3806 = vmatpush1.msra.mxu0 %v3791
    %3807 = vmatprep.subr.mxu0 0.0
    %3808 = vmatpush1.msra.mxu0 %v3792
    %3809 = vmatprep.subr.mxu0 0.0
    %3810 = vmatpush1.msra.mxu0 0.0
    %3811 = vmatprep.subr.mxu0 0.0
    %3812 = vmatpush1.msra.mxu0 0.0
    %3813 = vmatprep.subr.mxu0 0.0
    %3814 = vmatpush1.msra.mxu0 0.0
    %3815 = vmatprep.subr.mxu0 0.0
    %3816 = vmatpush1.msra.mxu0 0.0
    %3817 = vmatprep.subr.mxu0 0.0
    %3818 = vmatpush1.msra.mxu0 0.0
    %3819 = vmatprep.subr.mxu0 0.0
    %3820 = vmatpush1.msra.mxu0 0.0
    %3821 = vmatprep.subr.mxu0 0.0
    %3822 = vmatpush1.msra.mxu0 0.0
    %3823 = vmatprep.subr.mxu0 0.0
    %3824 = vmatpush1.msra.mxu0 0.0
    %3825 = vmatprep.subr.mxu0 0.0
    %3826 = vmatpush1.msra.mxu0 0.0
    %3827 = vmatprep.subr.mxu0 0.0
    %3828 = vmatpush1.msra.mxu0 0.0
    %3829 = vmatprep.subr.mxu0 0.0
    %3830 = vmatpush1.msra.mxu0 0.0
    %3831 = vmatprep.subr.mxu0 0.0
    %3832 = vmatpush1.msra.mxu0 0.0
    %3833 = vmatprep.subr.mxu0 0.0
    %3834 = vmatpush1.msra.mxu0 0.0
    %3835 = vmatprep.subr.mxu0 0.0
    %3836 = vmatpush1.msra.mxu0 0.0
    %3837 = vmatprep.subr.mxu0 0.0
    %3838 = vmatpush1.msra.mxu0 0.0
    %3839 = vmatprep.subr.mxu0 0.0
    %3840 = vmatpush1.msra.mxu0 0.0
    %3841 = vmatprep.subr.mxu0 0.0
    %3842 = vmatpush1.msra.mxu0 0.0
    %3843 = vmatprep.subr.mxu0 0.0
    %3844 = vmatpush1.msra.mxu0 0.0
    %3845 = vmatprep.subr.mxu0 0.0
    %3846 = vmatpush1.msra.mxu0 0.0
    %3847 = vmatprep.subr.mxu0 0.0
    %3848 = vmatpush1.msra.mxu0 0.0
    %3849 = vmatprep.subr.mxu0 0.0
    %3850 = vmatpush1.msra.mxu0 0.0
    %3851 = vmatprep.subr.mxu0 0.0
    %3852 = vmatpush1.msra.mxu0 0.0
    %3853 = vmatprep.subr.mxu0 0.0
    %3854 = vmatpush1.msra.mxu0 0.0
    %3855 = vmatprep.subr.mxu0 0.0
    %3856 = vmatpush1.msra.mxu0 0.0
    %3857 = vmatprep.subr.mxu0 0.0
    %3858 = vmatpush1.msra.mxu0 0.0
    %3859 = vmatprep.subr.mxu0 0.0
    %3860 = vmatpush1.msra.mxu0 0.0
    %3861 = vmatprep.subr.mxu0 0.0
    %3862 = vmatpush1.msra.mxu0 0.0
    %3863 = vmatprep.subr.mxu0 0.0
    %3864 = vmatpush1.msra.mxu0 0.0
    %3865 = vmatprep.mubr.f32.mxu0 0.0
    %3866 = vmatmul.mubr.f32.gmra.mrb[0].mxu0 %v3127
    %v3867 = vpop.f32.mrb[0].mxu0
    %v3868 = vadd.f32 %v3799, %v3867
    %v3869 = vpop.f32.mrb[0].mxu0
    %3870 = vmatprep.mubr.f32.mxu0 0.0
    %3871 = vmatmul.mubr.f32.gmra.mrb[0].mxu0 %v3130
    %v3872 = vpop.f32.mrb[0].mxu0
    %v3873 = vadd.f32 %v3799, %v3872
    %v3874 = vpop.f32.mrb[0].mxu0
    %3875 = vdwg.mxu0
    %s3876 = scalar_lea.vmem %s4, 160
    %v3877 = vld [vmem:[%s3876] sm:$0xff]
    %v3878 = vld [vmem:[%s3876 + $0x8] sm:$0xff]
    %v3879 = vld [vmem:[%s3876 + $0x10] sm:$0xff]
    %v3880 = vld [vmem:[%s3876 + $0x18] sm:$0xff]
    %s3881 = scalar_lea.vmem %s5, 5
    %v3882 = vld [vmem:[%s3881] sm:$0x1]
    %v3884 = vlaneseq
    %v3885 = vshrl.u32 %v3884, 7
    %v3886 = vsub.s32 0, %v3885
    %v3887 = vrot.slane %v3882, %v3886
    %3889 = vmatprep.subr.mxu0 0.0
    %3890 = vmatpush1.msra.mxu0 %v3877
    %3891 = vmatprep.subr.mxu0 0.0
    %3892 = vmatpush1.msra.mxu0 %v3878
    %3893 = vmatprep.subr.mxu0 0.0
    %3894 = vmatpush1.msra.mxu0 %v3879
    %3895 = vmatprep.subr.mxu0 0.0
    %3896 = vmatpush1.msra.mxu0 %v3880
    %3897 = vmatprep.subr.mxu0 0.0
    %3898 = vmatpush1.msra.mxu0 0.0
    %3899 = vmatprep.subr.mxu0 0.0
    %3900 = vmatpush1.msra.mxu0 0.0
    %3901 = vmatprep.subr.mxu0 0.0
    %3902 = vmatpush1.msra.mxu0 0.0
    %3903 = vmatprep.subr.mxu0 0.0
    %3904 = vmatpush1.msra.mxu0 0.0
    %3905 = vmatprep.subr.mxu0 0.0
    %3906 = vmatpush1.msra.mxu0 0.0
    %3907 = vmatprep.subr.mxu0 0.0
    %3908 = vmatpush1.msra.mxu0 0.0
    %3909 = vmatprep.subr.mxu0 0.0
    %3910 = vmatpush1.msra.mxu0 0.0
    %3911 = vmatprep.subr.mxu0 0.0
    %3912 = vmatpush1.msra.mxu0 0.0
    %3913 = vmatprep.subr.mxu0 0.0
    %3914 = vmatpush1.msra.mxu0 0.0
    %3915 = vmatprep.subr.mxu0 0.0
    %3916 = vmatpush1.msra.mxu0 0.0
    %3917 = vmatprep.subr.mxu0 0.0
    %3918 = vmatpush1.msra.mxu0 0.0
    %3919 = vmatprep.subr.mxu0 0.0
    %3920 = vmatpush1.msra.mxu0 0.0
    %3921 = vmatprep.subr.mxu0 0.0
    %3922 = vmatpush1.msra.mxu0 0.0
    %3923 = vmatprep.subr.mxu0 0.0
    %3924 = vmatpush1.msra.mxu0 0.0
    %3925 = vmatprep.subr.mxu0 0.0
    %3926 = vmatpush1.msra.mxu0 0.0
    %3927 = vmatprep.subr.mxu0 0.0
    %3928 = vmatpush1.msra.mxu0 0.0
    %3929 = vmatprep.subr.mxu0 0.0
    %3930 = vmatpush1.msra.mxu0 0.0
    %3931 = vmatprep.subr.mxu0 0.0
    %3932 = vmatpush1.msra.mxu0 0.0
    %3933 = vmatprep.subr.mxu0 0.0
    %3934 = vmatpush1.msra.mxu0 0.0
    %3935 = vmatprep.subr.mxu0 0.0
    %3936 = vmatpush1.msra.mxu0 0.0
    %3937 = vmatprep.subr.mxu0 0.0
    %3938 = vmatpush1.msra.mxu0 0.0
    %3939 = vmatprep.subr.mxu0 0.0
    %3940 = vmatpush1.msra.mxu0 0.0
    %3941 = vmatprep.subr.mxu0 0.0
    %3942 = vmatpush1.msra.mxu0 0.0
    %3943 = vmatprep.subr.mxu0 0.0
    %3944 = vmatpush1.msra.mxu0 0.0
    %3945 = vmatprep.subr.mxu0 0.0
    %3946 = vmatpush1.msra.mxu0 0.0
    %3947 = vmatprep.subr.mxu0 0.0
    %3948 = vmatpush1.msra.mxu0 0.0
    %3949 = vmatprep.subr.mxu0 0.0
    %3950 = vmatpush1.msra.mxu0 0.0
    %3951 = vmatprep.subr.mxu0 0.0
    %3952 = vmatpush1.msra.mxu0 0.0
    %3953 = vmatprep.mubr.f32.mxu0 0.0
    %3954 = vmatmul.mubr.f32.gmra.mrb[0].mxu0 %v3127
    %v3955 = vpop.f32.mrb[0].mxu0
    %v3956 = vadd.f32 %v3887, %v3955
    %v3957 = vpop.f32.mrb[0].mxu0
    %3958 = vmatprep.mubr.f32.mxu0 0.0
    %3959 = vmatmul.mubr.f32.gmra.mrb[0].mxu0 %v3130
    %v3960 = vpop.f32.mrb[0].mxu0
    %v3961 = vadd.f32 %v3887, %v3960
    %v3962 = vpop.f32.mrb[0].mxu0
    %3963 = vdwg.mxu0
    %s3964 = scalar_lea.vmem %s6, 160
    %v3965 = vld [vmem:[%s3964] sm:$0xff]
    %v3966 = vld [vmem:[%s3964 + $0x8] sm:$0xff]
    %v3967 = vld [vmem:[%s3964 + $0x10] sm:$0xff]
    %v3968 = vld [vmem:[%s3964 + $0x18] sm:$0xff]
    %s3969 = scalar_lea.vmem %s7, 5
    %v3970 = vld [vmem:[%s3969] sm:$0x1]
    %v3972 = vlaneseq
    %v3973 = vshrl.u32 %v3972, 7
    %v3974 = vsub.s32 0, %v3973
    %v3975 = vrot.slane %v3970, %v3974
    %3977 = vmatprep.subr.mxu0 0.0
    %3978 = vmatpush1.msra.mxu0 %v3965
    %3979 = vmatprep.subr.mxu0 0.0
    %3980 = vmatpush1.msra.mxu0 %v3966
    %3981 = vmatprep.subr.mxu0 0.0
    %3982 = vmatpush1.msra.mxu0 %v3967
    %3983 = vmatprep.subr.mxu0 0.0
    %3984 = vmatpush1.msra.mxu0 %v3968
    %3985 = vmatprep.subr.mxu0 0.0
    %3986 = vmatpush1.msra.mxu0 0.0
    %3987 = vmatprep.subr.mxu0 0.0
    %3988 = vmatpush1.msra.mxu0 0.0
    %3989 = vmatprep.subr.mxu0 0.0
    %3990 = vmatpush1.msra.mxu0 0.0
    %3991 = vmatprep.subr.mxu0 0.0
    %3992 = vmatpush1.msra.mxu0 0.0
    %3993 = vmatprep.subr.mxu0 0.0
    %3994 = vmatpush1.msra.mxu0 0.0
    %3995 = vmatprep.subr.mxu0 0.0
    %3996 = vmatpush1.msra.mxu0 0.0
    %3997 = vmatprep.subr.mxu0 0.0
    %3998 = vmatpush1.msra.mxu0 0.0
    %3999 = vmatprep.subr.mxu0 0.0
    %4000 = vmatpush1.msra.mxu0 0.0
    %4001 = vmatprep.subr.mxu0 0.0
    %4002 = vmatpush1.msra.mxu0 0.0
    %4003 = vmatprep.subr.mxu0 0.0
    %4004 = vmatpush1.msra.mxu0 0.0
    %4005 = vmatprep.subr.mxu0 0.0
    %4006 = vmatpush1.msra.mxu0 0.0
    %4007 = vmatprep.subr.mxu0 0.0
    %4008 = vmatpush1.msra.mxu0 0.0
    %4009 = vmatprep.subr.mxu0 0.0
    %4010 = vmatpush1.msra.mxu0 0.0
    %4011 = vmatprep.subr.mxu0 0.0
    %4012 = vmatpush1.msra.mxu0 0.0
    %4013 = vmatprep.subr.mxu0 0.0
    %4014 = vmatpush1.msra.mxu0 0.0
    %4015 = vmatprep.subr.mxu0 0.0
    %4016 = vmatpush1.msra.mxu0 0.0
    %4017 = vmatprep.subr.mxu0 0.0
    %4018 = vmatpush1.msra.mxu0 0.0
    %4019 = vmatprep.subr.mxu0 0.0
    %4020 = vmatpush1.msra.mxu0 0.0
    %4021 = vmatprep.subr.mxu0 0.0
    %4022 = vmatpush1.msra.mxu0 0.0
    %4023 = vmatprep.subr.mxu0 0.0
    %4024 = vmatpush1.msra.mxu0 0.0
    %4025 = vmatprep.subr.mxu0 0.0
    %4026 = vmatpush1.msra.mxu0 0.0
    %4027 = vmatprep.subr.mxu0 0.0
    %4028 = vmatpush1.msra.mxu0 0.0
    %4029 = vmatprep.subr.mxu0 0.0
    %4030 = vmatpush1.msra.mxu0 0.0
    %4031 = vmatprep.subr.mxu0 0.0
    %4032 = vmatpush1.msra.mxu0 0.0
    %4033 = vmatprep.subr.mxu0 0.0
    %4034 = vmatpush1.msra.mxu0 0.0
    %4035 = vmatprep.subr.mxu0 0.0
    %4036 = vmatpush1.msra.mxu0 0.0
    %4037 = vmatprep.subr.mxu0 0.0
    %4038 = vmatpush1.msra.mxu0 0.0
    %4039 = vmatprep.subr.mxu0 0.0
    %4040 = vmatpush1.msra.mxu0 0.0
    %4041 = vmatprep.mubr.f32.mxu0 0.0
    %4042 = vmatmul.mubr.f32.gmra.mrb[0].mxu0 %v3127
    %v4043 = vpop.f32.mrb[0].mxu0
    %v4044 = vadd.f32 %v3975, %v4043
    %v4045 = vpop.f32.mrb[0].mxu0
    %4046 = vmatprep.mubr.f32.mxu0 0.0
    %4047 = vmatmul.mubr.f32.gmra.mrb[0].mxu0 %v3130
    %v4048 = vpop.f32.mrb[0].mxu0
    %v4049 = vadd.f32 %v3975, %v4048
    %v4050 = vpop.f32.mrb[0].mxu0
    %4051 = vdwg.mxu0
    %v4053 = vsel %vm406, %v3868, 0
    %v4056 = vsel %vm406, %v3956, 0
    %4058 = vmatprep.subr.mxu0 0.0
    %4059 = vmatpush1.xpose.msra.mxu0 %v4056
    %4060 = vmatprep.subr.mxu0 0.0
    %4061 = vmatpush1.xpose.msra.mxu0 0.0
    %4062 = vmatprep.subr.mxu0 0.0
    %4063 = vmatpush1.xpose.msra.mxu0 0.0
    %4064 = vmatprep.subr.mxu0 0.0
    %4065 = vmatpush1.xpose.msra.mxu0 0.0
    %4066 = vmatprep.subr.mxu0 0.0
    %4067 = vmatpush1.xpose.msra.mxu0 0.0
    %4068 = vmatprep.subr.mxu0 0.0
    %4069 = vmatpush1.xpose.msra.mxu0 0.0
    %4070 = vmatprep.subr.mxu0 0.0
    %4071 = vmatpush1.xpose.msra.mxu0 0.0
    %4072 = vmatprep.subr.mxu0 0.0
    %4073 = vmatpush1.xpose.msra.mxu0 0.0
    %4074 = vmatprep.subr.mxu0 0.0
    %4075 = vmatpush1.xpose.msra.mxu0 0.0
    %4076 = vmatprep.subr.mxu0 0.0
    %4077 = vmatpush1.xpose.msra.mxu0 0.0
    %4078 = vmatprep.subr.mxu0 0.0
    %4079 = vmatpush1.xpose.msra.mxu0 0.0
    %4080 = vmatprep.subr.mxu0 0.0
    %4081 = vmatpush1.xpose.msra.mxu0 0.0
    %4082 = vmatprep.subr.mxu0 0.0
    %4083 = vmatpush1.xpose.msra.mxu0 0.0
    %4084 = vmatprep.subr.mxu0 0.0
    %4085 = vmatpush1.xpose.msra.mxu0 0.0
    %4086 = vmatprep.subr.mxu0 0.0
    %4087 = vmatpush1.xpose.msra.mxu0 0.0
    %4088 = vmatprep.subr.mxu0 0.0
    %4089 = vmatpush1.xpose.msra.mxu0 0.0
    %4090 = vmatprep.subr.mxu0 0.0
    %4091 = vmatpush1.xpose.msra.mxu0 0.0
    %4092 = vmatprep.subr.mxu0 0.0
    %4093 = vmatpush1.xpose.msra.mxu0 0.0
    %4094 = vmatprep.subr.mxu0 0.0
    %4095 = vmatpush1.xpose.msra.mxu0 0.0
    %4096 = vmatprep.subr.mxu0 0.0
    %4097 = vmatpush1.xpose.msra.mxu0 0.0
    %4098 = vmatprep.subr.mxu0 0.0
    %4099 = vmatpush1.xpose.msra.mxu0 0.0
    %4100 = vmatprep.subr.mxu0 0.0
    %4101 = vmatpush1.xpose.msra.mxu0 0.0
    %4102 = vmatprep.subr.mxu0 0.0
    %4103 = vmatpush1.xpose.msra.mxu0 0.0
    %4104 = vmatprep.subr.mxu0 0.0
    %4105 = vmatpush1.xpose.msra.mxu0 0.0
    %4106 = vmatprep.subr.mxu0 0.0
    %4107 = vmatpush1.xpose.msra.mxu0 0.0
    %4108 = vmatprep.subr.mxu0 0.0
    %4109 = vmatpush1.xpose.msra.mxu0 0.0
    %4110 = vmatprep.subr.mxu0 0.0
    %4111 = vmatpush1.xpose.msra.mxu0 0.0
    %4112 = vmatprep.subr.mxu0 0.0
    %4113 = vmatpush1.xpose.msra.mxu0 0.0
    %4114 = vmatprep.subr.mxu0 0.0
    %4115 = vmatpush1.xpose.msra.mxu0 0.0
    %4116 = vmatprep.subr.mxu0 0.0
    %4117 = vmatpush1.xpose.msra.mxu0 0.0
    %4118 = vmatprep.subr.mxu0 0.0
    %4119 = vmatpush1.xpose.msra.mxu0 0.0
    %4120 = vmatprep.subr.mxu0 0.0
    %4121 = vmatpush1.xpose.msra.mxu0 0.0
    %4122 = vmatprep.mubr.f32.mxu0 0.0
    %4123 = vmatmul.mubr.f32.gmra.mrb[0].mxu0 %v4053
    %v4124 = vpop.f32.mrb[0].mxu0
    %v4125 = vadd.f32 %v399, %v4124
    %v4126 = vpop.f32.mrb[0].mxu0
    %4127 = vdwg.mxu0
    %v4129 = vsel %vm406, %v3873, 0
    %v4132 = vsel %vm406, %v3961, 0
    %4134 = vmatprep.subr.mxu0 0.0
    %4135 = vmatpush1.xpose.msra.mxu0 %v4132
    %4136 = vmatprep.subr.mxu0 0.0
    %4137 = vmatpush1.xpose.msra.mxu0 0.0
    %4138 = vmatprep.subr.mxu0 0.0
    %4139 = vmatpush1.xpose.msra.mxu0 0.0
    %4140 = vmatprep.subr.mxu0 0.0
    %4141 = vmatpush1.xpose.msra.mxu0 0.0
    %4142 = vmatprep.subr.mxu0 0.0
    %4143 = vmatpush1.xpose.msra.mxu0 0.0
    %4144 = vmatprep.subr.mxu0 0.0
    %4145 = vmatpush1.xpose.msra.mxu0 0.0
    %4146 = vmatprep.subr.mxu0 0.0
    %4147 = vmatpush1.xpose.msra.mxu0 0.0
    %4148 = vmatprep.subr.mxu0 0.0
    %4149 = vmatpush1.xpose.msra.mxu0 0.0
    %4150 = vmatprep.subr.mxu0 0.0
    %4151 = vmatpush1.xpose.msra.mxu0 0.0
    %4152 = vmatprep.subr.mxu0 0.0
    %4153 = vmatpush1.xpose.msra.mxu0 0.0
    %4154 = vmatprep.subr.mxu0 0.0
    %4155 = vmatpush1.xpose.msra.mxu0 0.0
    %4156 = vmatprep.subr.mxu0 0.0
    %4157 = vmatpush1.xpose.msra.mxu0 0.0
    %4158 = vmatprep.subr.mxu0 0.0
    %4159 = vmatpush1.xpose.msra.mxu0 0.0
    %4160 = vmatprep.subr.mxu0 0.0
    %4161 = vmatpush1.xpose.msra.mxu0 0.0
    %4162 = vmatprep.subr.mxu0 0.0
    %4163 = vmatpush1.xpose.msra.mxu0 0.0
    %4164 = vmatprep.subr.mxu0 0.0
    %4165 = vmatpush1.xpose.msra.mxu0 0.0
    %4166 = vmatprep.subr.mxu0 0.0
    %4167 = vmatpush1.xpose.msra.mxu0 0.0
    %4168 = vmatprep.subr.mxu0 0.0
    %4169 = vmatpush1.xpose.msra.mxu0 0.0
    %4170 = vmatprep.subr.mxu0 0.0
    %4171 = vmatpush1.xpose.msra.mxu0 0.0
    %4172 = vmatprep.subr.mxu0 0.0
    %4173 = vmatpush1.xpose.msra.mxu0 0.0
    %4174 = vmatprep.subr.mxu0 0.0
    %4175 = vmatpush1.xpose.msra.mxu0 0.0
    %4176 = vmatprep.subr.mxu0 0.0
    %4177 = vmatpush1.xpose.msra.mxu0 0.0
    %4178 = vmatprep.subr.mxu0 0.0
    %4179 = vmatpush1.xpose.msra.mxu0 0.0
    %4180 = vmatprep.subr.mxu0 0.0
    %4181 = vmatpush1.xpose.msra.mxu0 0.0
    %4182 = vmatprep.subr.mxu0 0.0
    %4183 = vmatpush1.xpose.msra.mxu0 0.0
    %4184 = vmatprep.subr.mxu0 0.0
    %4185 = vmatpush1.xpose.msra.mxu0 0.0
    %4186 = vmatprep.subr.mxu0 0.0
    %4187 = vmatpush1.xpose.msra.mxu0 0.0
    %4188 = vmatprep.subr.mxu0 0.0
    %4189 = vmatpush1.xpose.msra.mxu0 0.0
    %4190 = vmatprep.subr.mxu0 0.0
    %4191 = vmatpush1.xpose.msra.mxu0 0.0
    %4192 = vmatprep.subr.mxu0 0.0
    %4193 = vmatpush1.xpose.msra.mxu0 0.0
    %4194 = vmatprep.subr.mxu0 0.0
    %4195 = vmatpush1.xpose.msra.mxu0 0.0
    %4196 = vmatprep.subr.mxu0 0.0
    %4197 = vmatpush1.xpose.msra.mxu0 0.0
    %4198 = vmatprep.mubr.f32.mxu0 0.0
    %4199 = vmatmul.mubr.f32.gmra.mrb[0].mxu0 %v4129
    %v4200 = vpop.f32.mrb[0].mxu0
    %v4201 = vadd.f32 %v403, %v4200
    %v4202 = vpop.f32.mrb[0].mxu0
    %4203 = vdwg.mxu0
    %v4204 = vsel %vm406, %v4125, -inf
    %4205 = vmax.xlane.f32.xlu0 %v4204
    %v4206 = vpop.xlane.xlu0 %4205
    %v4207 = vsel %vm406, %v4201, -inf
    %4208 = vmax.xlane.f32.xlu0 %v4207
    %v4209 = vpop.xlane.xlu0 %4208
    %v4210 = vsub.f32 %v4125, %v4206
    %v4211 = vsub.f32 %v4201, %v4209
    %v4212 = vmul.f32 %v4210, 1.442695
    %v4213 = vpow.pop %v4212
    %v4214 = vmul.f32 %v4211, 1.442695
    %v4215 = vpow.pop %v4214
    %v4216 = vsel %vm406, %v4213, 0.0
    %4217 = vadd.xlane.f32.xlu0 %v4216
    %v4218 = vpop.xlane.xlu0 %4217
    %v4219 = vsel %vm406, %v4215, 0.0
    %4220 = vadd.xlane.f32.xlu0 %v4219
    %v4221 = vpop.xlane.xlu0 %4220
    %v4222 = vrcp.pop %v4218
    %v4223 = vrcp.pop %v4221
    %v4224 = vmul.f32 %v4213, %v4222
    %v4225 = vmul.f32 %v4215, %v4223
    %v4227 = vsel %vm406, %v4224, 0
    %4229 = vmatprep.subr.mxu0 0.0
    %4230 = vmatpush1.msra.mxu0 %v4044
    %4231 = vmatprep.subr.mxu0 0.0
    %4232 = vmatpush1.msra.mxu0 0.0
    %4233 = vmatprep.subr.mxu0 0.0
    %4234 = vmatpush1.msra.mxu0 0.0
    %4235 = vmatprep.subr.mxu0 0.0
    %4236 = vmatpush1.msra.mxu0 0.0
    %4237 = vmatprep.subr.mxu0 0.0
    %4238 = vmatpush1.msra.mxu0 0.0
    %4239 = vmatprep.subr.mxu0 0.0
    %4240 = vmatpush1.msra.mxu0 0.0
    %4241 = vmatprep.subr.mxu0 0.0
    %4242 = vmatpush1.msra.mxu0 0.0
    %4243 = vmatprep.subr.mxu0 0.0
    %4244 = vmatpush1.msra.mxu0 0.0
    %4245 = vmatprep.subr.mxu0 0.0
    %4246 = vmatpush1.msra.mxu0 0.0
    %4247 = vmatprep.subr.mxu0 0.0
    %4248 = vmatpush1.msra.mxu0 0.0
    %4249 = vmatprep.subr.mxu0 0.0
    %4250 = vmatpush1.msra.mxu0 0.0
    %4251 = vmatprep.subr.mxu0 0.0
    %4252 = vmatpush1.msra.mxu0 0.0
    %4253 = vmatprep.subr.mxu0 0.0
    %4254 = vmatpush1.msra.mxu0 0.0
    %4255 = vmatprep.subr.mxu0 0.0
    %4256 = vmatpush1.msra.mxu0 0.0
    %4257 = vmatprep.subr.mxu0 0.0
    %4258 = vmatpush1.msra.mxu0 0.0
    %4259 = vmatprep.subr.mxu0 0.0
    %4260 = vmatpush1.msra.mxu0 0.0
    %4261 = vmatprep.subr.mxu0 0.0
    %4262 = vmatpush1.msra.mxu0 0.0
    %4263 = vmatprep.subr.mxu0 0.0
    %4264 = vmatpush1.msra.mxu0 0.0
    %4265 = vmatprep.subr.mxu0 0.0
    %4266 = vmatpush1.msra.mxu0 0.0
    %4267 = vmatprep.subr.mxu0 0.0
    %4268 = vmatpush1.msra.mxu0 0.0
    %4269 = vmatprep.subr.mxu0 0.0
    %4270 = vmatpush1.msra.mxu0 0.0
    %4271 = vmatprep.subr.mxu0 0.0
    %4272 = vmatpush1.msra.mxu0 0.0
    %4273 = vmatprep.subr.mxu0 0.0
    %4274 = vmatpush1.msra.mxu0 0.0
    %4275 = vmatprep.subr.mxu0 0.0
    %4276 = vmatpush1.msra.mxu0 0.0
    %4277 = vmatprep.subr.mxu0 0.0
    %4278 = vmatpush1.msra.mxu0 0.0
    %4279 = vmatprep.subr.mxu0 0.0
    %4280 = vmatpush1.msra.mxu0 0.0
    %4281 = vmatprep.subr.mxu0 0.0
    %4282 = vmatpush1.msra.mxu0 0.0
    %4283 = vmatprep.subr.mxu0 0.0
    %4284 = vmatpush1.msra.mxu0 0.0
    %4285 = vmatprep.subr.mxu0 0.0
    %4286 = vmatpush1.msra.mxu0 0.0
    %4287 = vmatprep.subr.mxu0 0.0
    %4288 = vmatpush1.msra.mxu0 0.0
    %4289 = vmatprep.subr.mxu0 0.0
    %4290 = vmatpush1.msra.mxu0 0.0
    %4291 = vmatprep.subr.mxu0 0.0
    %4292 = vmatpush1.msra.mxu0 0.0
    %4293 = vmatprep.mubr.f32.mxu0 0.0
    %4294 = vmatmul.mubr.f32.gmra.mrb[0].mxu0 %v4227
    %v4295 = vpop.f32.mrb[0].mxu0
    %v4296 = vadd.f32 0.0, %v4295
    %v4297 = vpop.f32.mrb[0].mxu0
    %4298 = vdwg.mxu0
    %v4300 = vsel %vm406, %v4225, 0
    %4302 = vmatprep.subr.mxu0 0.0
    %4303 = vmatpush1.msra.mxu0 %v4049
    %4304 = vmatprep.subr.mxu0 0.0
    %4305 = vmatpush1.msra.mxu0 0.0
    %4306 = vmatprep.subr.mxu0 0.0
    %4307 = vmatpush1.msra.mxu0 0.0
    %4308 = vmatprep.subr.mxu0 0.0
    %4309 = vmatpush1.msra.mxu0 0.0
    %4310 = vmatprep.subr.mxu0 0.0
    %4311 = vmatpush1.msra.mxu0 0.0
    %4312 = vmatprep.subr.mxu0 0.0
    %4313 = vmatpush1.msra.mxu0 0.0
    %4314 = vmatprep.subr.mxu0 0.0
    %4315 = vmatpush1.msra.mxu0 0.0
    %4316 = vmatprep.subr.mxu0 0.0
    %4317 = vmatpush1.msra.mxu0 0.0
    %4318 = vmatprep.subr.mxu0 0.0
    %4319 = vmatpush1.msra.mxu0 0.0
    %4320 = vmatprep.subr.mxu0 0.0
    %4321 = vmatpush1.msra.mxu0 0.0
    %4322 = vmatprep.subr.mxu0 0.0
    %4323 = vmatpush1.msra.mxu0 0.0
    %4324 = vmatprep.subr.mxu0 0.0
    %4325 = vmatpush1.msra.mxu0 0.0
    %4326 = vmatprep.subr.mxu0 0.0
    %4327 = vmatpush1.msra.mxu0 0.0
    %4328 = vmatprep.subr.mxu0 0.0
    %4329 = vmatpush1.msra.mxu0 0.0
    %4330 = vmatprep.subr.mxu0 0.0
    %4331 = vmatpush1.msra.mxu0 0.0
    %4332 = vmatprep.subr.mxu0 0.0
    %4333 = vmatpush1.msra.mxu0 0.0
    %4334 = vmatprep.subr.mxu0 0.0
    %4335 = vmatpush1.msra.mxu0 0.0
    %4336 = vmatprep.subr.mxu0 0.0
    %4337 = vmatpush1.msra.mxu0 0.0
    %4338 = vmatprep.subr.mxu0 0.0
    %4339 = vmatpush1.msra.mxu0 0.0
    %4340 = vmatprep.subr.mxu0 0.0
    %4341 = vmatpush1.msra.mxu0 0.0
    %4342 = vmatprep.subr.mxu0 0.0
    %4343 = vmatpush1.msra.mxu0 0.0
    %4344 = vmatprep.subr.mxu0 0.0
    %4345 = vmatpush1.msra.mxu0 0.0
    %4346 = vmatprep.subr.mxu0 0.0
    %4347 = vmatpush1.msra.mxu0 0.0
    %4348 = vmatprep.subr.mxu0 0.0
    %4349 = vmatpush1.msra.mxu0 0.0
    %4350 = vmatprep.subr.mxu0 0.0
    %4351 = vmatpush1.msra.mxu0 0.0
    %4352 = vmatprep.subr.mxu0 0.0
    %4353 = vmatpush1.msra.mxu0 0.0
    %4354 = vmatprep.subr.mxu0 0.0
    %4355 = vmatpush1.msra.mxu0 0.0
    %4356 = vmatprep.subr.mxu0 0.0
    %4357 = vmatpush1.msra.mxu0 0.0
    %4358 = vmatprep.subr.mxu0 0.0
    %4359 = vmatpush1.msra.mxu0 0.0
    %4360 = vmatprep.subr.mxu0 0.0
    %4361 = vmatpush1.msra.mxu0 0.0
    %4362 = vmatprep.subr.mxu0 0.0
    %4363 = vmatpush1.msra.mxu0 0.0
    %4364 = vmatprep.subr.mxu0 0.0
    %4365 = vmatpush1.msra.mxu0 0.0
    %4366 = vmatprep.mubr.f32.mxu0 0.0
    %4367 = vmatmul.mubr.f32.gmra.mrb[0].mxu0 %v4300
    %v4368 = vpop.f32.mrb[0].mxu0
    %v4369 = vadd.f32 0.0, %v4368
    %v4370 = vpop.f32.mrb[0].mxu0
    %4371 = vdwg.mxu0
    %s4372 = scalar_lea.vmem %s8, 40
    %v4373 = vld [vmem:[%s4372] sm:$0xff]
    %v4375 = vsel %vm406, %v4296, 0
    %v4378 = vsel %vm406, %v4369, 0
    %4380 = vmatprep.subr.mxu0 0.0
    %4381 = vmatpush1.msra.mxu0 %v4373
    %4382 = vmatprep.subr.mxu0 0.0
    %4383 = vmatpush1.msra.mxu0 0.0
    %4384 = vmatprep.subr.mxu0 0.0
    %4385 = vmatpush1.msra.mxu0 0.0
    %4386 = vmatprep.subr.mxu0 0.0
    %4387 = vmatpush1.msra.mxu0 0.0
    %4388 = vmatprep.subr.mxu0 0.0
    %4389 = vmatpush1.msra.mxu0 0.0
    %4390 = vmatprep.subr.mxu0 0.0
    %4391 = vmatpush1.msra.mxu0 0.0
    %4392 = vmatprep.subr.mxu0 0.0
    %4393 = vmatpush1.msra.mxu0 0.0
    %4394 = vmatprep.subr.mxu0 0.0
    %4395 = vmatpush1.msra.mxu0 0.0
    %4396 = vmatprep.subr.mxu0 0.0
    %4397 = vmatpush1.msra.mxu0 0.0
    %4398 = vmatprep.subr.mxu0 0.0
    %4399 = vmatpush1.msra.mxu0 0.0
    %4400 = vmatprep.subr.mxu0 0.0
    %4401 = vmatpush1.msra.mxu0 0.0
    %4402 = vmatprep.subr.mxu0 0.0
    %4403 = vmatpush1.msra.mxu0 0.0
    %4404 = vmatprep.subr.mxu0 0.0
    %4405 = vmatpush1.msra.mxu0 0.0
    %4406 = vmatprep.subr.mxu0 0.0
    %4407 = vmatpush1.msra.mxu0 0.0
    %4408 = vmatprep.subr.mxu0 0.0
    %4409 = vmatpush1.msra.mxu0 0.0
    %4410 = vmatprep.subr.mxu0 0.0
    %4411 = vmatpush1.msra.mxu0 0.0
    %4412 = vmatprep.subr.mxu0 0.0
    %4413 = vmatpush1.msra.mxu0 0.0
    %4414 = vmatprep.subr.mxu0 0.0
    %4415 = vmatpush1.msra.mxu0 0.0
    %4416 = vmatprep.subr.mxu0 0.0
    %4417 = vmatpush1.msra.mxu0 0.0
    %4418 = vmatprep.subr.mxu0 0.0
    %4419 = vmatpush1.msra.mxu0 0.0
    %4420 = vmatprep.subr.mxu0 0.0
    %4421 = vmatpush1.msra.mxu0 0.0
    %4422 = vmatprep.subr.mxu0 0.0
    %4423 = vmatpush1.msra.mxu0 0.0
    %4424 = vmatprep.subr.mxu0 0.0
    %4425 = vmatpush1.msra.mxu0 0.0
    %4426 = vmatprep.subr.mxu0 0.0
    %4427 = vmatpush1.msra.mxu0 0.0
    %4428 = vmatprep.subr.mxu0 0.0
    %4429 = vmatpush1.msra.mxu0 0.0
    %4430 = vmatprep.subr.mxu0 0.0
    %4431 = vmatpush1.msra.mxu0 0.0
    %4432 = vmatprep.subr.mxu0 0.0
    %4433 = vmatpush1.msra.mxu0 0.0
    %4434 = vmatprep.subr.mxu0 0.0
    %4435 = vmatpush1.msra.mxu0 0.0
    %4436 = vmatprep.subr.mxu0 0.0
    %4437 = vmatpush1.msra.mxu0 0.0
    %4438 = vmatprep.subr.mxu0 0.0
    %4439 = vmatpush1.msra.mxu0 0.0
    %4440 = vmatprep.subr.mxu0 0.0
    %4441 = vmatpush1.msra.mxu0 0.0
    %4442 = vmatprep.subr.mxu0 0.0
    %4443 = vmatpush1.msra.mxu0 0.0
    %4444 = vmatprep.mubr.f32.mxu0 0.0
    %4445 = vmatmul.mubr.f32.gmra.mrb[0].mxu0 %v4375
    %v4446 = vpop.f32.mrb[0].mxu0
    %v4447 = vadd.f32 0.0, %v4446
    %v4448 = vpop.f32.mrb[0].mxu0
    %4449 = vmatprep.mubr.f32.mxu0 0.0
    %4450 = vmatmul.mubr.f32.gmra.mrb[0].mxu0 %v4378
    %v4451 = vpop.f32.mrb[0].mxu0
    %v4452 = vadd.f32 0.0, %v4451
    %v4453 = vpop.f32.mrb[0].mxu0
    %4454 = vdwg.mxu0
    %v4455 = vadd.f32 %v3786, %v4447
    %v4456 = vadd.f32 %v3787, %v4452
    %s4457 = scalar_lea.vmem %s2, 192
    %v4458 = vld [vmem:[%s4457] sm:$0xff]
    %v4459 = vld [vmem:[%s4457 + $0x8] sm:$0xff]
    %v4460 = vld [vmem:[%s4457 + $0x10] sm:$0xff]
    %v4461 = vld [vmem:[%s4457 + $0x18] sm:$0xff]
    %s4462 = scalar_lea.vmem %s3, 6
    %v4463 = vld [vmem:[%s4462] sm:$0x1]
    %v4465 = vlaneseq
    %v4466 = vshrl.u32 %v4465, 7
    %v4467 = vsub.s32 0, %v4466
    %v4468 = vrot.slane %v4463, %v4467
    %4470 = vmatprep.subr.mxu0 0.0
    %4471 = vmatpush1.msra.mxu0 %v4458
    %4472 = vmatprep.subr.mxu0 0.0
    %4473 = vmatpush1.msra.mxu0 %v4459
    %4474 = vmatprep.subr.mxu0 0.0
    %4475 = vmatpush1.msra.mxu0 %v4460
    %4476 = vmatprep.subr.mxu0 0.0
    %4477 = vmatpush1.msra.mxu0 %v4461
    %4478 = vmatprep.subr.mxu0 0.0
    %4479 = vmatpush1.msra.mxu0 0.0
    %4480 = vmatprep.subr.mxu0 0.0
    %4481 = vmatpush1.msra.mxu0 0.0
    %4482 = vmatprep.subr.mxu0 0.0
    %4483 = vmatpush1.msra.mxu0 0.0
    %4484 = vmatprep.subr.mxu0 0.0
    %4485 = vmatpush1.msra.mxu0 0.0
    %4486 = vmatprep.subr.mxu0 0.0
    %4487 = vmatpush1.msra.mxu0 0.0
    %4488 = vmatprep.subr.mxu0 0.0
    %4489 = vmatpush1.msra.mxu0 0.0
    %4490 = vmatprep.subr.mxu0 0.0
    %4491 = vmatpush1.msra.mxu0 0.0
    %4492 = vmatprep.subr.mxu0 0.0
    %4493 = vmatpush1.msra.mxu0 0.0
    %4494 = vmatprep.subr.mxu0 0.0
    %4495 = vmatpush1.msra.mxu0 0.0
    %4496 = vmatprep.subr.mxu0 0.0
    %4497 = vmatpush1.msra.mxu0 0.0
    %4498 = vmatprep.subr.mxu0 0.0
    %4499 = vmatpush1.msra.mxu0 0.0
    %4500 = vmatprep.subr.mxu0 0.0
    %4501 = vmatpush1.msra.mxu0 0.0
    %4502 = vmatprep.subr.mxu0 0.0
    %4503 = vmatpush1.msra.mxu0 0.0
    %4504 = vmatprep.subr.mxu0 0.0
    %4505 = vmatpush1.msra.mxu0 0.0
    %4506 = vmatprep.subr.mxu0 0.0
    %4507 = vmatpush1.msra.mxu0 0.0
    %4508 = vmatprep.subr.mxu0 0.0
    %4509 = vmatpush1.msra.mxu0 0.0
    %4510 = vmatprep.subr.mxu0 0.0
    %4511 = vmatpush1.msra.mxu0 0.0
    %4512 = vmatprep.subr.mxu0 0.0
    %4513 = vmatpush1.msra.mxu0 0.0
    %4514 = vmatprep.subr.mxu0 0.0
    %4515 = vmatpush1.msra.mxu0 0.0
    %4516 = vmatprep.subr.mxu0 0.0
    %4517 = vmatpush1.msra.mxu0 0.0
    %4518 = vmatprep.subr.mxu0 0.0
    %4519 = vmatpush1.msra.mxu0 0.0
    %4520 = vmatprep.subr.mxu0 0.0
    %4521 = vmatpush1.msra.mxu0 0.0
    %4522 = vmatprep.subr.mxu0 0.0
    %4523 = vmatpush1.msra.mxu0 0.0
    %4524 = vmatprep.subr.mxu0 0.0
    %4525 = vmatpush1.msra.mxu0 0.0
    %4526 = vmatprep.subr.mxu0 0.0
    %4527 = vmatpush1.msra.mxu0 0.0
    %4528 = vmatprep.subr.mxu0 0.0
    %4529 = vmatpush1.msra.mxu0 0.0
    %4530 = vmatprep.subr.mxu0 0.0
    %4531 = vmatpush1.msra.mxu0 0.0
    %4532 = vmatprep.subr.mxu0 0.0
    %4533 = vmatpush1.msra.mxu0 0.0
    %4534 = vmatprep.mubr.f32.mxu0 0.0
    %4535 = vmatmul.mubr.f32.gmra.mrb[0].mxu0 %v3127
    %v4536 = vpop.f32.mrb[0].mxu0
    %v4537 = vadd.f32 %v4468, %v4536
    %v4538 = vpop.f32.mrb[0].mxu0
    %4539 = vmatprep.mubr.f32.mxu0 0.0
    %4540 = vmatmul.mubr.f32.gmra.mrb[0].mxu0 %v3130
    %v4541 = vpop.f32.mrb[0].mxu0
    %v4542 = vadd.f32 %v4468, %v4541
    %v4543 = vpop.f32.mrb[0].mxu0
    %4544 = vdwg.mxu0
    %s4545 = scalar_lea.vmem %s4, 192
    %v4546 = vld [vmem:[%s4545] sm:$0xff]
    %v4547 = vld [vmem:[%s4545 + $0x8] sm:$0xff]
    %v4548 = vld [vmem:[%s4545 + $0x10] sm:$0xff]
    %v4549 = vld [vmem:[%s4545 + $0x18] sm:$0xff]
    %s4550 = scalar_lea.vmem %s5, 6
    %v4551 = vld [vmem:[%s4550] sm:$0x1]
    %v4553 = vlaneseq
    %v4554 = vshrl.u32 %v4553, 7
    %v4555 = vsub.s32 0, %v4554
    %v4556 = vrot.slane %v4551, %v4555
    %4558 = vmatprep.subr.mxu0 0.0
    %4559 = vmatpush1.msra.mxu0 %v4546
    %4560 = vmatprep.subr.mxu0 0.0
    %4561 = vmatpush1.msra.mxu0 %v4547
    %4562 = vmatprep.subr.mxu0 0.0
    %4563 = vmatpush1.msra.mxu0 %v4548
    %4564 = vmatprep.subr.mxu0 0.0
    %4565 = vmatpush1.msra.mxu0 %v4549
    %4566 = vmatprep.subr.mxu0 0.0
    %4567 = vmatpush1.msra.mxu0 0.0
    %4568 = vmatprep.subr.mxu0 0.0
    %4569 = vmatpush1.msra.mxu0 0.0
    %4570 = vmatprep.subr.mxu0 0.0
    %4571 = vmatpush1.msra.mxu0 0.0
    %4572 = vmatprep.subr.mxu0 0.0
    %4573 = vmatpush1.msra.mxu0 0.0
    %4574 = vmatprep.subr.mxu0 0.0
    %4575 = vmatpush1.msra.mxu0 0.0
    %4576 = vmatprep.subr.mxu0 0.0
    %4577 = vmatpush1.msra.mxu0 0.0
    %4578 = vmatprep.subr.mxu0 0.0
    %4579 = vmatpush1.msra.mxu0 0.0
    %4580 = vmatprep.subr.mxu0 0.0
    %4581 = vmatpush1.msra.mxu0 0.0
    %4582 = vmatprep.subr.mxu0 0.0
    %4583 = vmatpush1.msra.mxu0 0.0
    %4584 = vmatprep.subr.mxu0 0.0
    %4585 = vmatpush1.msra.mxu0 0.0
    %4586 = vmatprep.subr.mxu0 0.0
    %4587 = vmatpush1.msra.mxu0 0.0
    %4588 = vmatprep.subr.mxu0 0.0
    %4589 = vmatpush1.msra.mxu0 0.0
    %4590 = vmatprep.subr.mxu0 0.0
    %4591 = vmatpush1.msra.mxu0 0.0
    %4592 = vmatprep.subr.mxu0 0.0
    %4593 = vmatpush1.msra.mxu0 0.0
    %4594 = vmatprep.subr.mxu0 0.0
    %4595 = vmatpush1.msra.mxu0 0.0
    %4596 = vmatprep.subr.mxu0 0.0
    %4597 = vmatpush1.msra.mxu0 0.0
    %4598 = vmatprep.subr.mxu0 0.0
    %4599 = vmatpush1.msra.mxu0 0.0
    %4600 = vmatprep.subr.mxu0 0.0
    %4601 = vmatpush1.msra.mxu0 0.0
    %4602 = vmatprep.subr.mxu0 0.0
    %4603 = vmatpush1.msra.mxu0 0.0
    %4604 = vmatprep.subr.mxu0 0.0
    %4605 = vmatpush1.msra.mxu0 0.0
    %4606 = vmatprep.subr.mxu0 0.0
    %4607 = vmatpush1.msra.mxu0 0.0
    %4608 = vmatprep.subr.mxu0 0.0
    %4609 = vmatpush1.msra.mxu0 0.0
    %4610 = vmatprep.subr.mxu0 0.0
    %4611 = vmatpush1.msra.mxu0 0.0
    %4612 = vmatprep.subr.mxu0 0.0
    %4613 = vmatpush1.msra.mxu0 0.0
    %4614 = vmatprep.subr.mxu0 0.0
    %4615 = vmatpush1.msra.mxu0 0.0
    %4616 = vmatprep.subr.mxu0 0.0
    %4617 = vmatpush1.msra.mxu0 0.0
    %4618 = vmatprep.subr.mxu0 0.0
    %4619 = vmatpush1.msra.mxu0 0.0
    %4620 = vmatprep.subr.mxu0 0.0
    %4621 = vmatpush1.msra.mxu0 0.0
    %4622 = vmatprep.mubr.f32.mxu0 0.0
    %4623 = vmatmul.mubr.f32.gmra.mrb[0].mxu0 %v3127
    %v4624 = vpop.f32.mrb[0].mxu0
    %v4625 = vadd.f32 %v4556, %v4624
    %v4626 = vpop.f32.mrb[0].mxu0
    %4627 = vmatprep.mubr.f32.mxu0 0.0
    %4628 = vmatmul.mubr.f32.gmra.mrb[0].mxu0 %v3130
    %v4629 = vpop.f32.mrb[0].mxu0
    %v4630 = vadd.f32 %v4556, %v4629
    %v4631 = vpop.f32.mrb[0].mxu0
    %4632 = vdwg.mxu0
    %s4633 = scalar_lea.vmem %s6, 192
    %v4634 = vld [vmem:[%s4633] sm:$0xff]
    %v4635 = vld [vmem:[%s4633 + $0x8] sm:$0xff]
    %v4636 = vld [vmem:[%s4633 + $0x10] sm:$0xff]
    %v4637 = vld [vmem:[%s4633 + $0x18] sm:$0xff]
    %s4638 = scalar_lea.vmem %s7, 6
    %v4639 = vld [vmem:[%s4638] sm:$0x1]
    %v4641 = vlaneseq
    %v4642 = vshrl.u32 %v4641, 7
    %v4643 = vsub.s32 0, %v4642
    %v4644 = vrot.slane %v4639, %v4643
    %4646 = vmatprep.subr.mxu0 0.0
    %4647 = vmatpush1.msra.mxu0 %v4634
    %4648 = vmatprep.subr.mxu0 0.0
    %4649 = vmatpush1.msra.mxu0 %v4635
    %4650 = vmatprep.subr.mxu0 0.0
    %4651 = vmatpush1.msra.mxu0 %v4636
    %4652 = vmatprep.subr.mxu0 0.0
    %4653 = vmatpush1.msra.mxu0 %v4637
    %4654 = vmatprep.subr.mxu0 0.0
    %4655 = vmatpush1.msra.mxu0 0.0
    %4656 = vmatprep.subr.mxu0 0.0
    %4657 = vmatpush1.msra.mxu0 0.0
    %4658 = vmatprep.subr.mxu0 0.0
    %4659 = vmatpush1.msra.mxu0 0.0
    %4660 = vmatprep.subr.mxu0 0.0
    %4661 = vmatpush1.msra.mxu0 0.0
    %4662 = vmatprep.subr.mxu0 0.0
    %4663 = vmatpush1.msra.mxu0 0.0
    %4664 = vmatprep.subr.mxu0 0.0
    %4665 = vmatpush1.msra.mxu0 0.0
    %4666 = vmatprep.subr.mxu0 0.0
    %4667 = vmatpush1.msra.mxu0 0.0
    %4668 = vmatprep.subr.mxu0 0.0
    %4669 = vmatpush1.msra.mxu0 0.0
    %4670 = vmatprep.subr.mxu0 0.0
    %4671 = vmatpush1.msra.mxu0 0.0
    %4672 = vmatprep.subr.mxu0 0.0
    %4673 = vmatpush1.msra.mxu0 0.0
    %4674 = vmatprep.subr.mxu0 0.0
    %4675 = vmatpush1.msra.mxu0 0.0
    %4676 = vmatprep.subr.mxu0 0.0
    %4677 = vmatpush1.msra.mxu0 0.0
    %4678 = vmatprep.subr.mxu0 0.0
    %4679 = vmatpush1.msra.mxu0 0.0
    %4680 = vmatprep.subr.mxu0 0.0
    %4681 = vmatpush1.msra.mxu0 0.0
    %4682 = vmatprep.subr.mxu0 0.0
    %4683 = vmatpush1.msra.mxu0 0.0
    %4684 = vmatprep.subr.mxu0 0.0
    %4685 = vmatpush1.msra.mxu0 0.0
    %4686 = vmatprep.subr.mxu0 0.0
    %4687 = vmatpush1.msra.mxu0 0.0
    %4688 = vmatprep.subr.mxu0 0.0
    %4689 = vmatpush1.msra.mxu0 0.0
    %4690 = vmatprep.subr.mxu0 0.0
    %4691 = vmatpush1.msra.mxu0 0.0
    %4692 = vmatprep.subr.mxu0 0.0
    %4693 = vmatpush1.msra.mxu0 0.0
    %4694 = vmatprep.subr.mxu0 0.0
    %4695 = vmatpush1.msra.mxu0 0.0
    %4696 = vmatprep.subr.mxu0 0.0
    %4697 = vmatpush1.msra.mxu0 0.0
    %4698 = vmatprep.subr.mxu0 0.0
    %4699 = vmatpush1.msra.mxu0 0.0
    %4700 = vmatprep.subr.mxu0 0.0
    %4701 = vmatpush1.msra.mxu0 0.0
    %4702 = vmatprep.subr.mxu0 0.0
    %4703 = vmatpush1.msra.mxu0 0.0
    %4704 = vmatprep.subr.mxu0 0.0
    %4705 = vmatpush1.msra.mxu0 0.0
    %4706 = vmatprep.subr.mxu0 0.0
    %4707 = vmatpush1.msra.mxu0 0.0
    %4708 = vmatprep.subr.mxu0 0.0
    %4709 = vmatpush1.msra.mxu0 0.0
    %4710 = vmatprep.mubr.f32.mxu0 0.0
    %4711 = vmatmul.mubr.f32.gmra.mrb[0].mxu0 %v3127
    %v4712 = vpop.f32.mrb[0].mxu0
    %v4713 = vadd.f32 %v4644, %v4712
    %v4714 = vpop.f32.mrb[0].mxu0
    %4715 = vmatprep.mubr.f32.mxu0 0.0
    %4716 = vmatmul.mubr.f32.gmra.mrb[0].mxu0 %v3130
    %v4717 = vpop.f32.mrb[0].mxu0
    %v4718 = vadd.f32 %v4644, %v4717
    %v4719 = vpop.f32.mrb[0].mxu0
    %4720 = vdwg.mxu0
    %v4722 = vsel %vm406, %v4537, 0
    %v4725 = vsel %vm406, %v4625, 0
    %4727 = vmatprep.subr.mxu0 0.0
    %4728 = vmatpush1.xpose.msra.mxu0 %v4725
    %4729 = vmatprep.subr.mxu0 0.0
    %4730 = vmatpush1.xpose.msra.mxu0 0.0
    %4731 = vmatprep.subr.mxu0 0.0
    %4732 = vmatpush1.xpose.msra.mxu0 0.0
    %4733 = vmatprep.subr.mxu0 0.0
    %4734 = vmatpush1.xpose.msra.mxu0 0.0
    %4735 = vmatprep.subr.mxu0 0.0
    %4736 = vmatpush1.xpose.msra.mxu0 0.0
    %4737 = vmatprep.subr.mxu0 0.0
    %4738 = vmatpush1.xpose.msra.mxu0 0.0
    %4739 = vmatprep.subr.mxu0 0.0
    %4740 = vmatpush1.xpose.msra.mxu0 0.0
    %4741 = vmatprep.subr.mxu0 0.0
    %4742 = vmatpush1.xpose.msra.mxu0 0.0
    %4743 = vmatprep.subr.mxu0 0.0
    %4744 = vmatpush1.xpose.msra.mxu0 0.0
    %4745 = vmatprep.subr.mxu0 0.0
    %4746 = vmatpush1.xpose.msra.mxu0 0.0
    %4747 = vmatprep.subr.mxu0 0.0
    %4748 = vmatpush1.xpose.msra.mxu0 0.0
    %4749 = vmatprep.subr.mxu0 0.0
    %4750 = vmatpush1.xpose.msra.mxu0 0.0
    %4751 = vmatprep.subr.mxu0 0.0
    %4752 = vmatpush1.xpose.msra.mxu0 0.0
    %4753 = vmatprep.subr.mxu0 0.0
    %4754 = vmatpush1.xpose.msra.mxu0 0.0
    %4755 = vmatprep.subr.mxu0 0.0
    %4756 = vmatpush1.xpose.msra.mxu0 0.0
    %4757 = vmatprep.subr.mxu0 0.0
    %4758 = vmatpush1.xpose.msra.mxu0 0.0
    %4759 = vmatprep.subr.mxu0 0.0
    %4760 = vmatpush1.xpose.msra.mxu0 0.0
    %4761 = vmatprep.subr.mxu0 0.0
    %4762 = vmatpush1.xpose.msra.mxu0 0.0
    %4763 = vmatprep.subr.mxu0 0.0
    %4764 = vmatpush1.xpose.msra.mxu0 0.0
    %4765 = vmatprep.subr.mxu0 0.0
    %4766 = vmatpush1.xpose.msra.mxu0 0.0
    %4767 = vmatprep.subr.mxu0 0.0
    %4768 = vmatpush1.xpose.msra.mxu0 0.0
    %4769 = vmatprep.subr.mxu0 0.0
    %4770 = vmatpush1.xpose.msra.mxu0 0.0
    %4771 = vmatprep.subr.mxu0 0.0
    %4772 = vmatpush1.xpose.msra.mxu0 0.0
    %4773 = vmatprep.subr.mxu0 0.0
    %4774 = vmatpush1.xpose.msra.mxu0 0.0
    %4775 = vmatprep.subr.mxu0 0.0
    %4776 = vmatpush1.xpose.msra.mxu0 0.0
    %4777 = vmatprep.subr.mxu0 0.0
    %4778 = vmatpush1.xpose.msra.mxu0 0.0
    %4779 = vmatprep.subr.mxu0 0.0
    %4780 = vmatpush1.xpose.msra.mxu0 0.0
    %4781 = vmatprep.subr.mxu0 0.0
    %4782 = vmatpush1.xpose.msra.mxu0 0.0
    %4783 = vmatprep.subr.mxu0 0.0
    %4784 = vmatpush1.xpose.msra.mxu0 0.0
    %4785 = vmatprep.subr.mxu0 0.0
    %4786 = vmatpush1.xpose.msra.mxu0 0.0
    %4787 = vmatprep.subr.mxu0 0.0
    %4788 = vmatpush1.xpose.msra.mxu0 0.0
    %4789 = vmatprep.subr.mxu0 0.0
    %4790 = vmatpush1.xpose.msra.mxu0 0.0
    %4791 = vmatprep.mubr.f32.mxu0 0.0
    %4792 = vmatmul.mubr.f32.gmra.mrb[0].mxu0 %v4722
    %v4793 = vpop.f32.mrb[0].mxu0
    %v4794 = vadd.f32 %v399, %v4793
    %v4795 = vpop.f32.mrb[0].mxu0
    %4796 = vdwg.mxu0
    %v4798 = vsel %vm406, %v4542, 0
    %v4801 = vsel %vm406, %v4630, 0
    %4803 = vmatprep.subr.mxu0 0.0
    %4804 = vmatpush1.xpose.msra.mxu0 %v4801
    %4805 = vmatprep.subr.mxu0 0.0
    %4806 = vmatpush1.xpose.msra.mxu0 0.0
    %4807 = vmatprep.subr.mxu0 0.0
    %4808 = vmatpush1.xpose.msra.mxu0 0.0
    %4809 = vmatprep.subr.mxu0 0.0
    %4810 = vmatpush1.xpose.msra.mxu0 0.0
    %4811 = vmatprep.subr.mxu0 0.0
    %4812 = vmatpush1.xpose.msra.mxu0 0.0
    %4813 = vmatprep.subr.mxu0 0.0
    %4814 = vmatpush1.xpose.msra.mxu0 0.0
    %4815 = vmatprep.subr.mxu0 0.0
    %4816 = vmatpush1.xpose.msra.mxu0 0.0
    %4817 = vmatprep.subr.mxu0 0.0
    %4818 = vmatpush1.xpose.msra.mxu0 0.0
    %4819 = vmatprep.subr.mxu0 0.0
    %4820 = vmatpush1.xpose.msra.mxu0 0.0
    %4821 = vmatprep.subr.mxu0 0.0
    %4822 = vmatpush1.xpose.msra.mxu0 0.0
    %4823 = vmatprep.subr.mxu0 0.0
    %4824 = vmatpush1.xpose.msra.mxu0 0.0
    %4825 = vmatprep.subr.mxu0 0.0
    %4826 = vmatpush1.xpose.msra.mxu0 0.0
    %4827 = vmatprep.subr.mxu0 0.0
    %4828 = vmatpush1.xpose.msra.mxu0 0.0
    %4829 = vmatprep.subr.mxu0 0.0
    %4830 = vmatpush1.xpose.msra.mxu0 0.0
    %4831 = vmatprep.subr.mxu0 0.0
    %4832 = vmatpush1.xpose.msra.mxu0 0.0
    %4833 = vmatprep.subr.mxu0 0.0
    %4834 = vmatpush1.xpose.msra.mxu0 0.0
    %4835 = vmatprep.subr.mxu0 0.0
    %4836 = vmatpush1.xpose.msra.mxu0 0.0
    %4837 = vmatprep.subr.mxu0 0.0
    %4838 = vmatpush1.xpose.msra.mxu0 0.0
    %4839 = vmatprep.subr.mxu0 0.0
    %4840 = vmatpush1.xpose.msra.mxu0 0.0
    %4841 = vmatprep.subr.mxu0 0.0
    %4842 = vmatpush1.xpose.msra.mxu0 0.0
    %4843 = vmatprep.subr.mxu0 0.0
    %4844 = vmatpush1.xpose.msra.mxu0 0.0
    %4845 = vmatprep.subr.mxu0 0.0
    %4846 = vmatpush1.xpose.msra.mxu0 0.0
    %4847 = vmatprep.subr.mxu0 0.0
    %4848 = vmatpush1.xpose.msra.mxu0 0.0
    %4849 = vmatprep.subr.mxu0 0.0
    %4850 = vmatpush1.xpose.msra.mxu0 0.0
    %4851 = vmatprep.subr.mxu0 0.0
    %4852 = vmatpush1.xpose.msra.mxu0 0.0
    %4853 = vmatprep.subr.mxu0 0.0
    %4854 = vmatpush1.xpose.msra.mxu0 0.0
    %4855 = vmatprep.subr.mxu0 0.0
    %4856 = vmatpush1.xpose.msra.mxu0 0.0
    %4857 = vmatprep.subr.mxu0 0.0
    %4858 = vmatpush1.xpose.msra.mxu0 0.0
    %4859 = vmatprep.subr.mxu0 0.0
    %4860 = vmatpush1.xpose.msra.mxu0 0.0
    %4861 = vmatprep.subr.mxu0 0.0
    %4862 = vmatpush1.xpose.msra.mxu0 0.0
    %4863 = vmatprep.subr.mxu0 0.0
    %4864 = vmatpush1.xpose.msra.mxu0 0.0
    %4865 = vmatprep.subr.mxu0 0.0
    %4866 = vmatpush1.xpose.msra.mxu0 0.0
    %4867 = vmatprep.mubr.f32.mxu0 0.0
    %4868 = vmatmul.mubr.f32.gmra.mrb[0].mxu0 %v4798
    %v4869 = vpop.f32.mrb[0].mxu0
    %v4870 = vadd.f32 %v403, %v4869
    %v4871 = vpop.f32.mrb[0].mxu0
    %4872 = vdwg.mxu0
    %v4873 = vsel %vm406, %v4794, -inf
    %4874 = vmax.xlane.f32.xlu0 %v4873
    %v4875 = vpop.xlane.xlu0 %4874
    %v4876 = vsel %vm406, %v4870, -inf
    %4877 = vmax.xlane.f32.xlu0 %v4876
    %v4878 = vpop.xlane.xlu0 %4877
    %v4879 = vsub.f32 %v4794, %v4875
    %v4880 = vsub.f32 %v4870, %v4878
    %v4881 = vmul.f32 %v4879, 1.442695
    %v4882 = vpow.pop %v4881
    %v4883 = vmul.f32 %v4880, 1.442695
    %v4884 = vpow.pop %v4883
    %v4885 = vsel %vm406, %v4882, 0.0
    %4886 = vadd.xlane.f32.xlu0 %v4885
    %v4887 = vpop.xlane.xlu0 %4886
    %v4888 = vsel %vm406, %v4884, 0.0
    %4889 = vadd.xlane.f32.xlu0 %v4888
    %v4890 = vpop.xlane.xlu0 %4889
    %v4891 = vrcp.pop %v4887
    %v4892 = vrcp.pop %v4890
    %v4893 = vmul.f32 %v4882, %v4891
    %v4894 = vmul.f32 %v4884, %v4892
    %v4896 = vsel %vm406, %v4893, 0
    %4898 = vmatprep.subr.mxu0 0.0
    %4899 = vmatpush1.msra.mxu0 %v4713
    %4900 = vmatprep.subr.mxu0 0.0
    %4901 = vmatpush1.msra.mxu0 0.0
    %4902 = vmatprep.subr.mxu0 0.0
    %4903 = vmatpush1.msra.mxu0 0.0
    %4904 = vmatprep.subr.mxu0 0.0
    %4905 = vmatpush1.msra.mxu0 0.0
    %4906 = vmatprep.subr.mxu0 0.0
    %4907 = vmatpush1.msra.mxu0 0.0
    %4908 = vmatprep.subr.mxu0 0.0
    %4909 = vmatpush1.msra.mxu0 0.0
    %4910 = vmatprep.subr.mxu0 0.0
    %4911 = vmatpush1.msra.mxu0 0.0
    %4912 = vmatprep.subr.mxu0 0.0
    %4913 = vmatpush1.msra.mxu0 0.0
    %4914 = vmatprep.subr.mxu0 0.0
    %4915 = vmatpush1.msra.mxu0 0.0
    %4916 = vmatprep.subr.mxu0 0.0
    %4917 = vmatpush1.msra.mxu0 0.0
    %4918 = vmatprep.subr.mxu0 0.0
    %4919 = vmatpush1.msra.mxu0 0.0
    %4920 = vmatprep.subr.mxu0 0.0
    %4921 = vmatpush1.msra.mxu0 0.0
    %4922 = vmatprep.subr.mxu0 0.0
    %4923 = vmatpush1.msra.mxu0 0.0
    %4924 = vmatprep.subr.mxu0 0.0
    %4925 = vmatpush1.msra.mxu0 0.0
    %4926 = vmatprep.subr.mxu0 0.0
    %4927 = vmatpush1.msra.mxu0 0.0
    %4928 = vmatprep.subr.mxu0 0.0
    %4929 = vmatpush1.msra.mxu0 0.0
    %4930 = vmatprep.subr.mxu0 0.0
    %4931 = vmatpush1.msra.mxu0 0.0
    %4932 = vmatprep.subr.mxu0 0.0
    %4933 = vmatpush1.msra.mxu0 0.0
    %4934 = vmatprep.subr.mxu0 0.0
    %4935 = vmatpush1.msra.mxu0 0.0
    %4936 = vmatprep.subr.mxu0 0.0
    %4937 = vmatpush1.msra.mxu0 0.0
    %4938 = vmatprep.subr.mxu0 0.0
    %4939 = vmatpush1.msra.mxu0 0.0
    %4940 = vmatprep.subr.mxu0 0.0
    %4941 = vmatpush1.msra.mxu0 0.0
    %4942 = vmatprep.subr.mxu0 0.0
    %4943 = vmatpush1.msra.mxu0 0.0
    %4944 = vmatprep.subr.mxu0 0.0
    %4945 = vmatpush1.msra.mxu0 0.0
    %4946 = vmatprep.subr.mxu0 0.0
    %4947 = vmatpush1.msra.mxu0 0.0
    %4948 = vmatprep.subr.mxu0 0.0
    %4949 = vmatpush1.msra.mxu0 0.0
    %4950 = vmatprep.subr.mxu0 0.0
    %4951 = vmatpush1.msra.mxu0 0.0
    %4952 = vmatprep.subr.mxu0 0.0
    %4953 = vmatpush1.msra.mxu0 0.0
    %4954 = vmatprep.subr.mxu0 0.0
    %4955 = vmatpush1.msra.mxu0 0.0
    %4956 = vmatprep.subr.mxu0 0.0
    %4957 = vmatpush1.msra.mxu0 0.0
    %4958 = vmatprep.subr.mxu0 0.0
    %4959 = vmatpush1.msra.mxu0 0.0
    %4960 = vmatprep.subr.mxu0 0.0
    %4961 = vmatpush1.msra.mxu0 0.0
    %4962 = vmatprep.mubr.f32.mxu0 0.0
    %4963 = vmatmul.mubr.f32.gmra.mrb[0].mxu0 %v4896
    %v4964 = vpop.f32.mrb[0].mxu0
    %v4965 = vadd.f32 0.0, %v4964
    %v4966 = vpop.f32.mrb[0].mxu0
    %4967 = vdwg.mxu0
    %v4969 = vsel %vm406, %v4894, 0
    %4971 = vmatprep.subr.mxu0 0.0
    %4972 = vmatpush1.msra.mxu0 %v4718
    %4973 = vmatprep.subr.mxu0 0.0
    %4974 = vmatpush1.msra.mxu0 0.0
    %4975 = vmatprep.subr.mxu0 0.0
    %4976 = vmatpush1.msra.mxu0 0.0
    %4977 = vmatprep.subr.mxu0 0.0
    %4978 = vmatpush1.msra.mxu0 0.0
    %4979 = vmatprep.subr.mxu0 0.0
    %4980 = vmatpush1.msra.mxu0 0.0
    %4981 = vmatprep.subr.mxu0 0.0
    %4982 = vmatpush1.msra.mxu0 0.0
    %4983 = vmatprep.subr.mxu0 0.0
    %4984 = vmatpush1.msra.mxu0 0.0
    %4985 = vmatprep.subr.mxu0 0.0
    %4986 = vmatpush1.msra.mxu0 0.0
    %4987 = vmatprep.subr.mxu0 0.0
    %4988 = vmatpush1.msra.mxu0 0.0
    %4989 = vmatprep.subr.mxu0 0.0
    %4990 = vmatpush1.msra.mxu0 0.0
    %4991 = vmatprep.subr.mxu0 0.0
    %4992 = vmatpush1.msra.mxu0 0.0
    %4993 = vmatprep.subr.mxu0 0.0
    %4994 = vmatpush1.msra.mxu0 0.0
    %4995 = vmatprep.subr.mxu0 0.0
    %4996 = vmatpush1.msra.mxu0 0.0
    %4997 = vmatprep.subr.mxu0 0.0
    %4998 = vmatpush1.msra.mxu0 0.0
    %4999 = vmatprep.subr.mxu0 0.0
    %5000 = vmatpush1.msra.mxu0 0.0
    %5001 = vmatprep.subr.mxu0 0.0
    %5002 = vmatpush1.msra.mxu0 0.0
    %5003 = vmatprep.subr.mxu0 0.0
    %5004 = vmatpush1.msra.mxu0 0.0
    %5005 = vmatprep.subr.mxu0 0.0
    %5006 = vmatpush1.msra.mxu0 0.0
    %5007 = vmatprep.subr.mxu0 0.0
    %5008 = vmatpush1.msra.mxu0 0.0
    %5009 = vmatprep.subr.mxu0 0.0
    %5010 = vmatpush1.msra.mxu0 0.0
    %5011 = vmatprep.subr.mxu0 0.0
    %5012 = vmatpush1.msra.mxu0 0.0
    %5013 = vmatprep.subr.mxu0 0.0
    %5014 = vmatpush1.msra.mxu0 0.0
    %5015 = vmatprep.subr.mxu0 0.0
    %5016 = vmatpush1.msra.mxu0 0.0
    %5017 = vmatprep.subr.mxu0 0.0
    %5018 = vmatpush1.msra.mxu0 0.0
    %5019 = vmatprep.subr.mxu0 0.0
    %5020 = vmatpush1.msra.mxu0 0.0
    %5021 = vmatprep.subr.mxu0 0.0
    %5022 = vmatpush1.msra.mxu0 0.0
    %5023 = vmatprep.subr.mxu0 0.0
    %5024 = vmatpush1.msra.mxu0 0.0
    %5025 = vmatprep.subr.mxu0 0.0
    %5026 = vmatpush1.msra.mxu0 0.0
    %5027 = vmatprep.subr.mxu0 0.0
    %5028 = vmatpush1.msra.mxu0 0.0
    %5029 = vmatprep.subr.mxu0 0.0
    %5030 = vmatpush1.msra.mxu0 0.0
    %5031 = vmatprep.subr.mxu0 0.0
    %5032 = vmatpush1.msra.mxu0 0.0
    %5033 = vmatprep.subr.mxu0 0.0
    %5034 = vmatpush1.msra.mxu0 0.0
    %5035 = vmatprep.mubr.f32.mxu0 0.0
    %5036 = vmatmul.mubr.f32.gmra.mrb[0].mxu0 %v4969
    %v5037 = vpop.f32.mrb[0].mxu0
    %v5038 = vadd.f32 0.0, %v5037
    %v5039 = vpop.f32.mrb[0].mxu0
    %5040 = vdwg.mxu0
    %s5041 = scalar_lea.vmem %s8, 48
    %v5042 = vld [vmem:[%s5041] sm:$0xff]
    %v5044 = vsel %vm406, %v4965, 0
    %v5047 = vsel %vm406, %v5038, 0
    %5049 = vmatprep.subr.mxu0 0.0
    %5050 = vmatpush1.msra.mxu0 %v5042
    %5051 = vmatprep.subr.mxu0 0.0
    %5052 = vmatpush1.msra.mxu0 0.0
    %5053 = vmatprep.subr.mxu0 0.0
    %5054 = vmatpush1.msra.mxu0 0.0
    %5055 = vmatprep.subr.mxu0 0.0
    %5056 = vmatpush1.msra.mxu0 0.0
    %5057 = vmatprep.subr.mxu0 0.0
    %5058 = vmatpush1.msra.mxu0 0.0
    %5059 = vmatprep.subr.mxu0 0.0
    %5060 = vmatpush1.msra.mxu0 0.0
    %5061 = vmatprep.subr.mxu0 0.0
    %5062 = vmatpush1.msra.mxu0 0.0
    %5063 = vmatprep.subr.mxu0 0.0
    %5064 = vmatpush1.msra.mxu0 0.0
    %5065 = vmatprep.subr.mxu0 0.0
    %5066 = vmatpush1.msra.mxu0 0.0
    %5067 = vmatprep.subr.mxu0 0.0
    %5068 = vmatpush1.msra.mxu0 0.0
    %5069 = vmatprep.subr.mxu0 0.0
    %5070 = vmatpush1.msra.mxu0 0.0
    %5071 = vmatprep.subr.mxu0 0.0
    %5072 = vmatpush1.msra.mxu0 0.0
    %5073 = vmatprep.subr.mxu0 0.0
    %5074 = vmatpush1.msra.mxu0 0.0
    %5075 = vmatprep.subr.mxu0 0.0
    %5076 = vmatpush1.msra.mxu0 0.0
    %5077 = vmatprep.subr.mxu0 0.0
    %5078 = vmatpush1.msra.mxu0 0.0
    %5079 = vmatprep.subr.mxu0 0.0
    %5080 = vmatpush1.msra.mxu0 0.0
    %5081 = vmatprep.subr.mxu0 0.0
    %5082 = vmatpush1.msra.mxu0 0.0
    %5083 = vmatprep.subr.mxu0 0.0
    %5084 = vmatpush1.msra.mxu0 0.0
    %5085 = vmatprep.subr.mxu0 0.0
    %5086 = vmatpush1.msra.mxu0 0.0
    %5087 = vmatprep.subr.mxu0 0.0
    %5088 = vmatpush1.msra.mxu0 0.0
    %5089 = vmatprep.subr.mxu0 0.0
    %5090 = vmatpush1.msra.mxu0 0.0
    %5091 = vmatprep.subr.mxu0 0.0
    %5092 = vmatpush1.msra.mxu0 0.0
    %5093 = vmatprep.subr.mxu0 0.0
    %5094 = vmatpush1.msra.mxu0 0.0
    %5095 = vmatprep.subr.mxu0 0.0
    %5096 = vmatpush1.msra.mxu0 0.0
    %5097 = vmatprep.subr.mxu0 0.0
    %5098 = vmatpush1.msra.mxu0 0.0
    %5099 = vmatprep.subr.mxu0 0.0
    %5100 = vmatpush1.msra.mxu0 0.0
    %5101 = vmatprep.subr.mxu0 0.0
    %5102 = vmatpush1.msra.mxu0 0.0
    %5103 = vmatprep.subr.mxu0 0.0
    %5104 = vmatpush1.msra.mxu0 0.0
    %5105 = vmatprep.subr.mxu0 0.0
    %5106 = vmatpush1.msra.mxu0 0.0
    %5107 = vmatprep.subr.mxu0 0.0
    %5108 = vmatpush1.msra.mxu0 0.0
    %5109 = vmatprep.subr.mxu0 0.0
    %5110 = vmatpush1.msra.mxu0 0.0
    %5111 = vmatprep.subr.mxu0 0.0
    %5112 = vmatpush1.msra.mxu0 0.0
    %5113 = vmatprep.mubr.f32.mxu0 0.0
    %5114 = vmatmul.mubr.f32.gmra.mrb[0].mxu0 %v5044
    %v5115 = vpop.f32.mrb[0].mxu0
    %v5116 = vadd.f32 0.0, %v5115
    %v5117 = vpop.f32.mrb[0].mxu0
    %5118 = vmatprep.mubr.f32.mxu0 0.0
    %5119 = vmatmul.mubr.f32.gmra.mrb[0].mxu0 %v5047
    %v5120 = vpop.f32.mrb[0].mxu0
    %v5121 = vadd.f32 0.0, %v5120
    %v5122 = vpop.f32.mrb[0].mxu0
    %5123 = vdwg.mxu0
    %v5124 = vadd.f32 %v4455, %v5116
    %v5125 = vadd.f32 %v4456, %v5121
    %s5126 = scalar_lea.vmem %s2, 224
    %v5127 = vld [vmem:[%s5126] sm:$0xff]
    %v5128 = vld [vmem:[%s5126 + $0x8] sm:$0xff]
    %v5129 = vld [vmem:[%s5126 + $0x10] sm:$0xff]
    %v5130 = vld [vmem:[%s5126 + $0x18] sm:$0xff]
    %s5131 = scalar_lea.vmem %s3, 7
    %v5132 = vld [vmem:[%s5131] sm:$0x1]
    %v5134 = vlaneseq
    %v5135 = vshrl.u32 %v5134, 7
    %v5136 = vsub.s32 0, %v5135
    %v5137 = vrot.slane %v5132, %v5136
    %5139 = vmatprep.subr.mxu0 0.0
    %5140 = vmatpush1.msra.mxu0 %v5127
    %5141 = vmatprep.subr.mxu0 0.0
    %5142 = vmatpush1.msra.mxu0 %v5128
    %5143 = vmatprep.subr.mxu0 0.0
    %5144 = vmatpush1.msra.mxu0 %v5129
    %5145 = vmatprep.subr.mxu0 0.0
    %5146 = vmatpush1.msra.mxu0 %v5130
    %5147 = vmatprep.subr.mxu0 0.0
    %5148 = vmatpush1.msra.mxu0 0.0
    %5149 = vmatprep.subr.mxu0 0.0
    %5150 = vmatpush1.msra.mxu0 0.0
    %5151 = vmatprep.subr.mxu0 0.0
    %5152 = vmatpush1.msra.mxu0 0.0
    %5153 = vmatprep.subr.mxu0 0.0
    %5154 = vmatpush1.msra.mxu0 0.0
    %5155 = vmatprep.subr.mxu0 0.0
    %5156 = vmatpush1.msra.mxu0 0.0
    %5157 = vmatprep.subr.mxu0 0.0
    %5158 = vmatpush1.msra.mxu0 0.0
    %5159 = vmatprep.subr.mxu0 0.0
    %5160 = vmatpush1.msra.mxu0 0.0
    %5161 = vmatprep.subr.mxu0 0.0
    %5162 = vmatpush1.msra.mxu0 0.0
    %5163 = vmatprep.subr.mxu0 0.0
    %5164 = vmatpush1.msra.mxu0 0.0
    %5165 = vmatprep.subr.mxu0 0.0
    %5166 = vmatpush1.msra.mxu0 0.0
    %5167 = vmatprep.subr.mxu0 0.0
    %5168 = vmatpush1.msra.mxu0 0.0
    %5169 = vmatprep.subr.mxu0 0.0
    %5170 = vmatpush1.msra.mxu0 0.0
    %5171 = vmatprep.subr.mxu0 0.0
    %5172 = vmatpush1.msra.mxu0 0.0
    %5173 = vmatprep.subr.mxu0 0.0
    %5174 = vmatpush1.msra.mxu0 0.0
    %5175 = vmatprep.subr.mxu0 0.0
    %5176 = vmatpush1.msra.mxu0 0.0
    %5177 = vmatprep.subr.mxu0 0.0
    %5178 = vmatpush1.msra.mxu0 0.0
    %5179 = vmatprep.subr.mxu0 0.0
    %5180 = vmatpush1.msra.mxu0 0.0
    %5181 = vmatprep.subr.mxu0 0.0
    %5182 = vmatpush1.msra.mxu0 0.0
    %5183 = vmatprep.subr.mxu0 0.0
    %5184 = vmatpush1.msra.mxu0 0.0
    %5185 = vmatprep.subr.mxu0 0.0
    %5186 = vmatpush1.msra.mxu0 0.0
    %5187 = vmatprep.subr.mxu0 0.0
    %5188 = vmatpush1.msra.mxu0 0.0
    %5189 = vmatprep.subr.mxu0 0.0
    %5190 = vmatpush1.msra.mxu0 0.0
    %5191 = vmatprep.subr.mxu0 0.0
    %5192 = vmatpush1.msra.mxu0 0.0
    %5193 = vmatprep.subr.mxu0 0.0
    %5194 = vmatpush1.msra.mxu0 0.0
    %5195 = vmatprep.subr.mxu0 0.0
    %5196 = vmatpush1.msra.mxu0 0.0
    %5197 = vmatprep.subr.mxu0 0.0
    %5198 = vmatpush1.msra.mxu0 0.0
    %5199 = vmatprep.subr.mxu0 0.0
    %5200 = vmatpush1.msra.mxu0 0.0
    %5201 = vmatprep.subr.mxu0 0.0
    %5202 = vmatpush1.msra.mxu0 0.0
    %5203 = vmatprep.mubr.f32.mxu0 0.0
    %5204 = vmatmul.mubr.f32.gmra.mrb[0].mxu0 %v3127
    %v5205 = vpop.f32.mrb[0].mxu0
    %v5206 = vadd.f32 %v5137, %v5205
    %v5207 = vpop.f32.mrb[0].mxu0
    %5208 = vmatprep.mubr.f32.mxu0 0.0
    %5209 = vmatmul.mubr.f32.gmra.mrb[0].mxu0 %v3130
    %v5210 = vpop.f32.mrb[0].mxu0
    %v5211 = vadd.f32 %v5137, %v5210
    %v5212 = vpop.f32.mrb[0].mxu0
    %5213 = vdwg.mxu0
    %s5214 = scalar_lea.vmem %s4, 224
    %v5215 = vld [vmem:[%s5214] sm:$0xff]
    %v5216 = vld [vmem:[%s5214 + $0x8] sm:$0xff]
    %v5217 = vld [vmem:[%s5214 + $0x10] sm:$0xff]
    %v5218 = vld [vmem:[%s5214 + $0x18] sm:$0xff]
    %s5219 = scalar_lea.vmem %s5, 7
    %v5220 = vld [vmem:[%s5219] sm:$0x1]
    %v5222 = vlaneseq
    %v5223 = vshrl.u32 %v5222, 7
    %v5224 = vsub.s32 0, %v5223
    %v5225 = vrot.slane %v5220, %v5224
    %5227 = vmatprep.subr.mxu0 0.0
    %5228 = vmatpush1.msra.mxu0 %v5215
    %5229 = vmatprep.subr.mxu0 0.0
    %5230 = vmatpush1.msra.mxu0 %v5216
    %5231 = vmatprep.subr.mxu0 0.0
    %5232 = vmatpush1.msra.mxu0 %v5217
    %5233 = vmatprep.subr.mxu0 0.0
    %5234 = vmatpush1.msra.mxu0 %v5218
    %5235 = vmatprep.subr.mxu0 0.0
    %5236 = vmatpush1.msra.mxu0 0.0
    %5237 = vmatprep.subr.mxu0 0.0
    %5238 = vmatpush1.msra.mxu0 0.0
    %5239 = vmatprep.subr.mxu0 0.0
    %5240 = vmatpush1.msra.mxu0 0.0
    %5241 = vmatprep.subr.mxu0 0.0
    %5242 = vmatpush1.msra.mxu0 0.0
    %5243 = vmatprep.subr.mxu0 0.0
    %5244 = vmatpush1.msra.mxu0 0.0
    %5245 = vmatprep.subr.mxu0 0.0
    %5246 = vmatpush1.msra.mxu0 0.0
    %5247 = vmatprep.subr.mxu0 0.0
    %5248 = vmatpush1.msra.mxu0 0.0
    %5249 = vmatprep.subr.mxu0 0.0
    %5250 = vmatpush1.msra.mxu0 0.0
    %5251 = vmatprep.subr.mxu0 0.0
    %5252 = vmatpush1.msra.mxu0 0.0
    %5253 = vmatprep.subr.mxu0 0.0
    %5254 = vmatpush1.msra.mxu0 0.0
    %5255 = vmatprep.subr.mxu0 0.0
    %5256 = vmatpush1.msra.mxu0 0.0
    %5257 = vmatprep.subr.mxu0 0.0
    %5258 = vmatpush1.msra.mxu0 0.0
    %5259 = vmatprep.subr.mxu0 0.0
    %5260 = vmatpush1.msra.mxu0 0.0
    %5261 = vmatprep.subr.mxu0 0.0
    %5262 = vmatpush1.msra.mxu0 0.0
    %5263 = vmatprep.subr.mxu0 0.0
    %5264 = vmatpush1.msra.mxu0 0.0
    %5265 = vmatprep.subr.mxu0 0.0
    %5266 = vmatpush1.msra.mxu0 0.0
    %5267 = vmatprep.subr.mxu0 0.0
    %5268 = vmatpush1.msra.mxu0 0.0
    %5269 = vmatprep.subr.mxu0 0.0
    %5270 = vmatpush1.msra.mxu0 0.0
    %5271 = vmatprep.subr.mxu0 0.0
    %5272 = vmatpush1.msra.mxu0 0.0
    %5273 = vmatprep.subr.mxu0 0.0
    %5274 = vmatpush1.msra.mxu0 0.0
    %5275 = vmatprep.subr.mxu0 0.0
    %5276 = vmatpush1.msra.mxu0 0.0
    %5277 = vmatprep.subr.mxu0 0.0
    %5278 = vmatpush1.msra.mxu0 0.0
    %5279 = vmatprep.subr.mxu0 0.0
    %5280 = vmatpush1.msra.mxu0 0.0
    %5281 = vmatprep.subr.mxu0 0.0
    %5282 = vmatpush1.msra.mxu0 0.0
    %5283 = vmatprep.subr.mxu0 0.0
    %5284 = vmatpush1.msra.mxu0 0.0
    %5285 = vmatprep.subr.mxu0 0.0
    %5286 = vmatpush1.msra.mxu0 0.0
    %5287 = vmatprep.subr.mxu0 0.0
    %5288 = vmatpush1.msra.mxu0 0.0
    %5289 = vmatprep.subr.mxu0 0.0
    %5290 = vmatpush1.msra.mxu0 0.0
    %5291 = vmatprep.mubr.f32.mxu0 0.0
    %5292 = vmatmul.mubr.f32.gmra.mrb[0].mxu0 %v3127
    %v5293 = vpop.f32.mrb[0].mxu0
    %v5294 = vadd.f32 %v5225, %v5293
    %v5295 = vpop.f32.mrb[0].mxu0
    %5296 = vmatprep.mubr.f32.mxu0 0.0
    %5297 = vmatmul.mubr.f32.gmra.mrb[0].mxu0 %v3130
    %v5298 = vpop.f32.mrb[0].mxu0
    %v5299 = vadd.f32 %v5225, %v5298
    %v5300 = vpop.f32.mrb[0].mxu0
    %5301 = vdwg.mxu0
    %s5302 = scalar_lea.vmem %s6, 224
    %v5303 = vld [vmem:[%s5302] sm:$0xff]
    %v5304 = vld [vmem:[%s5302 + $0x8] sm:$0xff]
    %v5305 = vld [vmem:[%s5302 + $0x10] sm:$0xff]
    %v5306 = vld [vmem:[%s5302 + $0x18] sm:$0xff]
    %s5307 = scalar_lea.vmem %s7, 7
    %v5308 = vld [vmem:[%s5307] sm:$0x1]
    %v5310 = vlaneseq
    %v5311 = vshrl.u32 %v5310, 7
    %v5312 = vsub.s32 0, %v5311
    %v5313 = vrot.slane %v5308, %v5312
    %5315 = vmatprep.subr.mxu0 0.0
    %5316 = vmatpush1.msra.mxu0 %v5303
    %5317 = vmatprep.subr.mxu0 0.0
    %5318 = vmatpush1.msra.mxu0 %v5304
    %5319 = vmatprep.subr.mxu0 0.0
    %5320 = vmatpush1.msra.mxu0 %v5305
    %5321 = vmatprep.subr.mxu0 0.0
    %5322 = vmatpush1.msra.mxu0 %v5306
    %5323 = vmatprep.subr.mxu0 0.0
    %5324 = vmatpush1.msra.mxu0 0.0
    %5325 = vmatprep.subr.mxu0 0.0
    %5326 = vmatpush1.msra.mxu0 0.0
    %5327 = vmatprep.subr.mxu0 0.0
    %5328 = vmatpush1.msra.mxu0 0.0
    %5329 = vmatprep.subr.mxu0 0.0
    %5330 = vmatpush1.msra.mxu0 0.0
    %5331 = vmatprep.subr.mxu0 0.0
    %5332 = vmatpush1.msra.mxu0 0.0
    %5333 = vmatprep.subr.mxu0 0.0
    %5334 = vmatpush1.msra.mxu0 0.0
    %5335 = vmatprep.subr.mxu0 0.0
    %5336 = vmatpush1.msra.mxu0 0.0
    %5337 = vmatprep.subr.mxu0 0.0
    %5338 = vmatpush1.msra.mxu0 0.0
    %5339 = vmatprep.subr.mxu0 0.0
    %5340 = vmatpush1.msra.mxu0 0.0
    %5341 = vmatprep.subr.mxu0 0.0
    %5342 = vmatpush1.msra.mxu0 0.0
    %5343 = vmatprep.subr.mxu0 0.0
    %5344 = vmatpush1.msra.mxu0 0.0
    %5345 = vmatprep.subr.mxu0 0.0
    %5346 = vmatpush1.msra.mxu0 0.0
    %5347 = vmatprep.subr.mxu0 0.0
    %5348 = vmatpush1.msra.mxu0 0.0
    %5349 = vmatprep.subr.mxu0 0.0
    %5350 = vmatpush1.msra.mxu0 0.0
    %5351 = vmatprep.subr.mxu0 0.0
    %5352 = vmatpush1.msra.mxu0 0.0
    %5353 = vmatprep.subr.mxu0 0.0
    %5354 = vmatpush1.msra.mxu0 0.0
    %5355 = vmatprep.subr.mxu0 0.0
    %5356 = vmatpush1.msra.mxu0 0.0
    %5357 = vmatprep.subr.mxu0 0.0
    %5358 = vmatpush1.msra.mxu0 0.0
    %5359 = vmatprep.subr.mxu0 0.0
    %5360 = vmatpush1.msra.mxu0 0.0
    %5361 = vmatprep.subr.mxu0 0.0
    %5362 = vmatpush1.msra.mxu0 0.0
    %5363 = vmatprep.subr.mxu0 0.0
    %5364 = vmatpush1.msra.mxu0 0.0
    %5365 = vmatprep.subr.mxu0 0.0
    %5366 = vmatpush1.msra.mxu0 0.0
    %5367 = vmatprep.subr.mxu0 0.0
    %5368 = vmatpush1.msra.mxu0 0.0
    %5369 = vmatprep.subr.mxu0 0.0
    %5370 = vmatpush1.msra.mxu0 0.0
    %5371 = vmatprep.subr.mxu0 0.0
    %5372 = vmatpush1.msra.mxu0 0.0
    %5373 = vmatprep.subr.mxu0 0.0
    %5374 = vmatpush1.msra.mxu0 0.0
    %5375 = vmatprep.subr.mxu0 0.0
    %5376 = vmatpush1.msra.mxu0 0.0
    %5377 = vmatprep.subr.mxu0 0.0
    %5378 = vmatpush1.msra.mxu0 0.0
    %5379 = vmatprep.mubr.f32.mxu0 0.0
    %5380 = vmatmul.mubr.f32.gmra.mrb[0].mxu0 %v3127
    %v5381 = vpop.f32.mrb[0].mxu0
    %v5382 = vadd.f32 %v5313, %v5381
    %v5383 = vpop.f32.mrb[0].mxu0
    %5384 = vmatprep.mubr.f32.mxu0 0.0
    %5385 = vmatmul.mubr.f32.gmra.mrb[0].mxu0 %v3130
    %v5386 = vpop.f32.mrb[0].mxu0
    %v5387 = vadd.f32 %v5313, %v5386
    %v5388 = vpop.f32.mrb[0].mxu0
    %5389 = vdwg.mxu0
    %v5391 = vsel %vm406, %v5206, 0
    %v5394 = vsel %vm406, %v5294, 0
    %5396 = vmatprep.subr.mxu0 0.0
    %5397 = vmatpush1.xpose.msra.mxu0 %v5394
    %5398 = vmatprep.subr.mxu0 0.0
    %5399 = vmatpush1.xpose.msra.mxu0 0.0
    %5400 = vmatprep.subr.mxu0 0.0
    %5401 = vmatpush1.xpose.msra.mxu0 0.0
    %5402 = vmatprep.subr.mxu0 0.0
    %5403 = vmatpush1.xpose.msra.mxu0 0.0
    %5404 = vmatprep.subr.mxu0 0.0
    %5405 = vmatpush1.xpose.msra.mxu0 0.0
    %5406 = vmatprep.subr.mxu0 0.0
    %5407 = vmatpush1.xpose.msra.mxu0 0.0
    %5408 = vmatprep.subr.mxu0 0.0
    %5409 = vmatpush1.xpose.msra.mxu0 0.0
    %5410 = vmatprep.subr.mxu0 0.0
    %5411 = vmatpush1.xpose.msra.mxu0 0.0
    %5412 = vmatprep.subr.mxu0 0.0
    %5413 = vmatpush1.xpose.msra.mxu0 0.0
    %5414 = vmatprep.subr.mxu0 0.0
    %5415 = vmatpush1.xpose.msra.mxu0 0.0
    %5416 = vmatprep.subr.mxu0 0.0
    %5417 = vmatpush1.xpose.msra.mxu0 0.0
    %5418 = vmatprep.subr.mxu0 0.0
    %5419 = vmatpush1.xpose.msra.mxu0 0.0
    %5420 = vmatprep.subr.mxu0 0.0
    %5421 = vmatpush1.xpose.msra.mxu0 0.0
    %5422 = vmatprep.subr.mxu0 0.0
    %5423 = vmatpush1.xpose.msra.mxu0 0.0
    %5424 = vmatprep.subr.mxu0 0.0
    %5425 = vmatpush1.xpose.msra.mxu0 0.0
    %5426 = vmatprep.subr.mxu0 0.0
    %5427 = vmatpush1.xpose.msra.mxu0 0.0
    %5428 = vmatprep.subr.mxu0 0.0
    %5429 = vmatpush1.xpose.msra.mxu0 0.0
    %5430 = vmatprep.subr.mxu0 0.0
    %5431 = vmatpush1.xpose.msra.mxu0 0.0
    %5432 = vmatprep.subr.mxu0 0.0
    %5433 = vmatpush1.xpose.msra.mxu0 0.0
    %5434 = vmatprep.subr.mxu0 0.0
    %5435 = vmatpush1.xpose.msra.mxu0 0.0
    %5436 = vmatprep.subr.mxu0 0.0
    %5437 = vmatpush1.xpose.msra.mxu0 0.0
    %5438 = vmatprep.subr.mxu0 0.0
    %5439 = vmatpush1.xpose.msra.mxu0 0.0
    %5440 = vmatprep.subr.mxu0 0.0
    %5441 = vmatpush1.xpose.msra.mxu0 0.0
    %5442 = vmatprep.subr.mxu0 0.0
    %5443 = vmatpush1.xpose.msra.mxu0 0.0
    %5444 = vmatprep.subr.mxu0 0.0
    %5445 = vmatpush1.xpose.msra.mxu0 0.0
    %5446 = vmatprep.subr.mxu0 0.0
    %5447 = vmatpush1.xpose.msra.mxu0 0.0
    %5448 = vmatprep.subr.mxu0 0.0
    %5449 = vmatpush1.xpose.msra.mxu0 0.0
    %5450 = vmatprep.subr.mxu0 0.0
    %5451 = vmatpush1.xpose.msra.mxu0 0.0
    %5452 = vmatprep.subr.mxu0 0.0
    %5453 = vmatpush1.xpose.msra.mxu0 0.0
    %5454 = vmatprep.subr.mxu0 0.0
    %5455 = vmatpush1.xpose.msra.mxu0 0.0
    %5456 = vmatprep.subr.mxu0 0.0
    %5457 = vmatpush1.xpose.msra.mxu0 0.0
    %5458 = vmatprep.subr.mxu0 0.0
    %5459 = vmatpush1.xpose.msra.mxu0 0.0
    %5460 = vmatprep.mubr.f32.mxu0 0.0
    %5461 = vmatmul.mubr.f32.gmra.mrb[0].mxu0 %v5391
    %v5462 = vpop.f32.mrb[0].mxu0
    %v5463 = vadd.f32 %v399, %v5462
    %v5464 = vpop.f32.mrb[0].mxu0
    %5465 = vdwg.mxu0
    %v5467 = vsel %vm406, %v5211, 0
    %v5470 = vsel %vm406, %v5299, 0
    %5472 = vmatprep.subr.mxu0 0.0
    %5473 = vmatpush1.xpose.msra.mxu0 %v5470
    %5474 = vmatprep.subr.mxu0 0.0
    %5475 = vmatpush1.xpose.msra.mxu0 0.0
    %5476 = vmatprep.subr.mxu0 0.0
    %5477 = vmatpush1.xpose.msra.mxu0 0.0
    %5478 = vmatprep.subr.mxu0 0.0
    %5479 = vmatpush1.xpose.msra.mxu0 0.0
    %5480 = vmatprep.subr.mxu0 0.0
    %5481 = vmatpush1.xpose.msra.mxu0 0.0
    %5482 = vmatprep.subr.mxu0 0.0
    %5483 = vmatpush1.xpose.msra.mxu0 0.0
    %5484 = vmatprep.subr.mxu0 0.0
    %5485 = vmatpush1.xpose.msra.mxu0 0.0
    %5486 = vmatprep.subr.mxu0 0.0
    %5487 = vmatpush1.xpose.msra.mxu0 0.0
    %5488 = vmatprep.subr.mxu0 0.0
    %5489 = vmatpush1.xpose.msra.mxu0 0.0
    %5490 = vmatprep.subr.mxu0 0.0
    %5491 = vmatpush1.xpose.msra.mxu0 0.0
    %5492 = vmatprep.subr.mxu0 0.0
    %5493 = vmatpush1.xpose.msra.mxu0 0.0
    %5494 = vmatprep.subr.mxu0 0.0
    %5495 = vmatpush1.xpose.msra.mxu0 0.0
    %5496 = vmatprep.subr.mxu0 0.0
    %5497 = vmatpush1.xpose.msra.mxu0 0.0
    %5498 = vmatprep.subr.mxu0 0.0
    %5499 = vmatpush1.xpose.msra.mxu0 0.0
    %5500 = vmatprep.subr.mxu0 0.0
    %5501 = vmatpush1.xpose.msra.mxu0 0.0
    %5502 = vmatprep.subr.mxu0 0.0
    %5503 = vmatpush1.xpose.msra.mxu0 0.0
    %5504 = vmatprep.subr.mxu0 0.0
    %5505 = vmatpush1.xpose.msra.mxu0 0.0
    %5506 = vmatprep.subr.mxu0 0.0
    %5507 = vmatpush1.xpose.msra.mxu0 0.0
    %5508 = vmatprep.subr.mxu0 0.0
    %5509 = vmatpush1.xpose.msra.mxu0 0.0
    %5510 = vmatprep.subr.mxu0 0.0
    %5511 = vmatpush1.xpose.msra.mxu0 0.0
    %5512 = vmatprep.subr.mxu0 0.0
    %5513 = vmatpush1.xpose.msra.mxu0 0.0
    %5514 = vmatprep.subr.mxu0 0.0
    %5515 = vmatpush1.xpose.msra.mxu0 0.0
    %5516 = vmatprep.subr.mxu0 0.0
    %5517 = vmatpush1.xpose.msra.mxu0 0.0
    %5518 = vmatprep.subr.mxu0 0.0
    %5519 = vmatpush1.xpose.msra.mxu0 0.0
    %5520 = vmatprep.subr.mxu0 0.0
    %5521 = vmatpush1.xpose.msra.mxu0 0.0
    %5522 = vmatprep.subr.mxu0 0.0
    %5523 = vmatpush1.xpose.msra.mxu0 0.0
    %5524 = vmatprep.subr.mxu0 0.0
    %5525 = vmatpush1.xpose.msra.mxu0 0.0
    %5526 = vmatprep.subr.mxu0 0.0
    %5527 = vmatpush1.xpose.msra.mxu0 0.0
    %5528 = vmatprep.subr.mxu0 0.0
    %5529 = vmatpush1.xpose.msra.mxu0 0.0
    %5530 = vmatprep.subr.mxu0 0.0
    %5531 = vmatpush1.xpose.msra.mxu0 0.0
    %5532 = vmatprep.subr.mxu0 0.0
    %5533 = vmatpush1.xpose.msra.mxu0 0.0
    %5534 = vmatprep.subr.mxu0 0.0
    %5535 = vmatpush1.xpose.msra.mxu0 0.0
    %5536 = vmatprep.mubr.f32.mxu0 0.0
    %5537 = vmatmul.mubr.f32.gmra.mrb[0].mxu0 %v5467
    %v5538 = vpop.f32.mrb[0].mxu0
    %v5539 = vadd.f32 %v403, %v5538
    %v5540 = vpop.f32.mrb[0].mxu0
    %5541 = vdwg.mxu0
    %v5542 = vsel %vm406, %v5463, -inf
    %5543 = vmax.xlane.f32.xlu0 %v5542
    %v5544 = vpop.xlane.xlu0 %5543
    %v5545 = vsel %vm406, %v5539, -inf
    %5546 = vmax.xlane.f32.xlu0 %v5545
    %v5547 = vpop.xlane.xlu0 %5546
    %v5548 = vsub.f32 %v5463, %v5544
    %v5549 = vsub.f32 %v5539, %v5547
    %v5550 = vmul.f32 %v5548, 1.442695
    %v5551 = vpow.pop %v5550
    %v5552 = vmul.f32 %v5549, 1.442695
    %v5553 = vpow.pop %v5552
    %v5554 = vsel %vm406, %v5551, 0.0
    %5555 = vadd.xlane.f32.xlu0 %v5554
    %v5556 = vpop.xlane.xlu0 %5555
    %v5557 = vsel %vm406, %v5553, 0.0
    %5558 = vadd.xlane.f32.xlu0 %v5557
    %v5559 = vpop.xlane.xlu0 %5558
    %v5560 = vrcp.pop %v5556
    %v5561 = vrcp.pop %v5559
    %v5562 = vmul.f32 %v5551, %v5560
    %v5563 = vmul.f32 %v5553, %v5561
    %v5565 = vsel %vm406, %v5562, 0
    %5567 = vmatprep.subr.mxu0 0.0
    %5568 = vmatpush1.msra.mxu0 %v5382
    %5569 = vmatprep.subr.mxu0 0.0
    %5570 = vmatpush1.msra.mxu0 0.0
    %5571 = vmatprep.subr.mxu0 0.0
    %5572 = vmatpush1.msra.mxu0 0.0
    %5573 = vmatprep.subr.mxu0 0.0
    %5574 = vmatpush1.msra.mxu0 0.0
    %5575 = vmatprep.subr.mxu0 0.0
    %5576 = vmatpush1.msra.mxu0 0.0
    %5577 = vmatprep.subr.mxu0 0.0
    %5578 = vmatpush1.msra.mxu0 0.0
    %5579 = vmatprep.subr.mxu0 0.0
    %5580 = vmatpush1.msra.mxu0 0.0
    %5581 = vmatprep.subr.mxu0 0.0
    %5582 = vmatpush1.msra.mxu0 0.0
    %5583 = vmatprep.subr.mxu0 0.0
    %5584 = vmatpush1.msra.mxu0 0.0
    %5585 = vmatprep.subr.mxu0 0.0
    %5586 = vmatpush1.msra.mxu0 0.0
    %5587 = vmatprep.subr.mxu0 0.0
    %5588 = vmatpush1.msra.mxu0 0.0
    %5589 = vmatprep.subr.mxu0 0.0
    %5590 = vmatpush1.msra.mxu0 0.0
    %5591 = vmatprep.subr.mxu0 0.0
    %5592 = vmatpush1.msra.mxu0 0.0
    %5593 = vmatprep.subr.mxu0 0.0
    %5594 = vmatpush1.msra.mxu0 0.0
    %5595 = vmatprep.subr.mxu0 0.0
    %5596 = vmatpush1.msra.mxu0 0.0
    %5597 = vmatprep.subr.mxu0 0.0
    %5598 = vmatpush1.msra.mxu0 0.0
    %5599 = vmatprep.subr.mxu0 0.0
    %5600 = vmatpush1.msra.mxu0 0.0
    %5601 = vmatprep.subr.mxu0 0.0
    %5602 = vmatpush1.msra.mxu0 0.0
    %5603 = vmatprep.subr.mxu0 0.0
    %5604 = vmatpush1.msra.mxu0 0.0
    %5605 = vmatprep.subr.mxu0 0.0
    %5606 = vmatpush1.msra.mxu0 0.0
    %5607 = vmatprep.subr.mxu0 0.0
    %5608 = vmatpush1.msra.mxu0 0.0
    %5609 = vmatprep.subr.mxu0 0.0
    %5610 = vmatpush1.msra.mxu0 0.0
    %5611 = vmatprep.subr.mxu0 0.0
    %5612 = vmatpush1.msra.mxu0 0.0
    %5613 = vmatprep.subr.mxu0 0.0
    %5614 = vmatpush1.msra.mxu0 0.0
    %5615 = vmatprep.subr.mxu0 0.0
    %5616 = vmatpush1.msra.mxu0 0.0
    %5617 = vmatprep.subr.mxu0 0.0
    %5618 = vmatpush1.msra.mxu0 0.0
    %5619 = vmatprep.subr.mxu0 0.0
    %5620 = vmatpush1.msra.mxu0 0.0
    %5621 = vmatprep.subr.mxu0 0.0
    %5622 = vmatpush1.msra.mxu0 0.0
    %5623 = vmatprep.subr.mxu0 0.0
    %5624 = vmatpush1.msra.mxu0 0.0
    %5625 = vmatprep.subr.mxu0 0.0
    %5626 = vmatpush1.msra.mxu0 0.0
    %5627 = vmatprep.subr.mxu0 0.0
    %5628 = vmatpush1.msra.mxu0 0.0
    %5629 = vmatprep.subr.mxu0 0.0
    %5630 = vmatpush1.msra.mxu0 0.0
    %5631 = vmatprep.mubr.f32.mxu0 0.0
    %5632 = vmatmul.mubr.f32.gmra.mrb[0].mxu0 %v5565
    %v5633 = vpop.f32.mrb[0].mxu0
    %v5634 = vadd.f32 0.0, %v5633
    %v5635 = vpop.f32.mrb[0].mxu0
    %5636 = vdwg.mxu0
    %v5638 = vsel %vm406, %v5563, 0
    %5640 = vmatprep.subr.mxu0 0.0
    %5641 = vmatpush1.msra.mxu0 %v5387
    %5642 = vmatprep.subr.mxu0 0.0
    %5643 = vmatpush1.msra.mxu0 0.0
    %5644 = vmatprep.subr.mxu0 0.0
    %5645 = vmatpush1.msra.mxu0 0.0
    %5646 = vmatprep.subr.mxu0 0.0
    %5647 = vmatpush1.msra.mxu0 0.0
    %5648 = vmatprep.subr.mxu0 0.0
    %5649 = vmatpush1.msra.mxu0 0.0
    %5650 = vmatprep.subr.mxu0 0.0
    %5651 = vmatpush1.msra.mxu0 0.0
    %5652 = vmatprep.subr.mxu0 0.0
    %5653 = vmatpush1.msra.mxu0 0.0
    %5654 = vmatprep.subr.mxu0 0.0
    %5655 = vmatpush1.msra.mxu0 0.0
    %5656 = vmatprep.subr.mxu0 0.0
    %5657 = vmatpush1.msra.mxu0 0.0
    %5658 = vmatprep.subr.mxu0 0.0
    %5659 = vmatpush1.msra.mxu0 0.0
    %5660 = vmatprep.subr.mxu0 0.0
    %5661 = vmatpush1.msra.mxu0 0.0
    %5662 = vmatprep.subr.mxu0 0.0
    %5663 = vmatpush1.msra.mxu0 0.0
    %5664 = vmatprep.subr.mxu0 0.0
    %5665 = vmatpush1.msra.mxu0 0.0
    %5666 = vmatprep.subr.mxu0 0.0
    %5667 = vmatpush1.msra.mxu0 0.0
    %5668 = vmatprep.subr.mxu0 0.0
    %5669 = vmatpush1.msra.mxu0 0.0
    %5670 = vmatprep.subr.mxu0 0.0
    %5671 = vmatpush1.msra.mxu0 0.0
    %5672 = vmatprep.subr.mxu0 0.0
    %5673 = vmatpush1.msra.mxu0 0.0
    %5674 = vmatprep.subr.mxu0 0.0
    %5675 = vmatpush1.msra.mxu0 0.0
    %5676 = vmatprep.subr.mxu0 0.0
    %5677 = vmatpush1.msra.mxu0 0.0
    %5678 = vmatprep.subr.mxu0 0.0
    %5679 = vmatpush1.msra.mxu0 0.0
    %5680 = vmatprep.subr.mxu0 0.0
    %5681 = vmatpush1.msra.mxu0 0.0
    %5682 = vmatprep.subr.mxu0 0.0
    %5683 = vmatpush1.msra.mxu0 0.0
    %5684 = vmatprep.subr.mxu0 0.0
    %5685 = vmatpush1.msra.mxu0 0.0
    %5686 = vmatprep.subr.mxu0 0.0
    %5687 = vmatpush1.msra.mxu0 0.0
    %5688 = vmatprep.subr.mxu0 0.0
    %5689 = vmatpush1.msra.mxu0 0.0
    %5690 = vmatprep.subr.mxu0 0.0
    %5691 = vmatpush1.msra.mxu0 0.0
    %5692 = vmatprep.subr.mxu0 0.0
    %5693 = vmatpush1.msra.mxu0 0.0
    %5694 = vmatprep.subr.mxu0 0.0
    %5695 = vmatpush1.msra.mxu0 0.0
    %5696 = vmatprep.subr.mxu0 0.0
    %5697 = vmatpush1.msra.mxu0 0.0
    %5698 = vmatprep.subr.mxu0 0.0
    %5699 = vmatpush1.msra.mxu0 0.0
    %5700 = vmatprep.subr.mxu0 0.0
    %5701 = vmatpush1.msra.mxu0 0.0
    %5702 = vmatprep.subr.mxu0 0.0
    %5703 = vmatpush1.msra.mxu0 0.0
    %5704 = vmatprep.mubr.f32.mxu0 0.0
    %5705 = vmatmul.mubr.f32.gmra.mrb[0].mxu0 %v5638
    %v5706 = vpop.f32.mrb[0].mxu0
    %v5707 = vadd.f32 0.0, %v5706
    %v5708 = vpop.f32.mrb[0].mxu0
    %5709 = vdwg.mxu0
    %s5710 = scalar_lea.vmem %s8, 56
    %v5711 = vld [vmem:[%s5710] sm:$0xff]
    %v5713 = vsel %vm406, %v5634, 0
    %v5716 = vsel %vm406, %v5707, 0
    %5718 = vmatprep.subr.mxu0 0.0
    %5719 = vmatpush1.msra.mxu0 %v5711
    %5720 = vmatprep.subr.mxu0 0.0
    %5721 = vmatpush1.msra.mxu0 0.0
    %5722 = vmatprep.subr.mxu0 0.0
    %5723 = vmatpush1.msra.mxu0 0.0
    %5724 = vmatprep.subr.mxu0 0.0
    %5725 = vmatpush1.msra.mxu0 0.0
    %5726 = vmatprep.subr.mxu0 0.0
    %5727 = vmatpush1.msra.mxu0 0.0
    %5728 = vmatprep.subr.mxu0 0.0
    %5729 = vmatpush1.msra.mxu0 0.0
    %5730 = vmatprep.subr.mxu0 0.0
    %5731 = vmatpush1.msra.mxu0 0.0
    %5732 = vmatprep.subr.mxu0 0.0
    %5733 = vmatpush1.msra.mxu0 0.0
    %5734 = vmatprep.subr.mxu0 0.0
    %5735 = vmatpush1.msra.mxu0 0.0
    %5736 = vmatprep.subr.mxu0 0.0
    %5737 = vmatpush1.msra.mxu0 0.0
    %5738 = vmatprep.subr.mxu0 0.0
    %5739 = vmatpush1.msra.mxu0 0.0
    %5740 = vmatprep.subr.mxu0 0.0
    %5741 = vmatpush1.msra.mxu0 0.0
    %5742 = vmatprep.subr.mxu0 0.0
    %5743 = vmatpush1.msra.mxu0 0.0
    %5744 = vmatprep.subr.mxu0 0.0
    %5745 = vmatpush1.msra.mxu0 0.0
    %5746 = vmatprep.subr.mxu0 0.0
    %5747 = vmatpush1.msra.mxu0 0.0
    %5748 = vmatprep.subr.mxu0 0.0
    %5749 = vmatpush1.msra.mxu0 0.0
    %5750 = vmatprep.subr.mxu0 0.0
    %5751 = vmatpush1.msra.mxu0 0.0
    %5752 = vmatprep.subr.mxu0 0.0
    %5753 = vmatpush1.msra.mxu0 0.0
    %5754 = vmatprep.subr.mxu0 0.0
    %5755 = vmatpush1.msra.mxu0 0.0
    %5756 = vmatprep.subr.mxu0 0.0
    %5757 = vmatpush1.msra.mxu0 0.0
    %5758 = vmatprep.subr.mxu0 0.0
    %5759 = vmatpush1.msra.mxu0 0.0
    %5760 = vmatprep.subr.mxu0 0.0
    %5761 = vmatpush1.msra.mxu0 0.0
    %5762 = vmatprep.subr.mxu0 0.0
    %5763 = vmatpush1.msra.mxu0 0.0
    %5764 = vmatprep.subr.mxu0 0.0
    %5765 = vmatpush1.msra.mxu0 0.0
    %5766 = vmatprep.subr.mxu0 0.0
    %5767 = vmatpush1.msra.mxu0 0.0
    %5768 = vmatprep.subr.mxu0 0.0
    %5769 = vmatpush1.msra.mxu0 0.0
    %5770 = vmatprep.subr.mxu0 0.0
    %5771 = vmatpush1.msra.mxu0 0.0
    %5772 = vmatprep.subr.mxu0 0.0
    %5773 = vmatpush1.msra.mxu0 0.0
    %5774 = vmatprep.subr.mxu0 0.0
    %5775 = vmatpush1.msra.mxu0 0.0
    %5776 = vmatprep.subr.mxu0 0.0
    %5777 = vmatpush1.msra.mxu0 0.0
    %5778 = vmatprep.subr.mxu0 0.0
    %5779 = vmatpush1.msra.mxu0 0.0
    %5780 = vmatprep.subr.mxu0 0.0
    %5781 = vmatpush1.msra.mxu0 0.0
    %5782 = vmatprep.mubr.f32.mxu0 0.0
    %5783 = vmatmul.mubr.f32.gmra.mrb[0].mxu0 %v5713
    %v5784 = vpop.f32.mrb[0].mxu0
    %v5785 = vadd.f32 0.0, %v5784
    %v5786 = vpop.f32.mrb[0].mxu0
    %5787 = vmatprep.mubr.f32.mxu0 0.0
    %5788 = vmatmul.mubr.f32.gmra.mrb[0].mxu0 %v5716
    %v5789 = vpop.f32.mrb[0].mxu0
    %v5790 = vadd.f32 0.0, %v5789
    %v5791 = vpop.f32.mrb[0].mxu0
    %5792 = vdwg.mxu0
    %v5793 = vadd.f32 %v5124, %v5785
    %v5794 = vadd.f32 %v5125, %v5790
    %s5795 = scalar_lea.vmem %s16, 1
    %v5796 = vld [vmem:[%s5795] sm:$0x1]
    %s5797 = scalar_lea.vmem %s17, 1
    %v5798 = vld [vmem:[%s5797] sm:$0x1]
    %v5799 = vsel %vm76, %v5793, 0.0
    %5800 = vadd.xlane.f32.xlu0 %v5799
    %v5801 = vpop.xlane.xlu0 %5800
    %v5802 = vsel %vm76, %v5794, 0.0
    %5803 = vadd.xlane.f32.xlu0 %v5802
    %v5804 = vpop.xlane.xlu0 %5803
    %v5805 = vmul.f32 %v5801, %v83
    %v5806 = vmul.f32 %v5804, %v83
    %v5807 = vsub.f32 %v5793, %v5805
    %v5808 = vsub.f32 %v5794, %v5806
    %v5809 = vmul.f32 %v5807, %v5807
    %v5810 = vmul.f32 %v5808, %v5808
    %v5811 = vsel %vm76, %v5809, 0.0
    %5812 = vadd.xlane.f32.xlu0 %v5811
    %v5813 = vpop.xlane.xlu0 %5812
    %v5814 = vsel %vm76, %v5810, 0.0
    %5815 = vadd.xlane.f32.xlu0 %v5814
    %v5816 = vpop.xlane.xlu0 %5815
    %v5817 = vmul.f32 %v5813, %v96
    %v5818 = vmul.f32 %v5816, %v96
    %v5819 = vadd.f32 %v5817, 1e-12
    %v5820 = vadd.f32 %v5818, 1e-12
    %v5821 = vrsqrt.pop %v5819
    %v5822 = vrsqrt.pop %v5820
    %v5824 = vlaneseq
    %v5825 = vshrl.u32 %v5824, 7
    %v5826 = vsub.s32 0, %v5825
    %v5827 = vrot.slane %v5796, %v5826
    %v5829 = vmul.f32 %v5827, %v5807
    %v5830 = vmul.f32 %v5827, %v5808
    %v5831 = vmul.f32 %v5829, %v5821
    %v5832 = vmul.f32 %v5830, %v5822
    %v5834 = vlaneseq
    %v5835 = vshrl.u32 %v5834, 7
    %v5836 = vsub.s32 0, %v5835
    %v5837 = vrot.slane %v5798, %v5836
    %v5839 = vadd.f32 %v5831, %v5837
    %v5840 = vadd.f32 %v5832, %v5837
    %s5841 = scalar_lea.vmem %s12, 32
    %v5842 = vld [vmem:[%s5841] sm:$0xff]
    %v5843 = vld [vmem:[%s5841 + $0x8] sm:$0xff]
    %v5844 = vld [vmem:[%s5841 + $0x10] sm:$0xff]
    %v5845 = vld [vmem:[%s5841 + $0x18] sm:$0xff]
    %s5846 = scalar_lea.vmem %s13, 1
    %v5847 = vld [vmem:[%s5846] sm:$0x1]
    %v5849 = vlaneseq
    %v5850 = vshrl.u32 %v5849, 7
    %v5851 = vsub.s32 0, %v5850
    %v5852 = vrot.slane %v5847, %v5851
    %v5855 = vsel %vm76, %v5839, 0
    %v5858 = vsel %vm76, %v5840, 0
    %5860 = vmatprep.subr.mxu0 0.0
    %5861 = vmatpush1.msra.mxu0 %v5842
    %5862 = vmatprep.subr.mxu0 0.0
    %5863 = vmatpush1.msra.mxu0 %v5843
    %5864 = vmatprep.subr.mxu0 0.0
    %5865 = vmatpush1.msra.mxu0 %v5844
    %5866 = vmatprep.subr.mxu0 0.0
    %5867 = vmatpush1.msra.mxu0 %v5845
    %5868 = vmatprep.subr.mxu0 0.0
    %5869 = vmatpush1.msra.mxu0 0.0
    %5870 = vmatprep.subr.mxu0 0.0
    %5871 = vmatpush1.msra.mxu0 0.0
    %5872 = vmatprep.subr.mxu0 0.0
    %5873 = vmatpush1.msra.mxu0 0.0
    %5874 = vmatprep.subr.mxu0 0.0
    %5875 = vmatpush1.msra.mxu0 0.0
    %5876 = vmatprep.subr.mxu0 0.0
    %5877 = vmatpush1.msra.mxu0 0.0
    %5878 = vmatprep.subr.mxu0 0.0
    %5879 = vmatpush1.msra.mxu0 0.0
    %5880 = vmatprep.subr.mxu0 0.0
    %5881 = vmatpush1.msra.mxu0 0.0
    %5882 = vmatprep.subr.mxu0 0.0
    %5883 = vmatpush1.msra.mxu0 0.0
    %5884 = vmatprep.subr.mxu0 0.0
    %5885 = vmatpush1.msra.mxu0 0.0
    %5886 = vmatprep.subr.mxu0 0.0
    %5887 = vmatpush1.msra.mxu0 0.0
    %5888 = vmatprep.subr.mxu0 0.0
    %5889 = vmatpush1.msra.mxu0 0.0
    %5890 = vmatprep.subr.mxu0 0.0
    %5891 = vmatpush1.msra.mxu0 0.0
    %5892 = vmatprep.subr.mxu0 0.0
    %5893 = vmatpush1.msra.mxu0 0.0
    %5894 = vmatprep.subr.mxu0 0.0
    %5895 = vmatpush1.msra.mxu0 0.0
    %5896 = vmatprep.subr.mxu0 0.0
    %5897 = vmatpush1.msra.mxu0 0.0
    %5898 = vmatprep.subr.mxu0 0.0
    %5899 = vmatpush1.msra.mxu0 0.0
    %5900 = vmatprep.subr.mxu0 0.0
    %5901 = vmatpush1.msra.mxu0 0.0
    %5902 = vmatprep.subr.mxu0 0.0
    %5903 = vmatpush1.msra.mxu0 0.0
    %5904 = vmatprep.subr.mxu0 0.0
    %5905 = vmatpush1.msra.mxu0 0.0
    %5906 = vmatprep.subr.mxu0 0.0
    %5907 = vmatpush1.msra.mxu0 0.0
    %5908 = vmatprep.subr.mxu0 0.0
    %5909 = vmatpush1.msra.mxu0 0.0
    %5910 = vmatprep.subr.mxu0 0.0
    %5911 = vmatpush1.msra.mxu0 0.0
    %5912 = vmatprep.subr.mxu0 0.0
    %5913 = vmatpush1.msra.mxu0 0.0
    %5914 = vmatprep.subr.mxu0 0.0
    %5915 = vmatpush1.msra.mxu0 0.0
    %5916 = vmatprep.subr.mxu0 0.0
    %5917 = vmatpush1.msra.mxu0 0.0
    %5918 = vmatprep.subr.mxu0 0.0
    %5919 = vmatpush1.msra.mxu0 0.0
    %5920 = vmatprep.subr.mxu0 0.0
    %5921 = vmatpush1.msra.mxu0 0.0
    %5922 = vmatprep.subr.mxu0 0.0
    %5923 = vmatpush1.msra.mxu0 0.0
    %5924 = vmatprep.mubr.f32.mxu0 0.0
    %5925 = vmatmul.mubr.f32.gmra.mrb[0].mxu0 %v5855
    %v5926 = vpop.f32.mrb[0].mxu0
    %v5927 = vadd.f32 %v5852, %v5926
    %v5928 = vpop.f32.mrb[0].mxu0
    %5929 = vmatprep.mubr.f32.mxu0 0.0
    %5930 = vmatmul.mubr.f32.gmra.mrb[0].mxu0 %v5858
    %v5931 = vpop.f32.mrb[0].mxu0
    %v5932 = vadd.f32 %v5852, %v5931
    %v5933 = vpop.f32.mrb[0].mxu0
    %5934 = vdwg.mxu0
    %v5935 = vmax.f32 %v5927, 0.0
    %v5936 = vmax.f32 %v5932, 0.0
    %s5937 = scalar_lea.vmem %s14, 64
    %v5938 = vld [vmem:[%s5937] sm:$0xff]
    %v5939 = vld [vmem:[%s5937 + $0x8] sm:$0xff]
    %v5940 = vld [vmem:[%s5937 + $0x10] sm:$0xff]
    %v5941 = vld [vmem:[%s5937 + $0x18] sm:$0xff]
    %v5942 = vld [vmem:[%s5937 + $0x20] sm:$0xff]
    %v5943 = vld [vmem:[%s5937 + $0x28] sm:$0xff]
    %v5944 = vld [vmem:[%s5937 + $0x30] sm:$0xff]
    %v5945 = vld [vmem:[%s5937 + $0x38] sm:$0xff]
    %v5947 = vsel %vm2964, %v5935, 0
    %v5950 = vsel %vm2964, %v5936, 0
    %5952 = vmatprep.subr.mxu0 0.0
    %5953 = vmatpush1.msra.mxu0 %v5938
    %5954 = vmatprep.subr.mxu0 0.0
    %5955 = vmatpush1.msra.mxu0 %v5939
    %5956 = vmatprep.subr.mxu0 0.0
    %5957 = vmatpush1.msra.mxu0 %v5940
    %5958 = vmatprep.subr.mxu0 0.0
    %5959 = vmatpush1.msra.mxu0 %v5941
    %5960 = vmatprep.subr.mxu0 0.0
    %5961 = vmatpush1.msra.mxu0 %v5942
    %5962 = vmatprep.subr.mxu0 0.0
    %5963 = vmatpush1.msra.mxu0 %v5943
    %5964 = vmatprep.subr.mxu0 0.0
    %5965 = vmatpush1.msra.mxu0 %v5944
    %5966 = vmatprep.subr.mxu0 0.0
    %5967 = vmatpush1.msra.mxu0 %v5945
    %5968 = vmatprep.subr.mxu0 0.0
    %5969 = vmatpush1.msra.mxu0 0.0
    %5970 = vmatprep.subr.mxu0 0.0
    %5971 = vmatpush1.msra.mxu0 0.0
    %5972 = vmatprep.subr.mxu0 0.0
    %5973 = vmatpush1.msra.mxu0 0.0
    %5974 = vmatprep.subr.mxu0 0.0
    %5975 = vmatpush1.msra.mxu0 0.0
    %5976 = vmatprep.subr.mxu0 0.0
    %5977 = vmatpush1.msra.mxu0 0.0
    %5978 = vmatprep.subr.mxu0 0.0
    %5979 = vmatpush1.msra.mxu0 0.0
    %5980 = vmatprep.subr.mxu0 0.0
    %5981 = vmatpush1.msra.mxu0 0.0
    %5982 = vmatprep.subr.mxu0 0.0
    %5983 = vmatpush1.msra.mxu0 0.0
    %5984 = vmatprep.subr.mxu0 0.0
    %5985 = vmatpush1.msra.mxu0 0.0
    %5986 = vmatprep.subr.mxu0 0.0
    %5987 = vmatpush1.msra.mxu0 0.0
    %5988 = vmatprep.subr.mxu0 0.0
    %5989 = vmatpush1.msra.mxu0 0.0
    %5990 = vmatprep.subr.mxu0 0.0
    %5991 = vmatpush1.msra.mxu0 0.0
    %5992 = vmatprep.subr.mxu0 0.0
    %5993 = vmatpush1.msra.mxu0 0.0
    %5994 = vmatprep.subr.mxu0 0.0
    %5995 = vmatpush1.msra.mxu0 0.0
    %5996 = vmatprep.subr.mxu0 0.0
    %5997 = vmatpush1.msra.mxu0 0.0
    %5998 = vmatprep.subr.mxu0 0.0
    %5999 = vmatpush1.msra.mxu0 0.0
    %6000 = vmatprep.subr.mxu0 0.0
    %6001 = vmatpush1.msra.mxu0 0.0
    %6002 = vmatprep.subr.mxu0 0.0
    %6003 = vmatpush1.msra.mxu0 0.0
    %6004 = vmatprep.subr.mxu0 0.0
    %6005 = vmatpush1.msra.mxu0 0.0
    %6006 = vmatprep.subr.mxu0 0.0
    %6007 = vmatpush1.msra.mxu0 0.0
    %6008 = vmatprep.subr.mxu0 0.0
    %6009 = vmatpush1.msra.mxu0 0.0
    %6010 = vmatprep.subr.mxu0 0.0
    %6011 = vmatpush1.msra.mxu0 0.0
    %6012 = vmatprep.subr.mxu0 0.0
    %6013 = vmatpush1.msra.mxu0 0.0
    %6014 = vmatprep.subr.mxu0 0.0
    %6015 = vmatpush1.msra.mxu0 0.0
    %6016 = vmatprep.mubr.f32.mxu0 0.0
    %6017 = vmatmul.mubr.f32.gmra.mrb[0].mxu0 %v5947
    %v6018 = vpop.f32.mrb[0].mxu0
    %v6019 = vadd.f32 0.0, %v6018
    %v6020 = vpop.f32.mrb[0].mxu0
    %6021 = vmatprep.mubr.f32.mxu0 0.0
    %6022 = vmatmul.mubr.f32.gmra.mrb[0].mxu0 %v5950
    %v6023 = vpop.f32.mrb[0].mxu0
    %v6024 = vadd.f32 0.0, %v6023
    %v6025 = vpop.f32.mrb[0].mxu0
    %6026 = vdwg.mxu0
    %v6027 = vadd.f32 %v5793, %v6019
    %v6028 = vadd.f32 %v5794, %v6024
    %s6029 = scalar_lea.vmem %s15, 1
    %v6030 = vld [vmem:[%s6029] sm:$0x1]
    %v6032 = vlaneseq
    %v6033 = vshrl.u32 %v6032, 7
    %v6034 = vsub.s32 0, %v6033
    %v6035 = vrot.slane %v6030, %v6034
    %v6037 = vadd.f32 %v6027, %v6035
    %v6038 = vadd.f32 %v6028, %v6035
    %v6039 = vld [vmem:[%s18] sm:$0x1]
    %v6040 = vld [vmem:[%s19] sm:$0x1]
    %v6041 = vsel %vm76, %v6037, 0.0
    %6042 = vadd.xlane.f32.xlu0 %v6041
    %v6043 = vpop.xlane.xlu0 %6042
    %v6044 = vsel %vm76, %v6038, 0.0
    %6045 = vadd.xlane.f32.xlu0 %v6044
    %v6046 = vpop.xlane.xlu0 %6045
    %v6047 = vmul.f32 %v6043, %v83
    %v6048 = vmul.f32 %v6046, %v83
    %v6049 = vsub.f32 %v6037, %v6047
    %v6050 = vsub.f32 %v6038, %v6048
    %v6051 = vmul.f32 %v6049, %v6049
    %v6052 = vmul.f32 %v6050, %v6050
    %v6053 = vsel %vm76, %v6051, 0.0
    %6054 = vadd.xlane.f32.xlu0 %v6053
    %v6055 = vpop.xlane.xlu0 %6054
    %v6056 = vsel %vm76, %v6052, 0.0
    %6057 = vadd.xlane.f32.xlu0 %v6056
    %v6058 = vpop.xlane.xlu0 %6057
    %v6059 = vmul.f32 %v6055, %v96
    %v6060 = vmul.f32 %v6058, %v96
    %v6061 = vadd.f32 %v6059, 1e-12
    %v6062 = vadd.f32 %v6060, 1e-12
    %v6063 = vrsqrt.pop %v6061
    %v6064 = vrsqrt.pop %v6062
    %v6066 = vlaneseq
    %v6067 = vshrl.u32 %v6066, 7
    %v6068 = vsub.s32 0, %v6067
    %v6069 = vrot.slane %v6039, %v6068
    %v6071 = vmul.f32 %v6069, %v6049
    %v6072 = vmul.f32 %v6069, %v6050
    %v6073 = vmul.f32 %v6071, %v6063
    %v6074 = vmul.f32 %v6072, %v6064
    %v6076 = vlaneseq
    %v6077 = vshrl.u32 %v6076, 7
    %v6078 = vsub.s32 0, %v6077
    %v6079 = vrot.slane %v6040, %v6078
    %v6081 = vadd.f32 %v6073, %v6079
    %v6082 = vadd.f32 %v6074, %v6079
    %6083 = vst.msk [vmem:[#allocation2] sm:$0xff] %vm76, %v6081
    %6084 = vst.msk [vmem:[#allocation2 + $0x8] sm:$0xff] %vm76, %v6082
    // Predicated region
    $region82: #{encoder_forward.1} parent=1 // pred_check
      _
    $region83: #{encoder_forward.1} parent=1 // pred_check_branch
      %6086 = sbr.rel (0) target = $region85
    $region84: #{encoder_forward.1} parent=1 // pred_region
      %s6088 = ssub.s32 256, 256
      %6089 = vsyncadd [#allocation3], %s6088
      %s6090 = sshll.u32 [#allocation2], 4
      %s6091 = int_to_ptr.vmem [resolvable:$true] %s6090
      %6096 = dma.vmem_to_hbm [thread:$0]  %s6091, 256, %s20, [#allocation3], 128, 128, 8
    $region85: #{encoder_forward.1} parent=1 // pred_fallthru
      _
    // Predicated region
    $region86: #{encoder_forward.1} parent=1 // pred_check
      _
    $region87: #{encoder_forward.1} parent=1 // pred_check_branch
      %6098 = sbr.rel (0) target = $region89
    $region88: #{encoder_forward.1} parent=1 // pred_region
      %6099 = dma.done [#allocation3], 256
    $region89: #{encoder_forward.1} parent=1 // pred_fallthru
      _
    %6100 = vsyncpa [#allocation3], 1

</llo_original>
